<compile_context>
chip_gen: v5e
topology: v5e:2x2
jax: 0.10.0
libtpu: 0.0.40
codegen_flags: <defaults>
</compile_context>

<pallas_src>
import jax
import jax.numpy as jnp
from jax import lax
from jax.experimental import pallas as pl
from jax.experimental.pallas import tpu as pltpu

# ----------------------------- config (small) -----------------------------
V_WORDS = 128      # vocab size (word_num)
D_MODEL = 32       # d_model
N_LAYERS = 2       # layers_num
LQ = 8             # question length
LA = 6             # answer length  -> forward output (1, LA-1, V_WORDS)

F32 = jnp.float32
_LN_EPS = 1e-5


# ----------------------------- kernel helpers -----------------------------
def _lstm_cell(xg_t, h, c, whh, d):
    """One LSTM step.  xg_t: (1,4d) = x_t @ W_ih + b (precomputed); h,c: (1,d)."""
    gates = xg_t + jnp.dot(h, whh, preferred_element_type=F32)
    sig = jax.nn.sigmoid(gates)          # full-width EUP op
    tnh = jnp.tanh(gates)                # full-width EUP op
    i_g = sig[:, 0 * d:1 * d]
    f_g = sig[:, 1 * d:2 * d]
    g_g = tnh[:, 2 * d:3 * d]
    o_g = sig[:, 3 * d:4 * d]
    c_new = f_g * c + i_g * g_g
    h_new = o_g * jnp.tanh(c_new)
    return h_new, c_new


def _layer_norm(x, g, b):
    m = jnp.mean(x, axis=-1, keepdims=True)
    v = jnp.mean((x - m) ** 2, axis=-1, keepdims=True)
    return (x - m) * lax.rsqrt(v + _LN_EPS) * g + b


# ----------------------------- fused kernel -----------------------------
def fused_forward_kernel(
    # SMEM inputs
    q_ids_ref, a_ids_ref,
    # VMEM inputs
    enc_emb_ref, dec_emb_ref,
    e0_wih_ref, e0_whh_f_ref, e0_whh_b_ref, e0_b_ref,
    e1_wih_ref, e1_whh_f_ref, e1_whh_b_ref, e1_b_ref,
    d0_wih_ref, d0_whh_ref, d0_b_ref,
    d1_wih_ref, d1_whh_ref, d1_b_ref,
    dec_ln_g_ref, dec_ln_b_ref,
    att_wd_ref, att_we_ref, att_ln_g_ref, att_ln_b_ref,
    proj_w_ref, proj_b_ref,
    # output
    out_ref,
    # scratch
    oh_ref, enc0_ref, qh_ref, do0_ref,
):
    d = D_MODEL
    Lq = q_ids_ref.shape[0]
    n_dec = out_ref.shape[0]                       # LA - 1 decode positions
    V = enc_emb_ref.shape[0]
    col = lax.broadcasted_iota(jnp.int32, (1, V), 1)

    # ================= encoder =================
    # In-kernel embedding gather: one-hot rows (built from SMEM ids) @ table.
    # (Encoder LayerNorm is dead code in the reference module -> skipped.)
    for t in range(Lq):
        oh_ref[t:t + 1, :] = (col == q_ids_ref[t]).astype(F32)
    x0 = jnp.dot(oh_ref[0:Lq, :], enc_emb_ref[...],
                 preferred_element_type=F32)                        # (Lq, d)

    def bidir_layer(x, wih_fb, whh_f, whh_b, b_fb, out_buf):
        # Hoisted input projection for BOTH directions: (T, 8d) in one matmul.
        xg = jnp.dot(x, wih_fb, preferred_element_type=F32) + b_fb
        h_f = jnp.zeros((1, d), F32)
        c_f = jnp.zeros((1, d), F32)
        h_b = jnp.zeros((1, d), F32)
        c_b = jnp.zeros((1, d), F32)
        T = x.shape[0]
        for t in range(T):                         # fully unrolled; fwd & bwd interleaved
            tb = T - 1 - t
            h_f, c_f = _lstm_cell(xg[t:t + 1, 0:4 * d], h_f, c_f, whh_f, d)
            h_b, c_b = _lstm_cell(xg[tb:tb + 1, 4 * d:8 * d], h_b, c_b, whh_b, d)
            out_buf[t:t + 1, 0:d] = h_f            # left half  = forward output
            out_buf[tb:tb + 1, d:2 * d] = h_b      # right half = backward output
        return (h_f, c_f), (h_b, c_b)

    (h0f, c0f), (h0b, c0b) = bidir_layer(
        x0, e0_wih_ref[...], e0_whh_f_ref[...], e0_whh_b_ref[...], e0_b_ref[...],
        enc0_ref)
    x1 = enc0_ref[...]                                              # (Lq, 2d)
    (h1f, c1f), (h1b, c1b) = bidir_layer(
        x1, e1_wih_ref[...], e1_whh_f_ref[...], e1_whh_b_ref[...], e1_b_ref[...],
        qh_ref)
    qh = qh_ref[...]                                                # (Lq, 2d)

    # PyTorch h_n order = [l0f, l0b, l1f, l1b];  h[:layers] + h[layers:]
    #   -> decoder layer-0 init = l0f + l1f ; decoder layer-1 init = l0b + l1b.
    dh0, dc0 = h0f + h1f, c0f + c1f
    dh1, dc1 = h0b + h1b, c0b + c1b

    # ---- attention question path: constant across all decode positions ----
    att_g = att_ln_g_ref[...]
    att_b = att_ln_b_ref[...]
    q_att = _layer_norm(jnp.dot(qh, att_we_ref[...], preferred_element_type=F32),
                        att_g, att_b)                               # (Lq, d)
    q_scaled = q_att * (1.0 / (float(d) ** 0.5))

    # ================= decoder (teacher forcing, fully unrolled) =================
    for t in range(n_dec):
        oh_ref[t:t + 1, :] = (col == a_ids_ref[t]).astype(F32)
    x_dec = jnp.dot(oh_ref[0:n_dec, :], dec_emb_ref[...],
                    preferred_element_type=F32)                     # (n_dec, d)
    x_dec = _layer_norm(x_dec, dec_ln_g_ref[...], dec_ln_b_ref[...])
    # layer-0 input projection is identical for every teacher-forcing prefix.
    xg0 = jnp.dot(x_dec, d0_wih_ref[...], preferred_element_type=F32) + d0_b_ref[...]

    whh_d0 = d0_whh_ref[...]
    wih_d1 = d1_wih_ref[...]
    whh_d1 = d1_whh_ref[...]
    b_d1 = d1_b_ref[...]
    wd = att_wd_ref[...]                                            # (2d, d)
    wd_top = wd[0:d, :]
    wd_bot = wd[d:2 * d, :]
    proj_w = proj_w_ref[...]
    proj_b = proj_b_ref[...]

    for i in range(n_dec):
        # --- decoder LSTM layer 0 over prefix 0..i (state carried across i) ---
        h0, c0 = dh0, dc0
        for t in range(i + 1):
            h0, c0 = _lstm_cell(xg0[t:t + 1, :], h0, c0, whh_d0, d)
            do0_ref[t:t + 1, :] = h0
        dh0, dc0 = h0, c0
        # --- decoder LSTM layer 1 (per-step outputs unused -> not stored) ---
        xg1 = jnp.dot(do0_ref[0:i + 1, :], wih_d1,
                      preferred_element_type=F32) + b_d1            # (i+1, 4d)
        h1, c1 = dh1, dc1
        for t in range(i + 1):
            h1, c1 = _lstm_cell(xg1[t:t + 1, :], h1, c1, whh_d1, d)
        dh1, dc1 = h1, c1

        # --- attention (decoder-state path) + vocab projection ---
        # [h0 | h1] @ W_d  ==  h0 @ W_d[:d] + h1 @ W_d[d:]  (no lane concat)
        h_att = _layer_norm(
            jnp.dot(dh0, wd_top, preferred_element_type=F32)
            + jnp.dot(dh1, wd_bot, preferred_element_type=F32),
            att_g, att_b)                                           # (1, d)
        scores = jnp.sum(q_scaled * h_att, axis=-1, keepdims=True)  # (Lq, 1)
        scores = scores - jnp.max(scores, axis=0, keepdims=True)
        e = jnp.exp(scores)
        probs = e * pl.reciprocal(jnp.sum(e, axis=0, keepdims=True), approx=True)
        ctx = jnp.sum(probs * q_att, axis=0, keepdims=True)         # (1, d)
        out_ref[i:i + 1, :] = (jnp.dot(ctx, proj_w, preferred_element_type=F32)
                               + proj_b)


# ----------------------------- Pallas wrapper -----------------------------
def _pack_encoder_layer(layer):
    # [W_ih_f | W_ih_b] -> (Din, 8d) so the hoisted input projection is one
    # 256-wide MXU matmul; biases folded in the same way.
    wih_fb = jnp.concatenate([layer['f']['wih_t'], layer['b']['wih_t']], axis=1)
    b_fb = jnp.concatenate([layer['f']['b'], layer['b']['b']], axis=1)
    return wih_fb, layer['f']['whh_t'], layer['b']['whh_t'], b_fb


@jax.jit
def forward_pallas(p, question, answer):
    q_ids = question[0].astype(jnp.int32)                 # (LQ,)
    a_ids = answer[0].astype(jnp.int32)                   # (LA,)
    n_dec = answer.shape[1] - 1
    V = p['enc_emb'].shape[0]

    e0 = _pack_encoder_layer(p['enc_lstm'][0])
    e1 = _pack_encoder_layer(p['enc_lstm'][1])
    d0 = p['dec_lstm'][0]
    d1 = p['dec_lstm'][1]

    smem = pl.BlockSpec(memory_space=pltpu.MemorySpace.SMEM)
    vmem = pl.BlockSpec(memory_space=pltpu.MemorySpace.VMEM)

    out = pl.pallas_call(
        fused_forward_kernel,
        out_shape=jax.ShapeDtypeStruct((n_dec, V), F32),
        in_specs=[smem, smem] + [vmem] * 24,
        out_specs=vmem,
        scratch_shapes=[
            pltpu.VMEM((LQ, V), F32),             # one-hot rows (reused enc/dec)
            pltpu.VMEM((LQ, 2 * D_MODEL), F32),   # encoder layer-0 output
            pltpu.VMEM((LQ, 2 * D_MODEL), F32),   # encoder layer-1 output (qh)
            pltpu.VMEM((8, D_MODEL), F32),        # decoder layer-0 outputs
        ],
    )(q_ids, a_ids,
      p['enc_emb'], p['dec_emb'],
      *e0, *e1,
      d0['wih_t'], d0['whh_t'], d0['b'],
      d1['wih_t'], d1['whh_t'], d1['b'],
      p['dec_ln_g'], p['dec_ln_b'],
      p['att_wd_t'], p['att_we_t'], p['att_ln_g'], p['att_ln_b'],
      p['proj_w_t'], p['proj_b'])
    return out[None]                                       # (1, LA-1, V)


# ------------------------- pure-JAX reference -------------------------
def _ref_layernorm(x, g, b):
    m = jnp.mean(x, axis=-1, keepdims=True)
    v = jnp.mean((x - m) ** 2, axis=-1, keepdims=True)
    return (x - m) * lax.rsqrt(v + _LN_EPS) * g + b


def _ref_lstm_layer(x, h0, c0, wih_t, whh_t, b):
    d = h0.shape[1]

    def step(carry, x_t):
        h, c = carry
        gates = x_t[None, :] @ wih_t + h @ whh_t + b
        i = jax.nn.sigmoid(gates[:, 0 * d:1 * d])
        f = jax.nn.sigmoid(gates[:, 1 * d:2 * d])
        g = jnp.tanh(gates[:, 2 * d:3 * d])
        o = jax.nn.sigmoid(gates[:, 3 * d:4 * d])
        c = f * c + i * g
        h = o * jnp.tanh(c)
        return (h, c), h[0]

    (h, c), out = lax.scan(step, (h0, c0), x)
    return out, h, c


def _ref_encoder(p, q_ids):
    d = p['enc_emb'].shape[1]
    x = p['enc_emb'][q_ids]                    # LSTM consumes RAW embedding
    z = jnp.zeros((1, d), F32)
    hs, cs = [], []
    layer_in = x
    for layer in p['enc_lstm']:
        of, hf, cf = _ref_lstm_layer(layer_in, z, z, **layer['f'])
        ob_r, hb, cb = _ref_lstm_layer(layer_in[::-1], z, z, **layer['b'])
        layer_in = jnp.concatenate([of, ob_r[::-1]], axis=-1)
        hs += [hf, hb]
        cs += [cf, cb]
    n = len(p['enc_lstm'])
    h = [hs[k] + hs[k + n] for k in range(n)]  # torch: h[:layers] + h[layers:]
    c = [cs[k] + cs[k + n] for k in range(n)]
    return layer_in, h, c


def _ref_decoder_step(p, dec_ids, qh, h, c):
    d = p['dec_emb'].shape[1]
    emb = p['dec_emb'][dec_ids]
    x = _ref_layernorm(emb, p['dec_ln_g'], p['dec_ln_b'])
    new_h, new_c = [], []
    layer_in = x
    for l, layer in enumerate(p['dec_lstm']):
        out, hT, cT = _ref_lstm_layer(layer_in, h[l], c[l], **layer)
        layer_in = out
        new_h.append(hT)
        new_c.append(cT)
    h_flat = jnp.concatenate(new_h, axis=-1)                 # (1, layers*d)
    h_att = _ref_layernorm(h_flat @ p['att_wd_t'], p['att_ln_g'], p['att_ln_b'])
    q_att = _ref_layernorm(qh @ p['att_we_t'], p['att_ln_g'], p['att_ln_b'])
    scores = (q_att / (float(d) ** 0.5)) @ h_att.T           # (Lq, 1)
    a = jax.nn.softmax(scores, axis=0)
    ctx = jnp.sum(a * q_att, axis=0, keepdims=True)
    logits = ctx @ p['proj_w_t'] + p['proj_b']
    return logits, new_h, new_c


@jax.jit
def forward_ref(p, question, answer):
    q_ids = question[0]
    a_ids = answer[0]
    qh, h, c = _ref_encoder(p, q_ids)
    outs = []
    for i in range(answer.shape[1] - 1):
        logits, h, c = _ref_decoder_step(p, a_ids[:i + 1], qh, h, c)
        outs.append(logits)
    return jnp.concatenate(outs, axis=0)[None]


# ----------------------------- params -----------------------------
def init_params(key, vocab, d, n_layers):
    keys = iter(jax.random.split(key, 64))

    def nrm(shape, scale=0.08):
        return jax.random.normal(next(keys), shape, F32) * scale

    p = {}
    p['enc_emb'] = nrm((vocab, d), 0.1)
    p['dec_emb'] = nrm((vocab, d), 0.1)      # shared module/decoder embedding

    enc = []
    for l in range(n_layers):
        in_dim = d if l == 0 else 2 * d      # bidirectional: layer>0 sees 2d features
        layer = {}
        for direction in ('f', 'b'):
            layer[direction] = dict(wih_t=nrm((in_dim, 4 * d)),
                                    whh_t=nrm((d, 4 * d)),
                                    b=nrm((1, 4 * d)))  # b_ih + b_hh combined
        enc.append(layer)
    p['enc_lstm'] = enc

    p['dec_lstm'] = [dict(wih_t=nrm((d, 4 * d)),
                          whh_t=nrm((d, 4 * d)),
                          b=nrm((1, 4 * d))) for _ in range(n_layers)]

    p['dec_ln_g'] = 1.0 + nrm((1, d), 0.1)
    p['dec_ln_b'] = nrm((1, d), 0.05)
    p['att_wd_t'] = nrm((n_layers * d, d))
    p['att_we_t'] = nrm((2 * d, d))
    p['att_ln_g'] = 1.0 + nrm((1, d), 0.1)
    p['att_ln_b'] = nrm((1, d), 0.05)
    p['proj_w_t'] = nrm((d, vocab))
    p['proj_b'] = nrm((1, vocab), 0.02)
    return p


# ----------------------------- main -----------------------------
if __name__ == "__main__":
    key = jax.random.PRNGKey(0)
    k_p, k_q, k_a = jax.random.split(key, 3)

    params = init_params(k_p, V_WORDS, D_MODEL, N_LAYERS)
    question = jax.random.randint(k_q, (1, LQ), 0, V_WORDS, dtype=jnp.int32)
    answer = jax.random.randint(k_a, (1, LA), 0, V_WORDS, dtype=jnp.int32)

    out_pallas = jax.block_until_ready(forward_pallas(params, question, answer))
    out_ref = jax.block_until_ready(forward_ref(params, question, answer))

    assert out_pallas.shape == (1, LA - 1, V_WORDS), out_pallas.shape
    max_err = float(jnp.max(jnp.abs(out_pallas - out_ref)))
    assert jnp.allclose(out_pallas, out_ref, atol=3e-3, rtol=3e-3), max_err

    # TODO(synk): generate()/generate2() (tokenizer decode + top-k/top-p multinomial
    # sampling) are host-side inference utilities, not part of forward(); not kernels.
    print("KERNEL_OK")
</pallas_src>

<mosaic_0001>
module attributes {stable_mosaic.version = 11 : i64} {
  func.func @fused_forward_kernel(%arg0: memref<8xi32, #tpu.memory_space<smem>>, %arg1: memref<6xi32, #tpu.memory_space<smem>>, %arg2: memref<128x32xf32, #tpu.memory_space<vmem>>, %arg3: memref<128x32xf32, #tpu.memory_space<vmem>>, %arg4: memref<32x256xf32, #tpu.memory_space<vmem>>, %arg5: memref<32x128xf32, #tpu.memory_space<vmem>>, %arg6: memref<32x128xf32, #tpu.memory_space<vmem>>, %arg7: memref<1x256xf32, #tpu.memory_space<vmem>>, %arg8: memref<64x256xf32, #tpu.memory_space<vmem>>, %arg9: memref<32x128xf32, #tpu.memory_space<vmem>>, %arg10: memref<32x128xf32, #tpu.memory_space<vmem>>, %arg11: memref<1x256xf32, #tpu.memory_space<vmem>>, %arg12: memref<32x128xf32, #tpu.memory_space<vmem>>, %arg13: memref<32x128xf32, #tpu.memory_space<vmem>>, %arg14: memref<1x128xf32, #tpu.memory_space<vmem>>, %arg15: memref<32x128xf32, #tpu.memory_space<vmem>>, %arg16: memref<32x128xf32, #tpu.memory_space<vmem>>, %arg17: memref<1x128xf32, #tpu.memory_space<vmem>>, %arg18: memref<1x32xf32, #tpu.memory_space<vmem>>, %arg19: memref<1x32xf32, #tpu.memory_space<vmem>>, %arg20: memref<64x32xf32, #tpu.memory_space<vmem>>, %arg21: memref<64x32xf32, #tpu.memory_space<vmem>>, %arg22: memref<1x32xf32, #tpu.memory_space<vmem>>, %arg23: memref<1x32xf32, #tpu.memory_space<vmem>>, %arg24: memref<32x128xf32, #tpu.memory_space<vmem>>, %arg25: memref<1x128xf32, #tpu.memory_space<vmem>>, %arg26: memref<5x128xf32, #tpu.memory_space<vmem>>, %arg27: memref<8x128xf32, #tpu.memory_space<vmem>>, %arg28: memref<8x64xf32, #tpu.memory_space<vmem>>, %arg29: memref<8x64xf32, #tpu.memory_space<vmem>>, %arg30: memref<8x32xf32, #tpu.memory_space<vmem>>) attributes {dimension_semantics = [], scalar_prefetch = 0 : i64, scratch_operands = 4 : i64, tpu.core_type = #tpu.core_type<tc>} {
    %0 = tpu.iota {dimensions = array<i32: 1>} : vector<1x128xi32>
    %c0 = arith.constant 0 : index
    %1 = memref.load %arg0[%c0] : memref<8xi32, #tpu.memory_space<smem>>
    %2 = vector.broadcast %1 : i32 to vector<1x128xi32>
    %3 = arith.cmpi eq, %0, %2 : vector<1x128xi32>
    %4 = arith.extui %3 : vector<1x128xi1> to vector<1x128xi32>
    %5 = arith.sitofp %4 : vector<1x128xi32> to vector<1x128xf32>
    %c0_0 = arith.constant 0 : index
    %c0_1 = arith.constant 0 : index
    %6 = vector.load %arg27[%c0_0, %c0_1] : memref<8x128xf32, #tpu.memory_space<vmem>>, vector<1x128xf32>
    tpu.vector_store %arg27[%c0_0, %c0_1], %5 {strides = array<i32>} : memref<8x128xf32, #tpu.memory_space<vmem>>, vector<1x128xf32>,
    %c1 = arith.constant 1 : index
    %7 = memref.load %arg0[%c1] : memref<8xi32, #tpu.memory_space<smem>>
    %8 = vector.broadcast %7 : i32 to vector<1x128xi32>
    %9 = arith.cmpi eq, %0, %8 : vector<1x128xi32>
    %10 = arith.extui %9 : vector<1x128xi1> to vector<1x128xi32>
    %11 = arith.sitofp %10 : vector<1x128xi32> to vector<1x128xf32>
    %c1_2 = arith.constant 1 : index
    %c0_3 = arith.constant 0 : index
    %12 = vector.load %arg27[%c1_2, %c0_3] : memref<8x128xf32, #tpu.memory_space<vmem>>, vector<1x128xf32>
    tpu.vector_store %arg27[%c1_2, %c0_3], %11 {strides = array<i32>} : memref<8x128xf32, #tpu.memory_space<vmem>>, vector<1x128xf32>,
    %c2 = arith.constant 2 : index
    %13 = memref.load %arg0[%c2] : memref<8xi32, #tpu.memory_space<smem>>
    %14 = vector.broadcast %13 : i32 to vector<1x128xi32>
    %15 = arith.cmpi eq, %0, %14 : vector<1x128xi32>
    %16 = arith.extui %15 : vector<1x128xi1> to vector<1x128xi32>
    %17 = arith.sitofp %16 : vector<1x128xi32> to vector<1x128xf32>
    %c2_4 = arith.constant 2 : index
    %c0_5 = arith.constant 0 : index
    %18 = vector.load %arg27[%c2_4, %c0_5] : memref<8x128xf32, #tpu.memory_space<vmem>>, vector<1x128xf32>
    tpu.vector_store %arg27[%c2_4, %c0_5], %17 {strides = array<i32>} : memref<8x128xf32, #tpu.memory_space<vmem>>, vector<1x128xf32>,
    %c3 = arith.constant 3 : index
    %19 = memref.load %arg0[%c3] : memref<8xi32, #tpu.memory_space<smem>>
    %20 = vector.broadcast %19 : i32 to vector<1x128xi32>
    %21 = arith.cmpi eq, %0, %20 : vector<1x128xi32>
    %22 = arith.extui %21 : vector<1x128xi1> to vector<1x128xi32>
    %23 = arith.sitofp %22 : vector<1x128xi32> to vector<1x128xf32>
    %c3_6 = arith.constant 3 : index
    %c0_7 = arith.constant 0 : index
    %24 = vector.load %arg27[%c3_6, %c0_7] : memref<8x128xf32, #tpu.memory_space<vmem>>, vector<1x128xf32>
    tpu.vector_store %arg27[%c3_6, %c0_7], %23 {strides = array<i32>} : memref<8x128xf32, #tpu.memory_space<vmem>>, vector<1x128xf32>,
    %c4 = arith.constant 4 : index
    %25 = memref.load %arg0[%c4] : memref<8xi32, #tpu.memory_space<smem>>
    %26 = vector.broadcast %25 : i32 to vector<1x128xi32>
    %27 = arith.cmpi eq, %0, %26 : vector<1x128xi32>
    %28 = arith.extui %27 : vector<1x128xi1> to vector<1x128xi32>
    %29 = arith.sitofp %28 : vector<1x128xi32> to vector<1x128xf32>
    %c4_8 = arith.constant 4 : index
    %c0_9 = arith.constant 0 : index
    %30 = vector.load %arg27[%c4_8, %c0_9] : memref<8x128xf32, #tpu.memory_space<vmem>>, vector<1x128xf32>
    tpu.vector_store %arg27[%c4_8, %c0_9], %29 {strides = array<i32>} : memref<8x128xf32, #tpu.memory_space<vmem>>, vector<1x128xf32>,
    %c5 = arith.constant 5 : index
    %31 = memref.load %arg0[%c5] : memref<8xi32, #tpu.memory_space<smem>>
    %32 = vector.broadcast %31 : i32 to vector<1x128xi32>
    %33 = arith.cmpi eq, %0, %32 : vector<1x128xi32>
    %34 = arith.extui %33 : vector<1x128xi1> to vector<1x128xi32>
    %35 = arith.sitofp %34 : vector<1x128xi32> to vector<1x128xf32>
    %c5_10 = arith.constant 5 : index
    %c0_11 = arith.constant 0 : index
    %36 = vector.load %arg27[%c5_10, %c0_11] : memref<8x128xf32, #tpu.memory_space<vmem>>, vector<1x128xf32>
    tpu.vector_store %arg27[%c5_10, %c0_11], %35 {strides = array<i32>} : memref<8x128xf32, #tpu.memory_space<vmem>>, vector<1x128xf32>,
    %c6 = arith.constant 6 : index
    %37 = memref.load %arg0[%c6] : memref<8xi32, #tpu.memory_space<smem>>
    %38 = vector.broadcast %37 : i32 to vector<1x128xi32>
    %39 = arith.cmpi eq, %0, %38 : vector<1x128xi32>
    %40 = arith.extui %39 : vector<1x128xi1> to vector<1x128xi32>
    %41 = arith.sitofp %40 : vector<1x128xi32> to vector<1x128xf32>
    %c6_12 = arith.constant 6 : index
    %c0_13 = arith.constant 0 : index
    %42 = vector.load %arg27[%c6_12, %c0_13] : memref<8x128xf32, #tpu.memory_space<vmem>>, vector<1x128xf32>
    tpu.vector_store %arg27[%c6_12, %c0_13], %41 {strides = array<i32>} : memref<8x128xf32, #tpu.memory_space<vmem>>, vector<1x128xf32>,
    %c7 = arith.constant 7 : index
    %43 = memref.load %arg0[%c7] : memref<8xi32, #tpu.memory_space<smem>>
    %44 = vector.broadcast %43 : i32 to vector<1x128xi32>
    %45 = arith.cmpi eq, %0, %44 : vector<1x128xi32>
    %46 = arith.extui %45 : vector<1x128xi1> to vector<1x128xi32>
    %47 = arith.sitofp %46 : vector<1x128xi32> to vector<1x128xf32>
    %c7_14 = arith.constant 7 : index
    %c0_15 = arith.constant 0 : index
    %48 = vector.load %arg27[%c7_14, %c0_15] : memref<8x128xf32, #tpu.memory_space<vmem>>, vector<1x128xf32>
    tpu.vector_store %arg27[%c7_14, %c0_15], %47 {strides = array<i32>} : memref<8x128xf32, #tpu.memory_space<vmem>>, vector<1x128xf32>,
    %c0_16 = arith.constant 0 : index
    %c0_17 = arith.constant 0 : index
    %49 = vector.load %arg27[%c0_16, %c0_17] : memref<8x128xf32, #tpu.memory_space<vmem>>, vector<8x128xf32>
    %c0_18 = arith.constant 0 : index
    %c0_19 = arith.constant 0 : index
    %50 = vector.load %arg2[%c0_18, %c0_19] : memref<128x32xf32, #tpu.memory_space<vmem>>, vector<128x32xf32>
    %cst = arith.constant dense<0.000000e+00> : vector<8x32xf32>
    %51 = tpu.matmul %49, %50, %cst {dimension_numbers = #tpu.dot_dimension_numbers<[1], [0], [0], [1], [0, 0, 1, 1], [], []>} : vector<8x128xf32>, vector<128x32xf32>, vector<8x32xf32> -> vector<8x32xf32>
    %c0_20 = arith.constant 0 : index
    %c0_21 = arith.constant 0 : index
    %52 = vector.load %arg4[%c0_20, %c0_21] : memref<32x256xf32, #tpu.memory_space<vmem>>, vector<32x256xf32>
    %c0_22 = arith.constant 0 : index
    %c0_23 = arith.constant 0 : index
    %53 = vector.load %arg5[%c0_22, %c0_23] : memref<32x128xf32, #tpu.memory_space<vmem>>, vector<32x128xf32>
    %c0_24 = arith.constant 0 : index
    %c0_25 = arith.constant 0 : index
    %54 = vector.load %arg6[%c0_24, %c0_25] : memref<32x128xf32, #tpu.memory_space<vmem>>, vector<32x128xf32>
    %c0_26 = arith.constant 0 : index
    %c0_27 = arith.constant 0 : index
    %55 = vector.load %arg7[%c0_26, %c0_27] : memref<1x256xf32, #tpu.memory_space<vmem>>, vector<1x256xf32>
    %cst_28 = arith.constant dense<0.000000e+00> : vector<8x256xf32>
    %56 = tpu.matmul %51, %52, %cst_28 {dimension_numbers = #tpu.dot_dimension_numbers<[1], [0], [0], [1], [0, 0, 1, 1], [], []>} : vector<8x32xf32>, vector<32x256xf32>, vector<8x256xf32> -> vector<8x256xf32>
    %57 = vector.broadcast %55 : vector<1x256xf32> to vector<8x256xf32>
    %58 = arith.addf %56, %57 : vector<8x256xf32>
    %cst_29 = arith.constant 0.000000e+00 : f32
    %59 = vector.broadcast %cst_29 : f32 to vector<1x32xf32>
    %cst_30 = arith.constant 0.000000e+00 : f32
    %60 = vector.broadcast %cst_30 : f32 to vector<1x32xf32>
    %cst_31 = arith.constant 0.000000e+00 : f32
    %61 = vector.broadcast %cst_31 : f32 to vector<1x32xf32>
    %cst_32 = arith.constant 0.000000e+00 : f32
    %62 = vector.broadcast %cst_32 : f32 to vector<1x32xf32>
    %63 = vector.extract_strided_slice %58 {offsets = [0, 0], sizes = [1, 128], strides = [1, 1]} : vector<8x256xf32> to vector<1x128xf32>
    %cst_33 = arith.constant dense<0.000000e+00> : vector<1x128xf32>
    %64 = tpu.matmul %59, %53, %cst_33 {dimension_numbers = #tpu.dot_dimension_numbers<[1], [0], [0], [1], [0, 0, 1, 1], [], []>} : vector<1x32xf32>, vector<32x128xf32>, vector<1x128xf32> -> vector<1x128xf32>
    %65 = arith.addf %63, %64 : vector<1x128xf32>
    %66 = arith.negf %65 : vector<1x128xf32>
    %67 = math.exp %66 : vector<1x128xf32>
    %cst_34 = arith.constant 1.000000e+00 : f32
    %68 = vector.broadcast %cst_34 : f32 to vector<1x128xf32>
    %69 = arith.addf %68, %67 : vector<1x128xf32>
    %70 = arith.divf %68, %69 : vector<1x128xf32>
    %71 = math.tanh %65 : vector<1x128xf32>
    %72 = vector.extract_strided_slice %70 {offsets = [0, 0], sizes = [1, 32], strides = [1, 1]} : vector<1x128xf32> to vector<1x32xf32>
    %73 = vector.extract_strided_slice %70 {offsets = [0, 32], sizes = [1, 32], strides = [1, 1]} : vector<1x128xf32> to vector<1x32xf32>
    %74 = vector.extract_strided_slice %71 {offsets = [0, 64], sizes = [1, 32], strides = [1, 1]} : vector<1x128xf32> to vector<1x32xf32>
    %75 = vector.extract_strided_slice %70 {offsets = [0, 96], sizes = [1, 32], strides = [1, 1]} : vector<1x128xf32> to vector<1x32xf32>
    %76 = arith.mulf %73, %60 : vector<1x32xf32>
    %77 = arith.mulf %72, %74 : vector<1x32xf32>
    %78 = arith.addf %76, %77 : vector<1x32xf32>
    %79 = math.tanh %78 : vector<1x32xf32>
    %80 = arith.mulf %75, %79 : vector<1x32xf32>
    %81 = vector.extract_strided_slice %58 {offsets = [7, 128], sizes = [1, 128], strides = [1, 1]} : vector<8x256xf32> to vector<1x128xf32>
    %cst_35 = arith.constant dense<0.000000e+00> : vector<1x128xf32>
    %82 = tpu.matmul %61, %54, %cst_35 {dimension_numbers = #tpu.dot_dimension_numbers<[1], [0], [0], [1], [0, 0, 1, 1], [], []>} : vector<1x32xf32>, vector<32x128xf32>, vector<1x128xf32> -> vector<1x128xf32>
    %83 = arith.addf %81, %82 : vector<1x128xf32>
    %84 = arith.negf %83 : vector<1x128xf32>
    %85 = math.exp %84 : vector<1x128xf32>
    %cst_36 = arith.constant 1.000000e+00 : f32
    %86 = vector.broadcast %cst_36 : f32 to vector<1x128xf32>
    %87 = arith.addf %86, %85 : vector<1x128xf32>
    %88 = arith.divf %86, %87 : vector<1x128xf32>
    %89 = math.tanh %83 : vector<1x128xf32>
    %90 = vector.extract_strided_slice %88 {offsets = [0, 0], sizes = [1, 32], strides = [1, 1]} : vector<1x128xf32> to vector<1x32xf32>
    %91 = vector.extract_strided_slice %88 {offsets = [0, 32], sizes = [1, 32], strides = [1, 1]} : vector<1x128xf32> to vector<1x32xf32>
    %92 = vector.extract_strided_slice %89 {offsets = [0, 64], sizes = [1, 32], strides = [1, 1]} : vector<1x128xf32> to vector<1x32xf32>
    %93 = vector.extract_strided_slice %88 {offsets = [0, 96], sizes = [1, 32], strides = [1, 1]} : vector<1x128xf32> to vector<1x32xf32>
    %94 = arith.mulf %91, %62 : vector<1x32xf32>
    %95 = arith.mulf %90, %92 : vector<1x32xf32>
    %96 = arith.addf %94, %95 : vector<1x32xf32>
    %97 = math.tanh %96 : vector<1x32xf32>
    %98 = arith.mulf %93, %97 : vector<1x32xf32>
    %c0_37 = arith.constant 0 : index
    %c0_38 = arith.constant 0 : index
    %99 = vector.load %arg28[%c0_37, %c0_38] : memref<8x64xf32, #tpu.memory_space<vmem>>, vector<1x32xf32>
    tpu.vector_store %arg28[%c0_37, %c0_38], %80 {strides = array<i32>} : memref<8x64xf32, #tpu.memory_space<vmem>>, vector<1x32xf32>,
    %c7_39 = arith.constant 7 : index
    %c32 = arith.constant 32 : index
    %100 = vector.load %arg28[%c7_39, %c32] : memref<8x64xf32, #tpu.memory_space<vmem>>, vector<1x32xf32>
    tpu.vector_store %arg28[%c7_39, %c32], %98 {strides = array<i32>} : memref<8x64xf32, #tpu.memory_space<vmem>>, vector<1x32xf32>,
    %101 = vector.extract_strided_slice %58 {offsets = [1, 0], sizes = [1, 128], strides = [1, 1]} : vector<8x256xf32> to vector<1x128xf32>
    %cst_40 = arith.constant dense<0.000000e+00> : vector<1x128xf32>
    %102 = tpu.matmul %80, %53, %cst_40 {dimension_numbers = #tpu.dot_dimension_numbers<[1], [0], [0], [1], [0, 0, 1, 1], [], []>} : vector<1x32xf32>, vector<32x128xf32>, vector<1x128xf32> -> vector<1x128xf32>
    %103 = arith.addf %101, %102 : vector<1x128xf32>
    %104 = arith.negf %103 : vector<1x128xf32>
    %105 = math.exp %104 : vector<1x128xf32>
    %cst_41 = arith.constant 1.000000e+00 : f32
    %106 = vector.broadcast %cst_41 : f32 to vector<1x128xf32>
    %107 = arith.addf %106, %105 : vector<1x128xf32>
    %108 = arith.divf %106, %107 : vector<1x128xf32>
    %109 = math.tanh %103 : vector<1x128xf32>
    %110 = vector.extract_strided_slice %108 {offsets = [0, 0], sizes = [1, 32], strides = [1, 1]} : vector<1x128xf32> to vector<1x32xf32>
    %111 = vector.extract_strided_slice %108 {offsets = [0, 32], sizes = [1, 32], strides = [1, 1]} : vector<1x128xf32> to vector<1x32xf32>
    %112 = vector.extract_strided_slice %109 {offsets = [0, 64], sizes = [1, 32], strides = [1, 1]} : vector<1x128xf32> to vector<1x32xf32>
    %113 = vector.extract_strided_slice %108 {offsets = [0, 96], sizes = [1, 32], strides = [1, 1]} : vector<1x128xf32> to vector<1x32xf32>
    %114 = arith.mulf %111, %78 : vector<1x32xf32>
    %115 = arith.mulf %110, %112 : vector<1x32xf32>
    %116 = arith.addf %114, %115 : vector<1x32xf32>
    %117 = math.tanh %116 : vector<1x32xf32>
    %118 = arith.mulf %113, %117 : vector<1x32xf32>
    %119 = vector.extract_strided_slice %58 {offsets = [6, 128], sizes = [1, 128], strides = [1, 1]} : vector<8x256xf32> to vector<1x128xf32>
    %cst_42 = arith.constant dense<0.000000e+00> : vector<1x128xf32>
    %120 = tpu.matmul %98, %54, %cst_42 {dimension_numbers = #tpu.dot_dimension_numbers<[1], [0], [0], [1], [0, 0, 1, 1], [], []>} : vector<1x32xf32>, vector<32x128xf32>, vector<1x128xf32> -> vector<1x128xf32>
    %121 = arith.addf %119, %120 : vector<1x128xf32>
    %122 = arith.negf %121 : vector<1x128xf32>
    %123 = math.exp %122 : vector<1x128xf32>
    %cst_43 = arith.constant 1.000000e+00 : f32
    %124 = vector.broadcast %cst_43 : f32 to vector<1x128xf32>
    %125 = arith.addf %124, %123 : vector<1x128xf32>
    %126 = arith.divf %124, %125 : vector<1x128xf32>
    %127 = math.tanh %121 : vector<1x128xf32>
    %128 = vector.extract_strided_slice %126 {offsets = [0, 0], sizes = [1, 32], strides = [1, 1]} : vector<1x128xf32> to vector<1x32xf32>
    %129 = vector.extract_strided_slice %126 {offsets = [0, 32], sizes = [1, 32], strides = [1, 1]} : vector<1x128xf32> to vector<1x32xf32>
    %130 = vector.extract_strided_slice %127 {offsets = [0, 64], sizes = [1, 32], strides = [1, 1]} : vector<1x128xf32> to vector<1x32xf32>
    %131 = vector.extract_strided_slice %126 {offsets = [0, 96], sizes = [1, 32], strides = [1, 1]} : vector<1x128xf32> to vector<1x32xf32>
    %132 = arith.mulf %129, %96 : vector<1x32xf32>
    %133 = arith.mulf %128, %130 : vector<1x32xf32>
    %134 = arith.addf %132, %133 : vector<1x32xf32>
    %135 = math.tanh %134 : vector<1x32xf32>
    %136 = arith.mulf %131, %135 : vector<1x32xf32>
    %c1_44 = arith.constant 1 : index
    %c0_45 = arith.constant 0 : index
    %137 = vector.load %arg28[%c1_44, %c0_45] : memref<8x64xf32, #tpu.memory_space<vmem>>, vector<1x32xf32>
    tpu.vector_store %arg28[%c1_44, %c0_45], %118 {strides = array<i32>} : memref<8x64xf32, #tpu.memory_space<vmem>>, vector<1x32xf32>,
    %c6_46 = arith.constant 6 : index
    %c32_47 = arith.constant 32 : index
    %138 = vector.load %arg28[%c6_46, %c32_47] : memref<8x64xf32, #tpu.memory_space<vmem>>, vector<1x32xf32>
    tpu.vector_store %arg28[%c6_46, %c32_47], %136 {strides = array<i32>} : memref<8x64xf32, #tpu.memory_space<vmem>>, vector<1x32xf32>,
    %139 = vector.extract_strided_slice %58 {offsets = [2, 0], sizes = [1, 128], strides = [1, 1]} : vector<8x256xf32> to vector<1x128xf32>
    %cst_48 = arith.constant dense<0.000000e+00> : vector<1x128xf32>
    %140 = tpu.matmul %118, %53, %cst_48 {dimension_numbers = #tpu.dot_dimension_numbers<[1], [0], [0], [1], [0, 0, 1, 1], [], []>} : vector<1x32xf32>, vector<32x128xf32>, vector<1x128xf32> -> vector<1x128xf32>
    %141 = arith.addf %139, %140 : vector<1x128xf32>
    %142 = arith.negf %141 : vector<1x128xf32>
    %143 = math.exp %142 : vector<1x128xf32>
    %cst_49 = arith.constant 1.000000e+00 : f32
    %144 = vector.broadcast %cst_49 : f32 to vector<1x128xf32>
    %145 = arith.addf %144, %143 : vector<1x128xf32>
    %146 = arith.divf %144, %145 : vector<1x128xf32>
    %147 = math.tanh %141 : vector<1x128xf32>
    %148 = vector.extract_strided_slice %146 {offsets = [0, 0], sizes = [1, 32], strides = [1, 1]} : vector<1x128xf32> to vector<1x32xf32>
    %149 = vector.extract_strided_slice %146 {offsets = [0, 32], sizes = [1, 32], strides = [1, 1]} : vector<1x128xf32> to vector<1x32xf32>
    %150 = vector.extract_strided_slice %147 {offsets = [0, 64], sizes = [1, 32], strides = [1, 1]} : vector<1x128xf32> to vector<1x32xf32>
    %151 = vector.extract_strided_slice %146 {offsets = [0, 96], sizes = [1, 32], strides = [1, 1]} : vector<1x128xf32> to vector<1x32xf32>
    %152 = arith.mulf %149, %116 : vector<1x32xf32>
    %153 = arith.mulf %148, %150 : vector<1x32xf32>
    %154 = arith.addf %152, %153 : vector<1x32xf32>
    %155 = math.tanh %154 : vector<1x32xf32>
    %156 = arith.mulf %151, %155 : vector<1x32xf32>
    %157 = vector.extract_strided_slice %58 {offsets = [5, 128], sizes = [1, 128], strides = [1, 1]} : vector<8x256xf32> to vector<1x128xf32>
    %cst_50 = arith.constant dense<0.000000e+00> : vector<1x128xf32>
    %158 = tpu.matmul %136, %54, %cst_50 {dimension_numbers = #tpu.dot_dimension_numbers<[1], [0], [0], [1], [0, 0, 1, 1], [], []>} : vector<1x32xf32>, vector<32x128xf32>, vector<1x128xf32> -> vector<1x128xf32>
    %159 = arith.addf %157, %158 : vector<1x128xf32>
    %160 = arith.negf %159 : vector<1x128xf32>
    %161 = math.exp %160 : vector<1x128xf32>
    %cst_51 = arith.constant 1.000000e+00 : f32
    %162 = vector.broadcast %cst_51 : f32 to vector<1x128xf32>
    %163 = arith.addf %162, %161 : vector<1x128xf32>
    %164 = arith.divf %162, %163 : vector<1x128xf32>
    %165 = math.tanh %159 : vector<1x128xf32>
    %166 = vector.extract_strided_slice %164 {offsets = [0, 0], sizes = [1, 32], strides = [1, 1]} : vector<1x128xf32> to vector<1x32xf32>
    %167 = vector.extract_strided_slice %164 {offsets = [0, 32], sizes = [1, 32], strides = [1, 1]} : vector<1x128xf32> to vector<1x32xf32>
    %168 = vector.extract_strided_slice %165 {offsets = [0, 64], sizes = [1, 32], strides = [1, 1]} : vector<1x128xf32> to vector<1x32xf32>
    %169 = vector.extract_strided_slice %164 {offsets = [0, 96], sizes = [1, 32], strides = [1, 1]} : vector<1x128xf32> to vector<1x32xf32>
    %170 = arith.mulf %167, %134 : vector<1x32xf32>
    %171 = arith.mulf %166, %168 : vector<1x32xf32>
    %172 = arith.addf %170, %171 : vector<1x32xf32>
    %173 = math.tanh %172 : vector<1x32xf32>
    %174 = arith.mulf %169, %173 : vector<1x32xf32>
    %c2_52 = arith.constant 2 : index
    %c0_53 = arith.constant 0 : index
    %175 = vector.load %arg28[%c2_52, %c0_53] : memref<8x64xf32, #tpu.memory_space<vmem>>, vector<1x32xf32>
    tpu.vector_store %arg28[%c2_52, %c0_53], %156 {strides = array<i32>} : memref<8x64xf32, #tpu.memory_space<vmem>>, vector<1x32xf32>,
    %c5_54 = arith.constant 5 : index
    %c32_55 = arith.constant 32 : index
    %176 = vector.load %arg28[%c5_54, %c32_55] : memref<8x64xf32, #tpu.memory_space<vmem>>, vector<1x32xf32>
    tpu.vector_store %arg28[%c5_54, %c32_55], %174 {strides = array<i32>} : memref<8x64xf32, #tpu.memory_space<vmem>>, vector<1x32xf32>,
    %177 = vector.extract_strided_slice %58 {offsets = [3, 0], sizes = [1, 128], strides = [1, 1]} : vector<8x256xf32> to vector<1x128xf32>
    %cst_56 = arith.constant dense<0.000000e+00> : vector<1x128xf32>
    %178 = tpu.matmul %156, %53, %cst_56 {dimension_numbers = #tpu.dot_dimension_numbers<[1], [0], [0], [1], [0, 0, 1, 1], [], []>} : vector<1x32xf32>, vector<32x128xf32>, vector<1x128xf32> -> vector<1x128xf32>
    %179 = arith.addf %177, %178 : vector<1x128xf32>
    %180 = arith.negf %179 : vector<1x128xf32>
    %181 = math.exp %180 : vector<1x128xf32>
    %cst_57 = arith.constant 1.000000e+00 : f32
    %182 = vector.broadcast %cst_57 : f32 to vector<1x128xf32>
    %183 = arith.addf %182, %181 : vector<1x128xf32>
    %184 = arith.divf %182, %183 : vector<1x128xf32>
    %185 = math.tanh %179 : vector<1x128xf32>
    %186 = vector.extract_strided_slice %184 {offsets = [0, 0], sizes = [1, 32], strides = [1, 1]} : vector<1x128xf32> to vector<1x32xf32>
    %187 = vector.extract_strided_slice %184 {offsets = [0, 32], sizes = [1, 32], strides = [1, 1]} : vector<1x128xf32> to vector<1x32xf32>
    %188 = vector.extract_strided_slice %185 {offsets = [0, 64], sizes = [1, 32], strides = [1, 1]} : vector<1x128xf32> to vector<1x32xf32>
    %189 = vector.extract_strided_slice %184 {offsets = [0, 96], sizes = [1, 32], strides = [1, 1]} : vector<1x128xf32> to vector<1x32xf32>
    %190 = arith.mulf %187, %154 : vector<1x32xf32>
    %191 = arith.mulf %186, %188 : vector<1x32xf32>
    %192 = arith.addf %190, %191 : vector<1x32xf32>
    %193 = math.tanh %192 : vector<1x32xf32>
    %194 = arith.mulf %189, %193 : vector<1x32xf32>
    %195 = vector.extract_strided_slice %58 {offsets = [4, 128], sizes = [1, 128], strides = [1, 1]} : vector<8x256xf32> to vector<1x128xf32>
    %cst_58 = arith.constant dense<0.000000e+00> : vector<1x128xf32>
    %196 = tpu.matmul %174, %54, %cst_58 {dimension_numbers = #tpu.dot_dimension_numbers<[1], [0], [0], [1], [0, 0, 1, 1], [], []>} : vector<1x32xf32>, vector<32x128xf32>, vector<1x128xf32> -> vector<1x128xf32>
    %197 = arith.addf %195, %196 : vector<1x128xf32>
    %198 = arith.negf %197 : vector<1x128xf32>
    %199 = math.exp %198 : vector<1x128xf32>
    %cst_59 = arith.constant 1.000000e+00 : f32
    %200 = vector.broadcast %cst_59 : f32 to vector<1x128xf32>
    %201 = arith.addf %200, %199 : vector<1x128xf32>
    %202 = arith.divf %200, %201 : vector<1x128xf32>
    %203 = math.tanh %197 : vector<1x128xf32>
    %204 = vector.extract_strided_slice %202 {offsets = [0, 0], sizes = [1, 32], strides = [1, 1]} : vector<1x128xf32> to vector<1x32xf32>
    %205 = vector.extract_strided_slice %202 {offsets = [0, 32], sizes = [1, 32], strides = [1, 1]} : vector<1x128xf32> to vector<1x32xf32>
    %206 = vector.extract_strided_slice %203 {offsets = [0, 64], sizes = [1, 32], strides = [1, 1]} : vector<1x128xf32> to vector<1x32xf32>
    %207 = vector.extract_strided_slice %202 {offsets = [0, 96], sizes = [1, 32], strides = [1, 1]} : vector<1x128xf32> to vector<1x32xf32>
    %208 = arith.mulf %205, %172 : vector<1x32xf32>
    %209 = arith.mulf %204, %206 : vector<1x32xf32>
    %210 = arith.addf %208, %209 : vector<1x32xf32>
    %211 = math.tanh %210 : vector<1x32xf32>
    %212 = arith.mulf %207, %211 : vector<1x32xf32>
    %c3_60 = arith.constant 3 : index
    %c0_61 = arith.constant 0 : index
    %213 = vector.load %arg28[%c3_60, %c0_61] : memref<8x64xf32, #tpu.memory_space<vmem>>, vector<1x32xf32>
    tpu.vector_store %arg28[%c3_60, %c0_61], %194 {strides = array<i32>} : memref<8x64xf32, #tpu.memory_space<vmem>>, vector<1x32xf32>,
    %c4_62 = arith.constant 4 : index
    %c32_63 = arith.constant 32 : index
    %214 = vector.load %arg28[%c4_62, %c32_63] : memref<8x64xf32, #tpu.memory_space<vmem>>, vector<1x32xf32>
    tpu.vector_store %arg28[%c4_62, %c32_63], %212 {strides = array<i32>} : memref<8x64xf32, #tpu.memory_space<vmem>>, vector<1x32xf32>,
    %215 = vector.extract_strided_slice %58 {offsets = [4, 0], sizes = [1, 128], strides = [1, 1]} : vector<8x256xf32> to vector<1x128xf32>
    %cst_64 = arith.constant dense<0.000000e+00> : vector<1x128xf32>
    %216 = tpu.matmul %194, %53, %cst_64 {dimension_numbers = #tpu.dot_dimension_numbers<[1], [0], [0], [1], [0, 0, 1, 1], [], []>} : vector<1x32xf32>, vector<32x128xf32>, vector<1x128xf32> -> vector<1x128xf32>
    %217 = arith.addf %215, %216 : vector<1x128xf32>
    %218 = arith.negf %217 : vector<1x128xf32>
    %219 = math.exp %218 : vector<1x128xf32>
    %cst_65 = arith.constant 1.000000e+00 : f32
    %220 = vector.broadcast %cst_65 : f32 to vector<1x128xf32>
    %221 = arith.addf %220, %219 : vector<1x128xf32>
    %222 = arith.divf %220, %221 : vector<1x128xf32>
    %223 = math.tanh %217 : vector<1x128xf32>
    %224 = vector.extract_strided_slice %222 {offsets = [0, 0], sizes = [1, 32], strides = [1, 1]} : vector<1x128xf32> to vector<1x32xf32>
    %225 = vector.extract_strided_slice %222 {offsets = [0, 32], sizes = [1, 32], strides = [1, 1]} : vector<1x128xf32> to vector<1x32xf32>
    %226 = vector.extract_strided_slice %223 {offsets = [0, 64], sizes = [1, 32], strides = [1, 1]} : vector<1x128xf32> to vector<1x32xf32>
    %227 = vector.extract_strided_slice %222 {offsets = [0, 96], sizes = [1, 32], strides = [1, 1]} : vector<1x128xf32> to vector<1x32xf32>
    %228 = arith.mulf %225, %192 : vector<1x32xf32>
    %229 = arith.mulf %224, %226 : vector<1x32xf32>
    %230 = arith.addf %228, %229 : vector<1x32xf32>
    %231 = math.tanh %230 : vector<1x32xf32>
    %232 = arith.mulf %227, %231 : vector<1x32xf32>
    %233 = vector.extract_strided_slice %58 {offsets = [3, 128], sizes = [1, 128], strides = [1, 1]} : vector<8x256xf32> to vector<1x128xf32>
    %cst_66 = arith.constant dense<0.000000e+00> : vector<1x128xf32>
    %234 = tpu.matmul %212, %54, %cst_66 {dimension_numbers = #tpu.dot_dimension_numbers<[1], [0], [0], [1], [0, 0, 1, 1], [], []>} : vector<1x32xf32>, vector<32x128xf32>, vector<1x128xf32> -> vector<1x128xf32>
    %235 = arith.addf %233, %234 : vector<1x128xf32>
    %236 = arith.negf %235 : vector<1x128xf32>
    %237 = math.exp %236 : vector<1x128xf32>
    %cst_67 = arith.constant 1.000000e+00 : f32
    %238 = vector.broadcast %cst_67 : f32 to vector<1x128xf32>
    %239 = arith.addf %238, %237 : vector<1x128xf32>
    %240 = arith.divf %238, %239 : vector<1x128xf32>
    %241 = math.tanh %235 : vector<1x128xf32>
    %242 = vector.extract_strided_slice %240 {offsets = [0, 0], sizes = [1, 32], strides = [1, 1]} : vector<1x128xf32> to vector<1x32xf32>
    %243 = vector.extract_strided_slice %240 {offsets = [0, 32], sizes = [1, 32], strides = [1, 1]} : vector<1x128xf32> to vector<1x32xf32>
    %244 = vector.extract_strided_slice %241 {offsets = [0, 64], sizes = [1, 32], strides = [1, 1]} : vector<1x128xf32> to vector<1x32xf32>
    %245 = vector.extract_strided_slice %240 {offsets = [0, 96], sizes = [1, 32], strides = [1, 1]} : vector<1x128xf32> to vector<1x32xf32>
    %246 = arith.mulf %243, %210 : vector<1x32xf32>
    %247 = arith.mulf %242, %244 : vector<1x32xf32>
    %248 = arith.addf %246, %247 : vector<1x32xf32>
    %249 = math.tanh %248 : vector<1x32xf32>
    %250 = arith.mulf %245, %249 : vector<1x32xf32>
    %c4_68 = arith.constant 4 : index
    %c0_69 = arith.constant 0 : index
    %251 = vector.load %arg28[%c4_68, %c0_69] : memref<8x64xf32, #tpu.memory_space<vmem>>, vector<1x32xf32>
    tpu.vector_store %arg28[%c4_68, %c0_69], %232 {strides = array<i32>} : memref<8x64xf32, #tpu.memory_space<vmem>>, vector<1x32xf32>,
    %c3_70 = arith.constant 3 : index
    %c32_71 = arith.constant 32 : index
    %252 = vector.load %arg28[%c3_70, %c32_71] : memref<8x64xf32, #tpu.memory_space<vmem>>, vector<1x32xf32>
    tpu.vector_store %arg28[%c3_70, %c32_71], %250 {strides = array<i32>} : memref<8x64xf32, #tpu.memory_space<vmem>>, vector<1x32xf32>,
    %253 = vector.extract_strided_slice %58 {offsets = [5, 0], sizes = [1, 128], strides = [1, 1]} : vector<8x256xf32> to vector<1x128xf32>
    %cst_72 = arith.constant dense<0.000000e+00> : vector<1x128xf32>
    %254 = tpu.matmul %232, %53, %cst_72 {dimension_numbers = #tpu.dot_dimension_numbers<[1], [0], [0], [1], [0, 0, 1, 1], [], []>} : vector<1x32xf32>, vector<32x128xf32>, vector<1x128xf32> -> vector<1x128xf32>
    %255 = arith.addf %253, %254 : vector<1x128xf32>
    %256 = arith.negf %255 : vector<1x128xf32>
    %257 = math.exp %256 : vector<1x128xf32>
    %cst_73 = arith.constant 1.000000e+00 : f32
    %258 = vector.broadcast %cst_73 : f32 to vector<1x128xf32>
    %259 = arith.addf %258, %257 : vector<1x128xf32>
    %260 = arith.divf %258, %259 : vector<1x128xf32>
    %261 = math.tanh %255 : vector<1x128xf32>
    %262 = vector.extract_strided_slice %260 {offsets = [0, 0], sizes = [1, 32], strides = [1, 1]} : vector<1x128xf32> to vector<1x32xf32>
    %263 = vector.extract_strided_slice %260 {offsets = [0, 32], sizes = [1, 32], strides = [1, 1]} : vector<1x128xf32> to vector<1x32xf32>
    %264 = vector.extract_strided_slice %261 {offsets = [0, 64], sizes = [1, 32], strides = [1, 1]} : vector<1x128xf32> to vector<1x32xf32>
    %265 = vector.extract_strided_slice %260 {offsets = [0, 96], sizes = [1, 32], strides = [1, 1]} : vector<1x128xf32> to vector<1x32xf32>
    %266 = arith.mulf %263, %230 : vector<1x32xf32>
    %267 = arith.mulf %262, %264 : vector<1x32xf32>
    %268 = arith.addf %266, %267 : vector<1x32xf32>
    %269 = math.tanh %268 : vector<1x32xf32>
    %270 = arith.mulf %265, %269 : vector<1x32xf32>
    %271 = vector.extract_strided_slice %58 {offsets = [2, 128], sizes = [1, 128], strides = [1, 1]} : vector<8x256xf32> to vector<1x128xf32>
    %cst_74 = arith.constant dense<0.000000e+00> : vector<1x128xf32>
    %272 = tpu.matmul %250, %54, %cst_74 {dimension_numbers = #tpu.dot_dimension_numbers<[1], [0], [0], [1], [0, 0, 1, 1], [], []>} : vector<1x32xf32>, vector<32x128xf32>, vector<1x128xf32> -> vector<1x128xf32>
    %273 = arith.addf %271, %272 : vector<1x128xf32>
    %274 = arith.negf %273 : vector<1x128xf32>
    %275 = math.exp %274 : vector<1x128xf32>
    %cst_75 = arith.constant 1.000000e+00 : f32
    %276 = vector.broadcast %cst_75 : f32 to vector<1x128xf32>
    %277 = arith.addf %276, %275 : vector<1x128xf32>
    %278 = arith.divf %276, %277 : vector<1x128xf32>
    %279 = math.tanh %273 : vector<1x128xf32>
    %280 = vector.extract_strided_slice %278 {offsets = [0, 0], sizes = [1, 32], strides = [1, 1]} : vector<1x128xf32> to vector<1x32xf32>
    %281 = vector.extract_strided_slice %278 {offsets = [0, 32], sizes = [1, 32], strides = [1, 1]} : vector<1x128xf32> to vector<1x32xf32>
    %282 = vector.extract_strided_slice %279 {offsets = [0, 64], sizes = [1, 32], strides = [1, 1]} : vector<1x128xf32> to vector<1x32xf32>
    %283 = vector.extract_strided_slice %278 {offsets = [0, 96], sizes = [1, 32], strides = [1, 1]} : vector<1x128xf32> to vector<1x32xf32>
    %284 = arith.mulf %281, %248 : vector<1x32xf32>
    %285 = arith.mulf %280, %282 : vector<1x32xf32>
    %286 = arith.addf %284, %285 : vector<1x32xf32>
    %287 = math.tanh %286 : vector<1x32xf32>
    %288 = arith.mulf %283, %287 : vector<1x32xf32>
    %c5_76 = arith.constant 5 : index
    %c0_77 = arith.constant 0 : index
    %289 = vector.load %arg28[%c5_76, %c0_77] : memref<8x64xf32, #tpu.memory_space<vmem>>, vector<1x32xf32>
    tpu.vector_store %arg28[%c5_76, %c0_77], %270 {strides = array<i32>} : memref<8x64xf32, #tpu.memory_space<vmem>>, vector<1x32xf32>,
    %c2_78 = arith.constant 2 : index
    %c32_79 = arith.constant 32 : index
    %290 = vector.load %arg28[%c2_78, %c32_79] : memref<8x64xf32, #tpu.memory_space<vmem>>, vector<1x32xf32>
    tpu.vector_store %arg28[%c2_78, %c32_79], %288 {strides = array<i32>} : memref<8x64xf32, #tpu.memory_space<vmem>>, vector<1x32xf32>,
    %291 = vector.extract_strided_slice %58 {offsets = [6, 0], sizes = [1, 128], strides = [1, 1]} : vector<8x256xf32> to vector<1x128xf32>
    %cst_80 = arith.constant dense<0.000000e+00> : vector<1x128xf32>
    %292 = tpu.matmul %270, %53, %cst_80 {dimension_numbers = #tpu.dot_dimension_numbers<[1], [0], [0], [1], [0, 0, 1, 1], [], []>} : vector<1x32xf32>, vector<32x128xf32>, vector<1x128xf32> -> vector<1x128xf32>
    %293 = arith.addf %291, %292 : vector<1x128xf32>
    %294 = arith.negf %293 : vector<1x128xf32>
    %295 = math.exp %294 : vector<1x128xf32>
    %cst_81 = arith.constant 1.000000e+00 : f32
    %296 = vector.broadcast %cst_81 : f32 to vector<1x128xf32>
    %297 = arith.addf %296, %295 : vector<1x128xf32>
    %298 = arith.divf %296, %297 : vector<1x128xf32>
    %299 = math.tanh %293 : vector<1x128xf32>
    %300 = vector.extract_strided_slice %298 {offsets = [0, 0], sizes = [1, 32], strides = [1, 1]} : vector<1x128xf32> to vector<1x32xf32>
    %301 = vector.extract_strided_slice %298 {offsets = [0, 32], sizes = [1, 32], strides = [1, 1]} : vector<1x128xf32> to vector<1x32xf32>
    %302 = vector.extract_strided_slice %299 {offsets = [0, 64], sizes = [1, 32], strides = [1, 1]} : vector<1x128xf32> to vector<1x32xf32>
    %303 = vector.extract_strided_slice %298 {offsets = [0, 96], sizes = [1, 32], strides = [1, 1]} : vector<1x128xf32> to vector<1x32xf32>
    %304 = arith.mulf %301, %268 : vector<1x32xf32>
    %305 = arith.mulf %300, %302 : vector<1x32xf32>
    %306 = arith.addf %304, %305 : vector<1x32xf32>
    %307 = math.tanh %306 : vector<1x32xf32>
    %308 = arith.mulf %303, %307 : vector<1x32xf32>
    %309 = vector.extract_strided_slice %58 {offsets = [1, 128], sizes = [1, 128], strides = [1, 1]} : vector<8x256xf32> to vector<1x128xf32>
    %cst_82 = arith.constant dense<0.000000e+00> : vector<1x128xf32>
    %310 = tpu.matmul %288, %54, %cst_82 {dimension_numbers = #tpu.dot_dimension_numbers<[1], [0], [0], [1], [0, 0, 1, 1], [], []>} : vector<1x32xf32>, vector<32x128xf32>, vector<1x128xf32> -> vector<1x128xf32>
    %311 = arith.addf %309, %310 : vector<1x128xf32>
    %312 = arith.negf %311 : vector<1x128xf32>
    %313 = math.exp %312 : vector<1x128xf32>
    %cst_83 = arith.constant 1.000000e+00 : f32
    %314 = vector.broadcast %cst_83 : f32 to vector<1x128xf32>
    %315 = arith.addf %314, %313 : vector<1x128xf32>
    %316 = arith.divf %314, %315 : vector<1x128xf32>
    %317 = math.tanh %311 : vector<1x128xf32>
    %318 = vector.extract_strided_slice %316 {offsets = [0, 0], sizes = [1, 32], strides = [1, 1]} : vector<1x128xf32> to vector<1x32xf32>
    %319 = vector.extract_strided_slice %316 {offsets = [0, 32], sizes = [1, 32], strides = [1, 1]} : vector<1x128xf32> to vector<1x32xf32>
    %320 = vector.extract_strided_slice %317 {offsets = [0, 64], sizes = [1, 32], strides = [1, 1]} : vector<1x128xf32> to vector<1x32xf32>
    %321 = vector.extract_strided_slice %316 {offsets = [0, 96], sizes = [1, 32], strides = [1, 1]} : vector<1x128xf32> to vector<1x32xf32>
    %322 = arith.mulf %319, %286 : vector<1x32xf32>
    %323 = arith.mulf %318, %320 : vector<1x32xf32>
    %324 = arith.addf %322, %323 : vector<1x32xf32>
    %325 = math.tanh %324 : vector<1x32xf32>
    %326 = arith.mulf %321, %325 : vector<1x32xf32>
    %c6_84 = arith.constant 6 : index
    %c0_85 = arith.constant 0 : index
    %327 = vector.load %arg28[%c6_84, %c0_85] : memref<8x64xf32, #tpu.memory_space<vmem>>, vector<1x32xf32>
    tpu.vector_store %arg28[%c6_84, %c0_85], %308 {strides = array<i32>} : memref<8x64xf32, #tpu.memory_space<vmem>>, vector<1x32xf32>,
    %c1_86 = arith.constant 1 : index
    %c32_87 = arith.constant 32 : index
    %328 = vector.load %arg28[%c1_86, %c32_87] : memref<8x64xf32, #tpu.memory_space<vmem>>, vector<1x32xf32>
    tpu.vector_store %arg28[%c1_86, %c32_87], %326 {strides = array<i32>} : memref<8x64xf32, #tpu.memory_space<vmem>>, vector<1x32xf32>,
    %329 = vector.extract_strided_slice %58 {offsets = [7, 0], sizes = [1, 128], strides = [1, 1]} : vector<8x256xf32> to vector<1x128xf32>
    %cst_88 = arith.constant dense<0.000000e+00> : vector<1x128xf32>
    %330 = tpu.matmul %308, %53, %cst_88 {dimension_numbers = #tpu.dot_dimension_numbers<[1], [0], [0], [1], [0, 0, 1, 1], [], []>} : vector<1x32xf32>, vector<32x128xf32>, vector<1x128xf32> -> vector<1x128xf32>
    %331 = arith.addf %329, %330 : vector<1x128xf32>
    %332 = arith.negf %331 : vector<1x128xf32>
    %333 = math.exp %332 : vector<1x128xf32>
    %cst_89 = arith.constant 1.000000e+00 : f32
    %334 = vector.broadcast %cst_89 : f32 to vector<1x128xf32>
    %335 = arith.addf %334, %333 : vector<1x128xf32>
    %336 = arith.divf %334, %335 : vector<1x128xf32>
    %337 = math.tanh %331 : vector<1x128xf32>
    %338 = vector.extract_strided_slice %336 {offsets = [0, 0], sizes = [1, 32], strides = [1, 1]} : vector<1x128xf32> to vector<1x32xf32>
    %339 = vector.extract_strided_slice %336 {offsets = [0, 32], sizes = [1, 32], strides = [1, 1]} : vector<1x128xf32> to vector<1x32xf32>
    %340 = vector.extract_strided_slice %337 {offsets = [0, 64], sizes = [1, 32], strides = [1, 1]} : vector<1x128xf32> to vector<1x32xf32>
    %341 = vector.extract_strided_slice %336 {offsets = [0, 96], sizes = [1, 32], strides = [1, 1]} : vector<1x128xf32> to vector<1x32xf32>
    %342 = arith.mulf %339, %306 : vector<1x32xf32>
    %343 = arith.mulf %338, %340 : vector<1x32xf32>
    %344 = arith.addf %342, %343 : vector<1x32xf32>
    %345 = math.tanh %344 : vector<1x32xf32>
    %346 = arith.mulf %341, %345 : vector<1x32xf32>
    %347 = vector.extract_strided_slice %58 {offsets = [0, 128], sizes = [1, 128], strides = [1, 1]} : vector<8x256xf32> to vector<1x128xf32>
    %cst_90 = arith.constant dense<0.000000e+00> : vector<1x128xf32>
    %348 = tpu.matmul %326, %54, %cst_90 {dimension_numbers = #tpu.dot_dimension_numbers<[1], [0], [0], [1], [0, 0, 1, 1], [], []>} : vector<1x32xf32>, vector<32x128xf32>, vector<1x128xf32> -> vector<1x128xf32>
    %349 = arith.addf %347, %348 : vector<1x128xf32>
    %350 = arith.negf %349 : vector<1x128xf32>
    %351 = math.exp %350 : vector<1x128xf32>
    %cst_91 = arith.constant 1.000000e+00 : f32
    %352 = vector.broadcast %cst_91 : f32 to vector<1x128xf32>
    %353 = arith.addf %352, %351 : vector<1x128xf32>
    %354 = arith.divf %352, %353 : vector<1x128xf32>
    %355 = math.tanh %349 : vector<1x128xf32>
    %356 = vector.extract_strided_slice %354 {offsets = [0, 0], sizes = [1, 32], strides = [1, 1]} : vector<1x128xf32> to vector<1x32xf32>
    %357 = vector.extract_strided_slice %354 {offsets = [0, 32], sizes = [1, 32], strides = [1, 1]} : vector<1x128xf32> to vector<1x32xf32>
    %358 = vector.extract_strided_slice %355 {offsets = [0, 64], sizes = [1, 32], strides = [1, 1]} : vector<1x128xf32> to vector<1x32xf32>
    %359 = vector.extract_strided_slice %354 {offsets = [0, 96], sizes = [1, 32], strides = [1, 1]} : vector<1x128xf32> to vector<1x32xf32>
    %360 = arith.mulf %357, %324 : vector<1x32xf32>
    %361 = arith.mulf %356, %358 : vector<1x32xf32>
    %362 = arith.addf %360, %361 : vector<1x32xf32>
    %363 = math.tanh %362 : vector<1x32xf32>
    %364 = arith.mulf %359, %363 : vector<1x32xf32>
    %c7_92 = arith.constant 7 : index
    %c0_93 = arith.constant 0 : index
    %365 = vector.load %arg28[%c7_92, %c0_93] : memref<8x64xf32, #tpu.memory_space<vmem>>, vector<1x32xf32>
    tpu.vector_store %arg28[%c7_92, %c0_93], %346 {strides = array<i32>} : memref<8x64xf32, #tpu.memory_space<vmem>>, vector<1x32xf32>,
    %c0_94 = arith.constant 0 : index
    %c32_95 = arith.constant 32 : index
    %366 = vector.load %arg28[%c0_94, %c32_95] : memref<8x64xf32, #tpu.memory_space<vmem>>, vector<1x32xf32>
    tpu.vector_store %arg28[%c0_94, %c32_95], %364 {strides = array<i32>} : memref<8x64xf32, #tpu.memory_space<vmem>>, vector<1x32xf32>,
    %c0_96 = arith.constant 0 : index
    %c0_97 = arith.constant 0 : index
    %367 = vector.load %arg28[%c0_96, %c0_97] : memref<8x64xf32, #tpu.memory_space<vmem>>, vector<8x64xf32>
    %c0_98 = arith.constant 0 : index
    %c0_99 = arith.constant 0 : index
    %368 = vector.load %arg8[%c0_98, %c0_99] : memref<64x256xf32, #tpu.memory_space<vmem>>, vector<64x256xf32>
    %c0_100 = arith.constant 0 : index
    %c0_101 = arith.constant 0 : index
    %369 = vector.load %arg9[%c0_100, %c0_101] : memref<32x128xf32, #tpu.memory_space<vmem>>, vector<32x128xf32>
    %c0_102 = arith.constant 0 : index
    %c0_103 = arith.constant 0 : index
    %370 = vector.load %arg10[%c0_102, %c0_103] : memref<32x128xf32, #tpu.memory_space<vmem>>, vector<32x128xf32>
    %c0_104 = arith.constant 0 : index
    %c0_105 = arith.constant 0 : index
    %371 = vector.load %arg11[%c0_104, %c0_105] : memref<1x256xf32, #tpu.memory_space<vmem>>, vector<1x256xf32>
    %cst_106 = arith.constant dense<0.000000e+00> : vector<8x256xf32>
    %372 = tpu.matmul %367, %368, %cst_106 {dimension_numbers = #tpu.dot_dimension_numbers<[1], [0], [0], [1], [0, 0, 1, 1], [], []>} : vector<8x64xf32>, vector<64x256xf32>, vector<8x256xf32> -> vector<8x256xf32>
    %373 = vector.broadcast %371 : vector<1x256xf32> to vector<8x256xf32>
    %374 = arith.addf %372, %373 : vector<8x256xf32>
    %cst_107 = arith.constant 0.000000e+00 : f32
    %375 = vector.broadcast %cst_107 : f32 to vector<1x32xf32>
    %cst_108 = arith.constant 0.000000e+00 : f32
    %376 = vector.broadcast %cst_108 : f32 to vector<1x32xf32>
    %cst_109 = arith.constant 0.000000e+00 : f32
    %377 = vector.broadcast %cst_109 : f32 to vector<1x32xf32>
    %cst_110 = arith.constant 0.000000e+00 : f32
    %378 = vector.broadcast %cst_110 : f32 to vector<1x32xf32>
    %379 = vector.extract_strided_slice %374 {offsets = [0, 0], sizes = [1, 128], strides = [1, 1]} : vector<8x256xf32> to vector<1x128xf32>
    %cst_111 = arith.constant dense<0.000000e+00> : vector<1x128xf32>
    %380 = tpu.matmul %375, %369, %cst_111 {dimension_numbers = #tpu.dot_dimension_numbers<[1], [0], [0], [1], [0, 0, 1, 1], [], []>} : vector<1x32xf32>, vector<32x128xf32>, vector<1x128xf32> -> vector<1x128xf32>
    %381 = arith.addf %379, %380 : vector<1x128xf32>
    %382 = arith.negf %381 : vector<1x128xf32>
    %383 = math.exp %382 : vector<1x128xf32>
    %cst_112 = arith.constant 1.000000e+00 : f32
    %384 = vector.broadcast %cst_112 : f32 to vector<1x128xf32>
    %385 = arith.addf %384, %383 : vector<1x128xf32>
    %386 = arith.divf %384, %385 : vector<1x128xf32>
    %387 = math.tanh %381 : vector<1x128xf32>
    %388 = vector.extract_strided_slice %386 {offsets = [0, 0], sizes = [1, 32], strides = [1, 1]} : vector<1x128xf32> to vector<1x32xf32>
    %389 = vector.extract_strided_slice %386 {offsets = [0, 32], sizes = [1, 32], strides = [1, 1]} : vector<1x128xf32> to vector<1x32xf32>
    %390 = vector.extract_strided_slice %387 {offsets = [0, 64], sizes = [1, 32], strides = [1, 1]} : vector<1x128xf32> to vector<1x32xf32>
    %391 = vector.extract_strided_slice %386 {offsets = [0, 96], sizes = [1, 32], strides = [1, 1]} : vector<1x128xf32> to vector<1x32xf32>
    %392 = arith.mulf %389, %376 : vector<1x32xf32>
    %393 = arith.mulf %388, %390 : vector<1x32xf32>
    %394 = arith.addf %392, %393 : vector<1x32xf32>
    %395 = math.tanh %394 : vector<1x32xf32>
    %396 = arith.mulf %391, %395 : vector<1x32xf32>
    %397 = vector.extract_strided_slice %374 {offsets = [7, 128], sizes = [1, 128], strides = [1, 1]} : vector<8x256xf32> to vector<1x128xf32>
    %cst_113 = arith.constant dense<0.000000e+00> : vector<1x128xf32>
    %398 = tpu.matmul %377, %370, %cst_113 {dimension_numbers = #tpu.dot_dimension_numbers<[1], [0], [0], [1], [0, 0, 1, 1], [], []>} : vector<1x32xf32>, vector<32x128xf32>, vector<1x128xf32> -> vector<1x128xf32>
    %399 = arith.addf %397, %398 : vector<1x128xf32>
    %400 = arith.negf %399 : vector<1x128xf32>
    %401 = math.exp %400 : vector<1x128xf32>
    %cst_114 = arith.constant 1.000000e+00 : f32
    %402 = vector.broadcast %cst_114 : f32 to vector<1x128xf32>
    %403 = arith.addf %402, %401 : vector<1x128xf32>
    %404 = arith.divf %402, %403 : vector<1x128xf32>
    %405 = math.tanh %399 : vector<1x128xf32>
    %406 = vector.extract_strided_slice %404 {offsets = [0, 0], sizes = [1, 32], strides = [1, 1]} : vector<1x128xf32> to vector<1x32xf32>
    %407 = vector.extract_strided_slice %404 {offsets = [0, 32], sizes = [1, 32], strides = [1, 1]} : vector<1x128xf32> to vector<1x32xf32>
    %408 = vector.extract_strided_slice %405 {offsets = [0, 64], sizes = [1, 32], strides = [1, 1]} : vector<1x128xf32> to vector<1x32xf32>
    %409 = vector.extract_strided_slice %404 {offsets = [0, 96], sizes = [1, 32], strides = [1, 1]} : vector<1x128xf32> to vector<1x32xf32>
    %410 = arith.mulf %407, %378 : vector<1x32xf32>
    %411 = arith.mulf %406, %408 : vector<1x32xf32>
    %412 = arith.addf %410, %411 : vector<1x32xf32>
    %413 = math.tanh %412 : vector<1x32xf32>
    %414 = arith.mulf %409, %413 : vector<1x32xf32>
    %c0_115 = arith.constant 0 : index
    %c0_116 = arith.constant 0 : index
    %415 = vector.load %arg29[%c0_115, %c0_116] : memref<8x64xf32, #tpu.memory_space<vmem>>, vector<1x32xf32>
    tpu.vector_store %arg29[%c0_115, %c0_116], %396 {strides = array<i32>} : memref<8x64xf32, #tpu.memory_space<vmem>>, vector<1x32xf32>,
    %c7_117 = arith.constant 7 : index
    %c32_118 = arith.constant 32 : index
    %416 = vector.load %arg29[%c7_117, %c32_118] : memref<8x64xf32, #tpu.memory_space<vmem>>, vector<1x32xf32>
    tpu.vector_store %arg29[%c7_117, %c32_118], %414 {strides = array<i32>} : memref<8x64xf32, #tpu.memory_space<vmem>>, vector<1x32xf32>,
    %417 = vector.extract_strided_slice %374 {offsets = [1, 0], sizes = [1, 128], strides = [1, 1]} : vector<8x256xf32> to vector<1x128xf32>
    %cst_119 = arith.constant dense<0.000000e+00> : vector<1x128xf32>
    %418 = tpu.matmul %396, %369, %cst_119 {dimension_numbers = #tpu.dot_dimension_numbers<[1], [0], [0], [1], [0, 0, 1, 1], [], []>} : vector<1x32xf32>, vector<32x128xf32>, vector<1x128xf32> -> vector<1x128xf32>
    %419 = arith.addf %417, %418 : vector<1x128xf32>
    %420 = arith.negf %419 : vector<1x128xf32>
    %421 = math.exp %420 : vector<1x128xf32>
    %cst_120 = arith.constant 1.000000e+00 : f32
    %422 = vector.broadcast %cst_120 : f32 to vector<1x128xf32>
    %423 = arith.addf %422, %421 : vector<1x128xf32>
    %424 = arith.divf %422, %423 : vector<1x128xf32>
    %425 = math.tanh %419 : vector<1x128xf32>
    %426 = vector.extract_strided_slice %424 {offsets = [0, 0], sizes = [1, 32], strides = [1, 1]} : vector<1x128xf32> to vector<1x32xf32>
    %427 = vector.extract_strided_slice %424 {offsets = [0, 32], sizes = [1, 32], strides = [1, 1]} : vector<1x128xf32> to vector<1x32xf32>
    %428 = vector.extract_strided_slice %425 {offsets = [0, 64], sizes = [1, 32], strides = [1, 1]} : vector<1x128xf32> to vector<1x32xf32>
    %429 = vector.extract_strided_slice %424 {offsets = [0, 96], sizes = [1, 32], strides = [1, 1]} : vector<1x128xf32> to vector<1x32xf32>
    %430 = arith.mulf %427, %394 : vector<1x32xf32>
    %431 = arith.mulf %426, %428 : vector<1x32xf32>
    %432 = arith.addf %430, %431 : vector<1x32xf32>
    %433 = math.tanh %432 : vector<1x32xf32>
    %434 = arith.mulf %429, %433 : vector<1x32xf32>
    %435 = vector.extract_strided_slice %374 {offsets = [6, 128], sizes = [1, 128], strides = [1, 1]} : vector<8x256xf32> to vector<1x128xf32>
    %cst_121 = arith.constant dense<0.000000e+00> : vector<1x128xf32>
    %436 = tpu.matmul %414, %370, %cst_121 {dimension_numbers = #tpu.dot_dimension_numbers<[1], [0], [0], [1], [0, 0, 1, 1], [], []>} : vector<1x32xf32>, vector<32x128xf32>, vector<1x128xf32> -> vector<1x128xf32>
    %437 = arith.addf %435, %436 : vector<1x128xf32>
    %438 = arith.negf %437 : vector<1x128xf32>
    %439 = math.exp %438 : vector<1x128xf32>
    %cst_122 = arith.constant 1.000000e+00 : f32
    %440 = vector.broadcast %cst_122 : f32 to vector<1x128xf32>
    %441 = arith.addf %440, %439 : vector<1x128xf32>
    %442 = arith.divf %440, %441 : vector<1x128xf32>
    %443 = math.tanh %437 : vector<1x128xf32>
    %444 = vector.extract_strided_slice %442 {offsets = [0, 0], sizes = [1, 32], strides = [1, 1]} : vector<1x128xf32> to vector<1x32xf32>
    %445 = vector.extract_strided_slice %442 {offsets = [0, 32], sizes = [1, 32], strides = [1, 1]} : vector<1x128xf32> to vector<1x32xf32>
    %446 = vector.extract_strided_slice %443 {offsets = [0, 64], sizes = [1, 32], strides = [1, 1]} : vector<1x128xf32> to vector<1x32xf32>
    %447 = vector.extract_strided_slice %442 {offsets = [0, 96], sizes = [1, 32], strides = [1, 1]} : vector<1x128xf32> to vector<1x32xf32>
    %448 = arith.mulf %445, %412 : vector<1x32xf32>
    %449 = arith.mulf %444, %446 : vector<1x32xf32>
    %450 = arith.addf %448, %449 : vector<1x32xf32>
    %451 = math.tanh %450 : vector<1x32xf32>
    %452 = arith.mulf %447, %451 : vector<1x32xf32>
    %c1_123 = arith.constant 1 : index
    %c0_124 = arith.constant 0 : index
    %453 = vector.load %arg29[%c1_123, %c0_124] : memref<8x64xf32, #tpu.memory_space<vmem>>, vector<1x32xf32>
    tpu.vector_store %arg29[%c1_123, %c0_124], %434 {strides = array<i32>} : memref<8x64xf32, #tpu.memory_space<vmem>>, vector<1x32xf32>,
    %c6_125 = arith.constant 6 : index
    %c32_126 = arith.constant 32 : index
    %454 = vector.load %arg29[%c6_125, %c32_126] : memref<8x64xf32, #tpu.memory_space<vmem>>, vector<1x32xf32>
    tpu.vector_store %arg29[%c6_125, %c32_126], %452 {strides = array<i32>} : memref<8x64xf32, #tpu.memory_space<vmem>>, vector<1x32xf32>,
    %455 = vector.extract_strided_slice %374 {offsets = [2, 0], sizes = [1, 128], strides = [1, 1]} : vector<8x256xf32> to vector<1x128xf32>
    %cst_127 = arith.constant dense<0.000000e+00> : vector<1x128xf32>
    %456 = tpu.matmul %434, %369, %cst_127 {dimension_numbers = #tpu.dot_dimension_numbers<[1], [0], [0], [1], [0, 0, 1, 1], [], []>} : vector<1x32xf32>, vector<32x128xf32>, vector<1x128xf32> -> vector<1x128xf32>
    %457 = arith.addf %455, %456 : vector<1x128xf32>
    %458 = arith.negf %457 : vector<1x128xf32>
    %459 = math.exp %458 : vector<1x128xf32>
    %cst_128 = arith.constant 1.000000e+00 : f32
    %460 = vector.broadcast %cst_128 : f32 to vector<1x128xf32>
    %461 = arith.addf %460, %459 : vector<1x128xf32>
    %462 = arith.divf %460, %461 : vector<1x128xf32>
    %463 = math.tanh %457 : vector<1x128xf32>
    %464 = vector.extract_strided_slice %462 {offsets = [0, 0], sizes = [1, 32], strides = [1, 1]} : vector<1x128xf32> to vector<1x32xf32>
    %465 = vector.extract_strided_slice %462 {offsets = [0, 32], sizes = [1, 32], strides = [1, 1]} : vector<1x128xf32> to vector<1x32xf32>
    %466 = vector.extract_strided_slice %463 {offsets = [0, 64], sizes = [1, 32], strides = [1, 1]} : vector<1x128xf32> to vector<1x32xf32>
    %467 = vector.extract_strided_slice %462 {offsets = [0, 96], sizes = [1, 32], strides = [1, 1]} : vector<1x128xf32> to vector<1x32xf32>
    %468 = arith.mulf %465, %432 : vector<1x32xf32>
    %469 = arith.mulf %464, %466 : vector<1x32xf32>
    %470 = arith.addf %468, %469 : vector<1x32xf32>
    %471 = math.tanh %470 : vector<1x32xf32>
    %472 = arith.mulf %467, %471 : vector<1x32xf32>
    %473 = vector.extract_strided_slice %374 {offsets = [5, 128], sizes = [1, 128], strides = [1, 1]} : vector<8x256xf32> to vector<1x128xf32>
    %cst_129 = arith.constant dense<0.000000e+00> : vector<1x128xf32>
    %474 = tpu.matmul %452, %370, %cst_129 {dimension_numbers = #tpu.dot_dimension_numbers<[1], [0], [0], [1], [0, 0, 1, 1], [], []>} : vector<1x32xf32>, vector<32x128xf32>, vector<1x128xf32> -> vector<1x128xf32>
    %475 = arith.addf %473, %474 : vector<1x128xf32>
    %476 = arith.negf %475 : vector<1x128xf32>
    %477 = math.exp %476 : vector<1x128xf32>
    %cst_130 = arith.constant 1.000000e+00 : f32
    %478 = vector.broadcast %cst_130 : f32 to vector<1x128xf32>
    %479 = arith.addf %478, %477 : vector<1x128xf32>
    %480 = arith.divf %478, %479 : vector<1x128xf32>
    %481 = math.tanh %475 : vector<1x128xf32>
    %482 = vector.extract_strided_slice %480 {offsets = [0, 0], sizes = [1, 32], strides = [1, 1]} : vector<1x128xf32> to vector<1x32xf32>
    %483 = vector.extract_strided_slice %480 {offsets = [0, 32], sizes = [1, 32], strides = [1, 1]} : vector<1x128xf32> to vector<1x32xf32>
    %484 = vector.extract_strided_slice %481 {offsets = [0, 64], sizes = [1, 32], strides = [1, 1]} : vector<1x128xf32> to vector<1x32xf32>
    %485 = vector.extract_strided_slice %480 {offsets = [0, 96], sizes = [1, 32], strides = [1, 1]} : vector<1x128xf32> to vector<1x32xf32>
    %486 = arith.mulf %483, %450 : vector<1x32xf32>
    %487 = arith.mulf %482, %484 : vector<1x32xf32>
    %488 = arith.addf %486, %487 : vector<1x32xf32>
    %489 = math.tanh %488 : vector<1x32xf32>
    %490 = arith.mulf %485, %489 : vector<1x32xf32>
    %c2_131 = arith.constant 2 : index
    %c0_132 = arith.constant 0 : index
    %491 = vector.load %arg29[%c2_131, %c0_132] : memref<8x64xf32, #tpu.memory_space<vmem>>, vector<1x32xf32>
    tpu.vector_store %arg29[%c2_131, %c0_132], %472 {strides = array<i32>} : memref<8x64xf32, #tpu.memory_space<vmem>>, vector<1x32xf32>,
    %c5_133 = arith.constant 5 : index
    %c32_134 = arith.constant 32 : index
    %492 = vector.load %arg29[%c5_133, %c32_134] : memref<8x64xf32, #tpu.memory_space<vmem>>, vector<1x32xf32>
    tpu.vector_store %arg29[%c5_133, %c32_134], %490 {strides = array<i32>} : memref<8x64xf32, #tpu.memory_space<vmem>>, vector<1x32xf32>,
    %493 = vector.extract_strided_slice %374 {offsets = [3, 0], sizes = [1, 128], strides = [1, 1]} : vector<8x256xf32> to vector<1x128xf32>
    %cst_135 = arith.constant dense<0.000000e+00> : vector<1x128xf32>
    %494 = tpu.matmul %472, %369, %cst_135 {dimension_numbers = #tpu.dot_dimension_numbers<[1], [0], [0], [1], [0, 0, 1, 1], [], []>} : vector<1x32xf32>, vector<32x128xf32>, vector<1x128xf32> -> vector<1x128xf32>
    %495 = arith.addf %493, %494 : vector<1x128xf32>
    %496 = arith.negf %495 : vector<1x128xf32>
    %497 = math.exp %496 : vector<1x128xf32>
    %cst_136 = arith.constant 1.000000e+00 : f32
    %498 = vector.broadcast %cst_136 : f32 to vector<1x128xf32>
    %499 = arith.addf %498, %497 : vector<1x128xf32>
    %500 = arith.divf %498, %499 : vector<1x128xf32>
    %501 = math.tanh %495 : vector<1x128xf32>
    %502 = vector.extract_strided_slice %500 {offsets = [0, 0], sizes = [1, 32], strides = [1, 1]} : vector<1x128xf32> to vector<1x32xf32>
    %503 = vector.extract_strided_slice %500 {offsets = [0, 32], sizes = [1, 32], strides = [1, 1]} : vector<1x128xf32> to vector<1x32xf32>
    %504 = vector.extract_strided_slice %501 {offsets = [0, 64], sizes = [1, 32], strides = [1, 1]} : vector<1x128xf32> to vector<1x32xf32>
    %505 = vector.extract_strided_slice %500 {offsets = [0, 96], sizes = [1, 32], strides = [1, 1]} : vector<1x128xf32> to vector<1x32xf32>
    %506 = arith.mulf %503, %470 : vector<1x32xf32>
    %507 = arith.mulf %502, %504 : vector<1x32xf32>
    %508 = arith.addf %506, %507 : vector<1x32xf32>
    %509 = math.tanh %508 : vector<1x32xf32>
    %510 = arith.mulf %505, %509 : vector<1x32xf32>
    %511 = vector.extract_strided_slice %374 {offsets = [4, 128], sizes = [1, 128], strides = [1, 1]} : vector<8x256xf32> to vector<1x128xf32>
    %cst_137 = arith.constant dense<0.000000e+00> : vector<1x128xf32>
    %512 = tpu.matmul %490, %370, %cst_137 {dimension_numbers = #tpu.dot_dimension_numbers<[1], [0], [0], [1], [0, 0, 1, 1], [], []>} : vector<1x32xf32>, vector<32x128xf32>, vector<1x128xf32> -> vector<1x128xf32>
    %513 = arith.addf %511, %512 : vector<1x128xf32>
    %514 = arith.negf %513 : vector<1x128xf32>
    %515 = math.exp %514 : vector<1x128xf32>
    %cst_138 = arith.constant 1.000000e+00 : f32
    %516 = vector.broadcast %cst_138 : f32 to vector<1x128xf32>
    %517 = arith.addf %516, %515 : vector<1x128xf32>
    %518 = arith.divf %516, %517 : vector<1x128xf32>
    %519 = math.tanh %513 : vector<1x128xf32>
    %520 = vector.extract_strided_slice %518 {offsets = [0, 0], sizes = [1, 32], strides = [1, 1]} : vector<1x128xf32> to vector<1x32xf32>
    %521 = vector.extract_strided_slice %518 {offsets = [0, 32], sizes = [1, 32], strides = [1, 1]} : vector<1x128xf32> to vector<1x32xf32>
    %522 = vector.extract_strided_slice %519 {offsets = [0, 64], sizes = [1, 32], strides = [1, 1]} : vector<1x128xf32> to vector<1x32xf32>
    %523 = vector.extract_strided_slice %518 {offsets = [0, 96], sizes = [1, 32], strides = [1, 1]} : vector<1x128xf32> to vector<1x32xf32>
    %524 = arith.mulf %521, %488 : vector<1x32xf32>
    %525 = arith.mulf %520, %522 : vector<1x32xf32>
    %526 = arith.addf %524, %525 : vector<1x32xf32>
    %527 = math.tanh %526 : vector<1x32xf32>
    %528 = arith.mulf %523, %527 : vector<1x32xf32>
    %c3_139 = arith.constant 3 : index
    %c0_140 = arith.constant 0 : index
    %529 = vector.load %arg29[%c3_139, %c0_140] : memref<8x64xf32, #tpu.memory_space<vmem>>, vector<1x32xf32>
    tpu.vector_store %arg29[%c3_139, %c0_140], %510 {strides = array<i32>} : memref<8x64xf32, #tpu.memory_space<vmem>>, vector<1x32xf32>,
    %c4_141 = arith.constant 4 : index
    %c32_142 = arith.constant 32 : index
    %530 = vector.load %arg29[%c4_141, %c32_142] : memref<8x64xf32, #tpu.memory_space<vmem>>, vector<1x32xf32>
    tpu.vector_store %arg29[%c4_141, %c32_142], %528 {strides = array<i32>} : memref<8x64xf32, #tpu.memory_space<vmem>>, vector<1x32xf32>,
    %531 = vector.extract_strided_slice %374 {offsets = [4, 0], sizes = [1, 128], strides = [1, 1]} : vector<8x256xf32> to vector<1x128xf32>
    %cst_143 = arith.constant dense<0.000000e+00> : vector<1x128xf32>
    %532 = tpu.matmul %510, %369, %cst_143 {dimension_numbers = #tpu.dot_dimension_numbers<[1], [0], [0], [1], [0, 0, 1, 1], [], []>} : vector<1x32xf32>, vector<32x128xf32>, vector<1x128xf32> -> vector<1x128xf32>
    %533 = arith.addf %531, %532 : vector<1x128xf32>
    %534 = arith.negf %533 : vector<1x128xf32>
    %535 = math.exp %534 : vector<1x128xf32>
    %cst_144 = arith.constant 1.000000e+00 : f32
    %536 = vector.broadcast %cst_144 : f32 to vector<1x128xf32>
    %537 = arith.addf %536, %535 : vector<1x128xf32>
    %538 = arith.divf %536, %537 : vector<1x128xf32>
    %539 = math.tanh %533 : vector<1x128xf32>
    %540 = vector.extract_strided_slice %538 {offsets = [0, 0], sizes = [1, 32], strides = [1, 1]} : vector<1x128xf32> to vector<1x32xf32>
    %541 = vector.extract_strided_slice %538 {offsets = [0, 32], sizes = [1, 32], strides = [1, 1]} : vector<1x128xf32> to vector<1x32xf32>
    %542 = vector.extract_strided_slice %539 {offsets = [0, 64], sizes = [1, 32], strides = [1, 1]} : vector<1x128xf32> to vector<1x32xf32>
    %543 = vector.extract_strided_slice %538 {offsets = [0, 96], sizes = [1, 32], strides = [1, 1]} : vector<1x128xf32> to vector<1x32xf32>
    %544 = arith.mulf %541, %508 : vector<1x32xf32>
    %545 = arith.mulf %540, %542 : vector<1x32xf32>
    %546 = arith.addf %544, %545 : vector<1x32xf32>
    %547 = math.tanh %546 : vector<1x32xf32>
    %548 = arith.mulf %543, %547 : vector<1x32xf32>
    %549 = vector.extract_strided_slice %374 {offsets = [3, 128], sizes = [1, 128], strides = [1, 1]} : vector<8x256xf32> to vector<1x128xf32>
    %cst_145 = arith.constant dense<0.000000e+00> : vector<1x128xf32>
    %550 = tpu.matmul %528, %370, %cst_145 {dimension_numbers = #tpu.dot_dimension_numbers<[1], [0], [0], [1], [0, 0, 1, 1], [], []>} : vector<1x32xf32>, vector<32x128xf32>, vector<1x128xf32> -> vector<1x128xf32>
    %551 = arith.addf %549, %550 : vector<1x128xf32>
    %552 = arith.negf %551 : vector<1x128xf32>
    %553 = math.exp %552 : vector<1x128xf32>
    %cst_146 = arith.constant 1.000000e+00 : f32
    %554 = vector.broadcast %cst_146 : f32 to vector<1x128xf32>
    %555 = arith.addf %554, %553 : vector<1x128xf32>
    %556 = arith.divf %554, %555 : vector<1x128xf32>
    %557 = math.tanh %551 : vector<1x128xf32>
    %558 = vector.extract_strided_slice %556 {offsets = [0, 0], sizes = [1, 32], strides = [1, 1]} : vector<1x128xf32> to vector<1x32xf32>
    %559 = vector.extract_strided_slice %556 {offsets = [0, 32], sizes = [1, 32], strides = [1, 1]} : vector<1x128xf32> to vector<1x32xf32>
    %560 = vector.extract_strided_slice %557 {offsets = [0, 64], sizes = [1, 32], strides = [1, 1]} : vector<1x128xf32> to vector<1x32xf32>
    %561 = vector.extract_strided_slice %556 {offsets = [0, 96], sizes = [1, 32], strides = [1, 1]} : vector<1x128xf32> to vector<1x32xf32>
    %562 = arith.mulf %559, %526 : vector<1x32xf32>
    %563 = arith.mulf %558, %560 : vector<1x32xf32>
    %564 = arith.addf %562, %563 : vector<1x32xf32>
    %565 = math.tanh %564 : vector<1x32xf32>
    %566 = arith.mulf %561, %565 : vector<1x32xf32>
    %c4_147 = arith.constant 4 : index
    %c0_148 = arith.constant 0 : index
    %567 = vector.load %arg29[%c4_147, %c0_148] : memref<8x64xf32, #tpu.memory_space<vmem>>, vector<1x32xf32>
    tpu.vector_store %arg29[%c4_147, %c0_148], %548 {strides = array<i32>} : memref<8x64xf32, #tpu.memory_space<vmem>>, vector<1x32xf32>,
    %c3_149 = arith.constant 3 : index
    %c32_150 = arith.constant 32 : index
    %568 = vector.load %arg29[%c3_149, %c32_150] : memref<8x64xf32, #tpu.memory_space<vmem>>, vector<1x32xf32>
    tpu.vector_store %arg29[%c3_149, %c32_150], %566 {strides = array<i32>} : memref<8x64xf32, #tpu.memory_space<vmem>>, vector<1x32xf32>,
    %569 = vector.extract_strided_slice %374 {offsets = [5, 0], sizes = [1, 128], strides = [1, 1]} : vector<8x256xf32> to vector<1x128xf32>
    %cst_151 = arith.constant dense<0.000000e+00> : vector<1x128xf32>
    %570 = tpu.matmul %548, %369, %cst_151 {dimension_numbers = #tpu.dot_dimension_numbers<[1], [0], [0], [1], [0, 0, 1, 1], [], []>} : vector<1x32xf32>, vector<32x128xf32>, vector<1x128xf32> -> vector<1x128xf32>
    %571 = arith.addf %569, %570 : vector<1x128xf32>
    %572 = arith.negf %571 : vector<1x128xf32>
    %573 = math.exp %572 : vector<1x128xf32>
    %cst_152 = arith.constant 1.000000e+00 : f32
    %574 = vector.broadcast %cst_152 : f32 to vector<1x128xf32>
    %575 = arith.addf %574, %573 : vector<1x128xf32>
    %576 = arith.divf %574, %575 : vector<1x128xf32>
    %577 = math.tanh %571 : vector<1x128xf32>
    %578 = vector.extract_strided_slice %576 {offsets = [0, 0], sizes = [1, 32], strides = [1, 1]} : vector<1x128xf32> to vector<1x32xf32>
    %579 = vector.extract_strided_slice %576 {offsets = [0, 32], sizes = [1, 32], strides = [1, 1]} : vector<1x128xf32> to vector<1x32xf32>
    %580 = vector.extract_strided_slice %577 {offsets = [0, 64], sizes = [1, 32], strides = [1, 1]} : vector<1x128xf32> to vector<1x32xf32>
    %581 = vector.extract_strided_slice %576 {offsets = [0, 96], sizes = [1, 32], strides = [1, 1]} : vector<1x128xf32> to vector<1x32xf32>
    %582 = arith.mulf %579, %546 : vector<1x32xf32>
    %583 = arith.mulf %578, %580 : vector<1x32xf32>
    %584 = arith.addf %582, %583 : vector<1x32xf32>
    %585 = math.tanh %584 : vector<1x32xf32>
    %586 = arith.mulf %581, %585 : vector<1x32xf32>
    %587 = vector.extract_strided_slice %374 {offsets = [2, 128], sizes = [1, 128], strides = [1, 1]} : vector<8x256xf32> to vector<1x128xf32>
    %cst_153 = arith.constant dense<0.000000e+00> : vector<1x128xf32>
    %588 = tpu.matmul %566, %370, %cst_153 {dimension_numbers = #tpu.dot_dimension_numbers<[1], [0], [0], [1], [0, 0, 1, 1], [], []>} : vector<1x32xf32>, vector<32x128xf32>, vector<1x128xf32> -> vector<1x128xf32>
    %589 = arith.addf %587, %588 : vector<1x128xf32>
    %590 = arith.negf %589 : vector<1x128xf32>
    %591 = math.exp %590 : vector<1x128xf32>
    %cst_154 = arith.constant 1.000000e+00 : f32
    %592 = vector.broadcast %cst_154 : f32 to vector<1x128xf32>
    %593 = arith.addf %592, %591 : vector<1x128xf32>
    %594 = arith.divf %592, %593 : vector<1x128xf32>
    %595 = math.tanh %589 : vector<1x128xf32>
    %596 = vector.extract_strided_slice %594 {offsets = [0, 0], sizes = [1, 32], strides = [1, 1]} : vector<1x128xf32> to vector<1x32xf32>
    %597 = vector.extract_strided_slice %594 {offsets = [0, 32], sizes = [1, 32], strides = [1, 1]} : vector<1x128xf32> to vector<1x32xf32>
    %598 = vector.extract_strided_slice %595 {offsets = [0, 64], sizes = [1, 32], strides = [1, 1]} : vector<1x128xf32> to vector<1x32xf32>
    %599 = vector.extract_strided_slice %594 {offsets = [0, 96], sizes = [1, 32], strides = [1, 1]} : vector<1x128xf32> to vector<1x32xf32>
    %600 = arith.mulf %597, %564 : vector<1x32xf32>
    %601 = arith.mulf %596, %598 : vector<1x32xf32>
    %602 = arith.addf %600, %601 : vector<1x32xf32>
    %603 = math.tanh %602 : vector<1x32xf32>
    %604 = arith.mulf %599, %603 : vector<1x32xf32>
    %c5_155 = arith.constant 5 : index
    %c0_156 = arith.constant 0 : index
    %605 = vector.load %arg29[%c5_155, %c0_156] : memref<8x64xf32, #tpu.memory_space<vmem>>, vector<1x32xf32>
    tpu.vector_store %arg29[%c5_155, %c0_156], %586 {strides = array<i32>} : memref<8x64xf32, #tpu.memory_space<vmem>>, vector<1x32xf32>,
    %c2_157 = arith.constant 2 : index
    %c32_158 = arith.constant 32 : index
    %606 = vector.load %arg29[%c2_157, %c32_158] : memref<8x64xf32, #tpu.memory_space<vmem>>, vector<1x32xf32>
    tpu.vector_store %arg29[%c2_157, %c32_158], %604 {strides = array<i32>} : memref<8x64xf32, #tpu.memory_space<vmem>>, vector<1x32xf32>,
    %607 = vector.extract_strided_slice %374 {offsets = [6, 0], sizes = [1, 128], strides = [1, 1]} : vector<8x256xf32> to vector<1x128xf32>
    %cst_159 = arith.constant dense<0.000000e+00> : vector<1x128xf32>
    %608 = tpu.matmul %586, %369, %cst_159 {dimension_numbers = #tpu.dot_dimension_numbers<[1], [0], [0], [1], [0, 0, 1, 1], [], []>} : vector<1x32xf32>, vector<32x128xf32>, vector<1x128xf32> -> vector<1x128xf32>
    %609 = arith.addf %607, %608 : vector<1x128xf32>
    %610 = arith.negf %609 : vector<1x128xf32>
    %611 = math.exp %610 : vector<1x128xf32>
    %cst_160 = arith.constant 1.000000e+00 : f32
    %612 = vector.broadcast %cst_160 : f32 to vector<1x128xf32>
    %613 = arith.addf %612, %611 : vector<1x128xf32>
    %614 = arith.divf %612, %613 : vector<1x128xf32>
    %615 = math.tanh %609 : vector<1x128xf32>
    %616 = vector.extract_strided_slice %614 {offsets = [0, 0], sizes = [1, 32], strides = [1, 1]} : vector<1x128xf32> to vector<1x32xf32>
    %617 = vector.extract_strided_slice %614 {offsets = [0, 32], sizes = [1, 32], strides = [1, 1]} : vector<1x128xf32> to vector<1x32xf32>
    %618 = vector.extract_strided_slice %615 {offsets = [0, 64], sizes = [1, 32], strides = [1, 1]} : vector<1x128xf32> to vector<1x32xf32>
    %619 = vector.extract_strided_slice %614 {offsets = [0, 96], sizes = [1, 32], strides = [1, 1]} : vector<1x128xf32> to vector<1x32xf32>
    %620 = arith.mulf %617, %584 : vector<1x32xf32>
    %621 = arith.mulf %616, %618 : vector<1x32xf32>
    %622 = arith.addf %620, %621 : vector<1x32xf32>
    %623 = math.tanh %622 : vector<1x32xf32>
    %624 = arith.mulf %619, %623 : vector<1x32xf32>
    %625 = vector.extract_strided_slice %374 {offsets = [1, 128], sizes = [1, 128], strides = [1, 1]} : vector<8x256xf32> to vector<1x128xf32>
    %cst_161 = arith.constant dense<0.000000e+00> : vector<1x128xf32>
    %626 = tpu.matmul %604, %370, %cst_161 {dimension_numbers = #tpu.dot_dimension_numbers<[1], [0], [0], [1], [0, 0, 1, 1], [], []>} : vector<1x32xf32>, vector<32x128xf32>, vector<1x128xf32> -> vector<1x128xf32>
    %627 = arith.addf %625, %626 : vector<1x128xf32>
    %628 = arith.negf %627 : vector<1x128xf32>
    %629 = math.exp %628 : vector<1x128xf32>
    %cst_162 = arith.constant 1.000000e+00 : f32
    %630 = vector.broadcast %cst_162 : f32 to vector<1x128xf32>
    %631 = arith.addf %630, %629 : vector<1x128xf32>
    %632 = arith.divf %630, %631 : vector<1x128xf32>
    %633 = math.tanh %627 : vector<1x128xf32>
    %634 = vector.extract_strided_slice %632 {offsets = [0, 0], sizes = [1, 32], strides = [1, 1]} : vector<1x128xf32> to vector<1x32xf32>
    %635 = vector.extract_strided_slice %632 {offsets = [0, 32], sizes = [1, 32], strides = [1, 1]} : vector<1x128xf32> to vector<1x32xf32>
    %636 = vector.extract_strided_slice %633 {offsets = [0, 64], sizes = [1, 32], strides = [1, 1]} : vector<1x128xf32> to vector<1x32xf32>
    %637 = vector.extract_strided_slice %632 {offsets = [0, 96], sizes = [1, 32], strides = [1, 1]} : vector<1x128xf32> to vector<1x32xf32>
    %638 = arith.mulf %635, %602 : vector<1x32xf32>
    %639 = arith.mulf %634, %636 : vector<1x32xf32>
    %640 = arith.addf %638, %639 : vector<1x32xf32>
    %641 = math.tanh %640 : vector<1x32xf32>
    %642 = arith.mulf %637, %641 : vector<1x32xf32>
    %c6_163 = arith.constant 6 : index
    %c0_164 = arith.constant 0 : index
    %643 = vector.load %arg29[%c6_163, %c0_164] : memref<8x64xf32, #tpu.memory_space<vmem>>, vector<1x32xf32>
    tpu.vector_store %arg29[%c6_163, %c0_164], %624 {strides = array<i32>} : memref<8x64xf32, #tpu.memory_space<vmem>>, vector<1x32xf32>,
    %c1_165 = arith.constant 1 : index
    %c32_166 = arith.constant 32 : index
    %644 = vector.load %arg29[%c1_165, %c32_166] : memref<8x64xf32, #tpu.memory_space<vmem>>, vector<1x32xf32>
    tpu.vector_store %arg29[%c1_165, %c32_166], %642 {strides = array<i32>} : memref<8x64xf32, #tpu.memory_space<vmem>>, vector<1x32xf32>,
    %645 = vector.extract_strided_slice %374 {offsets = [7, 0], sizes = [1, 128], strides = [1, 1]} : vector<8x256xf32> to vector<1x128xf32>
    %cst_167 = arith.constant dense<0.000000e+00> : vector<1x128xf32>
    %646 = tpu.matmul %624, %369, %cst_167 {dimension_numbers = #tpu.dot_dimension_numbers<[1], [0], [0], [1], [0, 0, 1, 1], [], []>} : vector<1x32xf32>, vector<32x128xf32>, vector<1x128xf32> -> vector<1x128xf32>
    %647 = arith.addf %645, %646 : vector<1x128xf32>
    %648 = arith.negf %647 : vector<1x128xf32>
    %649 = math.exp %648 : vector<1x128xf32>
    %cst_168 = arith.constant 1.000000e+00 : f32
    %650 = vector.broadcast %cst_168 : f32 to vector<1x128xf32>
    %651 = arith.addf %650, %649 : vector<1x128xf32>
    %652 = arith.divf %650, %651 : vector<1x128xf32>
    %653 = math.tanh %647 : vector<1x128xf32>
    %654 = vector.extract_strided_slice %652 {offsets = [0, 0], sizes = [1, 32], strides = [1, 1]} : vector<1x128xf32> to vector<1x32xf32>
    %655 = vector.extract_strided_slice %652 {offsets = [0, 32], sizes = [1, 32], strides = [1, 1]} : vector<1x128xf32> to vector<1x32xf32>
    %656 = vector.extract_strided_slice %653 {offsets = [0, 64], sizes = [1, 32], strides = [1, 1]} : vector<1x128xf32> to vector<1x32xf32>
    %657 = vector.extract_strided_slice %652 {offsets = [0, 96], sizes = [1, 32], strides = [1, 1]} : vector<1x128xf32> to vector<1x32xf32>
    %658 = arith.mulf %655, %622 : vector<1x32xf32>
    %659 = arith.mulf %654, %656 : vector<1x32xf32>
    %660 = arith.addf %658, %659 : vector<1x32xf32>
    %661 = math.tanh %660 : vector<1x32xf32>
    %662 = arith.mulf %657, %661 : vector<1x32xf32>
    %663 = vector.extract_strided_slice %374 {offsets = [0, 128], sizes = [1, 128], strides = [1, 1]} : vector<8x256xf32> to vector<1x128xf32>
    %cst_169 = arith.constant dense<0.000000e+00> : vector<1x128xf32>
    %664 = tpu.matmul %642, %370, %cst_169 {dimension_numbers = #tpu.dot_dimension_numbers<[1], [0], [0], [1], [0, 0, 1, 1], [], []>} : vector<1x32xf32>, vector<32x128xf32>, vector<1x128xf32> -> vector<1x128xf32>
    %665 = arith.addf %663, %664 : vector<1x128xf32>
    %666 = arith.negf %665 : vector<1x128xf32>
    %667 = math.exp %666 : vector<1x128xf32>
    %cst_170 = arith.constant 1.000000e+00 : f32
    %668 = vector.broadcast %cst_170 : f32 to vector<1x128xf32>
    %669 = arith.addf %668, %667 : vector<1x128xf32>
    %670 = arith.divf %668, %669 : vector<1x128xf32>
    %671 = math.tanh %665 : vector<1x128xf32>
    %672 = vector.extract_strided_slice %670 {offsets = [0, 0], sizes = [1, 32], strides = [1, 1]} : vector<1x128xf32> to vector<1x32xf32>
    %673 = vector.extract_strided_slice %670 {offsets = [0, 32], sizes = [1, 32], strides = [1, 1]} : vector<1x128xf32> to vector<1x32xf32>
    %674 = vector.extract_strided_slice %671 {offsets = [0, 64], sizes = [1, 32], strides = [1, 1]} : vector<1x128xf32> to vector<1x32xf32>
    %675 = vector.extract_strided_slice %670 {offsets = [0, 96], sizes = [1, 32], strides = [1, 1]} : vector<1x128xf32> to vector<1x32xf32>
    %676 = arith.mulf %673, %640 : vector<1x32xf32>
    %677 = arith.mulf %672, %674 : vector<1x32xf32>
    %678 = arith.addf %676, %677 : vector<1x32xf32>
    %679 = math.tanh %678 : vector<1x32xf32>
    %680 = arith.mulf %675, %679 : vector<1x32xf32>
    %c7_171 = arith.constant 7 : index
    %c0_172 = arith.constant 0 : index
    %681 = vector.load %arg29[%c7_171, %c0_172] : memref<8x64xf32, #tpu.memory_space<vmem>>, vector<1x32xf32>
    tpu.vector_store %arg29[%c7_171, %c0_172], %662 {strides = array<i32>} : memref<8x64xf32, #tpu.memory_space<vmem>>, vector<1x32xf32>,
    %c0_173 = arith.constant 0 : index
    %c32_174 = arith.constant 32 : index
    %682 = vector.load %arg29[%c0_173, %c32_174] : memref<8x64xf32, #tpu.memory_space<vmem>>, vector<1x32xf32>
    tpu.vector_store %arg29[%c0_173, %c32_174], %680 {strides = array<i32>} : memref<8x64xf32, #tpu.memory_space<vmem>>, vector<1x32xf32>,
    %c0_175 = arith.constant 0 : index
    %c0_176 = arith.constant 0 : index
    %683 = vector.load %arg29[%c0_175, %c0_176] : memref<8x64xf32, #tpu.memory_space<vmem>>, vector<8x64xf32>
    %684 = arith.addf %346, %662 : vector<1x32xf32>
    %685 = arith.addf %344, %660 : vector<1x32xf32>
    %686 = arith.addf %364, %680 : vector<1x32xf32>
    %687 = arith.addf %362, %678 : vector<1x32xf32>
    %c0_177 = arith.constant 0 : index
    %c0_178 = arith.constant 0 : index
    %688 = vector.load %arg22[%c0_177, %c0_178] : memref<1x32xf32, #tpu.memory_space<vmem>>, vector<1x32xf32>
    %c0_179 = arith.constant 0 : index
    %c0_180 = arith.constant 0 : index
    %689 = vector.load %arg23[%c0_179, %c0_180] : memref<1x32xf32, #tpu.memory_space<vmem>>, vector<1x32xf32>
    %c0_181 = arith.constant 0 : index
    %c0_182 = arith.constant 0 : index
    %690 = vector.load %arg21[%c0_181, %c0_182] : memref<64x32xf32, #tpu.memory_space<vmem>>, vector<64x32xf32>
    %cst_183 = arith.constant dense<0.000000e+00> : vector<8x32xf32>
    %691 = tpu.matmul %683, %690, %cst_183 {dimension_numbers = #tpu.dot_dimension_numbers<[1], [0], [0], [1], [0, 0, 1, 1], [], []>} : vector<8x64xf32>, vector<64x32xf32>, vector<8x32xf32> -> vector<8x32xf32>
    %cst_184 = arith.constant dense<0.000000e+00> : vector<8xf32>
    %692 = vector.multi_reduction <add>, %691, %cst_184 [1] : vector<8x32xf32> to vector<8xf32>
    %693 = vector.shape_cast %692 : vector<8xf32> to vector<8x1xf32>
    %cst_185 = arith.constant 3.200000e+01 : f32
    %694 = vector.broadcast %cst_185 : f32 to vector<8x1xf32>
    %695 = arith.divf %693, %694 : vector<8x1xf32>
    %696 = vector.broadcast %695 : vector<8x1xf32> to vector<8x32xf32>
    %697 = arith.subf %691, %696 : vector<8x32xf32>
    %698 = arith.mulf %697, %697 : vector<8x32xf32>
    %cst_186 = arith.constant dense<0.000000e+00> : vector<8xf32>
    %699 = vector.multi_reduction <add>, %698, %cst_186 [1] : vector<8x32xf32> to vector<8xf32>
    %700 = vector.shape_cast %699 : vector<8xf32> to vector<8x1xf32>
    %cst_187 = arith.constant 3.200000e+01 : f32
    %701 = vector.broadcast %cst_187 : f32 to vector<8x1xf32>
    %702 = arith.divf %700, %701 : vector<8x1xf32>
    %703 = vector.broadcast %695 : vector<8x1xf32> to vector<8x32xf32>
    %704 = arith.subf %691, %703 : vector<8x32xf32>
    %cst_188 = arith.constant 9.99999974E-6 : f32
    %705 = vector.broadcast %cst_188 : f32 to vector<8x1xf32>
    %706 = arith.addf %702, %705 : vector<8x1xf32>
    %707 = math.rsqrt %706 : vector<8x1xf32>
    %708 = vector.broadcast %707 : vector<8x1xf32> to vector<8x32xf32>
    %709 = arith.mulf %704, %708 : vector<8x32xf32>
    %710 = vector.broadcast %688 : vector<1x32xf32> to vector<8x32xf32>
    %711 = arith.mulf %709, %710 : vector<8x32xf32>
    %712 = vector.broadcast %689 : vector<1x32xf32> to vector<8x32xf32>
    %713 = arith.addf %711, %712 : vector<8x32xf32>
    %cst_189 = arith.constant 0.176776692 : f32
    %714 = vector.broadcast %cst_189 : f32 to vector<8x32xf32>
    %715 = arith.mulf %713, %714 : vector<8x32xf32>
    %c0_190 = arith.constant 0 : index
    %716 = memref.load %arg1[%c0_190] : memref<6xi32, #tpu.memory_space<smem>>
    %717 = vector.broadcast %716 : i32 to vector<1x128xi32>
    %718 = arith.cmpi eq, %0, %717 : vector<1x128xi32>
    %719 = arith.extui %718 : vector<1x128xi1> to vector<1x128xi32>
    %720 = arith.sitofp %719 : vector<1x128xi32> to vector<1x128xf32>
    %c0_191 = arith.constant 0 : index
    %c0_192 = arith.constant 0 : index
    %721 = vector.load %arg27[%c0_191, %c0_192] : memref<8x128xf32, #tpu.memory_space<vmem>>, vector<1x128xf32>
    tpu.vector_store %arg27[%c0_191, %c0_192], %720 {strides = array<i32>} : memref<8x128xf32, #tpu.memory_space<vmem>>, vector<1x128xf32>,
    %c1_193 = arith.constant 1 : index
    %722 = memref.load %arg1[%c1_193] : memref<6xi32, #tpu.memory_space<smem>>
    %723 = vector.broadcast %722 : i32 to vector<1x128xi32>
    %724 = arith.cmpi eq, %0, %723 : vector<1x128xi32>
    %725 = arith.extui %724 : vector<1x128xi1> to vector<1x128xi32>
    %726 = arith.sitofp %725 : vector<1x128xi32> to vector<1x128xf32>
    %c1_194 = arith.constant 1 : index
    %c0_195 = arith.constant 0 : index
    %727 = vector.load %arg27[%c1_194, %c0_195] : memref<8x128xf32, #tpu.memory_space<vmem>>, vector<1x128xf32>
    tpu.vector_store %arg27[%c1_194, %c0_195], %726 {strides = array<i32>} : memref<8x128xf32, #tpu.memory_space<vmem>>, vector<1x128xf32>,
    %c2_196 = arith.constant 2 : index
    %728 = memref.load %arg1[%c2_196] : memref<6xi32, #tpu.memory_space<smem>>
    %729 = vector.broadcast %728 : i32 to vector<1x128xi32>
    %730 = arith.cmpi eq, %0, %729 : vector<1x128xi32>
    %731 = arith.extui %730 : vector<1x128xi1> to vector<1x128xi32>
    %732 = arith.sitofp %731 : vector<1x128xi32> to vector<1x128xf32>
    %c2_197 = arith.constant 2 : index
    %c0_198 = arith.constant 0 : index
    %733 = vector.load %arg27[%c2_197, %c0_198] : memref<8x128xf32, #tpu.memory_space<vmem>>, vector<1x128xf32>
    tpu.vector_store %arg27[%c2_197, %c0_198], %732 {strides = array<i32>} : memref<8x128xf32, #tpu.memory_space<vmem>>, vector<1x128xf32>,
    %c3_199 = arith.constant 3 : index
    %734 = memref.load %arg1[%c3_199] : memref<6xi32, #tpu.memory_space<smem>>
    %735 = vector.broadcast %734 : i32 to vector<1x128xi32>
    %736 = arith.cmpi eq, %0, %735 : vector<1x128xi32>
    %737 = arith.extui %736 : vector<1x128xi1> to vector<1x128xi32>
    %738 = arith.sitofp %737 : vector<1x128xi32> to vector<1x128xf32>
    %c3_200 = arith.constant 3 : index
    %c0_201 = arith.constant 0 : index
    %739 = vector.load %arg27[%c3_200, %c0_201] : memref<8x128xf32, #tpu.memory_space<vmem>>, vector<1x128xf32>
    tpu.vector_store %arg27[%c3_200, %c0_201], %738 {strides = array<i32>} : memref<8x128xf32, #tpu.memory_space<vmem>>, vector<1x128xf32>,
    %c4_202 = arith.constant 4 : index
    %740 = memref.load %arg1[%c4_202] : memref<6xi32, #tpu.memory_space<smem>>
    %741 = vector.broadcast %740 : i32 to vector<1x128xi32>
    %742 = arith.cmpi eq, %0, %741 : vector<1x128xi32>
    %743 = arith.extui %742 : vector<1x128xi1> to vector<1x128xi32>
    %744 = arith.sitofp %743 : vector<1x128xi32> to vector<1x128xf32>
    %c4_203 = arith.constant 4 : index
    %c0_204 = arith.constant 0 : index
    %745 = vector.load %arg27[%c4_203, %c0_204] : memref<8x128xf32, #tpu.memory_space<vmem>>, vector<1x128xf32>
    tpu.vector_store %arg27[%c4_203, %c0_204], %744 {strides = array<i32>} : memref<8x128xf32, #tpu.memory_space<vmem>>, vector<1x128xf32>,
    %c0_205 = arith.constant 0 : index
    %c0_206 = arith.constant 0 : index
    %746 = vector.load %arg27[%c0_205, %c0_206] : memref<8x128xf32, #tpu.memory_space<vmem>>, vector<5x128xf32>
    %c0_207 = arith.constant 0 : index
    %c0_208 = arith.constant 0 : index
    %747 = vector.load %arg3[%c0_207, %c0_208] : memref<128x32xf32, #tpu.memory_space<vmem>>, vector<128x32xf32>
    %cst_209 = arith.constant dense<0.000000e+00> : vector<5x32xf32>
    %748 = tpu.matmul %746, %747, %cst_209 {dimension_numbers = #tpu.dot_dimension_numbers<[1], [0], [0], [1], [0, 0, 1, 1], [], []>} : vector<5x128xf32>, vector<128x32xf32>, vector<5x32xf32> -> vector<5x32xf32>
    %c0_210 = arith.constant 0 : index
    %c0_211 = arith.constant 0 : index
    %749 = vector.load %arg18[%c0_210, %c0_211] : memref<1x32xf32, #tpu.memory_space<vmem>>, vector<1x32xf32>
    %c0_212 = arith.constant 0 : index
    %c0_213 = arith.constant 0 : index
    %750 = vector.load %arg19[%c0_212, %c0_213] : memref<1x32xf32, #tpu.memory_space<vmem>>, vector<1x32xf32>
    %cst_214 = arith.constant dense<0.000000e+00> : vector<5xf32>
    %751 = vector.multi_reduction <add>, %748, %cst_214 [1] : vector<5x32xf32> to vector<5xf32>
    %752 = vector.shape_cast %751 : vector<5xf32> to vector<5x1xf32>
    %cst_215 = arith.constant 3.200000e+01 : f32
    %753 = vector.broadcast %cst_215 : f32 to vector<5x1xf32>
    %754 = arith.divf %752, %753 : vector<5x1xf32>
    %755 = vector.broadcast %754 : vector<5x1xf32> to vector<5x32xf32>
    %756 = arith.subf %748, %755 : vector<5x32xf32>
    %757 = arith.mulf %756, %756 : vector<5x32xf32>
    %cst_216 = arith.constant dense<0.000000e+00> : vector<5xf32>
    %758 = vector.multi_reduction <add>, %757, %cst_216 [1] : vector<5x32xf32> to vector<5xf32>
    %759 = vector.shape_cast %758 : vector<5xf32> to vector<5x1xf32>
    %cst_217 = arith.constant 3.200000e+01 : f32
    %760 = vector.broadcast %cst_217 : f32 to vector<5x1xf32>
    %761 = arith.divf %759, %760 : vector<5x1xf32>
    %762 = vector.broadcast %754 : vector<5x1xf32> to vector<5x32xf32>
    %763 = arith.subf %748, %762 : vector<5x32xf32>
    %cst_218 = arith.constant 9.99999974E-6 : f32
    %764 = vector.broadcast %cst_218 : f32 to vector<5x1xf32>
    %765 = arith.addf %761, %764 : vector<5x1xf32>
    %766 = math.rsqrt %765 : vector<5x1xf32>
    %767 = vector.broadcast %766 : vector<5x1xf32> to vector<5x32xf32>
    %768 = arith.mulf %763, %767 : vector<5x32xf32>
    %769 = vector.broadcast %749 : vector<1x32xf32> to vector<5x32xf32>
    %770 = arith.mulf %768, %769 : vector<5x32xf32>
    %771 = vector.broadcast %750 : vector<1x32xf32> to vector<5x32xf32>
    %772 = arith.addf %770, %771 : vector<5x32xf32>
    %c0_219 = arith.constant 0 : index
    %c0_220 = arith.constant 0 : index
    %773 = vector.load %arg12[%c0_219, %c0_220] : memref<32x128xf32, #tpu.memory_space<vmem>>, vector<32x128xf32>
    %cst_221 = arith.constant dense<0.000000e+00> : vector<5x128xf32>
    %774 = tpu.matmul %772, %773, %cst_221 {dimension_numbers = #tpu.dot_dimension_numbers<[1], [0], [0], [1], [0, 0, 1, 1], [], []>} : vector<5x32xf32>, vector<32x128xf32>, vector<5x128xf32> -> vector<5x128xf32>
    %c0_222 = arith.constant 0 : index
    %c0_223 = arith.constant 0 : index
    %775 = vector.load %arg14[%c0_222, %c0_223] : memref<1x128xf32, #tpu.memory_space<vmem>>, vector<1x128xf32>
    %776 = vector.broadcast %775 : vector<1x128xf32> to vector<5x128xf32>
    %777 = arith.addf %774, %776 : vector<5x128xf32>
    %c0_224 = arith.constant 0 : index
    %c0_225 = arith.constant 0 : index
    %778 = vector.load %arg13[%c0_224, %c0_225] : memref<32x128xf32, #tpu.memory_space<vmem>>, vector<32x128xf32>
    %c0_226 = arith.constant 0 : index
    %c0_227 = arith.constant 0 : index
    %779 = vector.load %arg15[%c0_226, %c0_227] : memref<32x128xf32, #tpu.memory_space<vmem>>, vector<32x128xf32>
    %c0_228 = arith.constant 0 : index
    %c0_229 = arith.constant 0 : index
    %780 = vector.load %arg16[%c0_228, %c0_229] : memref<32x128xf32, #tpu.memory_space<vmem>>, vector<32x128xf32>
    %c0_230 = arith.constant 0 : index
    %c0_231 = arith.constant 0 : index
    %781 = vector.load %arg17[%c0_230, %c0_231] : memref<1x128xf32, #tpu.memory_space<vmem>>, vector<1x128xf32>
    %c0_232 = arith.constant 0 : index
    %c0_233 = arith.constant 0 : index
    %782 = vector.load %arg20[%c0_232, %c0_233] : memref<64x32xf32, #tpu.memory_space<vmem>>, vector<64x32xf32>
    %783 = vector.extract_strided_slice %782 {offsets = [0, 0], sizes = [32, 32], strides = [1, 1]} : vector<64x32xf32> to vector<32x32xf32>
    %784 = vector.extract_strided_slice %782 {offsets = [32, 0], sizes = [32, 32], strides = [1, 1]} : vector<64x32xf32> to vector<32x32xf32>
    %c0_234 = arith.constant 0 : index
    %c0_235 = arith.constant 0 : index
    %785 = vector.load %arg24[%c0_234, %c0_235] : memref<32x128xf32, #tpu.memory_space<vmem>>, vector<32x128xf32>
    %c0_236 = arith.constant 0 : index
    %c0_237 = arith.constant 0 : index
    %786 = vector.load %arg25[%c0_236, %c0_237] : memref<1x128xf32, #tpu.memory_space<vmem>>, vector<1x128xf32>
    %787 = vector.extract_strided_slice %777 {offsets = [0, 0], sizes = [1, 128], strides = [1, 1]} : vector<5x128xf32> to vector<1x128xf32>
    %cst_238 = arith.constant dense<0.000000e+00> : vector<1x128xf32>
    %788 = tpu.matmul %684, %778, %cst_238 {dimension_numbers = #tpu.dot_dimension_numbers<[1], [0], [0], [1], [0, 0, 1, 1], [], []>} : vector<1x32xf32>, vector<32x128xf32>, vector<1x128xf32> -> vector<1x128xf32>
    %789 = arith.addf %787, %788 : vector<1x128xf32>
    %790 = arith.negf %789 : vector<1x128xf32>
    %791 = math.exp %790 : vector<1x128xf32>
    %cst_239 = arith.constant 1.000000e+00 : f32
    %792 = vector.broadcast %cst_239 : f32 to vector<1x128xf32>
    %793 = arith.addf %792, %791 : vector<1x128xf32>
    %794 = arith.divf %792, %793 : vector<1x128xf32>
    %795 = math.tanh %789 : vector<1x128xf32>
    %796 = vector.extract_strided_slice %794 {offsets = [0, 0], sizes = [1, 32], strides = [1, 1]} : vector<1x128xf32> to vector<1x32xf32>
    %797 = vector.extract_strided_slice %794 {offsets = [0, 32], sizes = [1, 32], strides = [1, 1]} : vector<1x128xf32> to vector<1x32xf32>
    %798 = vector.extract_strided_slice %795 {offsets = [0, 64], sizes = [1, 32], strides = [1, 1]} : vector<1x128xf32> to vector<1x32xf32>
    %799 = vector.extract_strided_slice %794 {offsets = [0, 96], sizes = [1, 32], strides = [1, 1]} : vector<1x128xf32> to vector<1x32xf32>
    %800 = arith.mulf %797, %685 : vector<1x32xf32>
    %801 = arith.mulf %796, %798 : vector<1x32xf32>
    %802 = arith.addf %800, %801 : vector<1x32xf32>
    %803 = math.tanh %802 : vector<1x32xf32>
    %804 = arith.mulf %799, %803 : vector<1x32xf32>
    %c0_240 = arith.constant 0 : index
    %c0_241 = arith.constant 0 : index
    %805 = vector.load %arg30[%c0_240, %c0_241] : memref<8x32xf32, #tpu.memory_space<vmem>>, vector<1x32xf32>
    tpu.vector_store %arg30[%c0_240, %c0_241], %804 {strides = array<i32>} : memref<8x32xf32, #tpu.memory_space<vmem>>, vector<1x32xf32>,
    %c0_242 = arith.constant 0 : index
    %c0_243 = arith.constant 0 : index
    %806 = vector.load %arg30[%c0_242, %c0_243] : memref<8x32xf32, #tpu.memory_space<vmem>>, vector<1x32xf32>
    %cst_244 = arith.constant dense<0.000000e+00> : vector<1x128xf32>
    %807 = tpu.matmul %806, %779, %cst_244 {dimension_numbers = #tpu.dot_dimension_numbers<[1], [0], [0], [1], [0, 0, 1, 1], [], []>} : vector<1x32xf32>, vector<32x128xf32>, vector<1x128xf32> -> vector<1x128xf32>
    %808 = arith.addf %807, %781 : vector<1x128xf32>
    %cst_245 = arith.constant dense<0.000000e+00> : vector<1x128xf32>
    %809 = tpu.matmul %686, %780, %cst_245 {dimension_numbers = #tpu.dot_dimension_numbers<[1], [0], [0], [1], [0, 0, 1, 1], [], []>} : vector<1x32xf32>, vector<32x128xf32>, vector<1x128xf32> -> vector<1x128xf32>
    %810 = arith.addf %808, %809 : vector<1x128xf32>
    %811 = arith.negf %810 : vector<1x128xf32>
    %812 = math.exp %811 : vector<1x128xf32>
    %cst_246 = arith.constant 1.000000e+00 : f32
    %813 = vector.broadcast %cst_246 : f32 to vector<1x128xf32>
    %814 = arith.addf %813, %812 : vector<1x128xf32>
    %815 = arith.divf %813, %814 : vector<1x128xf32>
    %816 = math.tanh %810 : vector<1x128xf32>
    %817 = vector.extract_strided_slice %815 {offsets = [0, 0], sizes = [1, 32], strides = [1, 1]} : vector<1x128xf32> to vector<1x32xf32>
    %818 = vector.extract_strided_slice %815 {offsets = [0, 32], sizes = [1, 32], strides = [1, 1]} : vector<1x128xf32> to vector<1x32xf32>
    %819 = vector.extract_strided_slice %816 {offsets = [0, 64], sizes = [1, 32], strides = [1, 1]} : vector<1x128xf32> to vector<1x32xf32>
    %820 = vector.extract_strided_slice %815 {offsets = [0, 96], sizes = [1, 32], strides = [1, 1]} : vector<1x128xf32> to vector<1x32xf32>
    %821 = arith.mulf %818, %687 : vector<1x32xf32>
    %822 = arith.mulf %817, %819 : vector<1x32xf32>
    %823 = arith.addf %821, %822 : vector<1x32xf32>
    %824 = math.tanh %823 : vector<1x32xf32>
    %825 = arith.mulf %820, %824 : vector<1x32xf32>
    %cst_247 = arith.constant dense<0.000000e+00> : vector<1x32xf32>
    %826 = tpu.matmul %804, %783, %cst_247 {dimension_numbers = #tpu.dot_dimension_numbers<[1], [0], [0], [1], [0, 0, 1, 1], [], []>} : vector<1x32xf32>, vector<32x32xf32>, vector<1x32xf32> -> vector<1x32xf32>
    %cst_248 = arith.constant dense<0.000000e+00> : vector<1x32xf32>
    %827 = tpu.matmul %825, %784, %cst_248 {dimension_numbers = #tpu.dot_dimension_numbers<[1], [0], [0], [1], [0, 0, 1, 1], [], []>} : vector<1x32xf32>, vector<32x32xf32>, vector<1x32xf32> -> vector<1x32xf32>
    %828 = arith.addf %826, %827 : vector<1x32xf32>
    %cst_249 = arith.constant dense<0.000000e+00> : vector<1xf32>
    %829 = vector.multi_reduction <add>, %828, %cst_249 [1] : vector<1x32xf32> to vector<1xf32>
    %830 = vector.shape_cast %829 : vector<1xf32> to vector<1x1xf32>
    %cst_250 = arith.constant 3.200000e+01 : f32
    %831 = vector.broadcast %cst_250 : f32 to vector<1x1xf32>
    %832 = arith.divf %830, %831 : vector<1x1xf32>
    %833 = vector.broadcast %832 : vector<1x1xf32> to vector<1x32xf32>
    %834 = arith.subf %828, %833 : vector<1x32xf32>
    %835 = arith.mulf %834, %834 : vector<1x32xf32>
    %cst_251 = arith.constant dense<0.000000e+00> : vector<1xf32>
    %836 = vector.multi_reduction <add>, %835, %cst_251 [1] : vector<1x32xf32> to vector<1xf32>
    %837 = vector.shape_cast %836 : vector<1xf32> to vector<1x1xf32>
    %cst_252 = arith.constant 3.200000e+01 : f32
    %838 = vector.broadcast %cst_252 : f32 to vector<1x1xf32>
    %839 = arith.divf %837, %838 : vector<1x1xf32>
    %840 = vector.broadcast %832 : vector<1x1xf32> to vector<1x32xf32>
    %841 = arith.subf %828, %840 : vector<1x32xf32>
    %cst_253 = arith.constant 9.99999974E-6 : f32
    %842 = vector.broadcast %cst_253 : f32 to vector<1x1xf32>
    %843 = arith.addf %839, %842 : vector<1x1xf32>
    %844 = math.rsqrt %843 : vector<1x1xf32>
    %845 = vector.broadcast %844 : vector<1x1xf32> to vector<1x32xf32>
    %846 = arith.mulf %841, %845 : vector<1x32xf32>
    %847 = arith.mulf %846, %688 : vector<1x32xf32>
    %848 = arith.addf %847, %689 : vector<1x32xf32>
    %849 = vector.broadcast %848 : vector<1x32xf32> to vector<8x32xf32>
    %850 = arith.mulf %715, %849 : vector<8x32xf32>
    %cst_254 = arith.constant dense<0.000000e+00> : vector<8xf32>
    %851 = vector.multi_reduction <add>, %850, %cst_254 [1] : vector<8x32xf32> to vector<8xf32>
    %852 = vector.shape_cast %851 : vector<8xf32> to vector<8x1xf32>
    %cst_255 = arith.constant dense<0xFF800000> : vector<1xf32>
    %853 = vector.multi_reduction <maximumf>, %852, %cst_255 [0] : vector<8x1xf32> to vector<1xf32>
    %854 = vector.shape_cast %853 : vector<1xf32> to vector<1x1xf32>
    %855 = vector.broadcast %854 : vector<1x1xf32> to vector<8x1xf32>
    %856 = arith.subf %852, %855 : vector<8x1xf32>
    %857 = math.exp %856 : vector<8x1xf32>
    %cst_256 = arith.constant dense<0.000000e+00> : vector<1xf32>
    %858 = vector.multi_reduction <add>, %857, %cst_256 [0] : vector<8x1xf32> to vector<1xf32>
    %859 = vector.shape_cast %858 : vector<1xf32> to vector<1x1xf32>
    %860 = tpu.reciprocal %859 {approx = true} : vector<1x1xf32> -> vector<1x1xf32>
    %861 = vector.broadcast %860 : vector<1x1xf32> to vector<8x1xf32>
    %862 = arith.mulf %857, %861 : vector<8x1xf32>
    %863 = vector.broadcast %862 : vector<8x1xf32> to vector<8x32xf32>
    %864 = arith.mulf %863, %713 : vector<8x32xf32>
    %cst_257 = arith.constant dense<0.000000e+00> : vector<32xf32>
    %865 = vector.multi_reduction <add>, %864, %cst_257 [0] : vector<8x32xf32> to vector<32xf32>
    %866 = vector.shape_cast %865 : vector<32xf32> to vector<1x32xf32>
    %cst_258 = arith.constant dense<0.000000e+00> : vector<1x128xf32>
    %867 = tpu.matmul %866, %785, %cst_258 {dimension_numbers = #tpu.dot_dimension_numbers<[1], [0], [0], [1], [0, 0, 1, 1], [], []>} : vector<1x32xf32>, vector<32x128xf32>, vector<1x128xf32> -> vector<1x128xf32>
    %868 = arith.addf %867, %786 : vector<1x128xf32>
    %c0_259 = arith.constant 0 : index
    %c0_260 = arith.constant 0 : index
    %869 = vector.load %arg26[%c0_259, %c0_260] : memref<5x128xf32, #tpu.memory_space<vmem>>, vector<1x128xf32>
    tpu.vector_store %arg26[%c0_259, %c0_260], %868 {strides = array<i32>} : memref<5x128xf32, #tpu.memory_space<vmem>>, vector<1x128xf32>,
    %870 = vector.extract_strided_slice %777 {offsets = [0, 0], sizes = [1, 128], strides = [1, 1]} : vector<5x128xf32> to vector<1x128xf32>
    %cst_261 = arith.constant dense<0.000000e+00> : vector<1x128xf32>
    %871 = tpu.matmul %804, %778, %cst_261 {dimension_numbers = #tpu.dot_dimension_numbers<[1], [0], [0], [1], [0, 0, 1, 1], [], []>} : vector<1x32xf32>, vector<32x128xf32>, vector<1x128xf32> -> vector<1x128xf32>
    %872 = arith.addf %870, %871 : vector<1x128xf32>
    %873 = arith.negf %872 : vector<1x128xf32>
    %874 = math.exp %873 : vector<1x128xf32>
    %cst_262 = arith.constant 1.000000e+00 : f32
    %875 = vector.broadcast %cst_262 : f32 to vector<1x128xf32>
    %876 = arith.addf %875, %874 : vector<1x128xf32>
    %877 = arith.divf %875, %876 : vector<1x128xf32>
    %878 = math.tanh %872 : vector<1x128xf32>
    %879 = vector.extract_strided_slice %877 {offsets = [0, 0], sizes = [1, 32], strides = [1, 1]} : vector<1x128xf32> to vector<1x32xf32>
    %880 = vector.extract_strided_slice %877 {offsets = [0, 32], sizes = [1, 32], strides = [1, 1]} : vector<1x128xf32> to vector<1x32xf32>
    %881 = vector.extract_strided_slice %878 {offsets = [0, 64], sizes = [1, 32], strides = [1, 1]} : vector<1x128xf32> to vector<1x32xf32>
    %882 = vector.extract_strided_slice %877 {offsets = [0, 96], sizes = [1, 32], strides = [1, 1]} : vector<1x128xf32> to vector<1x32xf32>
    %883 = arith.mulf %880, %802 : vector<1x32xf32>
    %884 = arith.mulf %879, %881 : vector<1x32xf32>
    %885 = arith.addf %883, %884 : vector<1x32xf32>
    %886 = math.tanh %885 : vector<1x32xf32>
    %887 = arith.mulf %882, %886 : vector<1x32xf32>
    %c0_263 = arith.constant 0 : index
    %c0_264 = arith.constant 0 : index
    %888 = vector.load %arg30[%c0_263, %c0_264] : memref<8x32xf32, #tpu.memory_space<vmem>>, vector<1x32xf32>
    tpu.vector_store %arg30[%c0_263, %c0_264], %887 {strides = array<i32>} : memref<8x32xf32, #tpu.memory_space<vmem>>, vector<1x32xf32>,
    %889 = vector.extract_strided_slice %777 {offsets = [1, 0], sizes = [1, 128], strides = [1, 1]} : vector<5x128xf32> to vector<1x128xf32>
    %cst_265 = arith.constant dense<0.000000e+00> : vector<1x128xf32>
    %890 = tpu.matmul %887, %778, %cst_265 {dimension_numbers = #tpu.dot_dimension_numbers<[1], [0], [0], [1], [0, 0, 1, 1], [], []>} : vector<1x32xf32>, vector<32x128xf32>, vector<1x128xf32> -> vector<1x128xf32>
    %891 = arith.addf %889, %890 : vector<1x128xf32>
    %892 = arith.negf %891 : vector<1x128xf32>
    %893 = math.exp %892 : vector<1x128xf32>
    %cst_266 = arith.constant 1.000000e+00 : f32
    %894 = vector.broadcast %cst_266 : f32 to vector<1x128xf32>
    %895 = arith.addf %894, %893 : vector<1x128xf32>
    %896 = arith.divf %894, %895 : vector<1x128xf32>
    %897 = math.tanh %891 : vector<1x128xf32>
    %898 = vector.extract_strided_slice %896 {offsets = [0, 0], sizes = [1, 32], strides = [1, 1]} : vector<1x128xf32> to vector<1x32xf32>
    %899 = vector.extract_strided_slice %896 {offsets = [0, 32], sizes = [1, 32], strides = [1, 1]} : vector<1x128xf32> to vector<1x32xf32>
    %900 = vector.extract_strided_slice %897 {offsets = [0, 64], sizes = [1, 32], strides = [1, 1]} : vector<1x128xf32> to vector<1x32xf32>
    %901 = vector.extract_strided_slice %896 {offsets = [0, 96], sizes = [1, 32], strides = [1, 1]} : vector<1x128xf32> to vector<1x32xf32>
    %902 = arith.mulf %899, %885 : vector<1x32xf32>
    %903 = arith.mulf %898, %900 : vector<1x32xf32>
    %904 = arith.addf %902, %903 : vector<1x32xf32>
    %905 = math.tanh %904 : vector<1x32xf32>
    %906 = arith.mulf %901, %905 : vector<1x32xf32>
    %c1_267 = arith.constant 1 : index
    %c0_268 = arith.constant 0 : index
    %907 = vector.load %arg30[%c1_267, %c0_268] : memref<8x32xf32, #tpu.memory_space<vmem>>, vector<1x32xf32>
    tpu.vector_store %arg30[%c1_267, %c0_268], %906 {strides = array<i32>} : memref<8x32xf32, #tpu.memory_space<vmem>>, vector<1x32xf32>,
    %c0_269 = arith.constant 0 : index
    %c0_270 = arith.constant 0 : index
    %908 = vector.load %arg30[%c0_269, %c0_270] : memref<8x32xf32, #tpu.memory_space<vmem>>, vector<2x32xf32>
    %cst_271 = arith.constant dense<0.000000e+00> : vector<2x128xf32>
    %909 = tpu.matmul %908, %779, %cst_271 {dimension_numbers = #tpu.dot_dimension_numbers<[1], [0], [0], [1], [0, 0, 1, 1], [], []>} : vector<2x32xf32>, vector<32x128xf32>, vector<2x128xf32> -> vector<2x128xf32>
    %910 = vector.broadcast %781 : vector<1x128xf32> to vector<2x128xf32>
    %911 = arith.addf %909, %910 : vector<2x128xf32>
    %912 = vector.extract_strided_slice %911 {offsets = [0, 0], sizes = [1, 128], strides = [1, 1]} : vector<2x128xf32> to vector<1x128xf32>
    %cst_272 = arith.constant dense<0.000000e+00> : vector<1x128xf32>
    %913 = tpu.matmul %825, %780, %cst_272 {dimension_numbers = #tpu.dot_dimension_numbers<[1], [0], [0], [1], [0, 0, 1, 1], [], []>} : vector<1x32xf32>, vector<32x128xf32>, vector<1x128xf32> -> vector<1x128xf32>
    %914 = arith.addf %912, %913 : vector<1x128xf32>
    %915 = arith.negf %914 : vector<1x128xf32>
    %916 = math.exp %915 : vector<1x128xf32>
    %cst_273 = arith.constant 1.000000e+00 : f32
    %917 = vector.broadcast %cst_273 : f32 to vector<1x128xf32>
    %918 = arith.addf %917, %916 : vector<1x128xf32>
    %919 = arith.divf %917, %918 : vector<1x128xf32>
    %920 = math.tanh %914 : vector<1x128xf32>
    %921 = vector.extract_strided_slice %919 {offsets = [0, 0], sizes = [1, 32], strides = [1, 1]} : vector<1x128xf32> to vector<1x32xf32>
    %922 = vector.extract_strided_slice %919 {offsets = [0, 32], sizes = [1, 32], strides = [1, 1]} : vector<1x128xf32> to vector<1x32xf32>
    %923 = vector.extract_strided_slice %920 {offsets = [0, 64], sizes = [1, 32], strides = [1, 1]} : vector<1x128xf32> to vector<1x32xf32>
    %924 = vector.extract_strided_slice %919 {offsets = [0, 96], sizes = [1, 32], strides = [1, 1]} : vector<1x128xf32> to vector<1x32xf32>
    %925 = arith.mulf %922, %823 : vector<1x32xf32>
    %926 = arith.mulf %921, %923 : vector<1x32xf32>
    %927 = arith.addf %925, %926 : vector<1x32xf32>
    %928 = math.tanh %927 : vector<1x32xf32>
    %929 = arith.mulf %924, %928 : vector<1x32xf32>
    %930 = vector.extract_strided_slice %911 {offsets = [1, 0], sizes = [1, 128], strides = [1, 1]} : vector<2x128xf32> to vector<1x128xf32>
    %cst_274 = arith.constant dense<0.000000e+00> : vector<1x128xf32>
    %931 = tpu.matmul %929, %780, %cst_274 {dimension_numbers = #tpu.dot_dimension_numbers<[1], [0], [0], [1], [0, 0, 1, 1], [], []>} : vector<1x32xf32>, vector<32x128xf32>, vector<1x128xf32> -> vector<1x128xf32>
    %932 = arith.addf %930, %931 : vector<1x128xf32>
    %933 = arith.negf %932 : vector<1x128xf32>
    %934 = math.exp %933 : vector<1x128xf32>
    %cst_275 = arith.constant 1.000000e+00 : f32
    %935 = vector.broadcast %cst_275 : f32 to vector<1x128xf32>
    %936 = arith.addf %935, %934 : vector<1x128xf32>
    %937 = arith.divf %935, %936 : vector<1x128xf32>
    %938 = math.tanh %932 : vector<1x128xf32>
    %939 = vector.extract_strided_slice %937 {offsets = [0, 0], sizes = [1, 32], strides = [1, 1]} : vector<1x128xf32> to vector<1x32xf32>
    %940 = vector.extract_strided_slice %937 {offsets = [0, 32], sizes = [1, 32], strides = [1, 1]} : vector<1x128xf32> to vector<1x32xf32>
    %941 = vector.extract_strided_slice %938 {offsets = [0, 64], sizes = [1, 32], strides = [1, 1]} : vector<1x128xf32> to vector<1x32xf32>
    %942 = vector.extract_strided_slice %937 {offsets = [0, 96], sizes = [1, 32], strides = [1, 1]} : vector<1x128xf32> to vector<1x32xf32>
    %943 = arith.mulf %940, %927 : vector<1x32xf32>
    %944 = arith.mulf %939, %941 : vector<1x32xf32>
    %945 = arith.addf %943, %944 : vector<1x32xf32>
    %946 = math.tanh %945 : vector<1x32xf32>
    %947 = arith.mulf %942, %946 : vector<1x32xf32>
    %cst_276 = arith.constant dense<0.000000e+00> : vector<1x32xf32>
    %948 = tpu.matmul %906, %783, %cst_276 {dimension_numbers = #tpu.dot_dimension_numbers<[1], [0], [0], [1], [0, 0, 1, 1], [], []>} : vector<1x32xf32>, vector<32x32xf32>, vector<1x32xf32> -> vector<1x32xf32>
    %cst_277 = arith.constant dense<0.000000e+00> : vector<1x32xf32>
    %949 = tpu.matmul %947, %784, %cst_277 {dimension_numbers = #tpu.dot_dimension_numbers<[1], [0], [0], [1], [0, 0, 1, 1], [], []>} : vector<1x32xf32>, vector<32x32xf32>, vector<1x32xf32> -> vector<1x32xf32>
    %950 = arith.addf %948, %949 : vector<1x32xf32>
    %cst_278 = arith.constant dense<0.000000e+00> : vector<1xf32>
    %951 = vector.multi_reduction <add>, %950, %cst_278 [1] : vector<1x32xf32> to vector<1xf32>
    %952 = vector.shape_cast %951 : vector<1xf32> to vector<1x1xf32>
    %cst_279 = arith.constant 3.200000e+01 : f32
    %953 = vector.broadcast %cst_279 : f32 to vector<1x1xf32>
    %954 = arith.divf %952, %953 : vector<1x1xf32>
    %955 = vector.broadcast %954 : vector<1x1xf32> to vector<1x32xf32>
    %956 = arith.subf %950, %955 : vector<1x32xf32>
    %957 = arith.mulf %956, %956 : vector<1x32xf32>
    %cst_280 = arith.constant dense<0.000000e+00> : vector<1xf32>
    %958 = vector.multi_reduction <add>, %957, %cst_280 [1] : vector<1x32xf32> to vector<1xf32>
    %959 = vector.shape_cast %958 : vector<1xf32> to vector<1x1xf32>
    %cst_281 = arith.constant 3.200000e+01 : f32
    %960 = vector.broadcast %cst_281 : f32 to vector<1x1xf32>
    %961 = arith.divf %959, %960 : vector<1x1xf32>
    %962 = vector.broadcast %954 : vector<1x1xf32> to vector<1x32xf32>
    %963 = arith.subf %950, %962 : vector<1x32xf32>
    %cst_282 = arith.constant 9.99999974E-6 : f32
    %964 = vector.broadcast %cst_282 : f32 to vector<1x1xf32>
    %965 = arith.addf %961, %964 : vector<1x1xf32>
    %966 = math.rsqrt %965 : vector<1x1xf32>
    %967 = vector.broadcast %966 : vector<1x1xf32> to vector<1x32xf32>
    %968 = arith.mulf %963, %967 : vector<1x32xf32>
    %969 = arith.mulf %968, %688 : vector<1x32xf32>
    %970 = arith.addf %969, %689 : vector<1x32xf32>
    %971 = vector.broadcast %970 : vector<1x32xf32> to vector<8x32xf32>
    %972 = arith.mulf %715, %971 : vector<8x32xf32>
    %cst_283 = arith.constant dense<0.000000e+00> : vector<8xf32>
    %973 = vector.multi_reduction <add>, %972, %cst_283 [1] : vector<8x32xf32> to vector<8xf32>
    %974 = vector.shape_cast %973 : vector<8xf32> to vector<8x1xf32>
    %cst_284 = arith.constant dense<0xFF800000> : vector<1xf32>
    %975 = vector.multi_reduction <maximumf>, %974, %cst_284 [0] : vector<8x1xf32> to vector<1xf32>
    %976 = vector.shape_cast %975 : vector<1xf32> to vector<1x1xf32>
    %977 = vector.broadcast %976 : vector<1x1xf32> to vector<8x1xf32>
    %978 = arith.subf %974, %977 : vector<8x1xf32>
    %979 = math.exp %978 : vector<8x1xf32>
    %cst_285 = arith.constant dense<0.000000e+00> : vector<1xf32>
    %980 = vector.multi_reduction <add>, %979, %cst_285 [0] : vector<8x1xf32> to vector<1xf32>
    %981 = vector.shape_cast %980 : vector<1xf32> to vector<1x1xf32>
    %982 = tpu.reciprocal %981 {approx = true} : vector<1x1xf32> -> vector<1x1xf32>
    %983 = vector.broadcast %982 : vector<1x1xf32> to vector<8x1xf32>
    %984 = arith.mulf %979, %983 : vector<8x1xf32>
    %985 = vector.broadcast %984 : vector<8x1xf32> to vector<8x32xf32>
    %986 = arith.mulf %985, %713 : vector<8x32xf32>
    %cst_286 = arith.constant dense<0.000000e+00> : vector<32xf32>
    %987 = vector.multi_reduction <add>, %986, %cst_286 [0] : vector<8x32xf32> to vector<32xf32>
    %988 = vector.shape_cast %987 : vector<32xf32> to vector<1x32xf32>
    %cst_287 = arith.constant dense<0.000000e+00> : vector<1x128xf32>
    %989 = tpu.matmul %988, %785, %cst_287 {dimension_numbers = #tpu.dot_dimension_numbers<[1], [0], [0], [1], [0, 0, 1, 1], [], []>} : vector<1x32xf32>, vector<32x128xf32>, vector<1x128xf32> -> vector<1x128xf32>
    %990 = arith.addf %989, %786 : vector<1x128xf32>
    %c1_288 = arith.constant 1 : index
    %c0_289 = arith.constant 0 : index
    %991 = vector.load %arg26[%c1_288, %c0_289] : memref<5x128xf32, #tpu.memory_space<vmem>>, vector<1x128xf32>
    tpu.vector_store %arg26[%c1_288, %c0_289], %990 {strides = array<i32>} : memref<5x128xf32, #tpu.memory_space<vmem>>, vector<1x128xf32>,
    %992 = vector.extract_strided_slice %777 {offsets = [0, 0], sizes = [1, 128], strides = [1, 1]} : vector<5x128xf32> to vector<1x128xf32>
    %cst_290 = arith.constant dense<0.000000e+00> : vector<1x128xf32>
    %993 = tpu.matmul %906, %778, %cst_290 {dimension_numbers = #tpu.dot_dimension_numbers<[1], [0], [0], [1], [0, 0, 1, 1], [], []>} : vector<1x32xf32>, vector<32x128xf32>, vector<1x128xf32> -> vector<1x128xf32>
    %994 = arith.addf %992, %993 : vector<1x128xf32>
    %995 = arith.negf %994 : vector<1x128xf32>
    %996 = math.exp %995 : vector<1x128xf32>
    %cst_291 = arith.constant 1.000000e+00 : f32
    %997 = vector.broadcast %cst_291 : f32 to vector<1x128xf32>
    %998 = arith.addf %997, %996 : vector<1x128xf32>
    %999 = arith.divf %997, %998 : vector<1x128xf32>
    %1000 = math.tanh %994 : vector<1x128xf32>
    %1001 = vector.extract_strided_slice %999 {offsets = [0, 0], sizes = [1, 32], strides = [1, 1]} : vector<1x128xf32> to vector<1x32xf32>
    %1002 = vector.extract_strided_slice %999 {offsets = [0, 32], sizes = [1, 32], strides = [1, 1]} : vector<1x128xf32> to vector<1x32xf32>
    %1003 = vector.extract_strided_slice %1000 {offsets = [0, 64], sizes = [1, 32], strides = [1, 1]} : vector<1x128xf32> to vector<1x32xf32>
    %1004 = vector.extract_strided_slice %999 {offsets = [0, 96], sizes = [1, 32], strides = [1, 1]} : vector<1x128xf32> to vector<1x32xf32>
    %1005 = arith.mulf %1002, %904 : vector<1x32xf32>
    %1006 = arith.mulf %1001, %1003 : vector<1x32xf32>
    %1007 = arith.addf %1005, %1006 : vector<1x32xf32>
    %1008 = math.tanh %1007 : vector<1x32xf32>
    %1009 = arith.mulf %1004, %1008 : vector<1x32xf32>
    %c0_292 = arith.constant 0 : index
    %c0_293 = arith.constant 0 : index
    %1010 = vector.load %arg30[%c0_292, %c0_293] : memref<8x32xf32, #tpu.memory_space<vmem>>, vector<1x32xf32>
    tpu.vector_store %arg30[%c0_292, %c0_293], %1009 {strides = array<i32>} : memref<8x32xf32, #tpu.memory_space<vmem>>, vector<1x32xf32>,
    %1011 = vector.extract_strided_slice %777 {offsets = [1, 0], sizes = [1, 128], strides = [1, 1]} : vector<5x128xf32> to vector<1x128xf32>
    %cst_294 = arith.constant dense<0.000000e+00> : vector<1x128xf32>
    %1012 = tpu.matmul %1009, %778, %cst_294 {dimension_numbers = #tpu.dot_dimension_numbers<[1], [0], [0], [1], [0, 0, 1, 1], [], []>} : vector<1x32xf32>, vector<32x128xf32>, vector<1x128xf32> -> vector<1x128xf32>
    %1013 = arith.addf %1011, %1012 : vector<1x128xf32>
    %1014 = arith.negf %1013 : vector<1x128xf32>
    %1015 = math.exp %1014 : vector<1x128xf32>
    %cst_295 = arith.constant 1.000000e+00 : f32
    %1016 = vector.broadcast %cst_295 : f32 to vector<1x128xf32>
    %1017 = arith.addf %1016, %1015 : vector<1x128xf32>
    %1018 = arith.divf %1016, %1017 : vector<1x128xf32>
    %1019 = math.tanh %1013 : vector<1x128xf32>
    %1020 = vector.extract_strided_slice %1018 {offsets = [0, 0], sizes = [1, 32], strides = [1, 1]} : vector<1x128xf32> to vector<1x32xf32>
    %1021 = vector.extract_strided_slice %1018 {offsets = [0, 32], sizes = [1, 32], strides = [1, 1]} : vector<1x128xf32> to vector<1x32xf32>
    %1022 = vector.extract_strided_slice %1019 {offsets = [0, 64], sizes = [1, 32], strides = [1, 1]} : vector<1x128xf32> to vector<1x32xf32>
    %1023 = vector.extract_strided_slice %1018 {offsets = [0, 96], sizes = [1, 32], strides = [1, 1]} : vector<1x128xf32> to vector<1x32xf32>
    %1024 = arith.mulf %1021, %1007 : vector<1x32xf32>
    %1025 = arith.mulf %1020, %1022 : vector<1x32xf32>
    %1026 = arith.addf %1024, %1025 : vector<1x32xf32>
    %1027 = math.tanh %1026 : vector<1x32xf32>
    %1028 = arith.mulf %1023, %1027 : vector<1x32xf32>
    %c1_296 = arith.constant 1 : index
    %c0_297 = arith.constant 0 : index
    %1029 = vector.load %arg30[%c1_296, %c0_297] : memref<8x32xf32, #tpu.memory_space<vmem>>, vector<1x32xf32>
    tpu.vector_store %arg30[%c1_296, %c0_297], %1028 {strides = array<i32>} : memref<8x32xf32, #tpu.memory_space<vmem>>, vector<1x32xf32>,
    %1030 = vector.extract_strided_slice %777 {offsets = [2, 0], sizes = [1, 128], strides = [1, 1]} : vector<5x128xf32> to vector<1x128xf32>
    %cst_298 = arith.constant dense<0.000000e+00> : vector<1x128xf32>
    %1031 = tpu.matmul %1028, %778, %cst_298 {dimension_numbers = #tpu.dot_dimension_numbers<[1], [0], [0], [1], [0, 0, 1, 1], [], []>} : vector<1x32xf32>, vector<32x128xf32>, vector<1x128xf32> -> vector<1x128xf32>
    %1032 = arith.addf %1030, %1031 : vector<1x128xf32>
    %1033 = arith.negf %1032 : vector<1x128xf32>
    %1034 = math.exp %1033 : vector<1x128xf32>
    %cst_299 = arith.constant 1.000000e+00 : f32
    %1035 = vector.broadcast %cst_299 : f32 to vector<1x128xf32>
    %1036 = arith.addf %1035, %1034 : vector<1x128xf32>
    %1037 = arith.divf %1035, %1036 : vector<1x128xf32>
    %1038 = math.tanh %1032 : vector<1x128xf32>
    %1039 = vector.extract_strided_slice %1037 {offsets = [0, 0], sizes = [1, 32], strides = [1, 1]} : vector<1x128xf32> to vector<1x32xf32>
    %1040 = vector.extract_strided_slice %1037 {offsets = [0, 32], sizes = [1, 32], strides = [1, 1]} : vector<1x128xf32> to vector<1x32xf32>
    %1041 = vector.extract_strided_slice %1038 {offsets = [0, 64], sizes = [1, 32], strides = [1, 1]} : vector<1x128xf32> to vector<1x32xf32>
    %1042 = vector.extract_strided_slice %1037 {offsets = [0, 96], sizes = [1, 32], strides = [1, 1]} : vector<1x128xf32> to vector<1x32xf32>
    %1043 = arith.mulf %1040, %1026 : vector<1x32xf32>
    %1044 = arith.mulf %1039, %1041 : vector<1x32xf32>
    %1045 = arith.addf %1043, %1044 : vector<1x32xf32>
    %1046 = math.tanh %1045 : vector<1x32xf32>
    %1047 = arith.mulf %1042, %1046 : vector<1x32xf32>
    %c2_300 = arith.constant 2 : index
    %c0_301 = arith.constant 0 : index
    %1048 = vector.load %arg30[%c2_300, %c0_301] : memref<8x32xf32, #tpu.memory_space<vmem>>, vector<1x32xf32>
    tpu.vector_store %arg30[%c2_300, %c0_301], %1047 {strides = array<i32>} : memref<8x32xf32, #tpu.memory_space<vmem>>, vector<1x32xf32>,
    %c0_302 = arith.constant 0 : index
    %c0_303 = arith.constant 0 : index
    %1049 = vector.load %arg30[%c0_302, %c0_303] : memref<8x32xf32, #tpu.memory_space<vmem>>, vector<3x32xf32>
    %cst_304 = arith.constant dense<0.000000e+00> : vector<3x128xf32>
    %1050 = tpu.matmul %1049, %779, %cst_304 {dimension_numbers = #tpu.dot_dimension_numbers<[1], [0], [0], [1], [0, 0, 1, 1], [], []>} : vector<3x32xf32>, vector<32x128xf32>, vector<3x128xf32> -> vector<3x128xf32>
    %1051 = vector.broadcast %781 : vector<1x128xf32> to vector<3x128xf32>
    %1052 = arith.addf %1050, %1051 : vector<3x128xf32>
    %1053 = vector.extract_strided_slice %1052 {offsets = [0, 0], sizes = [1, 128], strides = [1, 1]} : vector<3x128xf32> to vector<1x128xf32>
    %cst_305 = arith.constant dense<0.000000e+00> : vector<1x128xf32>
    %1054 = tpu.matmul %947, %780, %cst_305 {dimension_numbers = #tpu.dot_dimension_numbers<[1], [0], [0], [1], [0, 0, 1, 1], [], []>} : vector<1x32xf32>, vector<32x128xf32>, vector<1x128xf32> -> vector<1x128xf32>
    %1055 = arith.addf %1053, %1054 : vector<1x128xf32>
    %1056 = arith.negf %1055 : vector<1x128xf32>
    %1057 = math.exp %1056 : vector<1x128xf32>
    %cst_306 = arith.constant 1.000000e+00 : f32
    %1058 = vector.broadcast %cst_306 : f32 to vector<1x128xf32>
    %1059 = arith.addf %1058, %1057 : vector<1x128xf32>
    %1060 = arith.divf %1058, %1059 : vector<1x128xf32>
    %1061 = math.tanh %1055 : vector<1x128xf32>
    %1062 = vector.extract_strided_slice %1060 {offsets = [0, 0], sizes = [1, 32], strides = [1, 1]} : vector<1x128xf32> to vector<1x32xf32>
    %1063 = vector.extract_strided_slice %1060 {offsets = [0, 32], sizes = [1, 32], strides = [1, 1]} : vector<1x128xf32> to vector<1x32xf32>
    %1064 = vector.extract_strided_slice %1061 {offsets = [0, 64], sizes = [1, 32], strides = [1, 1]} : vector<1x128xf32> to vector<1x32xf32>
    %1065 = vector.extract_strided_slice %1060 {offsets = [0, 96], sizes = [1, 32], strides = [1, 1]} : vector<1x128xf32> to vector<1x32xf32>
    %1066 = arith.mulf %1063, %945 : vector<1x32xf32>
    %1067 = arith.mulf %1062, %1064 : vector<1x32xf32>
    %1068 = arith.addf %1066, %1067 : vector<1x32xf32>
    %1069 = math.tanh %1068 : vector<1x32xf32>
    %1070 = arith.mulf %1065, %1069 : vector<1x32xf32>
    %1071 = vector.extract_strided_slice %1052 {offsets = [1, 0], sizes = [1, 128], strides = [1, 1]} : vector<3x128xf32> to vector<1x128xf32>
    %cst_307 = arith.constant dense<0.000000e+00> : vector<1x128xf32>
    %1072 = tpu.matmul %1070, %780, %cst_307 {dimension_numbers = #tpu.dot_dimension_numbers<[1], [0], [0], [1], [0, 0, 1, 1], [], []>} : vector<1x32xf32>, vector<32x128xf32>, vector<1x128xf32> -> vector<1x128xf32>
    %1073 = arith.addf %1071, %1072 : vector<1x128xf32>
    %1074 = arith.negf %1073 : vector<1x128xf32>
    %1075 = math.exp %1074 : vector<1x128xf32>
    %cst_308 = arith.constant 1.000000e+00 : f32
    %1076 = vector.broadcast %cst_308 : f32 to vector<1x128xf32>
    %1077 = arith.addf %1076, %1075 : vector<1x128xf32>
    %1078 = arith.divf %1076, %1077 : vector<1x128xf32>
    %1079 = math.tanh %1073 : vector<1x128xf32>
    %1080 = vector.extract_strided_slice %1078 {offsets = [0, 0], sizes = [1, 32], strides = [1, 1]} : vector<1x128xf32> to vector<1x32xf32>
    %1081 = vector.extract_strided_slice %1078 {offsets = [0, 32], sizes = [1, 32], strides = [1, 1]} : vector<1x128xf32> to vector<1x32xf32>
    %1082 = vector.extract_strided_slice %1079 {offsets = [0, 64], sizes = [1, 32], strides = [1, 1]} : vector<1x128xf32> to vector<1x32xf32>
    %1083 = vector.extract_strided_slice %1078 {offsets = [0, 96], sizes = [1, 32], strides = [1, 1]} : vector<1x128xf32> to vector<1x32xf32>
    %1084 = arith.mulf %1081, %1068 : vector<1x32xf32>
    %1085 = arith.mulf %1080, %1082 : vector<1x32xf32>
    %1086 = arith.addf %1084, %1085 : vector<1x32xf32>
    %1087 = math.tanh %1086 : vector<1x32xf32>
    %1088 = arith.mulf %1083, %1087 : vector<1x32xf32>
    %1089 = vector.extract_strided_slice %1052 {offsets = [2, 0], sizes = [1, 128], strides = [1, 1]} : vector<3x128xf32> to vector<1x128xf32>
    %cst_309 = arith.constant dense<0.000000e+00> : vector<1x128xf32>
    %1090 = tpu.matmul %1088, %780, %cst_309 {dimension_numbers = #tpu.dot_dimension_numbers<[1], [0], [0], [1], [0, 0, 1, 1], [], []>} : vector<1x32xf32>, vector<32x128xf32>, vector<1x128xf32> -> vector<1x128xf32>
    %1091 = arith.addf %1089, %1090 : vector<1x128xf32>
    %1092 = arith.negf %1091 : vector<1x128xf32>
    %1093 = math.exp %1092 : vector<1x128xf32>
    %cst_310 = arith.constant 1.000000e+00 : f32
    %1094 = vector.broadcast %cst_310 : f32 to vector<1x128xf32>
    %1095 = arith.addf %1094, %1093 : vector<1x128xf32>
    %1096 = arith.divf %1094, %1095 : vector<1x128xf32>
    %1097 = math.tanh %1091 : vector<1x128xf32>
    %1098 = vector.extract_strided_slice %1096 {offsets = [0, 0], sizes = [1, 32], strides = [1, 1]} : vector<1x128xf32> to vector<1x32xf32>
    %1099 = vector.extract_strided_slice %1096 {offsets = [0, 32], sizes = [1, 32], strides = [1, 1]} : vector<1x128xf32> to vector<1x32xf32>
    %1100 = vector.extract_strided_slice %1097 {offsets = [0, 64], sizes = [1, 32], strides = [1, 1]} : vector<1x128xf32> to vector<1x32xf32>
    %1101 = vector.extract_strided_slice %1096 {offsets = [0, 96], sizes = [1, 32], strides = [1, 1]} : vector<1x128xf32> to vector<1x32xf32>
    %1102 = arith.mulf %1099, %1086 : vector<1x32xf32>
    %1103 = arith.mulf %1098, %1100 : vector<1x32xf32>
    %1104 = arith.addf %1102, %1103 : vector<1x32xf32>
    %1105 = math.tanh %1104 : vector<1x32xf32>
    %1106 = arith.mulf %1101, %1105 : vector<1x32xf32>
    %cst_311 = arith.constant dense<0.000000e+00> : vector<1x32xf32>
    %1107 = tpu.matmul %1047, %783, %cst_311 {dimension_numbers = #tpu.dot_dimension_numbers<[1], [0], [0], [1], [0, 0, 1, 1], [], []>} : vector<1x32xf32>, vector<32x32xf32>, vector<1x32xf32> -> vector<1x32xf32>
    %cst_312 = arith.constant dense<0.000000e+00> : vector<1x32xf32>
    %1108 = tpu.matmul %1106, %784, %cst_312 {dimension_numbers = #tpu.dot_dimension_numbers<[1], [0], [0], [1], [0, 0, 1, 1], [], []>} : vector<1x32xf32>, vector<32x32xf32>, vector<1x32xf32> -> vector<1x32xf32>
    %1109 = arith.addf %1107, %1108 : vector<1x32xf32>
    %cst_313 = arith.constant dense<0.000000e+00> : vector<1xf32>
    %1110 = vector.multi_reduction <add>, %1109, %cst_313 [1] : vector<1x32xf32> to vector<1xf32>
    %1111 = vector.shape_cast %1110 : vector<1xf32> to vector<1x1xf32>
    %cst_314 = arith.constant 3.200000e+01 : f32
    %1112 = vector.broadcast %cst_314 : f32 to vector<1x1xf32>
    %1113 = arith.divf %1111, %1112 : vector<1x1xf32>
    %1114 = vector.broadcast %1113 : vector<1x1xf32> to vector<1x32xf32>
    %1115 = arith.subf %1109, %1114 : vector<1x32xf32>
    %1116 = arith.mulf %1115, %1115 : vector<1x32xf32>
    %cst_315 = arith.constant dense<0.000000e+00> : vector<1xf32>
    %1117 = vector.multi_reduction <add>, %1116, %cst_315 [1] : vector<1x32xf32> to vector<1xf32>
    %1118 = vector.shape_cast %1117 : vector<1xf32> to vector<1x1xf32>
    %cst_316 = arith.constant 3.200000e+01 : f32
    %1119 = vector.broadcast %cst_316 : f32 to vector<1x1xf32>
    %1120 = arith.divf %1118, %1119 : vector<1x1xf32>
    %1121 = vector.broadcast %1113 : vector<1x1xf32> to vector<1x32xf32>
    %1122 = arith.subf %1109, %1121 : vector<1x32xf32>
    %cst_317 = arith.constant 9.99999974E-6 : f32
    %1123 = vector.broadcast %cst_317 : f32 to vector<1x1xf32>
    %1124 = arith.addf %1120, %1123 : vector<1x1xf32>
    %1125 = math.rsqrt %1124 : vector<1x1xf32>
    %1126 = vector.broadcast %1125 : vector<1x1xf32> to vector<1x32xf32>
    %1127 = arith.mulf %1122, %1126 : vector<1x32xf32>
    %1128 = arith.mulf %1127, %688 : vector<1x32xf32>
    %1129 = arith.addf %1128, %689 : vector<1x32xf32>
    %1130 = vector.broadcast %1129 : vector<1x32xf32> to vector<8x32xf32>
    %1131 = arith.mulf %715, %1130 : vector<8x32xf32>
    %cst_318 = arith.constant dense<0.000000e+00> : vector<8xf32>
    %1132 = vector.multi_reduction <add>, %1131, %cst_318 [1] : vector<8x32xf32> to vector<8xf32>
    %1133 = vector.shape_cast %1132 : vector<8xf32> to vector<8x1xf32>
    %cst_319 = arith.constant dense<0xFF800000> : vector<1xf32>
    %1134 = vector.multi_reduction <maximumf>, %1133, %cst_319 [0] : vector<8x1xf32> to vector<1xf32>
    %1135 = vector.shape_cast %1134 : vector<1xf32> to vector<1x1xf32>
    %1136 = vector.broadcast %1135 : vector<1x1xf32> to vector<8x1xf32>
    %1137 = arith.subf %1133, %1136 : vector<8x1xf32>
    %1138 = math.exp %1137 : vector<8x1xf32>
    %cst_320 = arith.constant dense<0.000000e+00> : vector<1xf32>
    %1139 = vector.multi_reduction <add>, %1138, %cst_320 [0] : vector<8x1xf32> to vector<1xf32>
    %1140 = vector.shape_cast %1139 : vector<1xf32> to vector<1x1xf32>
    %1141 = tpu.reciprocal %1140 {approx = true} : vector<1x1xf32> -> vector<1x1xf32>
    %1142 = vector.broadcast %1141 : vector<1x1xf32> to vector<8x1xf32>
    %1143 = arith.mulf %1138, %1142 : vector<8x1xf32>
    %1144 = vector.broadcast %1143 : vector<8x1xf32> to vector<8x32xf32>
    %1145 = arith.mulf %1144, %713 : vector<8x32xf32>
    %cst_321 = arith.constant dense<0.000000e+00> : vector<32xf32>
    %1146 = vector.multi_reduction <add>, %1145, %cst_321 [0] : vector<8x32xf32> to vector<32xf32>
    %1147 = vector.shape_cast %1146 : vector<32xf32> to vector<1x32xf32>
    %cst_322 = arith.constant dense<0.000000e+00> : vector<1x128xf32>
    %1148 = tpu.matmul %1147, %785, %cst_322 {dimension_numbers = #tpu.dot_dimension_numbers<[1], [0], [0], [1], [0, 0, 1, 1], [], []>} : vector<1x32xf32>, vector<32x128xf32>, vector<1x128xf32> -> vector<1x128xf32>
    %1149 = arith.addf %1148, %786 : vector<1x128xf32>
    %c2_323 = arith.constant 2 : index
    %c0_324 = arith.constant 0 : index
    %1150 = vector.load %arg26[%c2_323, %c0_324] : memref<5x128xf32, #tpu.memory_space<vmem>>, vector<1x128xf32>
    tpu.vector_store %arg26[%c2_323, %c0_324], %1149 {strides = array<i32>} : memref<5x128xf32, #tpu.memory_space<vmem>>, vector<1x128xf32>,
    %1151 = vector.extract_strided_slice %777 {offsets = [0, 0], sizes = [1, 128], strides = [1, 1]} : vector<5x128xf32> to vector<1x128xf32>
    %cst_325 = arith.constant dense<0.000000e+00> : vector<1x128xf32>
    %1152 = tpu.matmul %1047, %778, %cst_325 {dimension_numbers = #tpu.dot_dimension_numbers<[1], [0], [0], [1], [0, 0, 1, 1], [], []>} : vector<1x32xf32>, vector<32x128xf32>, vector<1x128xf32> -> vector<1x128xf32>
    %1153 = arith.addf %1151, %1152 : vector<1x128xf32>
    %1154 = arith.negf %1153 : vector<1x128xf32>
    %1155 = math.exp %1154 : vector<1x128xf32>
    %cst_326 = arith.constant 1.000000e+00 : f32
    %1156 = vector.broadcast %cst_326 : f32 to vector<1x128xf32>
    %1157 = arith.addf %1156, %1155 : vector<1x128xf32>
    %1158 = arith.divf %1156, %1157 : vector<1x128xf32>
    %1159 = math.tanh %1153 : vector<1x128xf32>
    %1160 = vector.extract_strided_slice %1158 {offsets = [0, 0], sizes = [1, 32], strides = [1, 1]} : vector<1x128xf32> to vector<1x32xf32>
    %1161 = vector.extract_strided_slice %1158 {offsets = [0, 32], sizes = [1, 32], strides = [1, 1]} : vector<1x128xf32> to vector<1x32xf32>
    %1162 = vector.extract_strided_slice %1159 {offsets = [0, 64], sizes = [1, 32], strides = [1, 1]} : vector<1x128xf32> to vector<1x32xf32>
    %1163 = vector.extract_strided_slice %1158 {offsets = [0, 96], sizes = [1, 32], strides = [1, 1]} : vector<1x128xf32> to vector<1x32xf32>
    %1164 = arith.mulf %1161, %1045 : vector<1x32xf32>
    %1165 = arith.mulf %1160, %1162 : vector<1x32xf32>
    %1166 = arith.addf %1164, %1165 : vector<1x32xf32>
    %1167 = math.tanh %1166 : vector<1x32xf32>
    %1168 = arith.mulf %1163, %1167 : vector<1x32xf32>
    %c0_327 = arith.constant 0 : index
    %c0_328 = arith.constant 0 : index
    %1169 = vector.load %arg30[%c0_327, %c0_328] : memref<8x32xf32, #tpu.memory_space<vmem>>, vector<1x32xf32>
    tpu.vector_store %arg30[%c0_327, %c0_328], %1168 {strides = array<i32>} : memref<8x32xf32, #tpu.memory_space<vmem>>, vector<1x32xf32>,
    %1170 = vector.extract_strided_slice %777 {offsets = [1, 0], sizes = [1, 128], strides = [1, 1]} : vector<5x128xf32> to vector<1x128xf32>
    %cst_329 = arith.constant dense<0.000000e+00> : vector<1x128xf32>
    %1171 = tpu.matmul %1168, %778, %cst_329 {dimension_numbers = #tpu.dot_dimension_numbers<[1], [0], [0], [1], [0, 0, 1, 1], [], []>} : vector<1x32xf32>, vector<32x128xf32>, vector<1x128xf32> -> vector<1x128xf32>
    %1172 = arith.addf %1170, %1171 : vector<1x128xf32>
    %1173 = arith.negf %1172 : vector<1x128xf32>
    %1174 = math.exp %1173 : vector<1x128xf32>
    %cst_330 = arith.constant 1.000000e+00 : f32
    %1175 = vector.broadcast %cst_330 : f32 to vector<1x128xf32>
    %1176 = arith.addf %1175, %1174 : vector<1x128xf32>
    %1177 = arith.divf %1175, %1176 : vector<1x128xf32>
    %1178 = math.tanh %1172 : vector<1x128xf32>
    %1179 = vector.extract_strided_slice %1177 {offsets = [0, 0], sizes = [1, 32], strides = [1, 1]} : vector<1x128xf32> to vector<1x32xf32>
    %1180 = vector.extract_strided_slice %1177 {offsets = [0, 32], sizes = [1, 32], strides = [1, 1]} : vector<1x128xf32> to vector<1x32xf32>
    %1181 = vector.extract_strided_slice %1178 {offsets = [0, 64], sizes = [1, 32], strides = [1, 1]} : vector<1x128xf32> to vector<1x32xf32>
    %1182 = vector.extract_strided_slice %1177 {offsets = [0, 96], sizes = [1, 32], strides = [1, 1]} : vector<1x128xf32> to vector<1x32xf32>
    %1183 = arith.mulf %1180, %1166 : vector<1x32xf32>
    %1184 = arith.mulf %1179, %1181 : vector<1x32xf32>
    %1185 = arith.addf %1183, %1184 : vector<1x32xf32>
    %1186 = math.tanh %1185 : vector<1x32xf32>
    %1187 = arith.mulf %1182, %1186 : vector<1x32xf32>
    %c1_331 = arith.constant 1 : index
    %c0_332 = arith.constant 0 : index
    %1188 = vector.load %arg30[%c1_331, %c0_332] : memref<8x32xf32, #tpu.memory_space<vmem>>, vector<1x32xf32>
    tpu.vector_store %arg30[%c1_331, %c0_332], %1187 {strides = array<i32>} : memref<8x32xf32, #tpu.memory_space<vmem>>, vector<1x32xf32>,
    %1189 = vector.extract_strided_slice %777 {offsets = [2, 0], sizes = [1, 128], strides = [1, 1]} : vector<5x128xf32> to vector<1x128xf32>
    %cst_333 = arith.constant dense<0.000000e+00> : vector<1x128xf32>
    %1190 = tpu.matmul %1187, %778, %cst_333 {dimension_numbers = #tpu.dot_dimension_numbers<[1], [0], [0], [1], [0, 0, 1, 1], [], []>} : vector<1x32xf32>, vector<32x128xf32>, vector<1x128xf32> -> vector<1x128xf32>
    %1191 = arith.addf %1189, %1190 : vector<1x128xf32>
    %1192 = arith.negf %1191 : vector<1x128xf32>
    %1193 = math.exp %1192 : vector<1x128xf32>
    %cst_334 = arith.constant 1.000000e+00 : f32
    %1194 = vector.broadcast %cst_334 : f32 to vector<1x128xf32>
    %1195 = arith.addf %1194, %1193 : vector<1x128xf32>
    %1196 = arith.divf %1194, %1195 : vector<1x128xf32>
    %1197 = math.tanh %1191 : vector<1x128xf32>
    %1198 = vector.extract_strided_slice %1196 {offsets = [0, 0], sizes = [1, 32], strides = [1, 1]} : vector<1x128xf32> to vector<1x32xf32>
    %1199 = vector.extract_strided_slice %1196 {offsets = [0, 32], sizes = [1, 32], strides = [1, 1]} : vector<1x128xf32> to vector<1x32xf32>
    %1200 = vector.extract_strided_slice %1197 {offsets = [0, 64], sizes = [1, 32], strides = [1, 1]} : vector<1x128xf32> to vector<1x32xf32>
    %1201 = vector.extract_strided_slice %1196 {offsets = [0, 96], sizes = [1, 32], strides = [1, 1]} : vector<1x128xf32> to vector<1x32xf32>
    %1202 = arith.mulf %1199, %1185 : vector<1x32xf32>
    %1203 = arith.mulf %1198, %1200 : vector<1x32xf32>
    %1204 = arith.addf %1202, %1203 : vector<1x32xf32>
    %1205 = math.tanh %1204 : vector<1x32xf32>
    %1206 = arith.mulf %1201, %1205 : vector<1x32xf32>
    %c2_335 = arith.constant 2 : index
    %c0_336 = arith.constant 0 : index
    %1207 = vector.load %arg30[%c2_335, %c0_336] : memref<8x32xf32, #tpu.memory_space<vmem>>, vector<1x32xf32>
    tpu.vector_store %arg30[%c2_335, %c0_336], %1206 {strides = array<i32>} : memref<8x32xf32, #tpu.memory_space<vmem>>, vector<1x32xf32>,
    %1208 = vector.extract_strided_slice %777 {offsets = [3, 0], sizes = [1, 128], strides = [1, 1]} : vector<5x128xf32> to vector<1x128xf32>
    %cst_337 = arith.constant dense<0.000000e+00> : vector<1x128xf32>
    %1209 = tpu.matmul %1206, %778, %cst_337 {dimension_numbers = #tpu.dot_dimension_numbers<[1], [0], [0], [1], [0, 0, 1, 1], [], []>} : vector<1x32xf32>, vector<32x128xf32>, vector<1x128xf32> -> vector<1x128xf32>
    %1210 = arith.addf %1208, %1209 : vector<1x128xf32>
    %1211 = arith.negf %1210 : vector<1x128xf32>
    %1212 = math.exp %1211 : vector<1x128xf32>
    %cst_338 = arith.constant 1.000000e+00 : f32
    %1213 = vector.broadcast %cst_338 : f32 to vector<1x128xf32>
    %1214 = arith.addf %1213, %1212 : vector<1x128xf32>
    %1215 = arith.divf %1213, %1214 : vector<1x128xf32>
    %1216 = math.tanh %1210 : vector<1x128xf32>
    %1217 = vector.extract_strided_slice %1215 {offsets = [0, 0], sizes = [1, 32], strides = [1, 1]} : vector<1x128xf32> to vector<1x32xf32>
    %1218 = vector.extract_strided_slice %1215 {offsets = [0, 32], sizes = [1, 32], strides = [1, 1]} : vector<1x128xf32> to vector<1x32xf32>
    %1219 = vector.extract_strided_slice %1216 {offsets = [0, 64], sizes = [1, 32], strides = [1, 1]} : vector<1x128xf32> to vector<1x32xf32>
    %1220 = vector.extract_strided_slice %1215 {offsets = [0, 96], sizes = [1, 32], strides = [1, 1]} : vector<1x128xf32> to vector<1x32xf32>
    %1221 = arith.mulf %1218, %1204 : vector<1x32xf32>
    %1222 = arith.mulf %1217, %1219 : vector<1x32xf32>
    %1223 = arith.addf %1221, %1222 : vector<1x32xf32>
    %1224 = math.tanh %1223 : vector<1x32xf32>
    %1225 = arith.mulf %1220, %1224 : vector<1x32xf32>
    %c3_339 = arith.constant 3 : index
    %c0_340 = arith.constant 0 : index
    %1226 = vector.load %arg30[%c3_339, %c0_340] : memref<8x32xf32, #tpu.memory_space<vmem>>, vector<1x32xf32>
    tpu.vector_store %arg30[%c3_339, %c0_340], %1225 {strides = array<i32>} : memref<8x32xf32, #tpu.memory_space<vmem>>, vector<1x32xf32>,
    %c0_341 = arith.constant 0 : index
    %c0_342 = arith.constant 0 : index
    %1227 = vector.load %arg30[%c0_341, %c0_342] : memref<8x32xf32, #tpu.memory_space<vmem>>, vector<4x32xf32>
    %cst_343 = arith.constant dense<0.000000e+00> : vector<4x128xf32>
    %1228 = tpu.matmul %1227, %779, %cst_343 {dimension_numbers = #tpu.dot_dimension_numbers<[1], [0], [0], [1], [0, 0, 1, 1], [], []>} : vector<4x32xf32>, vector<32x128xf32>, vector<4x128xf32> -> vector<4x128xf32>
    %1229 = vector.broadcast %781 : vector<1x128xf32> to vector<4x128xf32>
    %1230 = arith.addf %1228, %1229 : vector<4x128xf32>
    %1231 = vector.extract_strided_slice %1230 {offsets = [0, 0], sizes = [1, 128], strides = [1, 1]} : vector<4x128xf32> to vector<1x128xf32>
    %cst_344 = arith.constant dense<0.000000e+00> : vector<1x128xf32>
    %1232 = tpu.matmul %1106, %780, %cst_344 {dimension_numbers = #tpu.dot_dimension_numbers<[1], [0], [0], [1], [0, 0, 1, 1], [], []>} : vector<1x32xf32>, vector<32x128xf32>, vector<1x128xf32> -> vector<1x128xf32>
    %1233 = arith.addf %1231, %1232 : vector<1x128xf32>
    %1234 = arith.negf %1233 : vector<1x128xf32>
    %1235 = math.exp %1234 : vector<1x128xf32>
    %cst_345 = arith.constant 1.000000e+00 : f32
    %1236 = vector.broadcast %cst_345 : f32 to vector<1x128xf32>
    %1237 = arith.addf %1236, %1235 : vector<1x128xf32>
    %1238 = arith.divf %1236, %1237 : vector<1x128xf32>
    %1239 = math.tanh %1233 : vector<1x128xf32>
    %1240 = vector.extract_strided_slice %1238 {offsets = [0, 0], sizes = [1, 32], strides = [1, 1]} : vector<1x128xf32> to vector<1x32xf32>
    %1241 = vector.extract_strided_slice %1238 {offsets = [0, 32], sizes = [1, 32], strides = [1, 1]} : vector<1x128xf32> to vector<1x32xf32>
    %1242 = vector.extract_strided_slice %1239 {offsets = [0, 64], sizes = [1, 32], strides = [1, 1]} : vector<1x128xf32> to vector<1x32xf32>
    %1243 = vector.extract_strided_slice %1238 {offsets = [0, 96], sizes = [1, 32], strides = [1, 1]} : vector<1x128xf32> to vector<1x32xf32>
    %1244 = arith.mulf %1241, %1104 : vector<1x32xf32>
    %1245 = arith.mulf %1240, %1242 : vector<1x32xf32>
    %1246 = arith.addf %1244, %1245 : vector<1x32xf32>
    %1247 = math.tanh %1246 : vector<1x32xf32>
    %1248 = arith.mulf %1243, %1247 : vector<1x32xf32>
    %1249 = vector.extract_strided_slice %1230 {offsets = [1, 0], sizes = [1, 128], strides = [1, 1]} : vector<4x128xf32> to vector<1x128xf32>
    %cst_346 = arith.constant dense<0.000000e+00> : vector<1x128xf32>
    %1250 = tpu.matmul %1248, %780, %cst_346 {dimension_numbers = #tpu.dot_dimension_numbers<[1], [0], [0], [1], [0, 0, 1, 1], [], []>} : vector<1x32xf32>, vector<32x128xf32>, vector<1x128xf32> -> vector<1x128xf32>
    %1251 = arith.addf %1249, %1250 : vector<1x128xf32>
    %1252 = arith.negf %1251 : vector<1x128xf32>
    %1253 = math.exp %1252 : vector<1x128xf32>
    %cst_347 = arith.constant 1.000000e+00 : f32
    %1254 = vector.broadcast %cst_347 : f32 to vector<1x128xf32>
    %1255 = arith.addf %1254, %1253 : vector<1x128xf32>
    %1256 = arith.divf %1254, %1255 : vector<1x128xf32>
    %1257 = math.tanh %1251 : vector<1x128xf32>
    %1258 = vector.extract_strided_slice %1256 {offsets = [0, 0], sizes = [1, 32], strides = [1, 1]} : vector<1x128xf32> to vector<1x32xf32>
    %1259 = vector.extract_strided_slice %1256 {offsets = [0, 32], sizes = [1, 32], strides = [1, 1]} : vector<1x128xf32> to vector<1x32xf32>
    %1260 = vector.extract_strided_slice %1257 {offsets = [0, 64], sizes = [1, 32], strides = [1, 1]} : vector<1x128xf32> to vector<1x32xf32>
    %1261 = vector.extract_strided_slice %1256 {offsets = [0, 96], sizes = [1, 32], strides = [1, 1]} : vector<1x128xf32> to vector<1x32xf32>
    %1262 = arith.mulf %1259, %1246 : vector<1x32xf32>
    %1263 = arith.mulf %1258, %1260 : vector<1x32xf32>
    %1264 = arith.addf %1262, %1263 : vector<1x32xf32>
    %1265 = math.tanh %1264 : vector<1x32xf32>
    %1266 = arith.mulf %1261, %1265 : vector<1x32xf32>
    %1267 = vector.extract_strided_slice %1230 {offsets = [2, 0], sizes = [1, 128], strides = [1, 1]} : vector<4x128xf32> to vector<1x128xf32>
    %cst_348 = arith.constant dense<0.000000e+00> : vector<1x128xf32>
    %1268 = tpu.matmul %1266, %780, %cst_348 {dimension_numbers = #tpu.dot_dimension_numbers<[1], [0], [0], [1], [0, 0, 1, 1], [], []>} : vector<1x32xf32>, vector<32x128xf32>, vector<1x128xf32> -> vector<1x128xf32>
    %1269 = arith.addf %1267, %1268 : vector<1x128xf32>
    %1270 = arith.negf %1269 : vector<1x128xf32>
    %1271 = math.exp %1270 : vector<1x128xf32>
    %cst_349 = arith.constant 1.000000e+00 : f32
    %1272 = vector.broadcast %cst_349 : f32 to vector<1x128xf32>
    %1273 = arith.addf %1272, %1271 : vector<1x128xf32>
    %1274 = arith.divf %1272, %1273 : vector<1x128xf32>
    %1275 = math.tanh %1269 : vector<1x128xf32>
    %1276 = vector.extract_strided_slice %1274 {offsets = [0, 0], sizes = [1, 32], strides = [1, 1]} : vector<1x128xf32> to vector<1x32xf32>
    %1277 = vector.extract_strided_slice %1274 {offsets = [0, 32], sizes = [1, 32], strides = [1, 1]} : vector<1x128xf32> to vector<1x32xf32>
    %1278 = vector.extract_strided_slice %1275 {offsets = [0, 64], sizes = [1, 32], strides = [1, 1]} : vector<1x128xf32> to vector<1x32xf32>
    %1279 = vector.extract_strided_slice %1274 {offsets = [0, 96], sizes = [1, 32], strides = [1, 1]} : vector<1x128xf32> to vector<1x32xf32>
    %1280 = arith.mulf %1277, %1264 : vector<1x32xf32>
    %1281 = arith.mulf %1276, %1278 : vector<1x32xf32>
    %1282 = arith.addf %1280, %1281 : vector<1x32xf32>
    %1283 = math.tanh %1282 : vector<1x32xf32>
    %1284 = arith.mulf %1279, %1283 : vector<1x32xf32>
    %1285 = vector.extract_strided_slice %1230 {offsets = [3, 0], sizes = [1, 128], strides = [1, 1]} : vector<4x128xf32> to vector<1x128xf32>
    %cst_350 = arith.constant dense<0.000000e+00> : vector<1x128xf32>
    %1286 = tpu.matmul %1284, %780, %cst_350 {dimension_numbers = #tpu.dot_dimension_numbers<[1], [0], [0], [1], [0, 0, 1, 1], [], []>} : vector<1x32xf32>, vector<32x128xf32>, vector<1x128xf32> -> vector<1x128xf32>
    %1287 = arith.addf %1285, %1286 : vector<1x128xf32>
    %1288 = arith.negf %1287 : vector<1x128xf32>
    %1289 = math.exp %1288 : vector<1x128xf32>
    %cst_351 = arith.constant 1.000000e+00 : f32
    %1290 = vector.broadcast %cst_351 : f32 to vector<1x128xf32>
    %1291 = arith.addf %1290, %1289 : vector<1x128xf32>
    %1292 = arith.divf %1290, %1291 : vector<1x128xf32>
    %1293 = math.tanh %1287 : vector<1x128xf32>
    %1294 = vector.extract_strided_slice %1292 {offsets = [0, 0], sizes = [1, 32], strides = [1, 1]} : vector<1x128xf32> to vector<1x32xf32>
    %1295 = vector.extract_strided_slice %1292 {offsets = [0, 32], sizes = [1, 32], strides = [1, 1]} : vector<1x128xf32> to vector<1x32xf32>
    %1296 = vector.extract_strided_slice %1293 {offsets = [0, 64], sizes = [1, 32], strides = [1, 1]} : vector<1x128xf32> to vector<1x32xf32>
    %1297 = vector.extract_strided_slice %1292 {offsets = [0, 96], sizes = [1, 32], strides = [1, 1]} : vector<1x128xf32> to vector<1x32xf32>
    %1298 = arith.mulf %1295, %1282 : vector<1x32xf32>
    %1299 = arith.mulf %1294, %1296 : vector<1x32xf32>
    %1300 = arith.addf %1298, %1299 : vector<1x32xf32>
    %1301 = math.tanh %1300 : vector<1x32xf32>
    %1302 = arith.mulf %1297, %1301 : vector<1x32xf32>
    %cst_352 = arith.constant dense<0.000000e+00> : vector<1x32xf32>
    %1303 = tpu.matmul %1225, %783, %cst_352 {dimension_numbers = #tpu.dot_dimension_numbers<[1], [0], [0], [1], [0, 0, 1, 1], [], []>} : vector<1x32xf32>, vector<32x32xf32>, vector<1x32xf32> -> vector<1x32xf32>
    %cst_353 = arith.constant dense<0.000000e+00> : vector<1x32xf32>
    %1304 = tpu.matmul %1302, %784, %cst_353 {dimension_numbers = #tpu.dot_dimension_numbers<[1], [0], [0], [1], [0, 0, 1, 1], [], []>} : vector<1x32xf32>, vector<32x32xf32>, vector<1x32xf32> -> vector<1x32xf32>
    %1305 = arith.addf %1303, %1304 : vector<1x32xf32>
    %cst_354 = arith.constant dense<0.000000e+00> : vector<1xf32>
    %1306 = vector.multi_reduction <add>, %1305, %cst_354 [1] : vector<1x32xf32> to vector<1xf32>
    %1307 = vector.shape_cast %1306 : vector<1xf32> to vector<1x1xf32>
    %cst_355 = arith.constant 3.200000e+01 : f32
    %1308 = vector.broadcast %cst_355 : f32 to vector<1x1xf32>
    %1309 = arith.divf %1307, %1308 : vector<1x1xf32>
    %1310 = vector.broadcast %1309 : vector<1x1xf32> to vector<1x32xf32>
    %1311 = arith.subf %1305, %1310 : vector<1x32xf32>
    %1312 = arith.mulf %1311, %1311 : vector<1x32xf32>
    %cst_356 = arith.constant dense<0.000000e+00> : vector<1xf32>
    %1313 = vector.multi_reduction <add>, %1312, %cst_356 [1] : vector<1x32xf32> to vector<1xf32>
    %1314 = vector.shape_cast %1313 : vector<1xf32> to vector<1x1xf32>
    %cst_357 = arith.constant 3.200000e+01 : f32
    %1315 = vector.broadcast %cst_357 : f32 to vector<1x1xf32>
    %1316 = arith.divf %1314, %1315 : vector<1x1xf32>
    %1317 = vector.broadcast %1309 : vector<1x1xf32> to vector<1x32xf32>
    %1318 = arith.subf %1305, %1317 : vector<1x32xf32>
    %cst_358 = arith.constant 9.99999974E-6 : f32
    %1319 = vector.broadcast %cst_358 : f32 to vector<1x1xf32>
    %1320 = arith.addf %1316, %1319 : vector<1x1xf32>
    %1321 = math.rsqrt %1320 : vector<1x1xf32>
    %1322 = vector.broadcast %1321 : vector<1x1xf32> to vector<1x32xf32>
    %1323 = arith.mulf %1318, %1322 : vector<1x32xf32>
    %1324 = arith.mulf %1323, %688 : vector<1x32xf32>
    %1325 = arith.addf %1324, %689 : vector<1x32xf32>
    %1326 = vector.broadcast %1325 : vector<1x32xf32> to vector<8x32xf32>
    %1327 = arith.mulf %715, %1326 : vector<8x32xf32>
    %cst_359 = arith.constant dense<0.000000e+00> : vector<8xf32>
    %1328 = vector.multi_reduction <add>, %1327, %cst_359 [1] : vector<8x32xf32> to vector<8xf32>
    %1329 = vector.shape_cast %1328 : vector<8xf32> to vector<8x1xf32>
    %cst_360 = arith.constant dense<0xFF800000> : vector<1xf32>
    %1330 = vector.multi_reduction <maximumf>, %1329, %cst_360 [0] : vector<8x1xf32> to vector<1xf32>
    %1331 = vector.shape_cast %1330 : vector<1xf32> to vector<1x1xf32>
    %1332 = vector.broadcast %1331 : vector<1x1xf32> to vector<8x1xf32>
    %1333 = arith.subf %1329, %1332 : vector<8x1xf32>
    %1334 = math.exp %1333 : vector<8x1xf32>
    %cst_361 = arith.constant dense<0.000000e+00> : vector<1xf32>
    %1335 = vector.multi_reduction <add>, %1334, %cst_361 [0] : vector<8x1xf32> to vector<1xf32>
    %1336 = vector.shape_cast %1335 : vector<1xf32> to vector<1x1xf32>
    %1337 = tpu.reciprocal %1336 {approx = true} : vector<1x1xf32> -> vector<1x1xf32>
    %1338 = vector.broadcast %1337 : vector<1x1xf32> to vector<8x1xf32>
    %1339 = arith.mulf %1334, %1338 : vector<8x1xf32>
    %1340 = vector.broadcast %1339 : vector<8x1xf32> to vector<8x32xf32>
    %1341 = arith.mulf %1340, %713 : vector<8x32xf32>
    %cst_362 = arith.constant dense<0.000000e+00> : vector<32xf32>
    %1342 = vector.multi_reduction <add>, %1341, %cst_362 [0] : vector<8x32xf32> to vector<32xf32>
    %1343 = vector.shape_cast %1342 : vector<32xf32> to vector<1x32xf32>
    %cst_363 = arith.constant dense<0.000000e+00> : vector<1x128xf32>
    %1344 = tpu.matmul %1343, %785, %cst_363 {dimension_numbers = #tpu.dot_dimension_numbers<[1], [0], [0], [1], [0, 0, 1, 1], [], []>} : vector<1x32xf32>, vector<32x128xf32>, vector<1x128xf32> -> vector<1x128xf32>
    %1345 = arith.addf %1344, %786 : vector<1x128xf32>
    %c3_364 = arith.constant 3 : index
    %c0_365 = arith.constant 0 : index
    %1346 = vector.load %arg26[%c3_364, %c0_365] : memref<5x128xf32, #tpu.memory_space<vmem>>, vector<1x128xf32>
    tpu.vector_store %arg26[%c3_364, %c0_365], %1345 {strides = array<i32>} : memref<5x128xf32, #tpu.memory_space<vmem>>, vector<1x128xf32>,
    %1347 = vector.extract_strided_slice %777 {offsets = [0, 0], sizes = [1, 128], strides = [1, 1]} : vector<5x128xf32> to vector<1x128xf32>
    %cst_366 = arith.constant dense<0.000000e+00> : vector<1x128xf32>
    %1348 = tpu.matmul %1225, %778, %cst_366 {dimension_numbers = #tpu.dot_dimension_numbers<[1], [0], [0], [1], [0, 0, 1, 1], [], []>} : vector<1x32xf32>, vector<32x128xf32>, vector<1x128xf32> -> vector<1x128xf32>
    %1349 = arith.addf %1347, %1348 : vector<1x128xf32>
    %1350 = arith.negf %1349 : vector<1x128xf32>
    %1351 = math.exp %1350 : vector<1x128xf32>
    %cst_367 = arith.constant 1.000000e+00 : f32
    %1352 = vector.broadcast %cst_367 : f32 to vector<1x128xf32>
    %1353 = arith.addf %1352, %1351 : vector<1x128xf32>
    %1354 = arith.divf %1352, %1353 : vector<1x128xf32>
    %1355 = math.tanh %1349 : vector<1x128xf32>
    %1356 = vector.extract_strided_slice %1354 {offsets = [0, 0], sizes = [1, 32], strides = [1, 1]} : vector<1x128xf32> to vector<1x32xf32>
    %1357 = vector.extract_strided_slice %1354 {offsets = [0, 32], sizes = [1, 32], strides = [1, 1]} : vector<1x128xf32> to vector<1x32xf32>
    %1358 = vector.extract_strided_slice %1355 {offsets = [0, 64], sizes = [1, 32], strides = [1, 1]} : vector<1x128xf32> to vector<1x32xf32>
    %1359 = vector.extract_strided_slice %1354 {offsets = [0, 96], sizes = [1, 32], strides = [1, 1]} : vector<1x128xf32> to vector<1x32xf32>
    %1360 = arith.mulf %1357, %1223 : vector<1x32xf32>
    %1361 = arith.mulf %1356, %1358 : vector<1x32xf32>
    %1362 = arith.addf %1360, %1361 : vector<1x32xf32>
    %1363 = math.tanh %1362 : vector<1x32xf32>
    %1364 = arith.mulf %1359, %1363 : vector<1x32xf32>
    %c0_368 = arith.constant 0 : index
    %c0_369 = arith.constant 0 : index
    %1365 = vector.load %arg30[%c0_368, %c0_369] : memref<8x32xf32, #tpu.memory_space<vmem>>, vector<1x32xf32>
    tpu.vector_store %arg30[%c0_368, %c0_369], %1364 {strides = array<i32>} : memref<8x32xf32, #tpu.memory_space<vmem>>, vector<1x32xf32>,
    %1366 = vector.extract_strided_slice %777 {offsets = [1, 0], sizes = [1, 128], strides = [1, 1]} : vector<5x128xf32> to vector<1x128xf32>
    %cst_370 = arith.constant dense<0.000000e+00> : vector<1x128xf32>
    %1367 = tpu.matmul %1364, %778, %cst_370 {dimension_numbers = #tpu.dot_dimension_numbers<[1], [0], [0], [1], [0, 0, 1, 1], [], []>} : vector<1x32xf32>, vector<32x128xf32>, vector<1x128xf32> -> vector<1x128xf32>
    %1368 = arith.addf %1366, %1367 : vector<1x128xf32>
    %1369 = arith.negf %1368 : vector<1x128xf32>
    %1370 = math.exp %1369 : vector<1x128xf32>
    %cst_371 = arith.constant 1.000000e+00 : f32
    %1371 = vector.broadcast %cst_371 : f32 to vector<1x128xf32>
    %1372 = arith.addf %1371, %1370 : vector<1x128xf32>
    %1373 = arith.divf %1371, %1372 : vector<1x128xf32>
    %1374 = math.tanh %1368 : vector<1x128xf32>
    %1375 = vector.extract_strided_slice %1373 {offsets = [0, 0], sizes = [1, 32], strides = [1, 1]} : vector<1x128xf32> to vector<1x32xf32>
    %1376 = vector.extract_strided_slice %1373 {offsets = [0, 32], sizes = [1, 32], strides = [1, 1]} : vector<1x128xf32> to vector<1x32xf32>
    %1377 = vector.extract_strided_slice %1374 {offsets = [0, 64], sizes = [1, 32], strides = [1, 1]} : vector<1x128xf32> to vector<1x32xf32>
    %1378 = vector.extract_strided_slice %1373 {offsets = [0, 96], sizes = [1, 32], strides = [1, 1]} : vector<1x128xf32> to vector<1x32xf32>
    %1379 = arith.mulf %1376, %1362 : vector<1x32xf32>
    %1380 = arith.mulf %1375, %1377 : vector<1x32xf32>
    %1381 = arith.addf %1379, %1380 : vector<1x32xf32>
    %1382 = math.tanh %1381 : vector<1x32xf32>
    %1383 = arith.mulf %1378, %1382 : vector<1x32xf32>
    %c1_372 = arith.constant 1 : index
    %c0_373 = arith.constant 0 : index
    %1384 = vector.load %arg30[%c1_372, %c0_373] : memref<8x32xf32, #tpu.memory_space<vmem>>, vector<1x32xf32>
    tpu.vector_store %arg30[%c1_372, %c0_373], %1383 {strides = array<i32>} : memref<8x32xf32, #tpu.memory_space<vmem>>, vector<1x32xf32>,
    %1385 = vector.extract_strided_slice %777 {offsets = [2, 0], sizes = [1, 128], strides = [1, 1]} : vector<5x128xf32> to vector<1x128xf32>
    %cst_374 = arith.constant dense<0.000000e+00> : vector<1x128xf32>
    %1386 = tpu.matmul %1383, %778, %cst_374 {dimension_numbers = #tpu.dot_dimension_numbers<[1], [0], [0], [1], [0, 0, 1, 1], [], []>} : vector<1x32xf32>, vector<32x128xf32>, vector<1x128xf32> -> vector<1x128xf32>
    %1387 = arith.addf %1385, %1386 : vector<1x128xf32>
    %1388 = arith.negf %1387 : vector<1x128xf32>
    %1389 = math.exp %1388 : vector<1x128xf32>
    %cst_375 = arith.constant 1.000000e+00 : f32
    %1390 = vector.broadcast %cst_375 : f32 to vector<1x128xf32>
    %1391 = arith.addf %1390, %1389 : vector<1x128xf32>
    %1392 = arith.divf %1390, %1391 : vector<1x128xf32>
    %1393 = math.tanh %1387 : vector<1x128xf32>
    %1394 = vector.extract_strided_slice %1392 {offsets = [0, 0], sizes = [1, 32], strides = [1, 1]} : vector<1x128xf32> to vector<1x32xf32>
    %1395 = vector.extract_strided_slice %1392 {offsets = [0, 32], sizes = [1, 32], strides = [1, 1]} : vector<1x128xf32> to vector<1x32xf32>
    %1396 = vector.extract_strided_slice %1393 {offsets = [0, 64], sizes = [1, 32], strides = [1, 1]} : vector<1x128xf32> to vector<1x32xf32>
    %1397 = vector.extract_strided_slice %1392 {offsets = [0, 96], sizes = [1, 32], strides = [1, 1]} : vector<1x128xf32> to vector<1x32xf32>
    %1398 = arith.mulf %1395, %1381 : vector<1x32xf32>
    %1399 = arith.mulf %1394, %1396 : vector<1x32xf32>
    %1400 = arith.addf %1398, %1399 : vector<1x32xf32>
    %1401 = math.tanh %1400 : vector<1x32xf32>
    %1402 = arith.mulf %1397, %1401 : vector<1x32xf32>
    %c2_376 = arith.constant 2 : index
    %c0_377 = arith.constant 0 : index
    %1403 = vector.load %arg30[%c2_376, %c0_377] : memref<8x32xf32, #tpu.memory_space<vmem>>, vector<1x32xf32>
    tpu.vector_store %arg30[%c2_376, %c0_377], %1402 {strides = array<i32>} : memref<8x32xf32, #tpu.memory_space<vmem>>, vector<1x32xf32>,
    %1404 = vector.extract_strided_slice %777 {offsets = [3, 0], sizes = [1, 128], strides = [1, 1]} : vector<5x128xf32> to vector<1x128xf32>
    %cst_378 = arith.constant dense<0.000000e+00> : vector<1x128xf32>
    %1405 = tpu.matmul %1402, %778, %cst_378 {dimension_numbers = #tpu.dot_dimension_numbers<[1], [0], [0], [1], [0, 0, 1, 1], [], []>} : vector<1x32xf32>, vector<32x128xf32>, vector<1x128xf32> -> vector<1x128xf32>
    %1406 = arith.addf %1404, %1405 : vector<1x128xf32>
    %1407 = arith.negf %1406 : vector<1x128xf32>
    %1408 = math.exp %1407 : vector<1x128xf32>
    %cst_379 = arith.constant 1.000000e+00 : f32
    %1409 = vector.broadcast %cst_379 : f32 to vector<1x128xf32>
    %1410 = arith.addf %1409, %1408 : vector<1x128xf32>
    %1411 = arith.divf %1409, %1410 : vector<1x128xf32>
    %1412 = math.tanh %1406 : vector<1x128xf32>
    %1413 = vector.extract_strided_slice %1411 {offsets = [0, 0], sizes = [1, 32], strides = [1, 1]} : vector<1x128xf32> to vector<1x32xf32>
    %1414 = vector.extract_strided_slice %1411 {offsets = [0, 32], sizes = [1, 32], strides = [1, 1]} : vector<1x128xf32> to vector<1x32xf32>
    %1415 = vector.extract_strided_slice %1412 {offsets = [0, 64], sizes = [1, 32], strides = [1, 1]} : vector<1x128xf32> to vector<1x32xf32>
    %1416 = vector.extract_strided_slice %1411 {offsets = [0, 96], sizes = [1, 32], strides = [1, 1]} : vector<1x128xf32> to vector<1x32xf32>
    %1417 = arith.mulf %1414, %1400 : vector<1x32xf32>
    %1418 = arith.mulf %1413, %1415 : vector<1x32xf32>
    %1419 = arith.addf %1417, %1418 : vector<1x32xf32>
    %1420 = math.tanh %1419 : vector<1x32xf32>
    %1421 = arith.mulf %1416, %1420 : vector<1x32xf32>
    %c3_380 = arith.constant 3 : index
    %c0_381 = arith.constant 0 : index
    %1422 = vector.load %arg30[%c3_380, %c0_381] : memref<8x32xf32, #tpu.memory_space<vmem>>, vector<1x32xf32>
    tpu.vector_store %arg30[%c3_380, %c0_381], %1421 {strides = array<i32>} : memref<8x32xf32, #tpu.memory_space<vmem>>, vector<1x32xf32>,
    %1423 = vector.extract_strided_slice %777 {offsets = [4, 0], sizes = [1, 128], strides = [1, 1]} : vector<5x128xf32> to vector<1x128xf32>
    %cst_382 = arith.constant dense<0.000000e+00> : vector<1x128xf32>
    %1424 = tpu.matmul %1421, %778, %cst_382 {dimension_numbers = #tpu.dot_dimension_numbers<[1], [0], [0], [1], [0, 0, 1, 1], [], []>} : vector<1x32xf32>, vector<32x128xf32>, vector<1x128xf32> -> vector<1x128xf32>
    %1425 = arith.addf %1423, %1424 : vector<1x128xf32>
    %1426 = arith.negf %1425 : vector<1x128xf32>
    %1427 = math.exp %1426 : vector<1x128xf32>
    %cst_383 = arith.constant 1.000000e+00 : f32
    %1428 = vector.broadcast %cst_383 : f32 to vector<1x128xf32>
    %1429 = arith.addf %1428, %1427 : vector<1x128xf32>
    %1430 = arith.divf %1428, %1429 : vector<1x128xf32>
    %1431 = math.tanh %1425 : vector<1x128xf32>
    %1432 = vector.extract_strided_slice %1430 {offsets = [0, 0], sizes = [1, 32], strides = [1, 1]} : vector<1x128xf32> to vector<1x32xf32>
    %1433 = vector.extract_strided_slice %1430 {offsets = [0, 32], sizes = [1, 32], strides = [1, 1]} : vector<1x128xf32> to vector<1x32xf32>
    %1434 = vector.extract_strided_slice %1431 {offsets = [0, 64], sizes = [1, 32], strides = [1, 1]} : vector<1x128xf32> to vector<1x32xf32>
    %1435 = vector.extract_strided_slice %1430 {offsets = [0, 96], sizes = [1, 32], strides = [1, 1]} : vector<1x128xf32> to vector<1x32xf32>
    %1436 = arith.mulf %1433, %1419 : vector<1x32xf32>
    %1437 = arith.mulf %1432, %1434 : vector<1x32xf32>
    %1438 = arith.addf %1436, %1437 : vector<1x32xf32>
    %1439 = math.tanh %1438 : vector<1x32xf32>
    %1440 = arith.mulf %1435, %1439 : vector<1x32xf32>
    %c4_384 = arith.constant 4 : index
    %c0_385 = arith.constant 0 : index
    %1441 = vector.load %arg30[%c4_384, %c0_385] : memref<8x32xf32, #tpu.memory_space<vmem>>, vector<1x32xf32>
    tpu.vector_store %arg30[%c4_384, %c0_385], %1440 {strides = array<i32>} : memref<8x32xf32, #tpu.memory_space<vmem>>, vector<1x32xf32>,
    %c0_386 = arith.constant 0 : index
    %c0_387 = arith.constant 0 : index
    %1442 = vector.load %arg30[%c0_386, %c0_387] : memref<8x32xf32, #tpu.memory_space<vmem>>, vector<5x32xf32>
    %cst_388 = arith.constant dense<0.000000e+00> : vector<5x128xf32>
    %1443 = tpu.matmul %1442, %779, %cst_388 {dimension_numbers = #tpu.dot_dimension_numbers<[1], [0], [0], [1], [0, 0, 1, 1], [], []>} : vector<5x32xf32>, vector<32x128xf32>, vector<5x128xf32> -> vector<5x128xf32>
    %1444 = vector.broadcast %781 : vector<1x128xf32> to vector<5x128xf32>
    %1445 = arith.addf %1443, %1444 : vector<5x128xf32>
    %1446 = vector.extract_strided_slice %1445 {offsets = [0, 0], sizes = [1, 128], strides = [1, 1]} : vector<5x128xf32> to vector<1x128xf32>
    %cst_389 = arith.constant dense<0.000000e+00> : vector<1x128xf32>
    %1447 = tpu.matmul %1302, %780, %cst_389 {dimension_numbers = #tpu.dot_dimension_numbers<[1], [0], [0], [1], [0, 0, 1, 1], [], []>} : vector<1x32xf32>, vector<32x128xf32>, vector<1x128xf32> -> vector<1x128xf32>
    %1448 = arith.addf %1446, %1447 : vector<1x128xf32>
    %1449 = arith.negf %1448 : vector<1x128xf32>
    %1450 = math.exp %1449 : vector<1x128xf32>
    %cst_390 = arith.constant 1.000000e+00 : f32
    %1451 = vector.broadcast %cst_390 : f32 to vector<1x128xf32>
    %1452 = arith.addf %1451, %1450 : vector<1x128xf32>
    %1453 = arith.divf %1451, %1452 : vector<1x128xf32>
    %1454 = math.tanh %1448 : vector<1x128xf32>
    %1455 = vector.extract_strided_slice %1453 {offsets = [0, 0], sizes = [1, 32], strides = [1, 1]} : vector<1x128xf32> to vector<1x32xf32>
    %1456 = vector.extract_strided_slice %1453 {offsets = [0, 32], sizes = [1, 32], strides = [1, 1]} : vector<1x128xf32> to vector<1x32xf32>
    %1457 = vector.extract_strided_slice %1454 {offsets = [0, 64], sizes = [1, 32], strides = [1, 1]} : vector<1x128xf32> to vector<1x32xf32>
    %1458 = vector.extract_strided_slice %1453 {offsets = [0, 96], sizes = [1, 32], strides = [1, 1]} : vector<1x128xf32> to vector<1x32xf32>
    %1459 = arith.mulf %1456, %1300 : vector<1x32xf32>
    %1460 = arith.mulf %1455, %1457 : vector<1x32xf32>
    %1461 = arith.addf %1459, %1460 : vector<1x32xf32>
    %1462 = math.tanh %1461 : vector<1x32xf32>
    %1463 = arith.mulf %1458, %1462 : vector<1x32xf32>
    %1464 = vector.extract_strided_slice %1445 {offsets = [1, 0], sizes = [1, 128], strides = [1, 1]} : vector<5x128xf32> to vector<1x128xf32>
    %cst_391 = arith.constant dense<0.000000e+00> : vector<1x128xf32>
    %1465 = tpu.matmul %1463, %780, %cst_391 {dimension_numbers = #tpu.dot_dimension_numbers<[1], [0], [0], [1], [0, 0, 1, 1], [], []>} : vector<1x32xf32>, vector<32x128xf32>, vector<1x128xf32> -> vector<1x128xf32>
    %1466 = arith.addf %1464, %1465 : vector<1x128xf32>
    %1467 = arith.negf %1466 : vector<1x128xf32>
    %1468 = math.exp %1467 : vector<1x128xf32>
    %cst_392 = arith.constant 1.000000e+00 : f32
    %1469 = vector.broadcast %cst_392 : f32 to vector<1x128xf32>
    %1470 = arith.addf %1469, %1468 : vector<1x128xf32>
    %1471 = arith.divf %1469, %1470 : vector<1x128xf32>
    %1472 = math.tanh %1466 : vector<1x128xf32>
    %1473 = vector.extract_strided_slice %1471 {offsets = [0, 0], sizes = [1, 32], strides = [1, 1]} : vector<1x128xf32> to vector<1x32xf32>
    %1474 = vector.extract_strided_slice %1471 {offsets = [0, 32], sizes = [1, 32], strides = [1, 1]} : vector<1x128xf32> to vector<1x32xf32>
    %1475 = vector.extract_strided_slice %1472 {offsets = [0, 64], sizes = [1, 32], strides = [1, 1]} : vector<1x128xf32> to vector<1x32xf32>
    %1476 = vector.extract_strided_slice %1471 {offsets = [0, 96], sizes = [1, 32], strides = [1, 1]} : vector<1x128xf32> to vector<1x32xf32>
    %1477 = arith.mulf %1474, %1461 : vector<1x32xf32>
    %1478 = arith.mulf %1473, %1475 : vector<1x32xf32>
    %1479 = arith.addf %1477, %1478 : vector<1x32xf32>
    %1480 = math.tanh %1479 : vector<1x32xf32>
    %1481 = arith.mulf %1476, %1480 : vector<1x32xf32>
    %1482 = vector.extract_strided_slice %1445 {offsets = [2, 0], sizes = [1, 128], strides = [1, 1]} : vector<5x128xf32> to vector<1x128xf32>
    %cst_393 = arith.constant dense<0.000000e+00> : vector<1x128xf32>
    %1483 = tpu.matmul %1481, %780, %cst_393 {dimension_numbers = #tpu.dot_dimension_numbers<[1], [0], [0], [1], [0, 0, 1, 1], [], []>} : vector<1x32xf32>, vector<32x128xf32>, vector<1x128xf32> -> vector<1x128xf32>
    %1484 = arith.addf %1482, %1483 : vector<1x128xf32>
    %1485 = arith.negf %1484 : vector<1x128xf32>
    %1486 = math.exp %1485 : vector<1x128xf32>
    %cst_394 = arith.constant 1.000000e+00 : f32
    %1487 = vector.broadcast %cst_394 : f32 to vector<1x128xf32>
    %1488 = arith.addf %1487, %1486 : vector<1x128xf32>
    %1489 = arith.divf %1487, %1488 : vector<1x128xf32>
    %1490 = math.tanh %1484 : vector<1x128xf32>
    %1491 = vector.extract_strided_slice %1489 {offsets = [0, 0], sizes = [1, 32], strides = [1, 1]} : vector<1x128xf32> to vector<1x32xf32>
    %1492 = vector.extract_strided_slice %1489 {offsets = [0, 32], sizes = [1, 32], strides = [1, 1]} : vector<1x128xf32> to vector<1x32xf32>
    %1493 = vector.extract_strided_slice %1490 {offsets = [0, 64], sizes = [1, 32], strides = [1, 1]} : vector<1x128xf32> to vector<1x32xf32>
    %1494 = vector.extract_strided_slice %1489 {offsets = [0, 96], sizes = [1, 32], strides = [1, 1]} : vector<1x128xf32> to vector<1x32xf32>
    %1495 = arith.mulf %1492, %1479 : vector<1x32xf32>
    %1496 = arith.mulf %1491, %1493 : vector<1x32xf32>
    %1497 = arith.addf %1495, %1496 : vector<1x32xf32>
    %1498 = math.tanh %1497 : vector<1x32xf32>
    %1499 = arith.mulf %1494, %1498 : vector<1x32xf32>
    %1500 = vector.extract_strided_slice %1445 {offsets = [3, 0], sizes = [1, 128], strides = [1, 1]} : vector<5x128xf32> to vector<1x128xf32>
    %cst_395 = arith.constant dense<0.000000e+00> : vector<1x128xf32>
    %1501 = tpu.matmul %1499, %780, %cst_395 {dimension_numbers = #tpu.dot_dimension_numbers<[1], [0], [0], [1], [0, 0, 1, 1], [], []>} : vector<1x32xf32>, vector<32x128xf32>, vector<1x128xf32> -> vector<1x128xf32>
    %1502 = arith.addf %1500, %1501 : vector<1x128xf32>
    %1503 = arith.negf %1502 : vector<1x128xf32>
    %1504 = math.exp %1503 : vector<1x128xf32>
    %cst_396 = arith.constant 1.000000e+00 : f32
    %1505 = vector.broadcast %cst_396 : f32 to vector<1x128xf32>
    %1506 = arith.addf %1505, %1504 : vector<1x128xf32>
    %1507 = arith.divf %1505, %1506 : vector<1x128xf32>
    %1508 = math.tanh %1502 : vector<1x128xf32>
    %1509 = vector.extract_strided_slice %1507 {offsets = [0, 0], sizes = [1, 32], strides = [1, 1]} : vector<1x128xf32> to vector<1x32xf32>
    %1510 = vector.extract_strided_slice %1507 {offsets = [0, 32], sizes = [1, 32], strides = [1, 1]} : vector<1x128xf32> to vector<1x32xf32>
    %1511 = vector.extract_strided_slice %1508 {offsets = [0, 64], sizes = [1, 32], strides = [1, 1]} : vector<1x128xf32> to vector<1x32xf32>
    %1512 = vector.extract_strided_slice %1507 {offsets = [0, 96], sizes = [1, 32], strides = [1, 1]} : vector<1x128xf32> to vector<1x32xf32>
    %1513 = arith.mulf %1510, %1497 : vector<1x32xf32>
    %1514 = arith.mulf %1509, %1511 : vector<1x32xf32>
    %1515 = arith.addf %1513, %1514 : vector<1x32xf32>
    %1516 = math.tanh %1515 : vector<1x32xf32>
    %1517 = arith.mulf %1512, %1516 : vector<1x32xf32>
    %1518 = vector.extract_strided_slice %1445 {offsets = [4, 0], sizes = [1, 128], strides = [1, 1]} : vector<5x128xf32> to vector<1x128xf32>
    %cst_397 = arith.constant dense<0.000000e+00> : vector<1x128xf32>
    %1519 = tpu.matmul %1517, %780, %cst_397 {dimension_numbers = #tpu.dot_dimension_numbers<[1], [0], [0], [1], [0, 0, 1, 1], [], []>} : vector<1x32xf32>, vector<32x128xf32>, vector<1x128xf32> -> vector<1x128xf32>
    %1520 = arith.addf %1518, %1519 : vector<1x128xf32>
    %1521 = arith.negf %1520 : vector<1x128xf32>
    %1522 = math.exp %1521 : vector<1x128xf32>
    %cst_398 = arith.constant 1.000000e+00 : f32
    %1523 = vector.broadcast %cst_398 : f32 to vector<1x128xf32>
    %1524 = arith.addf %1523, %1522 : vector<1x128xf32>
    %1525 = arith.divf %1523, %1524 : vector<1x128xf32>
    %1526 = math.tanh %1520 : vector<1x128xf32>
    %1527 = vector.extract_strided_slice %1525 {offsets = [0, 0], sizes = [1, 32], strides = [1, 1]} : vector<1x128xf32> to vector<1x32xf32>
    %1528 = vector.extract_strided_slice %1525 {offsets = [0, 32], sizes = [1, 32], strides = [1, 1]} : vector<1x128xf32> to vector<1x32xf32>
    %1529 = vector.extract_strided_slice %1526 {offsets = [0, 64], sizes = [1, 32], strides = [1, 1]} : vector<1x128xf32> to vector<1x32xf32>
    %1530 = vector.extract_strided_slice %1525 {offsets = [0, 96], sizes = [1, 32], strides = [1, 1]} : vector<1x128xf32> to vector<1x32xf32>
    %1531 = arith.mulf %1528, %1515 : vector<1x32xf32>
    %1532 = arith.mulf %1527, %1529 : vector<1x32xf32>
    %1533 = arith.addf %1531, %1532 : vector<1x32xf32>
    %1534 = math.tanh %1533 : vector<1x32xf32>
    %1535 = arith.mulf %1530, %1534 : vector<1x32xf32>
    %cst_399 = arith.constant dense<0.000000e+00> : vector<1x32xf32>
    %1536 = tpu.matmul %1440, %783, %cst_399 {dimension_numbers = #tpu.dot_dimension_numbers<[1], [0], [0], [1], [0, 0, 1, 1], [], []>} : vector<1x32xf32>, vector<32x32xf32>, vector<1x32xf32> -> vector<1x32xf32>
    %cst_400 = arith.constant dense<0.000000e+00> : vector<1x32xf32>
    %1537 = tpu.matmul %1535, %784, %cst_400 {dimension_numbers = #tpu.dot_dimension_numbers<[1], [0], [0], [1], [0, 0, 1, 1], [], []>} : vector<1x32xf32>, vector<32x32xf32>, vector<1x32xf32> -> vector<1x32xf32>
    %1538 = arith.addf %1536, %1537 : vector<1x32xf32>
    %cst_401 = arith.constant dense<0.000000e+00> : vector<1xf32>
    %1539 = vector.multi_reduction <add>, %1538, %cst_401 [1] : vector<1x32xf32> to vector<1xf32>
    %1540 = vector.shape_cast %1539 : vector<1xf32> to vector<1x1xf32>
    %cst_402 = arith.constant 3.200000e+01 : f32
    %1541 = vector.broadcast %cst_402 : f32 to vector<1x1xf32>
    %1542 = arith.divf %1540, %1541 : vector<1x1xf32>
    %1543 = vector.broadcast %1542 : vector<1x1xf32> to vector<1x32xf32>
    %1544 = arith.subf %1538, %1543 : vector<1x32xf32>
    %1545 = arith.mulf %1544, %1544 : vector<1x32xf32>
    %cst_403 = arith.constant dense<0.000000e+00> : vector<1xf32>
    %1546 = vector.multi_reduction <add>, %1545, %cst_403 [1] : vector<1x32xf32> to vector<1xf32>
    %1547 = vector.shape_cast %1546 : vector<1xf32> to vector<1x1xf32>
    %cst_404 = arith.constant 3.200000e+01 : f32
    %1548 = vector.broadcast %cst_404 : f32 to vector<1x1xf32>
    %1549 = arith.divf %1547, %1548 : vector<1x1xf32>
    %1550 = vector.broadcast %1542 : vector<1x1xf32> to vector<1x32xf32>
    %1551 = arith.subf %1538, %1550 : vector<1x32xf32>
    %cst_405 = arith.constant 9.99999974E-6 : f32
    %1552 = vector.broadcast %cst_405 : f32 to vector<1x1xf32>
    %1553 = arith.addf %1549, %1552 : vector<1x1xf32>
    %1554 = math.rsqrt %1553 : vector<1x1xf32>
    %1555 = vector.broadcast %1554 : vector<1x1xf32> to vector<1x32xf32>
    %1556 = arith.mulf %1551, %1555 : vector<1x32xf32>
    %1557 = arith.mulf %1556, %688 : vector<1x32xf32>
    %1558 = arith.addf %1557, %689 : vector<1x32xf32>
    %1559 = vector.broadcast %1558 : vector<1x32xf32> to vector<8x32xf32>
    %1560 = arith.mulf %715, %1559 : vector<8x32xf32>
    %cst_406 = arith.constant dense<0.000000e+00> : vector<8xf32>
    %1561 = vector.multi_reduction <add>, %1560, %cst_406 [1] : vector<8x32xf32> to vector<8xf32>
    %1562 = vector.shape_cast %1561 : vector<8xf32> to vector<8x1xf32>
    %cst_407 = arith.constant dense<0xFF800000> : vector<1xf32>
    %1563 = vector.multi_reduction <maximumf>, %1562, %cst_407 [0] : vector<8x1xf32> to vector<1xf32>
    %1564 = vector.shape_cast %1563 : vector<1xf32> to vector<1x1xf32>
    %1565 = vector.broadcast %1564 : vector<1x1xf32> to vector<8x1xf32>
    %1566 = arith.subf %1562, %1565 : vector<8x1xf32>
    %1567 = math.exp %1566 : vector<8x1xf32>
    %cst_408 = arith.constant dense<0.000000e+00> : vector<1xf32>
    %1568 = vector.multi_reduction <add>, %1567, %cst_408 [0] : vector<8x1xf32> to vector<1xf32>
    %1569 = vector.shape_cast %1568 : vector<1xf32> to vector<1x1xf32>
    %1570 = tpu.reciprocal %1569 {approx = true} : vector<1x1xf32> -> vector<1x1xf32>
    %1571 = vector.broadcast %1570 : vector<1x1xf32> to vector<8x1xf32>
    %1572 = arith.mulf %1567, %1571 : vector<8x1xf32>
    %1573 = vector.broadcast %1572 : vector<8x1xf32> to vector<8x32xf32>
    %1574 = arith.mulf %1573, %713 : vector<8x32xf32>
    %cst_409 = arith.constant dense<0.000000e+00> : vector<32xf32>
    %1575 = vector.multi_reduction <add>, %1574, %cst_409 [0] : vector<8x32xf32> to vector<32xf32>
    %1576 = vector.shape_cast %1575 : vector<32xf32> to vector<1x32xf32>
    %cst_410 = arith.constant dense<0.000000e+00> : vector<1x128xf32>
    %1577 = tpu.matmul %1576, %785, %cst_410 {dimension_numbers = #tpu.dot_dimension_numbers<[1], [0], [0], [1], [0, 0, 1, 1], [], []>} : vector<1x32xf32>, vector<32x128xf32>, vector<1x128xf32> -> vector<1x128xf32>
    %1578 = arith.addf %1577, %786 : vector<1x128xf32>
    %c4_411 = arith.constant 4 : index
    %c0_412 = arith.constant 0 : index
    %1579 = vector.load %arg26[%c4_411, %c0_412] : memref<5x128xf32, #tpu.memory_space<vmem>>, vector<1x128xf32>
    tpu.vector_store %arg26[%c4_411, %c0_412], %1578 {strides = array<i32>} : memref<5x128xf32, #tpu.memory_space<vmem>>, vector<1x128xf32>,
    return
  }
}

</mosaic_0001>

<llo_original>
// kernel: forward_pallas.1
$region0: #{forward_pallas.1}
  #allocation0 [shape = 'u32[]', space=smem, size = 0x4, offset = 0x4, fixed_abs, tag = 'smem constant byte address 0x4 - core index']
  #allocation1 [shape = 'u32[72,128]{1,0:T(1,128)}', space=vmem, size = 0x9000, scoped, tag = 'internal scratch']
  #allocation2 [shape = 'f32[8,128]{1,0:T(8,128)}', space=vmem, size = 0x1000, scoped, tag = 'scratch operand']
  #allocation3 [shape = 'f32[8,64]{1,0:T(8,128)}', space=vmem, size = 0x1000, scoped, tag = 'scratch operand']
  #allocation4 [shape = 'f32[8,64]{1,0:T(8,128)}', space=vmem, size = 0x1000, scoped, tag = 'scratch operand']
  #allocation5 [shape = 'f32[8,32]{1,0:T(8,128)}', space=vmem, size = 0x1000, scoped, tag = 'scratch operand']
  %s0 = inlined_call_operand.vmem [shape: s32[8], index: 0, kind: input, shape index: {}]
  %s1 = inlined_call_operand.vmem [shape: s32[6], index: 1, kind: input, shape index: {}]
  %s2 = inlined_call_operand.vmem [shape: f32[128,32], index: 2, kind: input, shape index: {}]
  %s3 = inlined_call_operand.vmem [shape: f32[128,32], index: 3, kind: input, shape index: {}]
  %s4 = inlined_call_operand.vmem [shape: f32[32,256], index: 4, kind: input, shape index: {}]
  %s5 = inlined_call_operand.vmem [shape: f32[32,128], index: 5, kind: input, shape index: {}]
  %s6 = inlined_call_operand.vmem [shape: f32[32,128], index: 6, kind: input, shape index: {}]
  %s7 = inlined_call_operand.vmem [shape: f32[1,256], index: 7, kind: input, shape index: {}]
  %s8 = inlined_call_operand.vmem [shape: f32[64,256], index: 8, kind: input, shape index: {}]
  %s9 = inlined_call_operand.vmem [shape: f32[32,128], index: 9, kind: input, shape index: {}]
  %s10 = inlined_call_operand.vmem [shape: f32[32,128], index: 10, kind: input, shape index: {}]
  %s11 = inlined_call_operand.vmem [shape: f32[1,256], index: 11, kind: input, shape index: {}]
  %s12 = inlined_call_operand.vmem [shape: f32[32,128], index: 12, kind: input, shape index: {}]
  %s13 = inlined_call_operand.vmem [shape: f32[32,128], index: 13, kind: input, shape index: {}]
  %s14 = inlined_call_operand.vmem [shape: f32[1,128], index: 14, kind: input, shape index: {}]
  %s15 = inlined_call_operand.vmem [shape: f32[32,128], index: 15, kind: input, shape index: {}]
  %s16 = inlined_call_operand.vmem [shape: f32[32,128], index: 16, kind: input, shape index: {}]
  %s17 = inlined_call_operand.vmem [shape: f32[1,128], index: 17, kind: input, shape index: {}]
  %s18 = inlined_call_operand.vmem [shape: f32[1,32], index: 18, kind: input, shape index: {}]
  %s19 = inlined_call_operand.vmem [shape: f32[1,32], index: 19, kind: input, shape index: {}]
  %s20 = inlined_call_operand.vmem [shape: f32[64,32], index: 20, kind: input, shape index: {}]
  %s21 = inlined_call_operand.vmem [shape: f32[64,32], index: 21, kind: input, shape index: {}]
  %s22 = inlined_call_operand.vmem [shape: f32[1,32], index: 22, kind: input, shape index: {}]
  %s23 = inlined_call_operand.vmem [shape: f32[1,32], index: 23, kind: input, shape index: {}]
  %s24 = inlined_call_operand.vmem [shape: f32[32,128], index: 24, kind: input, shape index: {}]
  %s25 = inlined_call_operand.vmem [shape: f32[1,128], index: 25, kind: input, shape index: {}]
  %s26 = inlined_call_operand.vmem [shape: f32[5,128], index: 26, kind: output, shape index: {}]
  %s27 = sld [smem:[#allocation0]]
  $region122: #{forward_pallas.1} parent=0
    _
  %s29 = ssub.s32 1, %s27
  %s30 = scalar_select 0, %s29, %s27
  $region1: #{forward_pallas.1} parent=0
    #allocation6 [shape = 'u8[512]{0}', space=smem, size = 0x200, scoped, tag = 'input window, operand 0, single buffered']
    #allocation7 [shape = 's32[1]{0}', space=sflag, size = 0x4, scoped, tag = 'scoped memory for forward_pallas.1']
    #allocation8 [shape = 'u8[512]{0}', space=smem, size = 0x200, scoped, tag = 'input window, operand 1, single buffered']
    #allocation9 [shape = 's32[1]{0}', space=sflag, size = 0x4, scoped, tag = 'scoped memory for forward_pallas.1']
    %31 = vsyncpa [#allocation7], 0
    %32 = vsyncpa [#allocation9], 0
    // Predicated region
    $region2: #{forward_pallas.1} parent=1 // pred_check
      _
    $region3: #{forward_pallas.1} parent=1 // pred_check_branch
      %34 = sbr.rel (0) target = $region5
    $region4: #{forward_pallas.1} parent=1 // pred_region
      %36 = vsyncadd [#allocation7], 0
      %s38 = sshll.u32 %s0, 4
      %s39 = int_to_ptr.vmem [resolvable:$true] %s38
      %41 = dma.vmem_to_smem %s39, 16, [#allocation6], [#allocation7]
    $region5: #{forward_pallas.1} parent=1 // pred_fallthru
      _
    // Predicated region
    $region6: #{forward_pallas.1} parent=1 // pred_check
      _
    $region7: #{forward_pallas.1} parent=1 // pred_check_branch
      %43 = sbr.rel (0) target = $region9
    $region8: #{forward_pallas.1} parent=1 // pred_region
      %45 = vsyncadd [#allocation9], 0
      %s47 = sshll.u32 %s1, 4
      %s48 = int_to_ptr.vmem [resolvable:$true] %s47
      %50 = dma.vmem_to_smem %s48, 16, [#allocation8], [#allocation9]
    $region9: #{forward_pallas.1} parent=1 // pred_fallthru
      _
    // Predicated region
    $region10: #{forward_pallas.1} parent=1 // pred_check
      _
    $region11: #{forward_pallas.1} parent=1 // pred_check_branch
      %52 = sbr.rel (0) target = $region13
    $region12: #{forward_pallas.1} parent=1 // pred_region
      _
    $region13: #{forward_pallas.1} parent=1 // pred_fallthru
      _
    // Predicated region
    $region14: #{forward_pallas.1} parent=1 // pred_check
      _
    $region15: #{forward_pallas.1} parent=1 // pred_check_branch
      %54 = sbr.rel (0) target = $region17
    $region16: #{forward_pallas.1} parent=1 // pred_region
      _
    $region17: #{forward_pallas.1} parent=1 // pred_fallthru
      _
    // Predicated region
    $region18: #{forward_pallas.1} parent=1 // pred_check
      _
    $region19: #{forward_pallas.1} parent=1 // pred_check_branch
      %56 = sbr.rel (0) target = $region21
    $region20: #{forward_pallas.1} parent=1 // pred_region
      _
    $region21: #{forward_pallas.1} parent=1 // pred_fallthru
      _
    // Predicated region
    $region22: #{forward_pallas.1} parent=1 // pred_check
      _
    $region23: #{forward_pallas.1} parent=1 // pred_check_branch
      %58 = sbr.rel (0) target = $region25
    $region24: #{forward_pallas.1} parent=1 // pred_region
      _
    $region25: #{forward_pallas.1} parent=1 // pred_fallthru
      _
    // Predicated region
    $region26: #{forward_pallas.1} parent=1 // pred_check
      _
    $region27: #{forward_pallas.1} parent=1 // pred_check_branch
      %60 = sbr.rel (0) target = $region29
    $region28: #{forward_pallas.1} parent=1 // pred_region
      _
    $region29: #{forward_pallas.1} parent=1 // pred_fallthru
      _
    // Predicated region
    $region30: #{forward_pallas.1} parent=1 // pred_check
      _
    $region31: #{forward_pallas.1} parent=1 // pred_check_branch
      %62 = sbr.rel (0) target = $region33
    $region32: #{forward_pallas.1} parent=1 // pred_region
      _
    $region33: #{forward_pallas.1} parent=1 // pred_fallthru
      _
    // Predicated region
    $region34: #{forward_pallas.1} parent=1 // pred_check
      _
    $region35: #{forward_pallas.1} parent=1 // pred_check_branch
      %64 = sbr.rel (0) target = $region37
    $region36: #{forward_pallas.1} parent=1 // pred_region
      _
    $region37: #{forward_pallas.1} parent=1 // pred_fallthru
      _
    // Predicated region
    $region38: #{forward_pallas.1} parent=1 // pred_check
      _
    $region39: #{forward_pallas.1} parent=1 // pred_check_branch
      %66 = sbr.rel (0) target = $region41
    $region40: #{forward_pallas.1} parent=1 // pred_region
      _
    $region41: #{forward_pallas.1} parent=1 // pred_fallthru
      _
    // Predicated region
    $region42: #{forward_pallas.1} parent=1 // pred_check
      _
    $region43: #{forward_pallas.1} parent=1 // pred_check_branch
      %68 = sbr.rel (0) target = $region45
    $region44: #{forward_pallas.1} parent=1 // pred_region
      _
    $region45: #{forward_pallas.1} parent=1 // pred_fallthru
      _
    // Predicated region
    $region46: #{forward_pallas.1} parent=1 // pred_check
      _
    $region47: #{forward_pallas.1} parent=1 // pred_check_branch
      %70 = sbr.rel (0) target = $region49
    $region48: #{forward_pallas.1} parent=1 // pred_region
      _
    $region49: #{forward_pallas.1} parent=1 // pred_fallthru
      _
    // Predicated region
    $region50: #{forward_pallas.1} parent=1 // pred_check
      _
    $region51: #{forward_pallas.1} parent=1 // pred_check_branch
      %72 = sbr.rel (0) target = $region53
    $region52: #{forward_pallas.1} parent=1 // pred_region
      _
    $region53: #{forward_pallas.1} parent=1 // pred_fallthru
      _
    // Predicated region
    $region54: #{forward_pallas.1} parent=1 // pred_check
      _
    $region55: #{forward_pallas.1} parent=1 // pred_check_branch
      %74 = sbr.rel (0) target = $region57
    $region56: #{forward_pallas.1} parent=1 // pred_region
      _
    $region57: #{forward_pallas.1} parent=1 // pred_fallthru
      _
    // Predicated region
    $region58: #{forward_pallas.1} parent=1 // pred_check
      _
    $region59: #{forward_pallas.1} parent=1 // pred_check_branch
      %76 = sbr.rel (0) target = $region61
    $region60: #{forward_pallas.1} parent=1 // pred_region
      _
    $region61: #{forward_pallas.1} parent=1 // pred_fallthru
      _
    // Predicated region
    $region62: #{forward_pallas.1} parent=1 // pred_check
      _
    $region63: #{forward_pallas.1} parent=1 // pred_check_branch
      %78 = sbr.rel (0) target = $region65
    $region64: #{forward_pallas.1} parent=1 // pred_region
      _
    $region65: #{forward_pallas.1} parent=1 // pred_fallthru
      _
    // Predicated region
    $region66: #{forward_pallas.1} parent=1 // pred_check
      _
    $region67: #{forward_pallas.1} parent=1 // pred_check_branch
      %80 = sbr.rel (0) target = $region69
    $region68: #{forward_pallas.1} parent=1 // pred_region
      _
    $region69: #{forward_pallas.1} parent=1 // pred_fallthru
      _
    // Predicated region
    $region70: #{forward_pallas.1} parent=1 // pred_check
      _
    $region71: #{forward_pallas.1} parent=1 // pred_check_branch
      %82 = sbr.rel (0) target = $region73
    $region72: #{forward_pallas.1} parent=1 // pred_region
      _
    $region73: #{forward_pallas.1} parent=1 // pred_fallthru
      _
    // Predicated region
    $region74: #{forward_pallas.1} parent=1 // pred_check
      _
    $region75: #{forward_pallas.1} parent=1 // pred_check_branch
      %84 = sbr.rel (0) target = $region77
    $region76: #{forward_pallas.1} parent=1 // pred_region
      _
    $region77: #{forward_pallas.1} parent=1 // pred_fallthru
      _
    // Predicated region
    $region78: #{forward_pallas.1} parent=1 // pred_check
      _
    $region79: #{forward_pallas.1} parent=1 // pred_check_branch
      %86 = sbr.rel (0) target = $region81
    $region80: #{forward_pallas.1} parent=1 // pred_region
      _
    $region81: #{forward_pallas.1} parent=1 // pred_fallthru
      _
    // Predicated region
    $region82: #{forward_pallas.1} parent=1 // pred_check
      _
    $region83: #{forward_pallas.1} parent=1 // pred_check_branch
      %88 = sbr.rel (0) target = $region85
    $region84: #{forward_pallas.1} parent=1 // pred_region
      _
    $region85: #{forward_pallas.1} parent=1 // pred_fallthru
      _
    // Predicated region
    $region86: #{forward_pallas.1} parent=1 // pred_check
      _
    $region87: #{forward_pallas.1} parent=1 // pred_check_branch
      %90 = sbr.rel (0) target = $region89
    $region88: #{forward_pallas.1} parent=1 // pred_region
      _
    $region89: #{forward_pallas.1} parent=1 // pred_fallthru
      _
    // Predicated region
    $region90: #{forward_pallas.1} parent=1 // pred_check
      _
    $region91: #{forward_pallas.1} parent=1 // pred_check_branch
      %92 = sbr.rel (0) target = $region93
    $region92: #{forward_pallas.1} parent=1 // pred_region
      _
    $region93: #{forward_pallas.1} parent=1 // pred_fallthru
      _
    // Predicated region
    $region94: #{forward_pallas.1} parent=1 // pred_check
      _
    $region95: #{forward_pallas.1} parent=1 // pred_check_branch
      %94 = sbr.rel (0) target = $region97
    $region96: #{forward_pallas.1} parent=1 // pred_region
      _
    $region97: #{forward_pallas.1} parent=1 // pred_fallthru
      _
    // Predicated region
    $region98: #{forward_pallas.1} parent=1 // pred_check
      _
    $region99: #{forward_pallas.1} parent=1 // pred_check_branch
      %96 = sbr.rel (0) target = $region101
    $region100: #{forward_pallas.1} parent=1 // pred_region
      _
    $region101: #{forward_pallas.1} parent=1 // pred_fallthru
      _
    // Predicated region
    $region102: #{forward_pallas.1} parent=1 // pred_check
      _
    $region103: #{forward_pallas.1} parent=1 // pred_check_branch
      %98 = sbr.rel (0) target = $region105
    $region104: #{forward_pallas.1} parent=1 // pred_region
      _
    $region105: #{forward_pallas.1} parent=1 // pred_fallthru
      _
    // Predicated region
    $region106: #{forward_pallas.1} parent=1 // pred_check
      _
    $region107: #{forward_pallas.1} parent=1 // pred_check_branch
      %100 = sbr.rel (0) target = $region109
    $region108: #{forward_pallas.1} parent=1 // pred_region
      %102 = dma.done [#allocation7], 16
    $region109: #{forward_pallas.1} parent=1 // pred_fallthru
      _
    // Predicated region
    $region110: #{forward_pallas.1} parent=1 // pred_check
      _
    $region111: #{forward_pallas.1} parent=1 // pred_check_branch
      %104 = sbr.rel (0) target = $region113
    $region112: #{forward_pallas.1} parent=1 // pred_region
      %106 = dma.done [#allocation9], 16
    $region113: #{forward_pallas.1} parent=1 // pred_fallthru
      _
    %107 = sfence
    %v108 = vlaneseq
    %v109 = vand.u32 %v108, 127
    %s110 = sld [smem:[#allocation6]]
    %v111 = vstv %s110
    %vm112 = vcmp.eq.s32.totalorder %v109, %v111
    %v113 = vsel %vm112, 1, 0
    %v114 = vcvt.s32.f32 %v113
    %115 = vst [vmem:[#allocation2] sm:$0x1] %v114
    %s116 = sld [smem:[#allocation6 + $0x1]]
    %v117 = vstv %s116
    %vm118 = vcmp.eq.s32.totalorder %v109, %v117
    %v119 = vsel %vm118, 1, 0
    %v120 = vcvt.s32.f32 %v119
    %121 = vst [vmem:[#allocation2 + $0x1] sm:$0x1] %v120
    %s122 = sld [smem:[#allocation6 + $0x2]]
    %v123 = vstv %s122
    %vm124 = vcmp.eq.s32.totalorder %v109, %v123
    %v125 = vsel %vm124, 1, 0
    %v126 = vcvt.s32.f32 %v125
    %127 = vst [vmem:[#allocation2 + $0x2] sm:$0x1] %v126
    %s128 = sld [smem:[#allocation6 + $0x3]]
    %v129 = vstv %s128
    %vm130 = vcmp.eq.s32.totalorder %v109, %v129
    %v131 = vsel %vm130, 1, 0
    %v132 = vcvt.s32.f32 %v131
    %133 = vst [vmem:[#allocation2 + $0x3] sm:$0x1] %v132
    %s134 = sld [smem:[#allocation6 + $0x4]]
    %v135 = vstv %s134
    %vm136 = vcmp.eq.s32.totalorder %v109, %v135
    %v137 = vsel %vm136, 1, 0
    %v138 = vcvt.s32.f32 %v137
    %139 = vst [vmem:[#allocation2 + $0x4] sm:$0x1] %v138
    %s140 = sld [smem:[#allocation6 + $0x5]]
    %v141 = vstv %s140
    %vm142 = vcmp.eq.s32.totalorder %v109, %v141
    %v143 = vsel %vm142, 1, 0
    %v144 = vcvt.s32.f32 %v143
    %145 = vst [vmem:[#allocation2 + $0x5] sm:$0x1] %v144
    %s146 = sld [smem:[#allocation6 + $0x6]]
    %v147 = vstv %s146
    %vm148 = vcmp.eq.s32.totalorder %v109, %v147
    %v149 = vsel %vm148, 1, 0
    %v150 = vcvt.s32.f32 %v149
    %151 = vst [vmem:[#allocation2 + $0x6] sm:$0x1] %v150
    %s152 = sld [smem:[#allocation6 + $0x7]]
    %v153 = vstv %s152
    %vm154 = vcmp.eq.s32.totalorder %v109, %v153
    %v155 = vsel %vm154, 1, 0
    %v156 = vcvt.s32.f32 %v155
    %157 = vst [vmem:[#allocation2 + $0x7] sm:$0x1] %v156
    %v158 = vld [vmem:[#allocation2] sm:$0xff]
    %v159 = vld [vmem:[%s2] sm:$0xff]
    %v160 = vld [vmem:[%s2 + $0x8] sm:$0xff]
    %v161 = vld [vmem:[%s2 + $0x10] sm:$0xff]
    %v162 = vld [vmem:[%s2 + $0x18] sm:$0xff]
    %v163 = vld [vmem:[%s2 + $0x20] sm:$0xff]
    %v164 = vld [vmem:[%s2 + $0x28] sm:$0xff]
    %v165 = vld [vmem:[%s2 + $0x30] sm:$0xff]
    %v166 = vld [vmem:[%s2 + $0x38] sm:$0xff]
    %v167 = vld [vmem:[%s2 + $0x40] sm:$0xff]
    %v168 = vld [vmem:[%s2 + $0x48] sm:$0xff]
    %v169 = vld [vmem:[%s2 + $0x50] sm:$0xff]
    %v170 = vld [vmem:[%s2 + $0x58] sm:$0xff]
    %v171 = vld [vmem:[%s2 + $0x60] sm:$0xff]
    %v172 = vld [vmem:[%s2 + $0x68] sm:$0xff]
    %v173 = vld [vmem:[%s2 + $0x70] sm:$0xff]
    %v174 = vld [vmem:[%s2 + $0x78] sm:$0xff]
    %175 = vmatpush.msra.mxu0 %v174
    %176 = vmatpush.msra.mxu0 %v173
    %177 = vmatpush.msra.mxu0 %v172
    %178 = vmatpush.msra.mxu0 %v171
    %179 = vmatpush.msra.mxu0 %v170
    %180 = vmatpush.msra.mxu0 %v169
    %181 = vmatpush.msra.mxu0 %v168
    %182 = vmatpush.msra.mxu0 %v167
    %183 = vmatpush.msra.mxu0 %v166
    %184 = vmatpush.msra.mxu0 %v165
    %185 = vmatpush.msra.mxu0 %v164
    %186 = vmatpush.msra.mxu0 %v163
    %187 = vmatpush.msra.mxu0 %v162
    %188 = vmatpush.msra.mxu0 %v161
    %189 = vmatpush.msra.mxu0 %v160
    %190 = vmatpush.msra.mxu0 %v159
    %191 = vmatmul.f32.gmra.mxu0 %v158
    %v192 = vpop.f32.mrf.mxu0
    %v193 = vadd.f32 0.0, %v192
    %194 = vdwg.mxu0
    %v195 = vld [vmem:[%s4] sm:$0xff]
    %v196 = vld [vmem:[%s4 + $0x8] sm:$0xff]
    %v197 = vld [vmem:[%s4 + $0x10] sm:$0xff]
    %v198 = vld [vmem:[%s4 + $0x18] sm:$0xff]
    %v199 = vld [vmem:[%s4 + $0x20] sm:$0xff]
    %v200 = vld [vmem:[%s4 + $0x28] sm:$0xff]
    %v201 = vld [vmem:[%s4 + $0x30] sm:$0xff]
    %v202 = vld [vmem:[%s4 + $0x38] sm:$0xff]
    %v203 = vld [vmem:[%s5] sm:$0xff]
    %v204 = vld [vmem:[%s5 + $0x8] sm:$0xff]
    %v205 = vld [vmem:[%s5 + $0x10] sm:$0xff]
    %v206 = vld [vmem:[%s5 + $0x18] sm:$0xff]
    %v207 = vld [vmem:[%s6] sm:$0xff]
    %v208 = vld [vmem:[%s6 + $0x8] sm:$0xff]
    %v209 = vld [vmem:[%s6 + $0x10] sm:$0xff]
    %v210 = vld [vmem:[%s6 + $0x18] sm:$0xff]
    %v211 = vld [vmem:[%s7] sm:$0x3]
    %v213 = vperm.slane %v211, 0
    %v214 = vperm.slane %v211, 1
    %vm217 = vcmask 261120
    %v219 = vsel %vm217, %v193, 0
    %221 = vmatpush.msra.mxu0 0.0
    %222 = vmatpush.msra.mxu0 0.0
    %223 = vmatpush.msra.mxu0 0.0
    %224 = vmatpush.msra.mxu0 0.0
    %225 = vmatpush.msra.mxu0 0.0
    %226 = vmatpush.msra.mxu0 0.0
    %227 = vmatpush.msra.mxu0 0.0
    %228 = vmatpush.msra.mxu0 0.0
    %229 = vmatpush.msra.mxu0 0.0
    %230 = vmatpush.msra.mxu0 0.0
    %231 = vmatpush.msra.mxu0 0.0
    %232 = vmatpush.msra.mxu0 0.0
    %233 = vmatpush.msra.mxu0 %v201
    %234 = vmatpush.msra.mxu0 %v199
    %235 = vmatpush.msra.mxu0 %v197
    %236 = vmatpush.msra.mxu0 %v195
    %237 = vmatmul.f32.gmra.mxu0 %v219
    %v238 = vpop.f32.mrf.mxu0
    %v239 = vadd.f32 %v213, %v238
    %240 = vdwg.mxu0
    %241 = vmatpush.msra.mxu0 0.0
    %242 = vmatpush.msra.mxu0 0.0
    %243 = vmatpush.msra.mxu0 0.0
    %244 = vmatpush.msra.mxu0 0.0
    %245 = vmatpush.msra.mxu0 0.0
    %246 = vmatpush.msra.mxu0 0.0
    %247 = vmatpush.msra.mxu0 0.0
    %248 = vmatpush.msra.mxu0 0.0
    %249 = vmatpush.msra.mxu0 0.0
    %250 = vmatpush.msra.mxu0 0.0
    %251 = vmatpush.msra.mxu0 0.0
    %252 = vmatpush.msra.mxu0 0.0
    %253 = vmatpush.msra.mxu0 %v202
    %254 = vmatpush.msra.mxu0 %v200
    %255 = vmatpush.msra.mxu0 %v198
    %256 = vmatpush.msra.mxu0 %v196
    %257 = vmatmul.f32.gmra.mxu0 %v219
    %v258 = vpop.f32.mrf.mxu0
    %v259 = vadd.f32 %v214, %v258
    %260 = vdwg.mxu0
    %v262 = vsel %vm217, 0.0, 0
    %264 = vmatpush.msra.mxu0 0.0
    %265 = vmatpush.msra.mxu0 0.0
    %266 = vmatpush.msra.mxu0 0.0
    %267 = vmatpush.msra.mxu0 0.0
    %268 = vmatpush.msra.mxu0 0.0
    %269 = vmatpush.msra.mxu0 0.0
    %270 = vmatpush.msra.mxu0 0.0
    %271 = vmatpush.msra.mxu0 0.0
    %272 = vmatpush.msra.mxu0 0.0
    %273 = vmatpush.msra.mxu0 0.0
    %274 = vmatpush.msra.mxu0 0.0
    %275 = vmatpush.msra.mxu0 0.0
    %276 = vmatpush.msra.mxu0 %v206
    %277 = vmatpush.msra.mxu0 %v205
    %278 = vmatpush.msra.mxu0 %v204
    %279 = vmatpush.msra.mxu0 %v203
    %280 = vmatmul.f32.gmra.mxu0 %v262
    %v281 = vpop.f32.mrf.mxu0
    %v282 = vadd.f32 0.0, %v281
    %283 = vdwg.mxu0
    %v284 = vadd.f32 %v239, %v282
    %v285 = vxor.u32 %v284, 2147483648
    %v286 = vmul.f32 %v285, 1.442695
    %v287 = vpow.pop %v286
    %v288 = vadd.f32 %v287, 1.0
    %v289 = vrcp.pop %v288
    %v290 = vmul.f32 %v288, %v289
    %v291 = vsub.f32 1.0, %v290
    %v292 = vmul.f32 %v289, %v291
    %v293 = vadd.f32 %v289, %v292
    %vm294 = vweird.f32 %v288
    %vm295 = vweird.f32 %v289
    %vm296 = vmor %vm294, %vm295
    %v297 = vsel %vm296, %v289, %v293
    %v298 = vand.u32 2147483647, %v288
    %vm299 = vcmp.eq.f32.partialorder %v298, 8.507059e+37
    %v300 = vand.u32 %v288, 2147483648
    %v301 = vor.u32 1.1754944e-38, %v300
    %v302 = vsel %vm299, %v301, %v297
    %v303 = vmul.f32 1.0, %v302
    %v304 = vtanh.pop %v284
    %v305 = vmul.f32 %v303, 0.0
    %307 = vrot.lane.b32.xlu0 %v304, 64
    %v308 = vpop.permute.xlu0 %307
    %v310 = vmul.f32 %v303, %v308
    %312 = vrot.lane.b32.xlu0 %v310, 32
    %v313 = vpop.permute.xlu0 %312
    %v315 = vadd.f32 %v305, %v313
    %v316 = vtanh.pop %v315
    %318 = vrot.lane.b32.xlu0 %v316, 64
    %v319 = vpop.permute.xlu0 %318
    %v321 = vmul.f32 %v303, %v319
    %322 = vmatpush.msra.mxu0 0.0
    %323 = vmatpush.msra.mxu0 0.0
    %324 = vmatpush.msra.mxu0 0.0
    %325 = vmatpush.msra.mxu0 0.0
    %326 = vmatpush.msra.mxu0 0.0
    %327 = vmatpush.msra.mxu0 0.0
    %328 = vmatpush.msra.mxu0 0.0
    %329 = vmatpush.msra.mxu0 0.0
    %330 = vmatpush.msra.mxu0 0.0
    %331 = vmatpush.msra.mxu0 0.0
    %332 = vmatpush.msra.mxu0 0.0
    %333 = vmatpush.msra.mxu0 0.0
    %334 = vmatpush.msra.mxu0 %v210
    %335 = vmatpush.msra.mxu0 %v209
    %336 = vmatpush.msra.mxu0 %v208
    %337 = vmatpush.msra.mxu0 %v207
    %338 = vmatmul.f32.gmra.mxu0 %v262
    %v339 = vpop.f32.mrf.mxu0
    %v340 = vadd.f32 0.0, %v339
    %341 = vdwg.mxu0
    %v343 = vrot.slane %v340, 1
    %v345 = vadd.f32 %v259, %v343
    %v346 = vxor.u32 %v345, 2147483648
    %v347 = vmul.f32 %v346, 1.442695
    %v348 = vpow.pop %v347
    %v349 = vadd.f32 %v348, 1.0
    %v350 = vrcp.pop %v349
    %v351 = vmul.f32 %v349, %v350
    %v352 = vsub.f32 1.0, %v351
    %v353 = vmul.f32 %v350, %v352
    %v354 = vadd.f32 %v350, %v353
    %vm355 = vweird.f32 %v349
    %vm356 = vweird.f32 %v350
    %vm357 = vmor %vm355, %vm356
    %v358 = vsel %vm357, %v350, %v354
    %v359 = vand.u32 2147483647, %v349
    %vm360 = vcmp.eq.f32.partialorder %v359, 8.507059e+37
    %v361 = vand.u32 %v349, 2147483648
    %v362 = vor.u32 1.1754944e-38, %v361
    %v363 = vsel %vm360, %v362, %v358
    %v364 = vmul.f32 1.0, %v363
    %v365 = vtanh.pop %v345
    %v366 = vmul.f32 %v364, 0.0
    %368 = vrot.lane.b32.xlu0 %v365, 64
    %v369 = vpop.permute.xlu0 %368
    %v371 = vmul.f32 %v364, %v369
    %373 = vrot.lane.b32.xlu0 %v371, 32
    %v374 = vpop.permute.xlu0 %373
    %v376 = vadd.f32 %v366, %v374
    %v377 = vtanh.pop %v376
    %379 = vrot.lane.b32.xlu0 %v377, 64
    %v380 = vpop.permute.xlu0 %379
    %v382 = vmul.f32 %v364, %v380
    %384 = vrot.lane.b32.xlu0 %v321, 32
    %v385 = vpop.permute.xlu0 %384
    %vm387 = vcmask 253952
    %388 = vst.msk [vmem:[#allocation3] sm:$0x1] %vm387, %v385
    %390 = vrot.lane.b32.xlu0 %v382, 64
    %v391 = vpop.permute.xlu0 %390
    %vm393 = vcmask 523527
    %394 = vst.msk [vmem:[#allocation3] sm:$0x80] %vm393, %v391
    %v395 = vsel %vm217, %v385, 0
    %397 = vmatpush.msra.mxu0 0.0
    %398 = vmatpush.msra.mxu0 0.0
    %399 = vmatpush.msra.mxu0 0.0
    %400 = vmatpush.msra.mxu0 0.0
    %401 = vmatpush.msra.mxu0 0.0
    %402 = vmatpush.msra.mxu0 0.0
    %403 = vmatpush.msra.mxu0 0.0
    %404 = vmatpush.msra.mxu0 0.0
    %405 = vmatpush.msra.mxu0 0.0
    %406 = vmatpush.msra.mxu0 0.0
    %407 = vmatpush.msra.mxu0 0.0
    %408 = vmatpush.msra.mxu0 0.0
    %409 = vmatpush.msra.mxu0 %v206
    %410 = vmatpush.msra.mxu0 %v205
    %411 = vmatpush.msra.mxu0 %v204
    %412 = vmatpush.msra.mxu0 %v203
    %413 = vmatmul.f32.gmra.mxu0 %v395
    %v414 = vpop.f32.mrf.mxu0
    %v415 = vadd.f32 0.0, %v414
    %416 = vdwg.mxu0
    %v418 = vrot.slane %v415, 7
    %v420 = vadd.f32 %v239, %v418
    %v421 = vxor.u32 %v420, 2147483648
    %v422 = vmul.f32 %v421, 1.442695
    %v423 = vpow.pop %v422
    %v424 = vadd.f32 %v423, 1.0
    %v425 = vrcp.pop %v424
    %v426 = vmul.f32 %v424, %v425
    %v427 = vsub.f32 1.0, %v426
    %v428 = vmul.f32 %v425, %v427
    %v429 = vadd.f32 %v425, %v428
    %vm430 = vweird.f32 %v424
    %vm431 = vweird.f32 %v425
    %vm432 = vmor %vm430, %vm431
    %v433 = vsel %vm432, %v425, %v429
    %v434 = vand.u32 2147483647, %v424
    %vm435 = vcmp.eq.f32.partialorder %v434, 8.507059e+37
    %v436 = vand.u32 %v424, 2147483648
    %v437 = vor.u32 1.1754944e-38, %v436
    %v438 = vsel %vm435, %v437, %v433
    %v439 = vmul.f32 1.0, %v438
    %v440 = vtanh.pop %v420
    %v442 = vrot.slane %v315, 7
    %v444 = vmul.f32 %v439, %v442
    %446 = vrot.lane.b32.xlu0 %v440, 64
    %v447 = vpop.permute.xlu0 %446
    %v449 = vmul.f32 %v439, %v447
    %451 = vrot.lane.b32.xlu0 %v449, 32
    %v452 = vpop.permute.xlu0 %451
    %v454 = vadd.f32 %v444, %v452
    %v455 = vtanh.pop %v454
    %457 = vrot.lane.b32.xlu0 %v455, 64
    %v458 = vpop.permute.xlu0 %457
    %v460 = vmul.f32 %v439, %v458
    %v461 = vrot.slane %v382, 7
    %462 = vrot.lane.b32.xlu0 %v461, 32
    %v463 = vpop.permute.xlu0 %462
    %v464 = vsel %vm217, %v463, 0
    %466 = vmatpush.msra.mxu0 0.0
    %467 = vmatpush.msra.mxu0 0.0
    %468 = vmatpush.msra.mxu0 0.0
    %469 = vmatpush.msra.mxu0 0.0
    %470 = vmatpush.msra.mxu0 0.0
    %471 = vmatpush.msra.mxu0 0.0
    %472 = vmatpush.msra.mxu0 0.0
    %473 = vmatpush.msra.mxu0 0.0
    %474 = vmatpush.msra.mxu0 0.0
    %475 = vmatpush.msra.mxu0 0.0
    %476 = vmatpush.msra.mxu0 0.0
    %477 = vmatpush.msra.mxu0 0.0
    %478 = vmatpush.msra.mxu0 %v210
    %479 = vmatpush.msra.mxu0 %v209
    %480 = vmatpush.msra.mxu0 %v208
    %481 = vmatpush.msra.mxu0 %v207
    %482 = vmatmul.f32.gmra.mxu0 %v464
    %v483 = vpop.f32.mrf.mxu0
    %v484 = vadd.f32 0.0, %v483
    %485 = vdwg.mxu0
    %v487 = vrot.slane %v484, 2
    %v489 = vadd.f32 %v259, %v487
    %v490 = vxor.u32 %v489, 2147483648
    %v491 = vmul.f32 %v490, 1.442695
    %v492 = vpow.pop %v491
    %v493 = vadd.f32 %v492, 1.0
    %v494 = vrcp.pop %v493
    %v495 = vmul.f32 %v493, %v494
    %v496 = vsub.f32 1.0, %v495
    %v497 = vmul.f32 %v494, %v496
    %v498 = vadd.f32 %v494, %v497
    %vm499 = vweird.f32 %v493
    %vm500 = vweird.f32 %v494
    %vm501 = vmor %vm499, %vm500
    %v502 = vsel %vm501, %v494, %v498
    %v503 = vand.u32 2147483647, %v493
    %vm504 = vcmp.eq.f32.partialorder %v503, 8.507059e+37
    %v505 = vand.u32 %v493, 2147483648
    %v506 = vor.u32 1.1754944e-38, %v505
    %v507 = vsel %vm504, %v506, %v502
    %v508 = vmul.f32 1.0, %v507
    %v509 = vtanh.pop %v489
    %v511 = vrot.slane %v376, 1
    %v513 = vmul.f32 %v508, %v511
    %515 = vrot.lane.b32.xlu0 %v509, 64
    %v516 = vpop.permute.xlu0 %515
    %v518 = vmul.f32 %v508, %v516
    %520 = vrot.lane.b32.xlu0 %v518, 32
    %v521 = vpop.permute.xlu0 %520
    %v523 = vadd.f32 %v513, %v521
    %v524 = vtanh.pop %v523
    %526 = vrot.lane.b32.xlu0 %v524, 64
    %v527 = vpop.permute.xlu0 %526
    %v529 = vmul.f32 %v508, %v527
    %531 = vrot.lane.b32.xlu0 %v460, 32
    %v532 = vpop.permute.xlu0 %531
    %vm534 = vcmask 254977
    %535 = vst.msk [vmem:[#allocation3] sm:$0x2] %vm534, %v532
    %537 = vrot.lane.b32.xlu0 %v529, 64
    %v538 = vpop.permute.xlu0 %537
    %vm540 = vcmask 522502
    %541 = vst.msk [vmem:[#allocation3] sm:$0x40] %vm540, %v538
    %v542 = vrot.slane %v460, 1
    %543 = vrot.lane.b32.xlu0 %v542, 32
    %v544 = vpop.permute.xlu0 %543
    %v545 = vsel %vm217, %v544, 0
    %547 = vmatpush.msra.mxu0 0.0
    %548 = vmatpush.msra.mxu0 0.0
    %549 = vmatpush.msra.mxu0 0.0
    %550 = vmatpush.msra.mxu0 0.0
    %551 = vmatpush.msra.mxu0 0.0
    %552 = vmatpush.msra.mxu0 0.0
    %553 = vmatpush.msra.mxu0 0.0
    %554 = vmatpush.msra.mxu0 0.0
    %555 = vmatpush.msra.mxu0 0.0
    %556 = vmatpush.msra.mxu0 0.0
    %557 = vmatpush.msra.mxu0 0.0
    %558 = vmatpush.msra.mxu0 0.0
    %559 = vmatpush.msra.mxu0 %v206
    %560 = vmatpush.msra.mxu0 %v205
    %561 = vmatpush.msra.mxu0 %v204
    %562 = vmatpush.msra.mxu0 %v203
    %563 = vmatmul.f32.gmra.mxu0 %v545
    %v564 = vpop.f32.mrf.mxu0
    %v565 = vadd.f32 0.0, %v564
    %566 = vdwg.mxu0
    %v568 = vrot.slane %v565, 6
    %v570 = vadd.f32 %v239, %v568
    %v571 = vxor.u32 %v570, 2147483648
    %v572 = vmul.f32 %v571, 1.442695
    %v573 = vpow.pop %v572
    %v574 = vadd.f32 %v573, 1.0
    %v575 = vrcp.pop %v574
    %v576 = vmul.f32 %v574, %v575
    %v577 = vsub.f32 1.0, %v576
    %v578 = vmul.f32 %v575, %v577
    %v579 = vadd.f32 %v575, %v578
    %vm580 = vweird.f32 %v574
    %vm581 = vweird.f32 %v575
    %vm582 = vmor %vm580, %vm581
    %v583 = vsel %vm582, %v575, %v579
    %v584 = vand.u32 2147483647, %v574
    %vm585 = vcmp.eq.f32.partialorder %v584, 8.507059e+37
    %v586 = vand.u32 %v574, 2147483648
    %v587 = vor.u32 1.1754944e-38, %v586
    %v588 = vsel %vm585, %v587, %v583
    %v589 = vmul.f32 1.0, %v588
    %v590 = vtanh.pop %v570
    %v592 = vrot.slane %v454, 7
    %v594 = vmul.f32 %v589, %v592
    %596 = vrot.lane.b32.xlu0 %v590, 64
    %v597 = vpop.permute.xlu0 %596
    %v599 = vmul.f32 %v589, %v597
    %601 = vrot.lane.b32.xlu0 %v599, 32
    %v602 = vpop.permute.xlu0 %601
    %v604 = vadd.f32 %v594, %v602
    %v605 = vtanh.pop %v604
    %607 = vrot.lane.b32.xlu0 %v605, 64
    %v608 = vpop.permute.xlu0 %607
    %v610 = vmul.f32 %v589, %v608
    %v611 = vrot.slane %v529, 6
    %612 = vrot.lane.b32.xlu0 %v611, 32
    %v613 = vpop.permute.xlu0 %612
    %v614 = vsel %vm217, %v613, 0
    %616 = vmatpush.msra.mxu0 0.0
    %617 = vmatpush.msra.mxu0 0.0
    %618 = vmatpush.msra.mxu0 0.0
    %619 = vmatpush.msra.mxu0 0.0
    %620 = vmatpush.msra.mxu0 0.0
    %621 = vmatpush.msra.mxu0 0.0
    %622 = vmatpush.msra.mxu0 0.0
    %623 = vmatpush.msra.mxu0 0.0
    %624 = vmatpush.msra.mxu0 0.0
    %625 = vmatpush.msra.mxu0 0.0
    %626 = vmatpush.msra.mxu0 0.0
    %627 = vmatpush.msra.mxu0 0.0
    %628 = vmatpush.msra.mxu0 %v210
    %629 = vmatpush.msra.mxu0 %v209
    %630 = vmatpush.msra.mxu0 %v208
    %631 = vmatpush.msra.mxu0 %v207
    %632 = vmatmul.f32.gmra.mxu0 %v614
    %v633 = vpop.f32.mrf.mxu0
    %v634 = vadd.f32 0.0, %v633
    %635 = vdwg.mxu0
    %v637 = vrot.slane %v634, 3
    %v639 = vadd.f32 %v259, %v637
    %v640 = vxor.u32 %v639, 2147483648
    %v641 = vmul.f32 %v640, 1.442695
    %v642 = vpow.pop %v641
    %v643 = vadd.f32 %v642, 1.0
    %v644 = vrcp.pop %v643
    %v645 = vmul.f32 %v643, %v644
    %v646 = vsub.f32 1.0, %v645
    %v647 = vmul.f32 %v644, %v646
    %v648 = vadd.f32 %v644, %v647
    %vm649 = vweird.f32 %v643
    %vm650 = vweird.f32 %v644
    %vm651 = vmor %vm649, %vm650
    %v652 = vsel %vm651, %v644, %v648
    %v653 = vand.u32 2147483647, %v643
    %vm654 = vcmp.eq.f32.partialorder %v653, 8.507059e+37
    %v655 = vand.u32 %v643, 2147483648
    %v656 = vor.u32 1.1754944e-38, %v655
    %v657 = vsel %vm654, %v656, %v652
    %v658 = vmul.f32 1.0, %v657
    %v659 = vtanh.pop %v639
    %v661 = vrot.slane %v523, 1
    %v663 = vmul.f32 %v658, %v661
    %665 = vrot.lane.b32.xlu0 %v659, 64
    %v666 = vpop.permute.xlu0 %665
    %v668 = vmul.f32 %v658, %v666
    %670 = vrot.lane.b32.xlu0 %v668, 32
    %v671 = vpop.permute.xlu0 %670
    %v673 = vadd.f32 %v663, %v671
    %v674 = vtanh.pop %v673
    %676 = vrot.lane.b32.xlu0 %v674, 64
    %v677 = vpop.permute.xlu0 %676
    %v679 = vmul.f32 %v658, %v677
    %681 = vrot.lane.b32.xlu0 %v610, 32
    %v682 = vpop.permute.xlu0 %681
    %vm684 = vcmask 256002
    %685 = vst.msk [vmem:[#allocation3] sm:$0x4] %vm684, %v682
    %687 = vrot.lane.b32.xlu0 %v679, 64
    %v688 = vpop.permute.xlu0 %687
    %vm690 = vcmask 521477
    %691 = vst.msk [vmem:[#allocation3] sm:$0x20] %vm690, %v688
    %v692 = vrot.slane %v610, 2
    %693 = vrot.lane.b32.xlu0 %v692, 32
    %v694 = vpop.permute.xlu0 %693
    %v695 = vsel %vm217, %v694, 0
    %697 = vmatpush.msra.mxu0 0.0
    %698 = vmatpush.msra.mxu0 0.0
    %699 = vmatpush.msra.mxu0 0.0
    %700 = vmatpush.msra.mxu0 0.0
    %701 = vmatpush.msra.mxu0 0.0
    %702 = vmatpush.msra.mxu0 0.0
    %703 = vmatpush.msra.mxu0 0.0
    %704 = vmatpush.msra.mxu0 0.0
    %705 = vmatpush.msra.mxu0 0.0
    %706 = vmatpush.msra.mxu0 0.0
    %707 = vmatpush.msra.mxu0 0.0
    %708 = vmatpush.msra.mxu0 0.0
    %709 = vmatpush.msra.mxu0 %v206
    %710 = vmatpush.msra.mxu0 %v205
    %711 = vmatpush.msra.mxu0 %v204
    %712 = vmatpush.msra.mxu0 %v203
    %713 = vmatmul.f32.gmra.mxu0 %v695
    %v714 = vpop.f32.mrf.mxu0
    %v715 = vadd.f32 0.0, %v714
    %716 = vdwg.mxu0
    %v718 = vrot.slane %v715, 5
    %v720 = vadd.f32 %v239, %v718
    %v721 = vxor.u32 %v720, 2147483648
    %v722 = vmul.f32 %v721, 1.442695
    %v723 = vpow.pop %v722
    %v724 = vadd.f32 %v723, 1.0
    %v725 = vrcp.pop %v724
    %v726 = vmul.f32 %v724, %v725
    %v727 = vsub.f32 1.0, %v726
    %v728 = vmul.f32 %v725, %v727
    %v729 = vadd.f32 %v725, %v728
    %vm730 = vweird.f32 %v724
    %vm731 = vweird.f32 %v725
    %vm732 = vmor %vm730, %vm731
    %v733 = vsel %vm732, %v725, %v729
    %v734 = vand.u32 2147483647, %v724
    %vm735 = vcmp.eq.f32.partialorder %v734, 8.507059e+37
    %v736 = vand.u32 %v724, 2147483648
    %v737 = vor.u32 1.1754944e-38, %v736
    %v738 = vsel %vm735, %v737, %v733
    %v739 = vmul.f32 1.0, %v738
    %v740 = vtanh.pop %v720
    %v742 = vrot.slane %v604, 7
    %v744 = vmul.f32 %v739, %v742
    %746 = vrot.lane.b32.xlu0 %v740, 64
    %v747 = vpop.permute.xlu0 %746
    %v749 = vmul.f32 %v739, %v747
    %751 = vrot.lane.b32.xlu0 %v749, 32
    %v752 = vpop.permute.xlu0 %751
    %v754 = vadd.f32 %v744, %v752
    %v755 = vtanh.pop %v754
    %757 = vrot.lane.b32.xlu0 %v755, 64
    %v758 = vpop.permute.xlu0 %757
    %v760 = vmul.f32 %v739, %v758
    %v761 = vrot.slane %v679, 5
    %762 = vrot.lane.b32.xlu0 %v761, 32
    %v763 = vpop.permute.xlu0 %762
    %v764 = vsel %vm217, %v763, 0
    %766 = vmatpush.msra.mxu0 0.0
    %767 = vmatpush.msra.mxu0 0.0
    %768 = vmatpush.msra.mxu0 0.0
    %769 = vmatpush.msra.mxu0 0.0
    %770 = vmatpush.msra.mxu0 0.0
    %771 = vmatpush.msra.mxu0 0.0
    %772 = vmatpush.msra.mxu0 0.0
    %773 = vmatpush.msra.mxu0 0.0
    %774 = vmatpush.msra.mxu0 0.0
    %775 = vmatpush.msra.mxu0 0.0
    %776 = vmatpush.msra.mxu0 0.0
    %777 = vmatpush.msra.mxu0 0.0
    %778 = vmatpush.msra.mxu0 %v210
    %779 = vmatpush.msra.mxu0 %v209
    %780 = vmatpush.msra.mxu0 %v208
    %781 = vmatpush.msra.mxu0 %v207
    %782 = vmatmul.f32.gmra.mxu0 %v764
    %v783 = vpop.f32.mrf.mxu0
    %v784 = vadd.f32 0.0, %v783
    %785 = vdwg.mxu0
    %v787 = vrot.slane %v784, 4
    %v789 = vadd.f32 %v259, %v787
    %v790 = vxor.u32 %v789, 2147483648
    %v791 = vmul.f32 %v790, 1.442695
    %v792 = vpow.pop %v791
    %v793 = vadd.f32 %v792, 1.0
    %v794 = vrcp.pop %v793
    %v795 = vmul.f32 %v793, %v794
    %v796 = vsub.f32 1.0, %v795
    %v797 = vmul.f32 %v794, %v796
    %v798 = vadd.f32 %v794, %v797
    %vm799 = vweird.f32 %v793
    %vm800 = vweird.f32 %v794
    %vm801 = vmor %vm799, %vm800
    %v802 = vsel %vm801, %v794, %v798
    %v803 = vand.u32 2147483647, %v793
    %vm804 = vcmp.eq.f32.partialorder %v803, 8.507059e+37
    %v805 = vand.u32 %v793, 2147483648
    %v806 = vor.u32 1.1754944e-38, %v805
    %v807 = vsel %vm804, %v806, %v802
    %v808 = vmul.f32 1.0, %v807
    %v809 = vtanh.pop %v789
    %v811 = vrot.slane %v673, 1
    %v813 = vmul.f32 %v808, %v811
    %815 = vrot.lane.b32.xlu0 %v809, 64
    %v816 = vpop.permute.xlu0 %815
    %v818 = vmul.f32 %v808, %v816
    %820 = vrot.lane.b32.xlu0 %v818, 32
    %v821 = vpop.permute.xlu0 %820
    %v823 = vadd.f32 %v813, %v821
    %v824 = vtanh.pop %v823
    %826 = vrot.lane.b32.xlu0 %v824, 64
    %v827 = vpop.permute.xlu0 %826
    %v829 = vmul.f32 %v808, %v827
    %831 = vrot.lane.b32.xlu0 %v760, 32
    %v832 = vpop.permute.xlu0 %831
    %vm834 = vcmask 257027
    %835 = vst.msk [vmem:[#allocation3] sm:$0x8] %vm834, %v832
    %837 = vrot.lane.b32.xlu0 %v829, 64
    %v838 = vpop.permute.xlu0 %837
    %vm840 = vcmask 520452
    %841 = vst.msk [vmem:[#allocation3] sm:$0x10] %vm840, %v838
    %v842 = vrot.slane %v760, 3
    %843 = vrot.lane.b32.xlu0 %v842, 32
    %v844 = vpop.permute.xlu0 %843
    %v845 = vsel %vm217, %v844, 0
    %847 = vmatpush.msra.mxu0 0.0
    %848 = vmatpush.msra.mxu0 0.0
    %849 = vmatpush.msra.mxu0 0.0
    %850 = vmatpush.msra.mxu0 0.0
    %851 = vmatpush.msra.mxu0 0.0
    %852 = vmatpush.msra.mxu0 0.0
    %853 = vmatpush.msra.mxu0 0.0
    %854 = vmatpush.msra.mxu0 0.0
    %855 = vmatpush.msra.mxu0 0.0
    %856 = vmatpush.msra.mxu0 0.0
    %857 = vmatpush.msra.mxu0 0.0
    %858 = vmatpush.msra.mxu0 0.0
    %859 = vmatpush.msra.mxu0 %v206
    %860 = vmatpush.msra.mxu0 %v205
    %861 = vmatpush.msra.mxu0 %v204
    %862 = vmatpush.msra.mxu0 %v203
    %863 = vmatmul.f32.gmra.mxu0 %v845
    %v864 = vpop.f32.mrf.mxu0
    %v865 = vadd.f32 0.0, %v864
    %866 = vdwg.mxu0
    %v868 = vrot.slane %v865, 4
    %v870 = vadd.f32 %v239, %v868
    %v871 = vxor.u32 %v870, 2147483648
    %v872 = vmul.f32 %v871, 1.442695
    %v873 = vpow.pop %v872
    %v874 = vadd.f32 %v873, 1.0
    %v875 = vrcp.pop %v874
    %v876 = vmul.f32 %v874, %v875
    %v877 = vsub.f32 1.0, %v876
    %v878 = vmul.f32 %v875, %v877
    %v879 = vadd.f32 %v875, %v878
    %vm880 = vweird.f32 %v874
    %vm881 = vweird.f32 %v875
    %vm882 = vmor %vm880, %vm881
    %v883 = vsel %vm882, %v875, %v879
    %v884 = vand.u32 2147483647, %v874
    %vm885 = vcmp.eq.f32.partialorder %v884, 8.507059e+37
    %v886 = vand.u32 %v874, 2147483648
    %v887 = vor.u32 1.1754944e-38, %v886
    %v888 = vsel %vm885, %v887, %v883
    %v889 = vmul.f32 1.0, %v888
    %v890 = vtanh.pop %v870
    %v892 = vrot.slane %v754, 7
    %v894 = vmul.f32 %v889, %v892
    %896 = vrot.lane.b32.xlu0 %v890, 64
    %v897 = vpop.permute.xlu0 %896
    %v899 = vmul.f32 %v889, %v897
    %901 = vrot.lane.b32.xlu0 %v899, 32
    %v902 = vpop.permute.xlu0 %901
    %v904 = vadd.f32 %v894, %v902
    %v905 = vtanh.pop %v904
    %907 = vrot.lane.b32.xlu0 %v905, 64
    %v908 = vpop.permute.xlu0 %907
    %v910 = vmul.f32 %v889, %v908
    %v911 = vrot.slane %v829, 4
    %912 = vrot.lane.b32.xlu0 %v911, 32
    %v913 = vpop.permute.xlu0 %912
    %v914 = vsel %vm217, %v913, 0
    %916 = vmatpush.msra.mxu0 0.0
    %917 = vmatpush.msra.mxu0 0.0
    %918 = vmatpush.msra.mxu0 0.0
    %919 = vmatpush.msra.mxu0 0.0
    %920 = vmatpush.msra.mxu0 0.0
    %921 = vmatpush.msra.mxu0 0.0
    %922 = vmatpush.msra.mxu0 0.0
    %923 = vmatpush.msra.mxu0 0.0
    %924 = vmatpush.msra.mxu0 0.0
    %925 = vmatpush.msra.mxu0 0.0
    %926 = vmatpush.msra.mxu0 0.0
    %927 = vmatpush.msra.mxu0 0.0
    %928 = vmatpush.msra.mxu0 %v210
    %929 = vmatpush.msra.mxu0 %v209
    %930 = vmatpush.msra.mxu0 %v208
    %931 = vmatpush.msra.mxu0 %v207
    %932 = vmatmul.f32.gmra.mxu0 %v914
    %v933 = vpop.f32.mrf.mxu0
    %v934 = vadd.f32 0.0, %v933
    %935 = vdwg.mxu0
    %v937 = vrot.slane %v934, 5
    %v939 = vadd.f32 %v259, %v937
    %v940 = vxor.u32 %v939, 2147483648
    %v941 = vmul.f32 %v940, 1.442695
    %v942 = vpow.pop %v941
    %v943 = vadd.f32 %v942, 1.0
    %v944 = vrcp.pop %v943
    %v945 = vmul.f32 %v943, %v944
    %v946 = vsub.f32 1.0, %v945
    %v947 = vmul.f32 %v944, %v946
    %v948 = vadd.f32 %v944, %v947
    %vm949 = vweird.f32 %v943
    %vm950 = vweird.f32 %v944
    %vm951 = vmor %vm949, %vm950
    %v952 = vsel %vm951, %v944, %v948
    %v953 = vand.u32 2147483647, %v943
    %vm954 = vcmp.eq.f32.partialorder %v953, 8.507059e+37
    %v955 = vand.u32 %v943, 2147483648
    %v956 = vor.u32 1.1754944e-38, %v955
    %v957 = vsel %vm954, %v956, %v952
    %v958 = vmul.f32 1.0, %v957
    %v959 = vtanh.pop %v939
    %v961 = vrot.slane %v823, 1
    %v963 = vmul.f32 %v958, %v961
    %965 = vrot.lane.b32.xlu0 %v959, 64
    %v966 = vpop.permute.xlu0 %965
    %v968 = vmul.f32 %v958, %v966
    %970 = vrot.lane.b32.xlu0 %v968, 32
    %v971 = vpop.permute.xlu0 %970
    %v973 = vadd.f32 %v963, %v971
    %v974 = vtanh.pop %v973
    %976 = vrot.lane.b32.xlu0 %v974, 64
    %v977 = vpop.permute.xlu0 %976
    %v979 = vmul.f32 %v958, %v977
    %981 = vrot.lane.b32.xlu0 %v910, 32
    %v982 = vpop.permute.xlu0 %981
    %vm984 = vcmask 258052
    %985 = vst.msk [vmem:[#allocation3] sm:$0x10] %vm984, %v982
    %987 = vrot.lane.b32.xlu0 %v979, 64
    %v988 = vpop.permute.xlu0 %987
    %vm990 = vcmask 519427
    %991 = vst.msk [vmem:[#allocation3] sm:$0x8] %vm990, %v988
    %v992 = vrot.slane %v910, 4
    %993 = vrot.lane.b32.xlu0 %v992, 32
    %v994 = vpop.permute.xlu0 %993
    %v995 = vsel %vm217, %v994, 0
    %997 = vmatpush.msra.mxu0 0.0
    %998 = vmatpush.msra.mxu0 0.0
    %999 = vmatpush.msra.mxu0 0.0
    %1000 = vmatpush.msra.mxu0 0.0
    %1001 = vmatpush.msra.mxu0 0.0
    %1002 = vmatpush.msra.mxu0 0.0
    %1003 = vmatpush.msra.mxu0 0.0
    %1004 = vmatpush.msra.mxu0 0.0
    %1005 = vmatpush.msra.mxu0 0.0
    %1006 = vmatpush.msra.mxu0 0.0
    %1007 = vmatpush.msra.mxu0 0.0
    %1008 = vmatpush.msra.mxu0 0.0
    %1009 = vmatpush.msra.mxu0 %v206
    %1010 = vmatpush.msra.mxu0 %v205
    %1011 = vmatpush.msra.mxu0 %v204
    %1012 = vmatpush.msra.mxu0 %v203
    %1013 = vmatmul.f32.gmra.mxu0 %v995
    %v1014 = vpop.f32.mrf.mxu0
    %v1015 = vadd.f32 0.0, %v1014
    %1016 = vdwg.mxu0
    %v1018 = vrot.slane %v1015, 3
    %v1020 = vadd.f32 %v239, %v1018
    %v1021 = vxor.u32 %v1020, 2147483648
    %v1022 = vmul.f32 %v1021, 1.442695
    %v1023 = vpow.pop %v1022
    %v1024 = vadd.f32 %v1023, 1.0
    %v1025 = vrcp.pop %v1024
    %v1026 = vmul.f32 %v1024, %v1025
    %v1027 = vsub.f32 1.0, %v1026
    %v1028 = vmul.f32 %v1025, %v1027
    %v1029 = vadd.f32 %v1025, %v1028
    %vm1030 = vweird.f32 %v1024
    %vm1031 = vweird.f32 %v1025
    %vm1032 = vmor %vm1030, %vm1031
    %v1033 = vsel %vm1032, %v1025, %v1029
    %v1034 = vand.u32 2147483647, %v1024
    %vm1035 = vcmp.eq.f32.partialorder %v1034, 8.507059e+37
    %v1036 = vand.u32 %v1024, 2147483648
    %v1037 = vor.u32 1.1754944e-38, %v1036
    %v1038 = vsel %vm1035, %v1037, %v1033
    %v1039 = vmul.f32 1.0, %v1038
    %v1040 = vtanh.pop %v1020
    %v1042 = vrot.slane %v904, 7
    %v1044 = vmul.f32 %v1039, %v1042
    %1046 = vrot.lane.b32.xlu0 %v1040, 64
    %v1047 = vpop.permute.xlu0 %1046
    %v1049 = vmul.f32 %v1039, %v1047
    %1051 = vrot.lane.b32.xlu0 %v1049, 32
    %v1052 = vpop.permute.xlu0 %1051
    %v1054 = vadd.f32 %v1044, %v1052
    %v1055 = vtanh.pop %v1054
    %1057 = vrot.lane.b32.xlu0 %v1055, 64
    %v1058 = vpop.permute.xlu0 %1057
    %v1060 = vmul.f32 %v1039, %v1058
    %v1061 = vrot.slane %v979, 3
    %1062 = vrot.lane.b32.xlu0 %v1061, 32
    %v1063 = vpop.permute.xlu0 %1062
    %v1064 = vsel %vm217, %v1063, 0
    %1066 = vmatpush.msra.mxu0 0.0
    %1067 = vmatpush.msra.mxu0 0.0
    %1068 = vmatpush.msra.mxu0 0.0
    %1069 = vmatpush.msra.mxu0 0.0
    %1070 = vmatpush.msra.mxu0 0.0
    %1071 = vmatpush.msra.mxu0 0.0
    %1072 = vmatpush.msra.mxu0 0.0
    %1073 = vmatpush.msra.mxu0 0.0
    %1074 = vmatpush.msra.mxu0 0.0
    %1075 = vmatpush.msra.mxu0 0.0
    %1076 = vmatpush.msra.mxu0 0.0
    %1077 = vmatpush.msra.mxu0 0.0
    %1078 = vmatpush.msra.mxu0 %v210
    %1079 = vmatpush.msra.mxu0 %v209
    %1080 = vmatpush.msra.mxu0 %v208
    %1081 = vmatpush.msra.mxu0 %v207
    %1082 = vmatmul.f32.gmra.mxu0 %v1064
    %v1083 = vpop.f32.mrf.mxu0
    %v1084 = vadd.f32 0.0, %v1083
    %1085 = vdwg.mxu0
    %v1087 = vrot.slane %v1084, 6
    %v1089 = vadd.f32 %v259, %v1087
    %v1090 = vxor.u32 %v1089, 2147483648
    %v1091 = vmul.f32 %v1090, 1.442695
    %v1092 = vpow.pop %v1091
    %v1093 = vadd.f32 %v1092, 1.0
    %v1094 = vrcp.pop %v1093
    %v1095 = vmul.f32 %v1093, %v1094
    %v1096 = vsub.f32 1.0, %v1095
    %v1097 = vmul.f32 %v1094, %v1096
    %v1098 = vadd.f32 %v1094, %v1097
    %vm1099 = vweird.f32 %v1093
    %vm1100 = vweird.f32 %v1094
    %vm1101 = vmor %vm1099, %vm1100
    %v1102 = vsel %vm1101, %v1094, %v1098
    %v1103 = vand.u32 2147483647, %v1093
    %vm1104 = vcmp.eq.f32.partialorder %v1103, 8.507059e+37
    %v1105 = vand.u32 %v1093, 2147483648
    %v1106 = vor.u32 1.1754944e-38, %v1105
    %v1107 = vsel %vm1104, %v1106, %v1102
    %v1108 = vmul.f32 1.0, %v1107
    %v1109 = vtanh.pop %v1089
    %v1111 = vrot.slane %v973, 1
    %v1113 = vmul.f32 %v1108, %v1111
    %1115 = vrot.lane.b32.xlu0 %v1109, 64
    %v1116 = vpop.permute.xlu0 %1115
    %v1118 = vmul.f32 %v1108, %v1116
    %1120 = vrot.lane.b32.xlu0 %v1118, 32
    %v1121 = vpop.permute.xlu0 %1120
    %v1123 = vadd.f32 %v1113, %v1121
    %v1124 = vtanh.pop %v1123
    %1126 = vrot.lane.b32.xlu0 %v1124, 64
    %v1127 = vpop.permute.xlu0 %1126
    %v1129 = vmul.f32 %v1108, %v1127
    %1131 = vrot.lane.b32.xlu0 %v1060, 32
    %v1132 = vpop.permute.xlu0 %1131
    %vm1134 = vcmask 259077
    %1135 = vst.msk [vmem:[#allocation3] sm:$0x20] %vm1134, %v1132
    %1137 = vrot.lane.b32.xlu0 %v1129, 64
    %v1138 = vpop.permute.xlu0 %1137
    %vm1140 = vcmask 518402
    %1141 = vst.msk [vmem:[#allocation3] sm:$0x4] %vm1140, %v1138
    %v1142 = vrot.slane %v1060, 5
    %1143 = vrot.lane.b32.xlu0 %v1142, 32
    %v1144 = vpop.permute.xlu0 %1143
    %v1145 = vsel %vm217, %v1144, 0
    %1147 = vmatpush.msra.mxu0 0.0
    %1148 = vmatpush.msra.mxu0 0.0
    %1149 = vmatpush.msra.mxu0 0.0
    %1150 = vmatpush.msra.mxu0 0.0
    %1151 = vmatpush.msra.mxu0 0.0
    %1152 = vmatpush.msra.mxu0 0.0
    %1153 = vmatpush.msra.mxu0 0.0
    %1154 = vmatpush.msra.mxu0 0.0
    %1155 = vmatpush.msra.mxu0 0.0
    %1156 = vmatpush.msra.mxu0 0.0
    %1157 = vmatpush.msra.mxu0 0.0
    %1158 = vmatpush.msra.mxu0 0.0
    %1159 = vmatpush.msra.mxu0 %v206
    %1160 = vmatpush.msra.mxu0 %v205
    %1161 = vmatpush.msra.mxu0 %v204
    %1162 = vmatpush.msra.mxu0 %v203
    %1163 = vmatmul.f32.gmra.mxu0 %v1145
    %v1164 = vpop.f32.mrf.mxu0
    %v1165 = vadd.f32 0.0, %v1164
    %1166 = vdwg.mxu0
    %v1168 = vrot.slane %v1165, 2
    %v1170 = vadd.f32 %v239, %v1168
    %v1171 = vxor.u32 %v1170, 2147483648
    %v1172 = vmul.f32 %v1171, 1.442695
    %v1173 = vpow.pop %v1172
    %v1174 = vadd.f32 %v1173, 1.0
    %v1175 = vrcp.pop %v1174
    %v1176 = vmul.f32 %v1174, %v1175
    %v1177 = vsub.f32 1.0, %v1176
    %v1178 = vmul.f32 %v1175, %v1177
    %v1179 = vadd.f32 %v1175, %v1178
    %vm1180 = vweird.f32 %v1174
    %vm1181 = vweird.f32 %v1175
    %vm1182 = vmor %vm1180, %vm1181
    %v1183 = vsel %vm1182, %v1175, %v1179
    %v1184 = vand.u32 2147483647, %v1174
    %vm1185 = vcmp.eq.f32.partialorder %v1184, 8.507059e+37
    %v1186 = vand.u32 %v1174, 2147483648
    %v1187 = vor.u32 1.1754944e-38, %v1186
    %v1188 = vsel %vm1185, %v1187, %v1183
    %v1189 = vmul.f32 1.0, %v1188
    %v1190 = vtanh.pop %v1170
    %v1192 = vrot.slane %v1054, 7
    %v1194 = vmul.f32 %v1189, %v1192
    %1196 = vrot.lane.b32.xlu0 %v1190, 64
    %v1197 = vpop.permute.xlu0 %1196
    %v1199 = vmul.f32 %v1189, %v1197
    %1201 = vrot.lane.b32.xlu0 %v1199, 32
    %v1202 = vpop.permute.xlu0 %1201
    %v1204 = vadd.f32 %v1194, %v1202
    %v1205 = vtanh.pop %v1204
    %1207 = vrot.lane.b32.xlu0 %v1205, 64
    %v1208 = vpop.permute.xlu0 %1207
    %v1210 = vmul.f32 %v1189, %v1208
    %v1211 = vrot.slane %v1129, 2
    %1212 = vrot.lane.b32.xlu0 %v1211, 32
    %v1213 = vpop.permute.xlu0 %1212
    %v1214 = vsel %vm217, %v1213, 0
    %1216 = vmatpush.msra.mxu0 0.0
    %1217 = vmatpush.msra.mxu0 0.0
    %1218 = vmatpush.msra.mxu0 0.0
    %1219 = vmatpush.msra.mxu0 0.0
    %1220 = vmatpush.msra.mxu0 0.0
    %1221 = vmatpush.msra.mxu0 0.0
    %1222 = vmatpush.msra.mxu0 0.0
    %1223 = vmatpush.msra.mxu0 0.0
    %1224 = vmatpush.msra.mxu0 0.0
    %1225 = vmatpush.msra.mxu0 0.0
    %1226 = vmatpush.msra.mxu0 0.0
    %1227 = vmatpush.msra.mxu0 0.0
    %1228 = vmatpush.msra.mxu0 %v210
    %1229 = vmatpush.msra.mxu0 %v209
    %1230 = vmatpush.msra.mxu0 %v208
    %1231 = vmatpush.msra.mxu0 %v207
    %1232 = vmatmul.f32.gmra.mxu0 %v1214
    %v1233 = vpop.f32.mrf.mxu0
    %v1234 = vadd.f32 0.0, %v1233
    %1235 = vdwg.mxu0
    %v1237 = vrot.slane %v1234, 7
    %v1239 = vadd.f32 %v259, %v1237
    %v1240 = vxor.u32 %v1239, 2147483648
    %v1241 = vmul.f32 %v1240, 1.442695
    %v1242 = vpow.pop %v1241
    %v1243 = vadd.f32 %v1242, 1.0
    %v1244 = vrcp.pop %v1243
    %v1245 = vmul.f32 %v1243, %v1244
    %v1246 = vsub.f32 1.0, %v1245
    %v1247 = vmul.f32 %v1244, %v1246
    %v1248 = vadd.f32 %v1244, %v1247
    %vm1249 = vweird.f32 %v1243
    %vm1250 = vweird.f32 %v1244
    %vm1251 = vmor %vm1249, %vm1250
    %v1252 = vsel %vm1251, %v1244, %v1248
    %v1253 = vand.u32 2147483647, %v1243
    %vm1254 = vcmp.eq.f32.partialorder %v1253, 8.507059e+37
    %v1255 = vand.u32 %v1243, 2147483648
    %v1256 = vor.u32 1.1754944e-38, %v1255
    %v1257 = vsel %vm1254, %v1256, %v1252
    %v1258 = vmul.f32 1.0, %v1257
    %v1259 = vtanh.pop %v1239
    %v1261 = vrot.slane %v1123, 1
    %v1263 = vmul.f32 %v1258, %v1261
    %1265 = vrot.lane.b32.xlu0 %v1259, 64
    %v1266 = vpop.permute.xlu0 %1265
    %v1268 = vmul.f32 %v1258, %v1266
    %1270 = vrot.lane.b32.xlu0 %v1268, 32
    %v1271 = vpop.permute.xlu0 %1270
    %v1273 = vadd.f32 %v1263, %v1271
    %v1274 = vtanh.pop %v1273
    %1276 = vrot.lane.b32.xlu0 %v1274, 64
    %v1277 = vpop.permute.xlu0 %1276
    %v1279 = vmul.f32 %v1258, %v1277
    %1281 = vrot.lane.b32.xlu0 %v1210, 32
    %v1282 = vpop.permute.xlu0 %1281
    %vm1284 = vcmask 260102
    %1285 = vst.msk [vmem:[#allocation3] sm:$0x40] %vm1284, %v1282
    %1287 = vrot.lane.b32.xlu0 %v1279, 64
    %v1288 = vpop.permute.xlu0 %1287
    %vm1290 = vcmask 517377
    %1291 = vst.msk [vmem:[#allocation3] sm:$0x2] %vm1290, %v1288
    %v1292 = vrot.slane %v1210, 6
    %1293 = vrot.lane.b32.xlu0 %v1292, 32
    %v1294 = vpop.permute.xlu0 %1293
    %v1295 = vsel %vm217, %v1294, 0
    %1297 = vmatpush.msra.mxu0 0.0
    %1298 = vmatpush.msra.mxu0 0.0
    %1299 = vmatpush.msra.mxu0 0.0
    %1300 = vmatpush.msra.mxu0 0.0
    %1301 = vmatpush.msra.mxu0 0.0
    %1302 = vmatpush.msra.mxu0 0.0
    %1303 = vmatpush.msra.mxu0 0.0
    %1304 = vmatpush.msra.mxu0 0.0
    %1305 = vmatpush.msra.mxu0 0.0
    %1306 = vmatpush.msra.mxu0 0.0
    %1307 = vmatpush.msra.mxu0 0.0
    %1308 = vmatpush.msra.mxu0 0.0
    %1309 = vmatpush.msra.mxu0 %v206
    %1310 = vmatpush.msra.mxu0 %v205
    %1311 = vmatpush.msra.mxu0 %v204
    %1312 = vmatpush.msra.mxu0 %v203
    %1313 = vmatmul.f32.gmra.mxu0 %v1295
    %v1314 = vpop.f32.mrf.mxu0
    %v1315 = vadd.f32 0.0, %v1314
    %1316 = vdwg.mxu0
    %v1318 = vrot.slane %v1315, 1
    %v1320 = vadd.f32 %v239, %v1318
    %v1321 = vxor.u32 %v1320, 2147483648
    %v1322 = vmul.f32 %v1321, 1.442695
    %v1323 = vpow.pop %v1322
    %v1324 = vadd.f32 %v1323, 1.0
    %v1325 = vrcp.pop %v1324
    %v1326 = vmul.f32 %v1324, %v1325
    %v1327 = vsub.f32 1.0, %v1326
    %v1328 = vmul.f32 %v1325, %v1327
    %v1329 = vadd.f32 %v1325, %v1328
    %vm1330 = vweird.f32 %v1324
    %vm1331 = vweird.f32 %v1325
    %vm1332 = vmor %vm1330, %vm1331
    %v1333 = vsel %vm1332, %v1325, %v1329
    %v1334 = vand.u32 2147483647, %v1324
    %vm1335 = vcmp.eq.f32.partialorder %v1334, 8.507059e+37
    %v1336 = vand.u32 %v1324, 2147483648
    %v1337 = vor.u32 1.1754944e-38, %v1336
    %v1338 = vsel %vm1335, %v1337, %v1333
    %v1339 = vmul.f32 1.0, %v1338
    %v1340 = vtanh.pop %v1320
    %v1342 = vrot.slane %v1204, 7
    %v1344 = vmul.f32 %v1339, %v1342
    %1346 = vrot.lane.b32.xlu0 %v1340, 64
    %v1347 = vpop.permute.xlu0 %1346
    %v1349 = vmul.f32 %v1339, %v1347
    %1351 = vrot.lane.b32.xlu0 %v1349, 32
    %v1352 = vpop.permute.xlu0 %1351
    %v1354 = vadd.f32 %v1344, %v1352
    %v1355 = vtanh.pop %v1354
    %1357 = vrot.lane.b32.xlu0 %v1355, 64
    %v1358 = vpop.permute.xlu0 %1357
    %v1360 = vmul.f32 %v1339, %v1358
    %v1361 = vrot.slane %v1279, 1
    %1362 = vrot.lane.b32.xlu0 %v1361, 32
    %v1363 = vpop.permute.xlu0 %1362
    %v1364 = vsel %vm217, %v1363, 0
    %1366 = vmatpush.msra.mxu0 0.0
    %1367 = vmatpush.msra.mxu0 0.0
    %1368 = vmatpush.msra.mxu0 0.0
    %1369 = vmatpush.msra.mxu0 0.0
    %1370 = vmatpush.msra.mxu0 0.0
    %1371 = vmatpush.msra.mxu0 0.0
    %1372 = vmatpush.msra.mxu0 0.0
    %1373 = vmatpush.msra.mxu0 0.0
    %1374 = vmatpush.msra.mxu0 0.0
    %1375 = vmatpush.msra.mxu0 0.0
    %1376 = vmatpush.msra.mxu0 0.0
    %1377 = vmatpush.msra.mxu0 0.0
    %1378 = vmatpush.msra.mxu0 %v210
    %1379 = vmatpush.msra.mxu0 %v209
    %1380 = vmatpush.msra.mxu0 %v208
    %1381 = vmatpush.msra.mxu0 %v207
    %1382 = vmatmul.f32.gmra.mxu0 %v1364
    %v1383 = vpop.f32.mrf.mxu0
    %v1384 = vadd.f32 0.0, %v1383
    %1385 = vdwg.mxu0
    %v1386 = vadd.f32 %v259, %v1384
    %v1387 = vxor.u32 %v1386, 2147483648
    %v1388 = vmul.f32 %v1387, 1.442695
    %v1389 = vpow.pop %v1388
    %v1390 = vadd.f32 %v1389, 1.0
    %v1391 = vrcp.pop %v1390
    %v1392 = vmul.f32 %v1390, %v1391
    %v1393 = vsub.f32 1.0, %v1392
    %v1394 = vmul.f32 %v1391, %v1393
    %v1395 = vadd.f32 %v1391, %v1394
    %vm1396 = vweird.f32 %v1390
    %vm1397 = vweird.f32 %v1391
    %vm1398 = vmor %vm1396, %vm1397
    %v1399 = vsel %vm1398, %v1391, %v1395
    %v1400 = vand.u32 2147483647, %v1390
    %vm1401 = vcmp.eq.f32.partialorder %v1400, 8.507059e+37
    %v1402 = vand.u32 %v1390, 2147483648
    %v1403 = vor.u32 1.1754944e-38, %v1402
    %v1404 = vsel %vm1401, %v1403, %v1399
    %v1405 = vmul.f32 1.0, %v1404
    %v1406 = vtanh.pop %v1386
    %v1408 = vrot.slane %v1273, 1
    %v1410 = vmul.f32 %v1405, %v1408
    %1412 = vrot.lane.b32.xlu0 %v1406, 64
    %v1413 = vpop.permute.xlu0 %1412
    %v1415 = vmul.f32 %v1405, %v1413
    %1417 = vrot.lane.b32.xlu0 %v1415, 32
    %v1418 = vpop.permute.xlu0 %1417
    %v1420 = vadd.f32 %v1410, %v1418
    %v1421 = vtanh.pop %v1420
    %1423 = vrot.lane.b32.xlu0 %v1421, 64
    %v1424 = vpop.permute.xlu0 %1423
    %v1426 = vmul.f32 %v1405, %v1424
    %1428 = vrot.lane.b32.xlu0 %v1360, 32
    %v1429 = vpop.permute.xlu0 %1428
    %vm1431 = vcmask 261127
    %1432 = vst.msk [vmem:[#allocation3] sm:$0x80] %vm1431, %v1429
    %1434 = vrot.lane.b32.xlu0 %v1426, 64
    %v1435 = vpop.permute.xlu0 %1434
    %vm1437 = vcmask 516352
    %1438 = vst.msk [vmem:[#allocation3] sm:$0x1] %vm1437, %v1435
    %v1439 = vld [vmem:[#allocation3] sm:$0xff]
    %v1440 = vld [vmem:[%s8] sm:$0xff]
    %v1441 = vld [vmem:[%s8 + $0x8] sm:$0xff]
    %v1442 = vld [vmem:[%s8 + $0x10] sm:$0xff]
    %v1443 = vld [vmem:[%s8 + $0x18] sm:$0xff]
    %v1444 = vld [vmem:[%s8 + $0x20] sm:$0xff]
    %v1445 = vld [vmem:[%s8 + $0x28] sm:$0xff]
    %v1446 = vld [vmem:[%s8 + $0x30] sm:$0xff]
    %v1447 = vld [vmem:[%s8 + $0x38] sm:$0xff]
    %v1448 = vld [vmem:[%s8 + $0x40] sm:$0xff]
    %v1449 = vld [vmem:[%s8 + $0x48] sm:$0xff]
    %v1450 = vld [vmem:[%s8 + $0x50] sm:$0xff]
    %v1451 = vld [vmem:[%s8 + $0x58] sm:$0xff]
    %v1452 = vld [vmem:[%s8 + $0x60] sm:$0xff]
    %v1453 = vld [vmem:[%s8 + $0x68] sm:$0xff]
    %v1454 = vld [vmem:[%s8 + $0x70] sm:$0xff]
    %v1455 = vld [vmem:[%s8 + $0x78] sm:$0xff]
    %v1456 = vld [vmem:[%s9] sm:$0xff]
    %v1457 = vld [vmem:[%s9 + $0x8] sm:$0xff]
    %v1458 = vld [vmem:[%s9 + $0x10] sm:$0xff]
    %v1459 = vld [vmem:[%s9 + $0x18] sm:$0xff]
    %v1460 = vld [vmem:[%s10] sm:$0xff]
    %v1461 = vld [vmem:[%s10 + $0x8] sm:$0xff]
    %v1462 = vld [vmem:[%s10 + $0x10] sm:$0xff]
    %v1463 = vld [vmem:[%s10 + $0x18] sm:$0xff]
    %v1464 = vld [vmem:[%s11] sm:$0x3]
    %v1466 = vperm.slane %v1464, 0
    %v1467 = vperm.slane %v1464, 1
    %vm1470 = vcmask 523264
    %v1472 = vsel %vm1470, %v1439, 0
    %1474 = vmatpush.msra.mxu0 0.0
    %1475 = vmatpush.msra.mxu0 0.0
    %1476 = vmatpush.msra.mxu0 0.0
    %1477 = vmatpush.msra.mxu0 0.0
    %1478 = vmatpush.msra.mxu0 0.0
    %1479 = vmatpush.msra.mxu0 0.0
    %1480 = vmatpush.msra.mxu0 0.0
    %1481 = vmatpush.msra.mxu0 0.0
    %1482 = vmatpush.msra.mxu0 %v1454
    %1483 = vmatpush.msra.mxu0 %v1452
    %1484 = vmatpush.msra.mxu0 %v1450
    %1485 = vmatpush.msra.mxu0 %v1448
    %1486 = vmatpush.msra.mxu0 %v1446
    %1487 = vmatpush.msra.mxu0 %v1444
    %1488 = vmatpush.msra.mxu0 %v1442
    %1489 = vmatpush.msra.mxu0 %v1440
    %1490 = vmatmul.f32.gmra.mxu0 %v1472
    %v1491 = vpop.f32.mrf.mxu0
    %v1492 = vadd.f32 %v1466, %v1491
    %1493 = vdwg.mxu0
    %1494 = vmatpush.msra.mxu0 0.0
    %1495 = vmatpush.msra.mxu0 0.0
    %1496 = vmatpush.msra.mxu0 0.0
    %1497 = vmatpush.msra.mxu0 0.0
    %1498 = vmatpush.msra.mxu0 0.0
    %1499 = vmatpush.msra.mxu0 0.0
    %1500 = vmatpush.msra.mxu0 0.0
    %1501 = vmatpush.msra.mxu0 0.0
    %1502 = vmatpush.msra.mxu0 %v1455
    %1503 = vmatpush.msra.mxu0 %v1453
    %1504 = vmatpush.msra.mxu0 %v1451
    %1505 = vmatpush.msra.mxu0 %v1449
    %1506 = vmatpush.msra.mxu0 %v1447
    %1507 = vmatpush.msra.mxu0 %v1445
    %1508 = vmatpush.msra.mxu0 %v1443
    %1509 = vmatpush.msra.mxu0 %v1441
    %1510 = vmatmul.f32.gmra.mxu0 %v1472
    %v1511 = vpop.f32.mrf.mxu0
    %v1512 = vadd.f32 %v1467, %v1511
    %1513 = vdwg.mxu0
    %1514 = vmatpush.msra.mxu0 0.0
    %1515 = vmatpush.msra.mxu0 0.0
    %1516 = vmatpush.msra.mxu0 0.0
    %1517 = vmatpush.msra.mxu0 0.0
    %1518 = vmatpush.msra.mxu0 0.0
    %1519 = vmatpush.msra.mxu0 0.0
    %1520 = vmatpush.msra.mxu0 0.0
    %1521 = vmatpush.msra.mxu0 0.0
    %1522 = vmatpush.msra.mxu0 0.0
    %1523 = vmatpush.msra.mxu0 0.0
    %1524 = vmatpush.msra.mxu0 0.0
    %1525 = vmatpush.msra.mxu0 0.0
    %1526 = vmatpush.msra.mxu0 %v1459
    %1527 = vmatpush.msra.mxu0 %v1458
    %1528 = vmatpush.msra.mxu0 %v1457
    %1529 = vmatpush.msra.mxu0 %v1456
    %1530 = vmatmul.f32.gmra.mxu0 %v262
    %v1531 = vpop.f32.mrf.mxu0
    %v1532 = vadd.f32 0.0, %v1531
    %1533 = vdwg.mxu0
    %v1534 = vadd.f32 %v1492, %v1532
    %v1535 = vxor.u32 %v1534, 2147483648
    %v1536 = vmul.f32 %v1535, 1.442695
    %v1537 = vpow.pop %v1536
    %v1538 = vadd.f32 %v1537, 1.0
    %v1539 = vrcp.pop %v1538
    %v1540 = vmul.f32 %v1538, %v1539
    %v1541 = vsub.f32 1.0, %v1540
    %v1542 = vmul.f32 %v1539, %v1541
    %v1543 = vadd.f32 %v1539, %v1542
    %vm1544 = vweird.f32 %v1538
    %vm1545 = vweird.f32 %v1539
    %vm1546 = vmor %vm1544, %vm1545
    %v1547 = vsel %vm1546, %v1539, %v1543
    %v1548 = vand.u32 2147483647, %v1538
    %vm1549 = vcmp.eq.f32.partialorder %v1548, 8.507059e+37
    %v1550 = vand.u32 %v1538, 2147483648
    %v1551 = vor.u32 1.1754944e-38, %v1550
    %v1552 = vsel %vm1549, %v1551, %v1547
    %v1553 = vmul.f32 1.0, %v1552
    %v1554 = vtanh.pop %v1534
    %v1555 = vmul.f32 %v1553, 0.0
    %1557 = vrot.lane.b32.xlu0 %v1554, 64
    %v1558 = vpop.permute.xlu0 %1557
    %v1560 = vmul.f32 %v1553, %v1558
    %1562 = vrot.lane.b32.xlu0 %v1560, 32
    %v1563 = vpop.permute.xlu0 %1562
    %v1565 = vadd.f32 %v1555, %v1563
    %v1566 = vtanh.pop %v1565
    %1568 = vrot.lane.b32.xlu0 %v1566, 64
    %v1569 = vpop.permute.xlu0 %1568
    %v1571 = vmul.f32 %v1553, %v1569
    %1572 = vmatpush.msra.mxu0 0.0
    %1573 = vmatpush.msra.mxu0 0.0
    %1574 = vmatpush.msra.mxu0 0.0
    %1575 = vmatpush.msra.mxu0 0.0
    %1576 = vmatpush.msra.mxu0 0.0
    %1577 = vmatpush.msra.mxu0 0.0
    %1578 = vmatpush.msra.mxu0 0.0
    %1579 = vmatpush.msra.mxu0 0.0
    %1580 = vmatpush.msra.mxu0 0.0
    %1581 = vmatpush.msra.mxu0 0.0
    %1582 = vmatpush.msra.mxu0 0.0
    %1583 = vmatpush.msra.mxu0 0.0
    %1584 = vmatpush.msra.mxu0 %v1463
    %1585 = vmatpush.msra.mxu0 %v1462
    %1586 = vmatpush.msra.mxu0 %v1461
    %1587 = vmatpush.msra.mxu0 %v1460
    %1588 = vmatmul.f32.gmra.mxu0 %v262
    %v1589 = vpop.f32.mrf.mxu0
    %v1590 = vadd.f32 0.0, %v1589
    %1591 = vdwg.mxu0
    %v1593 = vrot.slane %v1590, 1
    %v1595 = vadd.f32 %v1512, %v1593
    %v1596 = vxor.u32 %v1595, 2147483648
    %v1597 = vmul.f32 %v1596, 1.442695
    %v1598 = vpow.pop %v1597
    %v1599 = vadd.f32 %v1598, 1.0
    %v1600 = vrcp.pop %v1599
    %v1601 = vmul.f32 %v1599, %v1600
    %v1602 = vsub.f32 1.0, %v1601
    %v1603 = vmul.f32 %v1600, %v1602
    %v1604 = vadd.f32 %v1600, %v1603
    %vm1605 = vweird.f32 %v1599
    %vm1606 = vweird.f32 %v1600
    %vm1607 = vmor %vm1605, %vm1606
    %v1608 = vsel %vm1607, %v1600, %v1604
    %v1609 = vand.u32 2147483647, %v1599
    %vm1610 = vcmp.eq.f32.partialorder %v1609, 8.507059e+37
    %v1611 = vand.u32 %v1599, 2147483648
    %v1612 = vor.u32 1.1754944e-38, %v1611
    %v1613 = vsel %vm1610, %v1612, %v1608
    %v1614 = vmul.f32 1.0, %v1613
    %v1615 = vtanh.pop %v1595
    %v1616 = vmul.f32 %v1614, 0.0
    %1618 = vrot.lane.b32.xlu0 %v1615, 64
    %v1619 = vpop.permute.xlu0 %1618
    %v1621 = vmul.f32 %v1614, %v1619
    %1623 = vrot.lane.b32.xlu0 %v1621, 32
    %v1624 = vpop.permute.xlu0 %1623
    %v1626 = vadd.f32 %v1616, %v1624
    %v1627 = vtanh.pop %v1626
    %1629 = vrot.lane.b32.xlu0 %v1627, 64
    %v1630 = vpop.permute.xlu0 %1629
    %v1632 = vmul.f32 %v1614, %v1630
    %1634 = vrot.lane.b32.xlu0 %v1571, 32
    %v1635 = vpop.permute.xlu0 %1634
    %1637 = vst.msk [vmem:[#allocation4] sm:$0x1] %vm387, %v1635
    %1639 = vrot.lane.b32.xlu0 %v1632, 64
    %v1640 = vpop.permute.xlu0 %1639
    %1642 = vst.msk [vmem:[#allocation4] sm:$0x80] %vm393, %v1640
    %v1643 = vsel %vm217, %v1635, 0
    %1645 = vmatpush.msra.mxu0 0.0
    %1646 = vmatpush.msra.mxu0 0.0
    %1647 = vmatpush.msra.mxu0 0.0
    %1648 = vmatpush.msra.mxu0 0.0
    %1649 = vmatpush.msra.mxu0 0.0
    %1650 = vmatpush.msra.mxu0 0.0
    %1651 = vmatpush.msra.mxu0 0.0
    %1652 = vmatpush.msra.mxu0 0.0
    %1653 = vmatpush.msra.mxu0 0.0
    %1654 = vmatpush.msra.mxu0 0.0
    %1655 = vmatpush.msra.mxu0 0.0
    %1656 = vmatpush.msra.mxu0 0.0
    %1657 = vmatpush.msra.mxu0 %v1459
    %1658 = vmatpush.msra.mxu0 %v1458
    %1659 = vmatpush.msra.mxu0 %v1457
    %1660 = vmatpush.msra.mxu0 %v1456
    %1661 = vmatmul.f32.gmra.mxu0 %v1643
    %v1662 = vpop.f32.mrf.mxu0
    %v1663 = vadd.f32 0.0, %v1662
    %1664 = vdwg.mxu0
    %v1666 = vrot.slane %v1663, 7
    %v1668 = vadd.f32 %v1492, %v1666
    %v1669 = vxor.u32 %v1668, 2147483648
    %v1670 = vmul.f32 %v1669, 1.442695
    %v1671 = vpow.pop %v1670
    %v1672 = vadd.f32 %v1671, 1.0
    %v1673 = vrcp.pop %v1672
    %v1674 = vmul.f32 %v1672, %v1673
    %v1675 = vsub.f32 1.0, %v1674
    %v1676 = vmul.f32 %v1673, %v1675
    %v1677 = vadd.f32 %v1673, %v1676
    %vm1678 = vweird.f32 %v1672
    %vm1679 = vweird.f32 %v1673
    %vm1680 = vmor %vm1678, %vm1679
    %v1681 = vsel %vm1680, %v1673, %v1677
    %v1682 = vand.u32 2147483647, %v1672
    %vm1683 = vcmp.eq.f32.partialorder %v1682, 8.507059e+37
    %v1684 = vand.u32 %v1672, 2147483648
    %v1685 = vor.u32 1.1754944e-38, %v1684
    %v1686 = vsel %vm1683, %v1685, %v1681
    %v1687 = vmul.f32 1.0, %v1686
    %v1688 = vtanh.pop %v1668
    %v1690 = vrot.slane %v1565, 7
    %v1692 = vmul.f32 %v1687, %v1690
    %1694 = vrot.lane.b32.xlu0 %v1688, 64
    %v1695 = vpop.permute.xlu0 %1694
    %v1697 = vmul.f32 %v1687, %v1695
    %1699 = vrot.lane.b32.xlu0 %v1697, 32
    %v1700 = vpop.permute.xlu0 %1699
    %v1702 = vadd.f32 %v1692, %v1700
    %v1703 = vtanh.pop %v1702
    %1705 = vrot.lane.b32.xlu0 %v1703, 64
    %v1706 = vpop.permute.xlu0 %1705
    %v1708 = vmul.f32 %v1687, %v1706
    %v1709 = vrot.slane %v1632, 7
    %1710 = vrot.lane.b32.xlu0 %v1709, 32
    %v1711 = vpop.permute.xlu0 %1710
    %v1712 = vsel %vm217, %v1711, 0
    %1714 = vmatpush.msra.mxu0 0.0
    %1715 = vmatpush.msra.mxu0 0.0
    %1716 = vmatpush.msra.mxu0 0.0
    %1717 = vmatpush.msra.mxu0 0.0
    %1718 = vmatpush.msra.mxu0 0.0
    %1719 = vmatpush.msra.mxu0 0.0
    %1720 = vmatpush.msra.mxu0 0.0
    %1721 = vmatpush.msra.mxu0 0.0
    %1722 = vmatpush.msra.mxu0 0.0
    %1723 = vmatpush.msra.mxu0 0.0
    %1724 = vmatpush.msra.mxu0 0.0
    %1725 = vmatpush.msra.mxu0 0.0
    %1726 = vmatpush.msra.mxu0 %v1463
    %1727 = vmatpush.msra.mxu0 %v1462
    %1728 = vmatpush.msra.mxu0 %v1461
    %1729 = vmatpush.msra.mxu0 %v1460
    %1730 = vmatmul.f32.gmra.mxu0 %v1712
    %v1731 = vpop.f32.mrf.mxu0
    %v1732 = vadd.f32 0.0, %v1731
    %1733 = vdwg.mxu0
    %v1735 = vrot.slane %v1732, 2
    %v1737 = vadd.f32 %v1512, %v1735
    %v1738 = vxor.u32 %v1737, 2147483648
    %v1739 = vmul.f32 %v1738, 1.442695
    %v1740 = vpow.pop %v1739
    %v1741 = vadd.f32 %v1740, 1.0
    %v1742 = vrcp.pop %v1741
    %v1743 = vmul.f32 %v1741, %v1742
    %v1744 = vsub.f32 1.0, %v1743
    %v1745 = vmul.f32 %v1742, %v1744
    %v1746 = vadd.f32 %v1742, %v1745
    %vm1747 = vweird.f32 %v1741
    %vm1748 = vweird.f32 %v1742
    %vm1749 = vmor %vm1747, %vm1748
    %v1750 = vsel %vm1749, %v1742, %v1746
    %v1751 = vand.u32 2147483647, %v1741
    %vm1752 = vcmp.eq.f32.partialorder %v1751, 8.507059e+37
    %v1753 = vand.u32 %v1741, 2147483648
    %v1754 = vor.u32 1.1754944e-38, %v1753
    %v1755 = vsel %vm1752, %v1754, %v1750
    %v1756 = vmul.f32 1.0, %v1755
    %v1757 = vtanh.pop %v1737
    %v1759 = vrot.slane %v1626, 1
    %v1761 = vmul.f32 %v1756, %v1759
    %1763 = vrot.lane.b32.xlu0 %v1757, 64
    %v1764 = vpop.permute.xlu0 %1763
    %v1766 = vmul.f32 %v1756, %v1764
    %1768 = vrot.lane.b32.xlu0 %v1766, 32
    %v1769 = vpop.permute.xlu0 %1768
    %v1771 = vadd.f32 %v1761, %v1769
    %v1772 = vtanh.pop %v1771
    %1774 = vrot.lane.b32.xlu0 %v1772, 64
    %v1775 = vpop.permute.xlu0 %1774
    %v1777 = vmul.f32 %v1756, %v1775
    %1779 = vrot.lane.b32.xlu0 %v1708, 32
    %v1780 = vpop.permute.xlu0 %1779
    %1782 = vst.msk [vmem:[#allocation4] sm:$0x2] %vm534, %v1780
    %1784 = vrot.lane.b32.xlu0 %v1777, 64
    %v1785 = vpop.permute.xlu0 %1784
    %1787 = vst.msk [vmem:[#allocation4] sm:$0x40] %vm540, %v1785
    %v1788 = vrot.slane %v1708, 1
    %1789 = vrot.lane.b32.xlu0 %v1788, 32
    %v1790 = vpop.permute.xlu0 %1789
    %v1791 = vsel %vm217, %v1790, 0
    %1793 = vmatpush.msra.mxu0 0.0
    %1794 = vmatpush.msra.mxu0 0.0
    %1795 = vmatpush.msra.mxu0 0.0
    %1796 = vmatpush.msra.mxu0 0.0
    %1797 = vmatpush.msra.mxu0 0.0
    %1798 = vmatpush.msra.mxu0 0.0
    %1799 = vmatpush.msra.mxu0 0.0
    %1800 = vmatpush.msra.mxu0 0.0
    %1801 = vmatpush.msra.mxu0 0.0
    %1802 = vmatpush.msra.mxu0 0.0
    %1803 = vmatpush.msra.mxu0 0.0
    %1804 = vmatpush.msra.mxu0 0.0
    %1805 = vmatpush.msra.mxu0 %v1459
    %1806 = vmatpush.msra.mxu0 %v1458
    %1807 = vmatpush.msra.mxu0 %v1457
    %1808 = vmatpush.msra.mxu0 %v1456
    %1809 = vmatmul.f32.gmra.mxu0 %v1791
    %v1810 = vpop.f32.mrf.mxu0
    %v1811 = vadd.f32 0.0, %v1810
    %1812 = vdwg.mxu0
    %v1814 = vrot.slane %v1811, 6
    %v1816 = vadd.f32 %v1492, %v1814
    %v1817 = vxor.u32 %v1816, 2147483648
    %v1818 = vmul.f32 %v1817, 1.442695
    %v1819 = vpow.pop %v1818
    %v1820 = vadd.f32 %v1819, 1.0
    %v1821 = vrcp.pop %v1820
    %v1822 = vmul.f32 %v1820, %v1821
    %v1823 = vsub.f32 1.0, %v1822
    %v1824 = vmul.f32 %v1821, %v1823
    %v1825 = vadd.f32 %v1821, %v1824
    %vm1826 = vweird.f32 %v1820
    %vm1827 = vweird.f32 %v1821
    %vm1828 = vmor %vm1826, %vm1827
    %v1829 = vsel %vm1828, %v1821, %v1825
    %v1830 = vand.u32 2147483647, %v1820
    %vm1831 = vcmp.eq.f32.partialorder %v1830, 8.507059e+37
    %v1832 = vand.u32 %v1820, 2147483648
    %v1833 = vor.u32 1.1754944e-38, %v1832
    %v1834 = vsel %vm1831, %v1833, %v1829
    %v1835 = vmul.f32 1.0, %v1834
    %v1836 = vtanh.pop %v1816
    %v1838 = vrot.slane %v1702, 7
    %v1840 = vmul.f32 %v1835, %v1838
    %1842 = vrot.lane.b32.xlu0 %v1836, 64
    %v1843 = vpop.permute.xlu0 %1842
    %v1845 = vmul.f32 %v1835, %v1843
    %1847 = vrot.lane.b32.xlu0 %v1845, 32
    %v1848 = vpop.permute.xlu0 %1847
    %v1850 = vadd.f32 %v1840, %v1848
    %v1851 = vtanh.pop %v1850
    %1853 = vrot.lane.b32.xlu0 %v1851, 64
    %v1854 = vpop.permute.xlu0 %1853
    %v1856 = vmul.f32 %v1835, %v1854
    %v1857 = vrot.slane %v1777, 6
    %1858 = vrot.lane.b32.xlu0 %v1857, 32
    %v1859 = vpop.permute.xlu0 %1858
    %v1860 = vsel %vm217, %v1859, 0
    %1862 = vmatpush.msra.mxu0 0.0
    %1863 = vmatpush.msra.mxu0 0.0
    %1864 = vmatpush.msra.mxu0 0.0
    %1865 = vmatpush.msra.mxu0 0.0
    %1866 = vmatpush.msra.mxu0 0.0
    %1867 = vmatpush.msra.mxu0 0.0
    %1868 = vmatpush.msra.mxu0 0.0
    %1869 = vmatpush.msra.mxu0 0.0
    %1870 = vmatpush.msra.mxu0 0.0
    %1871 = vmatpush.msra.mxu0 0.0
    %1872 = vmatpush.msra.mxu0 0.0
    %1873 = vmatpush.msra.mxu0 0.0
    %1874 = vmatpush.msra.mxu0 %v1463
    %1875 = vmatpush.msra.mxu0 %v1462
    %1876 = vmatpush.msra.mxu0 %v1461
    %1877 = vmatpush.msra.mxu0 %v1460
    %1878 = vmatmul.f32.gmra.mxu0 %v1860
    %v1879 = vpop.f32.mrf.mxu0
    %v1880 = vadd.f32 0.0, %v1879
    %1881 = vdwg.mxu0
    %v1883 = vrot.slane %v1880, 3
    %v1885 = vadd.f32 %v1512, %v1883
    %v1886 = vxor.u32 %v1885, 2147483648
    %v1887 = vmul.f32 %v1886, 1.442695
    %v1888 = vpow.pop %v1887
    %v1889 = vadd.f32 %v1888, 1.0
    %v1890 = vrcp.pop %v1889
    %v1891 = vmul.f32 %v1889, %v1890
    %v1892 = vsub.f32 1.0, %v1891
    %v1893 = vmul.f32 %v1890, %v1892
    %v1894 = vadd.f32 %v1890, %v1893
    %vm1895 = vweird.f32 %v1889
    %vm1896 = vweird.f32 %v1890
    %vm1897 = vmor %vm1895, %vm1896
    %v1898 = vsel %vm1897, %v1890, %v1894
    %v1899 = vand.u32 2147483647, %v1889
    %vm1900 = vcmp.eq.f32.partialorder %v1899, 8.507059e+37
    %v1901 = vand.u32 %v1889, 2147483648
    %v1902 = vor.u32 1.1754944e-38, %v1901
    %v1903 = vsel %vm1900, %v1902, %v1898
    %v1904 = vmul.f32 1.0, %v1903
    %v1905 = vtanh.pop %v1885
    %v1907 = vrot.slane %v1771, 1
    %v1909 = vmul.f32 %v1904, %v1907
    %1911 = vrot.lane.b32.xlu0 %v1905, 64
    %v1912 = vpop.permute.xlu0 %1911
    %v1914 = vmul.f32 %v1904, %v1912
    %1916 = vrot.lane.b32.xlu0 %v1914, 32
    %v1917 = vpop.permute.xlu0 %1916
    %v1919 = vadd.f32 %v1909, %v1917
    %v1920 = vtanh.pop %v1919
    %1922 = vrot.lane.b32.xlu0 %v1920, 64
    %v1923 = vpop.permute.xlu0 %1922
    %v1925 = vmul.f32 %v1904, %v1923
    %1927 = vrot.lane.b32.xlu0 %v1856, 32
    %v1928 = vpop.permute.xlu0 %1927
    %1930 = vst.msk [vmem:[#allocation4] sm:$0x4] %vm684, %v1928
    %1932 = vrot.lane.b32.xlu0 %v1925, 64
    %v1933 = vpop.permute.xlu0 %1932
    %1935 = vst.msk [vmem:[#allocation4] sm:$0x20] %vm690, %v1933
    %v1936 = vrot.slane %v1856, 2
    %1937 = vrot.lane.b32.xlu0 %v1936, 32
    %v1938 = vpop.permute.xlu0 %1937
    %v1939 = vsel %vm217, %v1938, 0
    %1941 = vmatpush.msra.mxu0 0.0
    %1942 = vmatpush.msra.mxu0 0.0
    %1943 = vmatpush.msra.mxu0 0.0
    %1944 = vmatpush.msra.mxu0 0.0
    %1945 = vmatpush.msra.mxu0 0.0
    %1946 = vmatpush.msra.mxu0 0.0
    %1947 = vmatpush.msra.mxu0 0.0
    %1948 = vmatpush.msra.mxu0 0.0
    %1949 = vmatpush.msra.mxu0 0.0
    %1950 = vmatpush.msra.mxu0 0.0
    %1951 = vmatpush.msra.mxu0 0.0
    %1952 = vmatpush.msra.mxu0 0.0
    %1953 = vmatpush.msra.mxu0 %v1459
    %1954 = vmatpush.msra.mxu0 %v1458
    %1955 = vmatpush.msra.mxu0 %v1457
    %1956 = vmatpush.msra.mxu0 %v1456
    %1957 = vmatmul.f32.gmra.mxu0 %v1939
    %v1958 = vpop.f32.mrf.mxu0
    %v1959 = vadd.f32 0.0, %v1958
    %1960 = vdwg.mxu0
    %v1962 = vrot.slane %v1959, 5
    %v1964 = vadd.f32 %v1492, %v1962
    %v1965 = vxor.u32 %v1964, 2147483648
    %v1966 = vmul.f32 %v1965, 1.442695
    %v1967 = vpow.pop %v1966
    %v1968 = vadd.f32 %v1967, 1.0
    %v1969 = vrcp.pop %v1968
    %v1970 = vmul.f32 %v1968, %v1969
    %v1971 = vsub.f32 1.0, %v1970
    %v1972 = vmul.f32 %v1969, %v1971
    %v1973 = vadd.f32 %v1969, %v1972
    %vm1974 = vweird.f32 %v1968
    %vm1975 = vweird.f32 %v1969
    %vm1976 = vmor %vm1974, %vm1975
    %v1977 = vsel %vm1976, %v1969, %v1973
    %v1978 = vand.u32 2147483647, %v1968
    %vm1979 = vcmp.eq.f32.partialorder %v1978, 8.507059e+37
    %v1980 = vand.u32 %v1968, 2147483648
    %v1981 = vor.u32 1.1754944e-38, %v1980
    %v1982 = vsel %vm1979, %v1981, %v1977
    %v1983 = vmul.f32 1.0, %v1982
    %v1984 = vtanh.pop %v1964
    %v1986 = vrot.slane %v1850, 7
    %v1988 = vmul.f32 %v1983, %v1986
    %1990 = vrot.lane.b32.xlu0 %v1984, 64
    %v1991 = vpop.permute.xlu0 %1990
    %v1993 = vmul.f32 %v1983, %v1991
    %1995 = vrot.lane.b32.xlu0 %v1993, 32
    %v1996 = vpop.permute.xlu0 %1995
    %v1998 = vadd.f32 %v1988, %v1996
    %v1999 = vtanh.pop %v1998
    %2001 = vrot.lane.b32.xlu0 %v1999, 64
    %v2002 = vpop.permute.xlu0 %2001
    %v2004 = vmul.f32 %v1983, %v2002
    %v2005 = vrot.slane %v1925, 5
    %2006 = vrot.lane.b32.xlu0 %v2005, 32
    %v2007 = vpop.permute.xlu0 %2006
    %v2008 = vsel %vm217, %v2007, 0
    %2010 = vmatpush.msra.mxu0 0.0
    %2011 = vmatpush.msra.mxu0 0.0
    %2012 = vmatpush.msra.mxu0 0.0
    %2013 = vmatpush.msra.mxu0 0.0
    %2014 = vmatpush.msra.mxu0 0.0
    %2015 = vmatpush.msra.mxu0 0.0
    %2016 = vmatpush.msra.mxu0 0.0
    %2017 = vmatpush.msra.mxu0 0.0
    %2018 = vmatpush.msra.mxu0 0.0
    %2019 = vmatpush.msra.mxu0 0.0
    %2020 = vmatpush.msra.mxu0 0.0
    %2021 = vmatpush.msra.mxu0 0.0
    %2022 = vmatpush.msra.mxu0 %v1463
    %2023 = vmatpush.msra.mxu0 %v1462
    %2024 = vmatpush.msra.mxu0 %v1461
    %2025 = vmatpush.msra.mxu0 %v1460
    %2026 = vmatmul.f32.gmra.mxu0 %v2008
    %v2027 = vpop.f32.mrf.mxu0
    %v2028 = vadd.f32 0.0, %v2027
    %2029 = vdwg.mxu0
    %v2031 = vrot.slane %v2028, 4
    %v2033 = vadd.f32 %v1512, %v2031
    %v2034 = vxor.u32 %v2033, 2147483648
    %v2035 = vmul.f32 %v2034, 1.442695
    %v2036 = vpow.pop %v2035
    %v2037 = vadd.f32 %v2036, 1.0
    %v2038 = vrcp.pop %v2037
    %v2039 = vmul.f32 %v2037, %v2038
    %v2040 = vsub.f32 1.0, %v2039
    %v2041 = vmul.f32 %v2038, %v2040
    %v2042 = vadd.f32 %v2038, %v2041
    %vm2043 = vweird.f32 %v2037
    %vm2044 = vweird.f32 %v2038
    %vm2045 = vmor %vm2043, %vm2044
    %v2046 = vsel %vm2045, %v2038, %v2042
    %v2047 = vand.u32 2147483647, %v2037
    %vm2048 = vcmp.eq.f32.partialorder %v2047, 8.507059e+37
    %v2049 = vand.u32 %v2037, 2147483648
    %v2050 = vor.u32 1.1754944e-38, %v2049
    %v2051 = vsel %vm2048, %v2050, %v2046
    %v2052 = vmul.f32 1.0, %v2051
    %v2053 = vtanh.pop %v2033
    %v2055 = vrot.slane %v1919, 1
    %v2057 = vmul.f32 %v2052, %v2055
    %2059 = vrot.lane.b32.xlu0 %v2053, 64
    %v2060 = vpop.permute.xlu0 %2059
    %v2062 = vmul.f32 %v2052, %v2060
    %2064 = vrot.lane.b32.xlu0 %v2062, 32
    %v2065 = vpop.permute.xlu0 %2064
    %v2067 = vadd.f32 %v2057, %v2065
    %v2068 = vtanh.pop %v2067
    %2070 = vrot.lane.b32.xlu0 %v2068, 64
    %v2071 = vpop.permute.xlu0 %2070
    %v2073 = vmul.f32 %v2052, %v2071
    %2075 = vrot.lane.b32.xlu0 %v2004, 32
    %v2076 = vpop.permute.xlu0 %2075
    %2078 = vst.msk [vmem:[#allocation4] sm:$0x8] %vm834, %v2076
    %2080 = vrot.lane.b32.xlu0 %v2073, 64
    %v2081 = vpop.permute.xlu0 %2080
    %2083 = vst.msk [vmem:[#allocation4] sm:$0x10] %vm840, %v2081
    %v2084 = vrot.slane %v2004, 3
    %2085 = vrot.lane.b32.xlu0 %v2084, 32
    %v2086 = vpop.permute.xlu0 %2085
    %v2087 = vsel %vm217, %v2086, 0
    %2089 = vmatpush.msra.mxu0 0.0
    %2090 = vmatpush.msra.mxu0 0.0
    %2091 = vmatpush.msra.mxu0 0.0
    %2092 = vmatpush.msra.mxu0 0.0
    %2093 = vmatpush.msra.mxu0 0.0
    %2094 = vmatpush.msra.mxu0 0.0
    %2095 = vmatpush.msra.mxu0 0.0
    %2096 = vmatpush.msra.mxu0 0.0
    %2097 = vmatpush.msra.mxu0 0.0
    %2098 = vmatpush.msra.mxu0 0.0
    %2099 = vmatpush.msra.mxu0 0.0
    %2100 = vmatpush.msra.mxu0 0.0
    %2101 = vmatpush.msra.mxu0 %v1459
    %2102 = vmatpush.msra.mxu0 %v1458
    %2103 = vmatpush.msra.mxu0 %v1457
    %2104 = vmatpush.msra.mxu0 %v1456
    %2105 = vmatmul.f32.gmra.mxu0 %v2087
    %v2106 = vpop.f32.mrf.mxu0
    %v2107 = vadd.f32 0.0, %v2106
    %2108 = vdwg.mxu0
    %v2110 = vrot.slane %v2107, 4
    %v2112 = vadd.f32 %v1492, %v2110
    %v2113 = vxor.u32 %v2112, 2147483648
    %v2114 = vmul.f32 %v2113, 1.442695
    %v2115 = vpow.pop %v2114
    %v2116 = vadd.f32 %v2115, 1.0
    %v2117 = vrcp.pop %v2116
    %v2118 = vmul.f32 %v2116, %v2117
    %v2119 = vsub.f32 1.0, %v2118
    %v2120 = vmul.f32 %v2117, %v2119
    %v2121 = vadd.f32 %v2117, %v2120
    %vm2122 = vweird.f32 %v2116
    %vm2123 = vweird.f32 %v2117
    %vm2124 = vmor %vm2122, %vm2123
    %v2125 = vsel %vm2124, %v2117, %v2121
    %v2126 = vand.u32 2147483647, %v2116
    %vm2127 = vcmp.eq.f32.partialorder %v2126, 8.507059e+37
    %v2128 = vand.u32 %v2116, 2147483648
    %v2129 = vor.u32 1.1754944e-38, %v2128
    %v2130 = vsel %vm2127, %v2129, %v2125
    %v2131 = vmul.f32 1.0, %v2130
    %v2132 = vtanh.pop %v2112
    %v2134 = vrot.slane %v1998, 7
    %v2136 = vmul.f32 %v2131, %v2134
    %2138 = vrot.lane.b32.xlu0 %v2132, 64
    %v2139 = vpop.permute.xlu0 %2138
    %v2141 = vmul.f32 %v2131, %v2139
    %2143 = vrot.lane.b32.xlu0 %v2141, 32
    %v2144 = vpop.permute.xlu0 %2143
    %v2146 = vadd.f32 %v2136, %v2144
    %v2147 = vtanh.pop %v2146
    %2149 = vrot.lane.b32.xlu0 %v2147, 64
    %v2150 = vpop.permute.xlu0 %2149
    %v2152 = vmul.f32 %v2131, %v2150
    %v2153 = vrot.slane %v2073, 4
    %2154 = vrot.lane.b32.xlu0 %v2153, 32
    %v2155 = vpop.permute.xlu0 %2154
    %v2156 = vsel %vm217, %v2155, 0
    %2158 = vmatpush.msra.mxu0 0.0
    %2159 = vmatpush.msra.mxu0 0.0
    %2160 = vmatpush.msra.mxu0 0.0
    %2161 = vmatpush.msra.mxu0 0.0
    %2162 = vmatpush.msra.mxu0 0.0
    %2163 = vmatpush.msra.mxu0 0.0
    %2164 = vmatpush.msra.mxu0 0.0
    %2165 = vmatpush.msra.mxu0 0.0
    %2166 = vmatpush.msra.mxu0 0.0
    %2167 = vmatpush.msra.mxu0 0.0
    %2168 = vmatpush.msra.mxu0 0.0
    %2169 = vmatpush.msra.mxu0 0.0
    %2170 = vmatpush.msra.mxu0 %v1463
    %2171 = vmatpush.msra.mxu0 %v1462
    %2172 = vmatpush.msra.mxu0 %v1461
    %2173 = vmatpush.msra.mxu0 %v1460
    %2174 = vmatmul.f32.gmra.mxu0 %v2156
    %v2175 = vpop.f32.mrf.mxu0
    %v2176 = vadd.f32 0.0, %v2175
    %2177 = vdwg.mxu0
    %v2179 = vrot.slane %v2176, 5
    %v2181 = vadd.f32 %v1512, %v2179
    %v2182 = vxor.u32 %v2181, 2147483648
    %v2183 = vmul.f32 %v2182, 1.442695
    %v2184 = vpow.pop %v2183
    %v2185 = vadd.f32 %v2184, 1.0
    %v2186 = vrcp.pop %v2185
    %v2187 = vmul.f32 %v2185, %v2186
    %v2188 = vsub.f32 1.0, %v2187
    %v2189 = vmul.f32 %v2186, %v2188
    %v2190 = vadd.f32 %v2186, %v2189
    %vm2191 = vweird.f32 %v2185
    %vm2192 = vweird.f32 %v2186
    %vm2193 = vmor %vm2191, %vm2192
    %v2194 = vsel %vm2193, %v2186, %v2190
    %v2195 = vand.u32 2147483647, %v2185
    %vm2196 = vcmp.eq.f32.partialorder %v2195, 8.507059e+37
    %v2197 = vand.u32 %v2185, 2147483648
    %v2198 = vor.u32 1.1754944e-38, %v2197
    %v2199 = vsel %vm2196, %v2198, %v2194
    %v2200 = vmul.f32 1.0, %v2199
    %v2201 = vtanh.pop %v2181
    %v2203 = vrot.slane %v2067, 1
    %v2205 = vmul.f32 %v2200, %v2203
    %2207 = vrot.lane.b32.xlu0 %v2201, 64
    %v2208 = vpop.permute.xlu0 %2207
    %v2210 = vmul.f32 %v2200, %v2208
    %2212 = vrot.lane.b32.xlu0 %v2210, 32
    %v2213 = vpop.permute.xlu0 %2212
    %v2215 = vadd.f32 %v2205, %v2213
    %v2216 = vtanh.pop %v2215
    %2218 = vrot.lane.b32.xlu0 %v2216, 64
    %v2219 = vpop.permute.xlu0 %2218
    %v2221 = vmul.f32 %v2200, %v2219
    %2223 = vrot.lane.b32.xlu0 %v2152, 32
    %v2224 = vpop.permute.xlu0 %2223
    %2226 = vst.msk [vmem:[#allocation4] sm:$0x10] %vm984, %v2224
    %2228 = vrot.lane.b32.xlu0 %v2221, 64
    %v2229 = vpop.permute.xlu0 %2228
    %2231 = vst.msk [vmem:[#allocation4] sm:$0x8] %vm990, %v2229
    %v2232 = vrot.slane %v2152, 4
    %2233 = vrot.lane.b32.xlu0 %v2232, 32
    %v2234 = vpop.permute.xlu0 %2233
    %v2235 = vsel %vm217, %v2234, 0
    %2237 = vmatpush.msra.mxu0 0.0
    %2238 = vmatpush.msra.mxu0 0.0
    %2239 = vmatpush.msra.mxu0 0.0
    %2240 = vmatpush.msra.mxu0 0.0
    %2241 = vmatpush.msra.mxu0 0.0
    %2242 = vmatpush.msra.mxu0 0.0
    %2243 = vmatpush.msra.mxu0 0.0
    %2244 = vmatpush.msra.mxu0 0.0
    %2245 = vmatpush.msra.mxu0 0.0
    %2246 = vmatpush.msra.mxu0 0.0
    %2247 = vmatpush.msra.mxu0 0.0
    %2248 = vmatpush.msra.mxu0 0.0
    %2249 = vmatpush.msra.mxu0 %v1459
    %2250 = vmatpush.msra.mxu0 %v1458
    %2251 = vmatpush.msra.mxu0 %v1457
    %2252 = vmatpush.msra.mxu0 %v1456
    %2253 = vmatmul.f32.gmra.mxu0 %v2235
    %v2254 = vpop.f32.mrf.mxu0
    %v2255 = vadd.f32 0.0, %v2254
    %2256 = vdwg.mxu0
    %v2258 = vrot.slane %v2255, 3
    %v2260 = vadd.f32 %v1492, %v2258
    %v2261 = vxor.u32 %v2260, 2147483648
    %v2262 = vmul.f32 %v2261, 1.442695
    %v2263 = vpow.pop %v2262
    %v2264 = vadd.f32 %v2263, 1.0
    %v2265 = vrcp.pop %v2264
    %v2266 = vmul.f32 %v2264, %v2265
    %v2267 = vsub.f32 1.0, %v2266
    %v2268 = vmul.f32 %v2265, %v2267
    %v2269 = vadd.f32 %v2265, %v2268
    %vm2270 = vweird.f32 %v2264
    %vm2271 = vweird.f32 %v2265
    %vm2272 = vmor %vm2270, %vm2271
    %v2273 = vsel %vm2272, %v2265, %v2269
    %v2274 = vand.u32 2147483647, %v2264
    %vm2275 = vcmp.eq.f32.partialorder %v2274, 8.507059e+37
    %v2276 = vand.u32 %v2264, 2147483648
    %v2277 = vor.u32 1.1754944e-38, %v2276
    %v2278 = vsel %vm2275, %v2277, %v2273
    %v2279 = vmul.f32 1.0, %v2278
    %v2280 = vtanh.pop %v2260
    %v2282 = vrot.slane %v2146, 7
    %v2284 = vmul.f32 %v2279, %v2282
    %2286 = vrot.lane.b32.xlu0 %v2280, 64
    %v2287 = vpop.permute.xlu0 %2286
    %v2289 = vmul.f32 %v2279, %v2287
    %2291 = vrot.lane.b32.xlu0 %v2289, 32
    %v2292 = vpop.permute.xlu0 %2291
    %v2294 = vadd.f32 %v2284, %v2292
    %v2295 = vtanh.pop %v2294
    %2297 = vrot.lane.b32.xlu0 %v2295, 64
    %v2298 = vpop.permute.xlu0 %2297
    %v2300 = vmul.f32 %v2279, %v2298
    %v2301 = vrot.slane %v2221, 3
    %2302 = vrot.lane.b32.xlu0 %v2301, 32
    %v2303 = vpop.permute.xlu0 %2302
    %v2304 = vsel %vm217, %v2303, 0
    %2306 = vmatpush.msra.mxu0 0.0
    %2307 = vmatpush.msra.mxu0 0.0
    %2308 = vmatpush.msra.mxu0 0.0
    %2309 = vmatpush.msra.mxu0 0.0
    %2310 = vmatpush.msra.mxu0 0.0
    %2311 = vmatpush.msra.mxu0 0.0
    %2312 = vmatpush.msra.mxu0 0.0
    %2313 = vmatpush.msra.mxu0 0.0
    %2314 = vmatpush.msra.mxu0 0.0
    %2315 = vmatpush.msra.mxu0 0.0
    %2316 = vmatpush.msra.mxu0 0.0
    %2317 = vmatpush.msra.mxu0 0.0
    %2318 = vmatpush.msra.mxu0 %v1463
    %2319 = vmatpush.msra.mxu0 %v1462
    %2320 = vmatpush.msra.mxu0 %v1461
    %2321 = vmatpush.msra.mxu0 %v1460
    %2322 = vmatmul.f32.gmra.mxu0 %v2304
    %v2323 = vpop.f32.mrf.mxu0
    %v2324 = vadd.f32 0.0, %v2323
    %2325 = vdwg.mxu0
    %v2327 = vrot.slane %v2324, 6
    %v2329 = vadd.f32 %v1512, %v2327
    %v2330 = vxor.u32 %v2329, 2147483648
    %v2331 = vmul.f32 %v2330, 1.442695
    %v2332 = vpow.pop %v2331
    %v2333 = vadd.f32 %v2332, 1.0
    %v2334 = vrcp.pop %v2333
    %v2335 = vmul.f32 %v2333, %v2334
    %v2336 = vsub.f32 1.0, %v2335
    %v2337 = vmul.f32 %v2334, %v2336
    %v2338 = vadd.f32 %v2334, %v2337
    %vm2339 = vweird.f32 %v2333
    %vm2340 = vweird.f32 %v2334
    %vm2341 = vmor %vm2339, %vm2340
    %v2342 = vsel %vm2341, %v2334, %v2338
    %v2343 = vand.u32 2147483647, %v2333
    %vm2344 = vcmp.eq.f32.partialorder %v2343, 8.507059e+37
    %v2345 = vand.u32 %v2333, 2147483648
    %v2346 = vor.u32 1.1754944e-38, %v2345
    %v2347 = vsel %vm2344, %v2346, %v2342
    %v2348 = vmul.f32 1.0, %v2347
    %v2349 = vtanh.pop %v2329
    %v2351 = vrot.slane %v2215, 1
    %v2353 = vmul.f32 %v2348, %v2351
    %2355 = vrot.lane.b32.xlu0 %v2349, 64
    %v2356 = vpop.permute.xlu0 %2355
    %v2358 = vmul.f32 %v2348, %v2356
    %2360 = vrot.lane.b32.xlu0 %v2358, 32
    %v2361 = vpop.permute.xlu0 %2360
    %v2363 = vadd.f32 %v2353, %v2361
    %v2364 = vtanh.pop %v2363
    %2366 = vrot.lane.b32.xlu0 %v2364, 64
    %v2367 = vpop.permute.xlu0 %2366
    %v2369 = vmul.f32 %v2348, %v2367
    %2371 = vrot.lane.b32.xlu0 %v2300, 32
    %v2372 = vpop.permute.xlu0 %2371
    %2374 = vst.msk [vmem:[#allocation4] sm:$0x20] %vm1134, %v2372
    %2376 = vrot.lane.b32.xlu0 %v2369, 64
    %v2377 = vpop.permute.xlu0 %2376
    %2379 = vst.msk [vmem:[#allocation4] sm:$0x4] %vm1140, %v2377
    %v2380 = vrot.slane %v2300, 5
    %2381 = vrot.lane.b32.xlu0 %v2380, 32
    %v2382 = vpop.permute.xlu0 %2381
    %v2383 = vsel %vm217, %v2382, 0
    %2385 = vmatpush.msra.mxu0 0.0
    %2386 = vmatpush.msra.mxu0 0.0
    %2387 = vmatpush.msra.mxu0 0.0
    %2388 = vmatpush.msra.mxu0 0.0
    %2389 = vmatpush.msra.mxu0 0.0
    %2390 = vmatpush.msra.mxu0 0.0
    %2391 = vmatpush.msra.mxu0 0.0
    %2392 = vmatpush.msra.mxu0 0.0
    %2393 = vmatpush.msra.mxu0 0.0
    %2394 = vmatpush.msra.mxu0 0.0
    %2395 = vmatpush.msra.mxu0 0.0
    %2396 = vmatpush.msra.mxu0 0.0
    %2397 = vmatpush.msra.mxu0 %v1459
    %2398 = vmatpush.msra.mxu0 %v1458
    %2399 = vmatpush.msra.mxu0 %v1457
    %2400 = vmatpush.msra.mxu0 %v1456
    %2401 = vmatmul.f32.gmra.mxu0 %v2383
    %v2402 = vpop.f32.mrf.mxu0
    %v2403 = vadd.f32 0.0, %v2402
    %2404 = vdwg.mxu0
    %v2406 = vrot.slane %v2403, 2
    %v2408 = vadd.f32 %v1492, %v2406
    %v2409 = vxor.u32 %v2408, 2147483648
    %v2410 = vmul.f32 %v2409, 1.442695
    %v2411 = vpow.pop %v2410
    %v2412 = vadd.f32 %v2411, 1.0
    %v2413 = vrcp.pop %v2412
    %v2414 = vmul.f32 %v2412, %v2413
    %v2415 = vsub.f32 1.0, %v2414
    %v2416 = vmul.f32 %v2413, %v2415
    %v2417 = vadd.f32 %v2413, %v2416
    %vm2418 = vweird.f32 %v2412
    %vm2419 = vweird.f32 %v2413
    %vm2420 = vmor %vm2418, %vm2419
    %v2421 = vsel %vm2420, %v2413, %v2417
    %v2422 = vand.u32 2147483647, %v2412
    %vm2423 = vcmp.eq.f32.partialorder %v2422, 8.507059e+37
    %v2424 = vand.u32 %v2412, 2147483648
    %v2425 = vor.u32 1.1754944e-38, %v2424
    %v2426 = vsel %vm2423, %v2425, %v2421
    %v2427 = vmul.f32 1.0, %v2426
    %v2428 = vtanh.pop %v2408
    %v2430 = vrot.slane %v2294, 7
    %v2432 = vmul.f32 %v2427, %v2430
    %2434 = vrot.lane.b32.xlu0 %v2428, 64
    %v2435 = vpop.permute.xlu0 %2434
    %v2437 = vmul.f32 %v2427, %v2435
    %2439 = vrot.lane.b32.xlu0 %v2437, 32
    %v2440 = vpop.permute.xlu0 %2439
    %v2442 = vadd.f32 %v2432, %v2440
    %v2443 = vtanh.pop %v2442
    %2445 = vrot.lane.b32.xlu0 %v2443, 64
    %v2446 = vpop.permute.xlu0 %2445
    %v2448 = vmul.f32 %v2427, %v2446
    %v2449 = vrot.slane %v2369, 2
    %2450 = vrot.lane.b32.xlu0 %v2449, 32
    %v2451 = vpop.permute.xlu0 %2450
    %v2452 = vsel %vm217, %v2451, 0
    %2454 = vmatpush.msra.mxu0 0.0
    %2455 = vmatpush.msra.mxu0 0.0
    %2456 = vmatpush.msra.mxu0 0.0
    %2457 = vmatpush.msra.mxu0 0.0
    %2458 = vmatpush.msra.mxu0 0.0
    %2459 = vmatpush.msra.mxu0 0.0
    %2460 = vmatpush.msra.mxu0 0.0
    %2461 = vmatpush.msra.mxu0 0.0
    %2462 = vmatpush.msra.mxu0 0.0
    %2463 = vmatpush.msra.mxu0 0.0
    %2464 = vmatpush.msra.mxu0 0.0
    %2465 = vmatpush.msra.mxu0 0.0
    %2466 = vmatpush.msra.mxu0 %v1463
    %2467 = vmatpush.msra.mxu0 %v1462
    %2468 = vmatpush.msra.mxu0 %v1461
    %2469 = vmatpush.msra.mxu0 %v1460
    %2470 = vmatmul.f32.gmra.mxu0 %v2452
    %v2471 = vpop.f32.mrf.mxu0
    %v2472 = vadd.f32 0.0, %v2471
    %2473 = vdwg.mxu0
    %v2475 = vrot.slane %v2472, 7
    %v2477 = vadd.f32 %v1512, %v2475
    %v2478 = vxor.u32 %v2477, 2147483648
    %v2479 = vmul.f32 %v2478, 1.442695
    %v2480 = vpow.pop %v2479
    %v2481 = vadd.f32 %v2480, 1.0
    %v2482 = vrcp.pop %v2481
    %v2483 = vmul.f32 %v2481, %v2482
    %v2484 = vsub.f32 1.0, %v2483
    %v2485 = vmul.f32 %v2482, %v2484
    %v2486 = vadd.f32 %v2482, %v2485
    %vm2487 = vweird.f32 %v2481
    %vm2488 = vweird.f32 %v2482
    %vm2489 = vmor %vm2487, %vm2488
    %v2490 = vsel %vm2489, %v2482, %v2486
    %v2491 = vand.u32 2147483647, %v2481
    %vm2492 = vcmp.eq.f32.partialorder %v2491, 8.507059e+37
    %v2493 = vand.u32 %v2481, 2147483648
    %v2494 = vor.u32 1.1754944e-38, %v2493
    %v2495 = vsel %vm2492, %v2494, %v2490
    %v2496 = vmul.f32 1.0, %v2495
    %v2497 = vtanh.pop %v2477
    %v2499 = vrot.slane %v2363, 1
    %v2501 = vmul.f32 %v2496, %v2499
    %2503 = vrot.lane.b32.xlu0 %v2497, 64
    %v2504 = vpop.permute.xlu0 %2503
    %v2506 = vmul.f32 %v2496, %v2504
    %2508 = vrot.lane.b32.xlu0 %v2506, 32
    %v2509 = vpop.permute.xlu0 %2508
    %v2511 = vadd.f32 %v2501, %v2509
    %v2512 = vtanh.pop %v2511
    %2514 = vrot.lane.b32.xlu0 %v2512, 64
    %v2515 = vpop.permute.xlu0 %2514
    %v2517 = vmul.f32 %v2496, %v2515
    %2519 = vrot.lane.b32.xlu0 %v2448, 32
    %v2520 = vpop.permute.xlu0 %2519
    %2522 = vst.msk [vmem:[#allocation4] sm:$0x40] %vm1284, %v2520
    %2524 = vrot.lane.b32.xlu0 %v2517, 64
    %v2525 = vpop.permute.xlu0 %2524
    %2527 = vst.msk [vmem:[#allocation4] sm:$0x2] %vm1290, %v2525
    %v2528 = vrot.slane %v2448, 6
    %2529 = vrot.lane.b32.xlu0 %v2528, 32
    %v2530 = vpop.permute.xlu0 %2529
    %v2531 = vsel %vm217, %v2530, 0
    %2533 = vmatpush.msra.mxu0 0.0
    %2534 = vmatpush.msra.mxu0 0.0
    %2535 = vmatpush.msra.mxu0 0.0
    %2536 = vmatpush.msra.mxu0 0.0
    %2537 = vmatpush.msra.mxu0 0.0
    %2538 = vmatpush.msra.mxu0 0.0
    %2539 = vmatpush.msra.mxu0 0.0
    %2540 = vmatpush.msra.mxu0 0.0
    %2541 = vmatpush.msra.mxu0 0.0
    %2542 = vmatpush.msra.mxu0 0.0
    %2543 = vmatpush.msra.mxu0 0.0
    %2544 = vmatpush.msra.mxu0 0.0
    %2545 = vmatpush.msra.mxu0 %v1459
    %2546 = vmatpush.msra.mxu0 %v1458
    %2547 = vmatpush.msra.mxu0 %v1457
    %2548 = vmatpush.msra.mxu0 %v1456
    %2549 = vmatmul.f32.gmra.mxu0 %v2531
    %v2550 = vpop.f32.mrf.mxu0
    %v2551 = vadd.f32 0.0, %v2550
    %2552 = vdwg.mxu0
    %v2554 = vrot.slane %v2551, 1
    %v2556 = vadd.f32 %v1492, %v2554
    %v2557 = vxor.u32 %v2556, 2147483648
    %v2558 = vmul.f32 %v2557, 1.442695
    %v2559 = vpow.pop %v2558
    %v2560 = vadd.f32 %v2559, 1.0
    %v2561 = vrcp.pop %v2560
    %v2562 = vmul.f32 %v2560, %v2561
    %v2563 = vsub.f32 1.0, %v2562
    %v2564 = vmul.f32 %v2561, %v2563
    %v2565 = vadd.f32 %v2561, %v2564
    %vm2566 = vweird.f32 %v2560
    %vm2567 = vweird.f32 %v2561
    %vm2568 = vmor %vm2566, %vm2567
    %v2569 = vsel %vm2568, %v2561, %v2565
    %v2570 = vand.u32 2147483647, %v2560
    %vm2571 = vcmp.eq.f32.partialorder %v2570, 8.507059e+37
    %v2572 = vand.u32 %v2560, 2147483648
    %v2573 = vor.u32 1.1754944e-38, %v2572
    %v2574 = vsel %vm2571, %v2573, %v2569
    %v2575 = vmul.f32 1.0, %v2574
    %v2576 = vtanh.pop %v2556
    %v2578 = vrot.slane %v2442, 7
    %v2580 = vmul.f32 %v2575, %v2578
    %2582 = vrot.lane.b32.xlu0 %v2576, 64
    %v2583 = vpop.permute.xlu0 %2582
    %v2585 = vmul.f32 %v2575, %v2583
    %2587 = vrot.lane.b32.xlu0 %v2585, 32
    %v2588 = vpop.permute.xlu0 %2587
    %v2590 = vadd.f32 %v2580, %v2588
    %v2591 = vtanh.pop %v2590
    %2593 = vrot.lane.b32.xlu0 %v2591, 64
    %v2594 = vpop.permute.xlu0 %2593
    %v2596 = vmul.f32 %v2575, %v2594
    %v2597 = vrot.slane %v2517, 1
    %2598 = vrot.lane.b32.xlu0 %v2597, 32
    %v2599 = vpop.permute.xlu0 %2598
    %v2600 = vsel %vm217, %v2599, 0
    %2602 = vmatpush.msra.mxu0 0.0
    %2603 = vmatpush.msra.mxu0 0.0
    %2604 = vmatpush.msra.mxu0 0.0
    %2605 = vmatpush.msra.mxu0 0.0
    %2606 = vmatpush.msra.mxu0 0.0
    %2607 = vmatpush.msra.mxu0 0.0
    %2608 = vmatpush.msra.mxu0 0.0
    %2609 = vmatpush.msra.mxu0 0.0
    %2610 = vmatpush.msra.mxu0 0.0
    %2611 = vmatpush.msra.mxu0 0.0
    %2612 = vmatpush.msra.mxu0 0.0
    %2613 = vmatpush.msra.mxu0 0.0
    %2614 = vmatpush.msra.mxu0 %v1463
    %2615 = vmatpush.msra.mxu0 %v1462
    %2616 = vmatpush.msra.mxu0 %v1461
    %2617 = vmatpush.msra.mxu0 %v1460
    %2618 = vmatmul.f32.gmra.mxu0 %v2600
    %v2619 = vpop.f32.mrf.mxu0
    %v2620 = vadd.f32 0.0, %v2619
    %2621 = vdwg.mxu0
    %v2622 = vadd.f32 %v1512, %v2620
    %v2623 = vxor.u32 %v2622, 2147483648
    %v2624 = vmul.f32 %v2623, 1.442695
    %v2625 = vpow.pop %v2624
    %v2626 = vadd.f32 %v2625, 1.0
    %v2627 = vrcp.pop %v2626
    %v2628 = vmul.f32 %v2626, %v2627
    %v2629 = vsub.f32 1.0, %v2628
    %v2630 = vmul.f32 %v2627, %v2629
    %v2631 = vadd.f32 %v2627, %v2630
    %vm2632 = vweird.f32 %v2626
    %vm2633 = vweird.f32 %v2627
    %vm2634 = vmor %vm2632, %vm2633
    %v2635 = vsel %vm2634, %v2627, %v2631
    %v2636 = vand.u32 2147483647, %v2626
    %vm2637 = vcmp.eq.f32.partialorder %v2636, 8.507059e+37
    %v2638 = vand.u32 %v2626, 2147483648
    %v2639 = vor.u32 1.1754944e-38, %v2638
    %v2640 = vsel %vm2637, %v2639, %v2635
    %v2641 = vmul.f32 1.0, %v2640
    %v2642 = vtanh.pop %v2622
    %v2644 = vrot.slane %v2511, 1
    %v2646 = vmul.f32 %v2641, %v2644
    %2648 = vrot.lane.b32.xlu0 %v2642, 64
    %v2649 = vpop.permute.xlu0 %2648
    %v2651 = vmul.f32 %v2641, %v2649
    %2653 = vrot.lane.b32.xlu0 %v2651, 32
    %v2654 = vpop.permute.xlu0 %2653
    %v2656 = vadd.f32 %v2646, %v2654
    %v2657 = vtanh.pop %v2656
    %2659 = vrot.lane.b32.xlu0 %v2657, 64
    %v2660 = vpop.permute.xlu0 %2659
    %v2662 = vmul.f32 %v2641, %v2660
    %2664 = vrot.lane.b32.xlu0 %v2596, 32
    %v2665 = vpop.permute.xlu0 %2664
    %2667 = vst.msk [vmem:[#allocation4] sm:$0x80] %vm1431, %v2665
    %2669 = vrot.lane.b32.xlu0 %v2662, 64
    %v2670 = vpop.permute.xlu0 %2669
    %2672 = vst.msk [vmem:[#allocation4] sm:$0x1] %vm1437, %v2670
    %v2673 = vld [vmem:[#allocation4] sm:$0xff]
    %v2674 = vadd.f32 %v1360, %v2596
    %v2675 = vadd.f32 %v1354, %v2590
    %v2676 = vadd.f32 %v1426, %v2662
    %v2677 = vadd.f32 %v1420, %v2656
    %v2678 = vld [vmem:[%s22] sm:$0x1]
    %v2679 = vld [vmem:[%s23] sm:$0x1]
    %v2680 = vld [vmem:[%s21] sm:$0xff]
    %v2681 = vld [vmem:[%s21 + $0x8] sm:$0xff]
    %v2682 = vld [vmem:[%s21 + $0x10] sm:$0xff]
    %v2683 = vld [vmem:[%s21 + $0x18] sm:$0xff]
    %v2684 = vld [vmem:[%s21 + $0x20] sm:$0xff]
    %v2685 = vld [vmem:[%s21 + $0x28] sm:$0xff]
    %v2686 = vld [vmem:[%s21 + $0x30] sm:$0xff]
    %v2687 = vld [vmem:[%s21 + $0x38] sm:$0xff]
    %v2689 = vsel %vm1470, %v2673, 0
    %2691 = vmatpush.msra.mxu0 0.0
    %2692 = vmatpush.msra.mxu0 0.0
    %2693 = vmatpush.msra.mxu0 0.0
    %2694 = vmatpush.msra.mxu0 0.0
    %2695 = vmatpush.msra.mxu0 0.0
    %2696 = vmatpush.msra.mxu0 0.0
    %2697 = vmatpush.msra.mxu0 0.0
    %2698 = vmatpush.msra.mxu0 0.0
    %2699 = vmatpush.msra.mxu0 %v2687
    %2700 = vmatpush.msra.mxu0 %v2686
    %2701 = vmatpush.msra.mxu0 %v2685
    %2702 = vmatpush.msra.mxu0 %v2684
    %2703 = vmatpush.msra.mxu0 %v2683
    %2704 = vmatpush.msra.mxu0 %v2682
    %2705 = vmatpush.msra.mxu0 %v2681
    %2706 = vmatpush.msra.mxu0 %v2680
    %2707 = vmatmul.f32.gmra.mxu0 %v2689
    %v2708 = vpop.f32.mrf.mxu0
    %v2709 = vadd.f32 0.0, %v2708
    %2710 = vdwg.mxu0
    %v2711 = vsel %vm217, %v2709, 0.0
    %2712 = vadd.xlane.f32.xlu0 %v2711
    %v2713 = vpop.xlane.xlu0 %2712
    %v2714 = vrcp.pop 32.0
    %v2715 = vmul.f32 32.0, %v2714
    %v2716 = vsub.f32 1.0, %v2715
    %v2717 = vmul.f32 %v2714, %v2716
    %v2718 = vadd.f32 %v2714, %v2717
    %vm2719 = vweird.f32 %v2714
    %v2720 = vsel %vm2719, %v2714, %v2718
    %v2721 = vmul.f32 %v2713, %v2720
    %v2722 = vsub.f32 %v2709, %v2721
    %v2723 = vmul.f32 %v2722, %v2722
    %v2724 = vsel %vm217, %v2723, 0.0
    %2725 = vadd.xlane.f32.xlu0 %v2724
    %v2726 = vpop.xlane.xlu0 %2725
    %v2727 = vmul.f32 %v2726, %v2720
    %v2728 = vadd.f32 %v2727, 1e-05
    %v2729 = vrsqrt.pop %v2728
    %v2730 = vmul.f32 %v2729, %v2728
    %v2731 = vmul.f32 %v2730, %v2729
    %v2732 = vmul.f32 0.5, %v2731
    %v2733 = vsub.f32 1.5, %v2732
    %v2734 = vmul.f32 %v2729, %v2733
    %vm2735 = vweird.f32 %v2728
    %vm2736 = vweird.f32 %v2729
    %vm2737 = vmor %vm2735, %vm2736
    %v2738 = vsel %vm2737, %v2729, %v2734
    %v2739 = vmul.f32 %v2722, %v2738
    %v2741 = vperm.slane %v2678, 0
    %v2743 = vmul.f32 %v2739, %v2741
    %v2745 = vperm.slane %v2679, 0
    %v2747 = vadd.f32 %v2743, %v2745
    %v2748 = vmul.f32 %v2747, 0.17677669
    %s2749 = sld [smem:[#allocation8]]
    %v2750 = vstv %s2749
    %vm2751 = vcmp.eq.s32.totalorder %v109, %v2750
    %v2752 = vsel %vm2751, 1, 0
    %v2753 = vcvt.s32.f32 %v2752
    %2754 = vst [vmem:[#allocation2] sm:$0x1] %v2753
    %s2755 = sld [smem:[#allocation8 + $0x1]]
    %v2756 = vstv %s2755
    %vm2757 = vcmp.eq.s32.totalorder %v109, %v2756
    %v2758 = vsel %vm2757, 1, 0
    %v2759 = vcvt.s32.f32 %v2758
    %2760 = vst [vmem:[#allocation2 + $0x1] sm:$0x1] %v2759
    %s2761 = sld [smem:[#allocation8 + $0x2]]
    %v2762 = vstv %s2761
    %vm2763 = vcmp.eq.s32.totalorder %v109, %v2762
    %v2764 = vsel %vm2763, 1, 0
    %v2765 = vcvt.s32.f32 %v2764
    %2766 = vst [vmem:[#allocation2 + $0x2] sm:$0x1] %v2765
    %s2767 = sld [smem:[#allocation8 + $0x3]]
    %v2768 = vstv %s2767
    %vm2769 = vcmp.eq.s32.totalorder %v109, %v2768
    %v2770 = vsel %vm2769, 1, 0
    %v2771 = vcvt.s32.f32 %v2770
    %2772 = vst [vmem:[#allocation2 + $0x3] sm:$0x1] %v2771
    %s2773 = sld [smem:[#allocation8 + $0x4]]
    %v2774 = vstv %s2773
    %vm2775 = vcmp.eq.s32.totalorder %v109, %v2774
    %v2776 = vsel %vm2775, 1, 0
    %v2777 = vcvt.s32.f32 %v2776
    %2778 = vst [vmem:[#allocation2 + $0x4] sm:$0x1] %v2777
    %v2779 = vld [vmem:[#allocation2] sm:$0x1f]
    %v2780 = vld [vmem:[%s3] sm:$0xff]
    %v2781 = vld [vmem:[%s3 + $0x8] sm:$0xff]
    %v2782 = vld [vmem:[%s3 + $0x10] sm:$0xff]
    %v2783 = vld [vmem:[%s3 + $0x18] sm:$0xff]
    %v2784 = vld [vmem:[%s3 + $0x20] sm:$0xff]
    %v2785 = vld [vmem:[%s3 + $0x28] sm:$0xff]
    %v2786 = vld [vmem:[%s3 + $0x30] sm:$0xff]
    %v2787 = vld [vmem:[%s3 + $0x38] sm:$0xff]
    %v2788 = vld [vmem:[%s3 + $0x40] sm:$0xff]
    %v2789 = vld [vmem:[%s3 + $0x48] sm:$0xff]
    %v2790 = vld [vmem:[%s3 + $0x50] sm:$0xff]
    %v2791 = vld [vmem:[%s3 + $0x58] sm:$0xff]
    %v2792 = vld [vmem:[%s3 + $0x60] sm:$0xff]
    %v2793 = vld [vmem:[%s3 + $0x68] sm:$0xff]
    %v2794 = vld [vmem:[%s3 + $0x70] sm:$0xff]
    %v2795 = vld [vmem:[%s3 + $0x78] sm:$0xff]
    %2796 = vmatpush.msra.mxu0 %v2795
    %2797 = vmatpush.msra.mxu0 %v2794
    %2798 = vmatpush.msra.mxu0 %v2793
    %2799 = vmatpush.msra.mxu0 %v2792
    %2800 = vmatpush.msra.mxu0 %v2791
    %2801 = vmatpush.msra.mxu0 %v2790
    %2802 = vmatpush.msra.mxu0 %v2789
    %2803 = vmatpush.msra.mxu0 %v2788
    %2804 = vmatpush.msra.mxu0 %v2787
    %2805 = vmatpush.msra.mxu0 %v2786
    %2806 = vmatpush.msra.mxu0 %v2785
    %2807 = vmatpush.msra.mxu0 %v2784
    %2808 = vmatpush.msra.mxu0 %v2783
    %2809 = vmatpush.msra.mxu0 %v2782
    %2810 = vmatpush.msra.mxu0 %v2781
    %2811 = vmatpush.msra.mxu0 %v2780
    %2812 = vmatmul.f32.gmra.mxu0 %v2779
    %v2813 = vpop.f32.mrf.mxu0
    %v2814 = vadd.f32 0.0, %v2813
    %2815 = vdwg.mxu0
    %v2816 = vld [vmem:[%s18] sm:$0x1]
    %v2817 = vld [vmem:[%s19] sm:$0x1]
    %vm2818 = vcmask 258048
    %v2819 = vsel %vm2818, %v2814, 0.0
    %2820 = vadd.xlane.f32.xlu0 %v2819
    %v2821 = vpop.xlane.xlu0 %2820
    %v2822 = vmul.f32 %v2821, %v2720
    %v2823 = vsub.f32 %v2814, %v2822
    %v2824 = vmul.f32 %v2823, %v2823
    %v2825 = vsel %vm2818, %v2824, 0.0
    %2826 = vadd.xlane.f32.xlu0 %v2825
    %v2827 = vpop.xlane.xlu0 %2826
    %v2828 = vmul.f32 %v2827, %v2720
    %v2829 = vadd.f32 %v2828, 1e-05
    %v2830 = vrsqrt.pop %v2829
    %v2831 = vmul.f32 %v2830, %v2829
    %v2832 = vmul.f32 %v2831, %v2830
    %v2833 = vmul.f32 0.5, %v2832
    %v2834 = vsub.f32 1.5, %v2833
    %v2835 = vmul.f32 %v2830, %v2834
    %vm2836 = vweird.f32 %v2829
    %vm2837 = vweird.f32 %v2830
    %vm2838 = vmor %vm2836, %vm2837
    %v2839 = vsel %vm2838, %v2830, %v2835
    %v2840 = vmul.f32 %v2823, %v2839
    %v2842 = vperm.slane %v2816, 0
    %v2844 = vmul.f32 %v2840, %v2842
    %v2846 = vperm.slane %v2817, 0
    %v2848 = vadd.f32 %v2844, %v2846
    %v2849 = vld [vmem:[%s12] sm:$0xff]
    %v2850 = vld [vmem:[%s12 + $0x8] sm:$0xff]
    %v2851 = vld [vmem:[%s12 + $0x10] sm:$0xff]
    %v2852 = vld [vmem:[%s12 + $0x18] sm:$0xff]
    %v2853 = vld [vmem:[%s14] sm:$0x1]
    %v2855 = vperm.slane %v2853, 0
    %v2858 = vsel %vm217, %v2848, 0
    %2860 = vmatpush.msra.mxu0 0.0
    %2861 = vmatpush.msra.mxu0 0.0
    %2862 = vmatpush.msra.mxu0 0.0
    %2863 = vmatpush.msra.mxu0 0.0
    %2864 = vmatpush.msra.mxu0 0.0
    %2865 = vmatpush.msra.mxu0 0.0
    %2866 = vmatpush.msra.mxu0 0.0
    %2867 = vmatpush.msra.mxu0 0.0
    %2868 = vmatpush.msra.mxu0 0.0
    %2869 = vmatpush.msra.mxu0 0.0
    %2870 = vmatpush.msra.mxu0 0.0
    %2871 = vmatpush.msra.mxu0 0.0
    %2872 = vmatpush.msra.mxu0 %v2852
    %2873 = vmatpush.msra.mxu0 %v2851
    %2874 = vmatpush.msra.mxu0 %v2850
    %2875 = vmatpush.msra.mxu0 %v2849
    %2876 = vmatmul.f32.gmra.mxu0 %v2858
    %v2877 = vpop.f32.mrf.mxu0
    %v2878 = vadd.f32 %v2855, %v2877
    %2879 = vdwg.mxu0
    %v2880 = vld [vmem:[%s13] sm:$0xff]
    %v2881 = vld [vmem:[%s13 + $0x8] sm:$0xff]
    %v2882 = vld [vmem:[%s13 + $0x10] sm:$0xff]
    %v2883 = vld [vmem:[%s13 + $0x18] sm:$0xff]
    %v2884 = vld [vmem:[%s15] sm:$0xff]
    %v2885 = vld [vmem:[%s15 + $0x8] sm:$0xff]
    %v2886 = vld [vmem:[%s15 + $0x10] sm:$0xff]
    %v2887 = vld [vmem:[%s15 + $0x18] sm:$0xff]
    %v2888 = vld [vmem:[%s16] sm:$0xff]
    %v2889 = vld [vmem:[%s16 + $0x8] sm:$0xff]
    %v2890 = vld [vmem:[%s16 + $0x10] sm:$0xff]
    %v2891 = vld [vmem:[%s16 + $0x18] sm:$0xff]
    %v2892 = vld [vmem:[%s17] sm:$0x1]
    %v2893 = vld [vmem:[%s20] sm:$0xff]
    %v2894 = vld [vmem:[%s20 + $0x8] sm:$0xff]
    %v2895 = vld [vmem:[%s20 + $0x10] sm:$0xff]
    %v2896 = vld [vmem:[%s20 + $0x18] sm:$0xff]
    %v2897 = vld [vmem:[%s20 + $0x20] sm:$0xff]
    %v2898 = vld [vmem:[%s20 + $0x28] sm:$0xff]
    %v2899 = vld [vmem:[%s20 + $0x30] sm:$0xff]
    %v2900 = vld [vmem:[%s20 + $0x38] sm:$0xff]
    %v2901 = vld [vmem:[%s24] sm:$0xff]
    %v2902 = vld [vmem:[%s24 + $0x8] sm:$0xff]
    %v2903 = vld [vmem:[%s24 + $0x10] sm:$0xff]
    %v2904 = vld [vmem:[%s24 + $0x18] sm:$0xff]
    %v2905 = vld [vmem:[%s25] sm:$0x1]
    %v2907 = vrot.slane %v2674, 7
    %2908 = vrot.lane.b32.xlu0 %v2907, 32
    %v2909 = vpop.permute.xlu0 %2908
    %v2910 = vsel %vm217, %v2909, 0
    %2912 = vmatpush.msra.mxu0 0.0
    %2913 = vmatpush.msra.mxu0 0.0
    %2914 = vmatpush.msra.mxu0 0.0
    %2915 = vmatpush.msra.mxu0 0.0
    %2916 = vmatpush.msra.mxu0 0.0
    %2917 = vmatpush.msra.mxu0 0.0
    %2918 = vmatpush.msra.mxu0 0.0
    %2919 = vmatpush.msra.mxu0 0.0
    %2920 = vmatpush.msra.mxu0 0.0
    %2921 = vmatpush.msra.mxu0 0.0
    %2922 = vmatpush.msra.mxu0 0.0
    %2923 = vmatpush.msra.mxu0 0.0
    %2924 = vmatpush.msra.mxu0 %v2883
    %2925 = vmatpush.msra.mxu0 %v2882
    %2926 = vmatpush.msra.mxu0 %v2881
    %2927 = vmatpush.msra.mxu0 %v2880
    %2928 = vmatmul.f32.gmra.mxu0 %v2910
    %v2929 = vpop.f32.mrf.mxu0
    %v2930 = vadd.f32 0.0, %v2929
    %2931 = vdwg.mxu0
    %v2932 = vadd.f32 %v2878, %v2930
    %v2933 = vxor.u32 %v2932, 2147483648
    %v2934 = vmul.f32 %v2933, 1.442695
    %v2935 = vpow.pop %v2934
    %v2936 = vadd.f32 %v2935, 1.0
    %v2937 = vrcp.pop %v2936
    %v2938 = vmul.f32 %v2936, %v2937
    %v2939 = vsub.f32 1.0, %v2938
    %v2940 = vmul.f32 %v2937, %v2939
    %v2941 = vadd.f32 %v2937, %v2940
    %vm2942 = vweird.f32 %v2936
    %vm2943 = vweird.f32 %v2937
    %vm2944 = vmor %vm2942, %vm2943
    %v2945 = vsel %vm2944, %v2937, %v2941
    %v2946 = vand.u32 2147483647, %v2936
    %vm2947 = vcmp.eq.f32.partialorder %v2946, 8.507059e+37
    %v2948 = vand.u32 %v2936, 2147483648
    %v2949 = vor.u32 1.1754944e-38, %v2948
    %v2950 = vsel %vm2947, %v2949, %v2945
    %v2951 = vmul.f32 1.0, %v2950
    %v2952 = vtanh.pop %v2932
    %v2954 = vrot.slane %v2675, 7
    %v2956 = vmul.f32 %v2951, %v2954
    %2958 = vrot.lane.b32.xlu0 %v2952, 64
    %v2959 = vpop.permute.xlu0 %2958
    %v2961 = vmul.f32 %v2951, %v2959
    %2963 = vrot.lane.b32.xlu0 %v2961, 32
    %v2964 = vpop.permute.xlu0 %2963
    %v2966 = vadd.f32 %v2956, %v2964
    %v2967 = vtanh.pop %v2966
    %2969 = vrot.lane.b32.xlu0 %v2967, 64
    %v2970 = vpop.permute.xlu0 %2969
    %v2972 = vmul.f32 %v2951, %v2970
    %2974 = vrot.lane.b32.xlu0 %v2972, 32
    %v2975 = vpop.permute.xlu0 %2974
    %2977 = vst.msk [vmem:[#allocation5] sm:$0x1] %vm387, %v2975
    %v2978 = vld [vmem:[#allocation5] sm:$0x1]
    %v2980 = vsel %vm217, %v2978, 0
    %2982 = vmatpush.msra.mxu0 0.0
    %2983 = vmatpush.msra.mxu0 0.0
    %2984 = vmatpush.msra.mxu0 0.0
    %2985 = vmatpush.msra.mxu0 0.0
    %2986 = vmatpush.msra.mxu0 0.0
    %2987 = vmatpush.msra.mxu0 0.0
    %2988 = vmatpush.msra.mxu0 0.0
    %2989 = vmatpush.msra.mxu0 0.0
    %2990 = vmatpush.msra.mxu0 0.0
    %2991 = vmatpush.msra.mxu0 0.0
    %2992 = vmatpush.msra.mxu0 0.0
    %2993 = vmatpush.msra.mxu0 0.0
    %2994 = vmatpush.msra.mxu0 %v2887
    %2995 = vmatpush.msra.mxu0 %v2886
    %2996 = vmatpush.msra.mxu0 %v2885
    %2997 = vmatpush.msra.mxu0 %v2884
    %2998 = vmatmul.f32.gmra.mxu0 %v2980
    %v2999 = vpop.f32.mrf.mxu0
    %v3000 = vadd.f32 %v2892, %v2999
    %3001 = vdwg.mxu0
    %3003 = vrot.lane.b32.xlu0 %v2676, 32
    %v3004 = vpop.permute.xlu0 %3003
    %v3005 = vsel %vm217, %v3004, 0
    %3007 = vmatpush.msra.mxu0 0.0
    %3008 = vmatpush.msra.mxu0 0.0
    %3009 = vmatpush.msra.mxu0 0.0
    %3010 = vmatpush.msra.mxu0 0.0
    %3011 = vmatpush.msra.mxu0 0.0
    %3012 = vmatpush.msra.mxu0 0.0
    %3013 = vmatpush.msra.mxu0 0.0
    %3014 = vmatpush.msra.mxu0 0.0
    %3015 = vmatpush.msra.mxu0 0.0
    %3016 = vmatpush.msra.mxu0 0.0
    %3017 = vmatpush.msra.mxu0 0.0
    %3018 = vmatpush.msra.mxu0 0.0
    %3019 = vmatpush.msra.mxu0 %v2891
    %3020 = vmatpush.msra.mxu0 %v2890
    %3021 = vmatpush.msra.mxu0 %v2889
    %3022 = vmatpush.msra.mxu0 %v2888
    %3023 = vmatmul.f32.gmra.mxu0 %v3005
    %v3024 = vpop.f32.mrf.mxu0
    %v3025 = vadd.f32 0.0, %v3024
    %3026 = vdwg.mxu0
    %v3027 = vadd.f32 %v3000, %v3025
    %v3028 = vxor.u32 %v3027, 2147483648
    %v3029 = vmul.f32 %v3028, 1.442695
    %v3030 = vpow.pop %v3029
    %v3031 = vadd.f32 %v3030, 1.0
    %v3032 = vrcp.pop %v3031
    %v3033 = vmul.f32 %v3031, %v3032
    %v3034 = vsub.f32 1.0, %v3033
    %v3035 = vmul.f32 %v3032, %v3034
    %v3036 = vadd.f32 %v3032, %v3035
    %vm3037 = vweird.f32 %v3031
    %vm3038 = vweird.f32 %v3032
    %vm3039 = vmor %vm3037, %vm3038
    %v3040 = vsel %vm3039, %v3032, %v3036
    %v3041 = vand.u32 2147483647, %v3031
    %vm3042 = vcmp.eq.f32.partialorder %v3041, 8.507059e+37
    %v3043 = vand.u32 %v3031, 2147483648
    %v3044 = vor.u32 1.1754944e-38, %v3043
    %v3045 = vsel %vm3042, %v3044, %v3040
    %v3046 = vmul.f32 1.0, %v3045
    %v3047 = vtanh.pop %v3027
    %v3048 = vmul.f32 %v3046, %v2677
    %3050 = vrot.lane.b32.xlu0 %v3047, 64
    %v3051 = vpop.permute.xlu0 %3050
    %v3053 = vmul.f32 %v3046, %v3051
    %3055 = vrot.lane.b32.xlu0 %v3053, 32
    %v3056 = vpop.permute.xlu0 %3055
    %v3058 = vadd.f32 %v3048, %v3056
    %v3059 = vtanh.pop %v3058
    %3061 = vrot.lane.b32.xlu0 %v3059, 64
    %v3062 = vpop.permute.xlu0 %3061
    %v3064 = vmul.f32 %v3046, %v3062
    %3066 = vrot.lane.b32.xlu0 %v3064, 32
    %v3067 = vpop.permute.xlu0 %3066
    %v3068 = vsel %vm217, %v3067, 0
    %3070 = vmatpush.msra.mxu0 0.0
    %3071 = vmatpush.msra.mxu0 0.0
    %3072 = vmatpush.msra.mxu0 0.0
    %3073 = vmatpush.msra.mxu0 0.0
    %3074 = vmatpush.msra.mxu0 0.0
    %3075 = vmatpush.msra.mxu0 0.0
    %3076 = vmatpush.msra.mxu0 0.0
    %3077 = vmatpush.msra.mxu0 0.0
    %3078 = vmatpush.msra.mxu0 0.0
    %3079 = vmatpush.msra.mxu0 0.0
    %3080 = vmatpush.msra.mxu0 0.0
    %3081 = vmatpush.msra.mxu0 0.0
    %3082 = vmatpush.msra.mxu0 %v2900
    %3083 = vmatpush.msra.mxu0 %v2899
    %3084 = vmatpush.msra.mxu0 %v2898
    %3085 = vmatpush.msra.mxu0 %v2897
    %3086 = vmatmul.f32.gmra.mxu0 %v3068
    %v3087 = vpop.f32.mrf.mxu0
    %v3088 = vadd.f32 0.0, %v3087
    %3089 = vdwg.mxu0
    %v3090 = vsel %vm217, %v2975, 0
    %3092 = vmatpush.msra.mxu0 0.0
    %3093 = vmatpush.msra.mxu0 0.0
    %3094 = vmatpush.msra.mxu0 0.0
    %3095 = vmatpush.msra.mxu0 0.0
    %3096 = vmatpush.msra.mxu0 0.0
    %3097 = vmatpush.msra.mxu0 0.0
    %3098 = vmatpush.msra.mxu0 0.0
    %3099 = vmatpush.msra.mxu0 0.0
    %3100 = vmatpush.msra.mxu0 0.0
    %3101 = vmatpush.msra.mxu0 0.0
    %3102 = vmatpush.msra.mxu0 0.0
    %3103 = vmatpush.msra.mxu0 0.0
    %3104 = vmatpush.msra.mxu0 %v2896
    %3105 = vmatpush.msra.mxu0 %v2895
    %3106 = vmatpush.msra.mxu0 %v2894
    %3107 = vmatpush.msra.mxu0 %v2893
    %3108 = vmatmul.f32.gmra.mxu0 %v3090
    %v3109 = vpop.f32.mrf.mxu0
    %v3110 = vadd.f32 %v3088, %v3109
    %3111 = vdwg.mxu0
    %v3112 = vsel %vm387, %v3110, 0.0
    %3113 = vadd.xlane.f32.xlu0 %v3112
    %v3114 = vpop.xlane.xlu0 %3113
    %v3115 = vmul.f32 %v3114, %v2720
    %v3116 = vsub.f32 %v3110, %v3115
    %v3117 = vmul.f32 %v3116, %v3116
    %v3118 = vsel %vm387, %v3117, 0.0
    %3119 = vadd.xlane.f32.xlu0 %v3118
    %v3120 = vpop.xlane.xlu0 %3119
    %v3121 = vmul.f32 %v3120, %v2720
    %v3122 = vadd.f32 %v3121, 1e-05
    %v3123 = vrsqrt.pop %v3122
    %v3124 = vmul.f32 %v3123, %v3122
    %v3125 = vmul.f32 %v3124, %v3123
    %v3126 = vmul.f32 0.5, %v3125
    %v3127 = vsub.f32 1.5, %v3126
    %v3128 = vmul.f32 %v3123, %v3127
    %vm3129 = vweird.f32 %v3122
    %vm3130 = vweird.f32 %v3123
    %vm3131 = vmor %vm3129, %vm3130
    %v3132 = vsel %vm3131, %v3123, %v3128
    %v3133 = vmul.f32 %v3116, %v3132
    %v3134 = vmul.f32 %v3133, %v2678
    %v3135 = vadd.f32 %v3134, %v2679
    %v3136 = vperm.slane %v3135, 0
    %v3137 = vmul.f32 %v2748, %v3136
    %v3138 = vsel %vm217, %v3137, 0.0
    %3139 = vadd.xlane.f32.xlu0 %v3138
    %v3140 = vpop.xlane.xlu0 %3139
    %v3141 = vrot.slane %v3140, 4
    %v3142 = vmax.f32 %v3140, %v3141
    %v3143 = vrot.slane %v3142, 2
    %v3144 = vmax.f32 %v3142, %v3143
    %v3145 = vrot.slane %v3144, 1
    %v3146 = vmax.f32 %v3144, %v3145
    %v3147 = vsub.f32 %v3140, %v3146
    %v3148 = vmul.f32 %v3147, 1.442695
    %v3149 = vpow.pop %v3148
    %v3150 = vrot.slane %v3149, 4
    %v3151 = vadd.f32 %v3149, %v3150
    %v3152 = vrot.slane %v3151, 2
    %v3153 = vadd.f32 %v3151, %v3152
    %v3154 = vrot.slane %v3153, 1
    %v3155 = vadd.f32 %v3153, %v3154
    %v3156 = vrcp.pop %v3155
    %v3157 = vmul.f32 %v3149, %v3156
    %v3158 = vmul.f32 %v3157, %v2747
    %v3159 = vsel %vm217, %v3158, 0.0
    %v3160 = vrot.slane %v3159, 4
    %v3161 = vadd.f32 %v3159, %v3160
    %v3162 = vrot.slane %v3161, 2
    %v3163 = vadd.f32 %v3161, %v3162
    %v3164 = vrot.slane %v3163, 1
    %v3165 = vadd.f32 %v3163, %v3164
    %v3167 = vsel %vm217, %v3165, 0
    %3169 = vmatpush.msra.mxu0 0.0
    %3170 = vmatpush.msra.mxu0 0.0
    %3171 = vmatpush.msra.mxu0 0.0
    %3172 = vmatpush.msra.mxu0 0.0
    %3173 = vmatpush.msra.mxu0 0.0
    %3174 = vmatpush.msra.mxu0 0.0
    %3175 = vmatpush.msra.mxu0 0.0
    %3176 = vmatpush.msra.mxu0 0.0
    %3177 = vmatpush.msra.mxu0 0.0
    %3178 = vmatpush.msra.mxu0 0.0
    %3179 = vmatpush.msra.mxu0 0.0
    %3180 = vmatpush.msra.mxu0 0.0
    %3181 = vmatpush.msra.mxu0 %v2904
    %3182 = vmatpush.msra.mxu0 %v2903
    %3183 = vmatpush.msra.mxu0 %v2902
    %3184 = vmatpush.msra.mxu0 %v2901
    %3185 = vmatmul.f32.gmra.mxu0 %v3167
    %v3186 = vpop.f32.mrf.mxu0
    %v3187 = vadd.f32 %v2905, %v3186
    %3188 = vdwg.mxu0
    %3189 = vst [vmem:[%s26] sm:$0x1] %v3187
    %3190 = vmatpush.msra.mxu0 0.0
    %3191 = vmatpush.msra.mxu0 0.0
    %3192 = vmatpush.msra.mxu0 0.0
    %3193 = vmatpush.msra.mxu0 0.0
    %3194 = vmatpush.msra.mxu0 0.0
    %3195 = vmatpush.msra.mxu0 0.0
    %3196 = vmatpush.msra.mxu0 0.0
    %3197 = vmatpush.msra.mxu0 0.0
    %3198 = vmatpush.msra.mxu0 0.0
    %3199 = vmatpush.msra.mxu0 0.0
    %3200 = vmatpush.msra.mxu0 0.0
    %3201 = vmatpush.msra.mxu0 0.0
    %3202 = vmatpush.msra.mxu0 %v2883
    %3203 = vmatpush.msra.mxu0 %v2882
    %3204 = vmatpush.msra.mxu0 %v2881
    %3205 = vmatpush.msra.mxu0 %v2880
    %3206 = vmatmul.f32.gmra.mxu0 %v3090
    %v3207 = vpop.f32.mrf.mxu0
    %v3208 = vadd.f32 0.0, %v3207
    %3209 = vdwg.mxu0
    %v3210 = vadd.f32 %v2878, %v3208
    %v3211 = vxor.u32 %v3210, 2147483648
    %v3212 = vmul.f32 %v3211, 1.442695
    %v3213 = vpow.pop %v3212
    %v3214 = vadd.f32 %v3213, 1.0
    %v3215 = vrcp.pop %v3214
    %v3216 = vmul.f32 %v3214, %v3215
    %v3217 = vsub.f32 1.0, %v3216
    %v3218 = vmul.f32 %v3215, %v3217
    %v3219 = vadd.f32 %v3215, %v3218
    %vm3220 = vweird.f32 %v3214
    %vm3221 = vweird.f32 %v3215
    %vm3222 = vmor %vm3220, %vm3221
    %v3223 = vsel %vm3222, %v3215, %v3219
    %v3224 = vand.u32 2147483647, %v3214
    %vm3225 = vcmp.eq.f32.partialorder %v3224, 8.507059e+37
    %v3226 = vand.u32 %v3214, 2147483648
    %v3227 = vor.u32 1.1754944e-38, %v3226
    %v3228 = vsel %vm3225, %v3227, %v3223
    %v3229 = vmul.f32 1.0, %v3228
    %v3230 = vtanh.pop %v3210
    %v3231 = vmul.f32 %v3229, %v2966
    %3233 = vrot.lane.b32.xlu0 %v3230, 64
    %v3234 = vpop.permute.xlu0 %3233
    %v3236 = vmul.f32 %v3229, %v3234
    %3238 = vrot.lane.b32.xlu0 %v3236, 32
    %v3239 = vpop.permute.xlu0 %3238
    %v3241 = vadd.f32 %v3231, %v3239
    %v3242 = vtanh.pop %v3241
    %3244 = vrot.lane.b32.xlu0 %v3242, 64
    %v3245 = vpop.permute.xlu0 %3244
    %v3247 = vmul.f32 %v3229, %v3245
    %3249 = vrot.lane.b32.xlu0 %v3247, 32
    %v3250 = vpop.permute.xlu0 %3249
    %3252 = vst.msk [vmem:[#allocation5] sm:$0x1] %vm387, %v3250
    %v3253 = vsel %vm217, %v3250, 0
    %3255 = vmatpush.msra.mxu0 0.0
    %3256 = vmatpush.msra.mxu0 0.0
    %3257 = vmatpush.msra.mxu0 0.0
    %3258 = vmatpush.msra.mxu0 0.0
    %3259 = vmatpush.msra.mxu0 0.0
    %3260 = vmatpush.msra.mxu0 0.0
    %3261 = vmatpush.msra.mxu0 0.0
    %3262 = vmatpush.msra.mxu0 0.0
    %3263 = vmatpush.msra.mxu0 0.0
    %3264 = vmatpush.msra.mxu0 0.0
    %3265 = vmatpush.msra.mxu0 0.0
    %3266 = vmatpush.msra.mxu0 0.0
    %3267 = vmatpush.msra.mxu0 %v2883
    %3268 = vmatpush.msra.mxu0 %v2882
    %3269 = vmatpush.msra.mxu0 %v2881
    %3270 = vmatpush.msra.mxu0 %v2880
    %3271 = vmatmul.f32.gmra.mxu0 %v3253
    %v3272 = vpop.f32.mrf.mxu0
    %v3273 = vadd.f32 0.0, %v3272
    %3274 = vdwg.mxu0
    %v3276 = vrot.slane %v3273, 7
    %v3278 = vadd.f32 %v2878, %v3276
    %v3279 = vxor.u32 %v3278, 2147483648
    %v3280 = vmul.f32 %v3279, 1.442695
    %v3281 = vpow.pop %v3280
    %v3282 = vadd.f32 %v3281, 1.0
    %v3283 = vrcp.pop %v3282
    %v3284 = vmul.f32 %v3282, %v3283
    %v3285 = vsub.f32 1.0, %v3284
    %v3286 = vmul.f32 %v3283, %v3285
    %v3287 = vadd.f32 %v3283, %v3286
    %vm3288 = vweird.f32 %v3282
    %vm3289 = vweird.f32 %v3283
    %vm3290 = vmor %vm3288, %vm3289
    %v3291 = vsel %vm3290, %v3283, %v3287
    %v3292 = vand.u32 2147483647, %v3282
    %vm3293 = vcmp.eq.f32.partialorder %v3292, 8.507059e+37
    %v3294 = vand.u32 %v3282, 2147483648
    %v3295 = vor.u32 1.1754944e-38, %v3294
    %v3296 = vsel %vm3293, %v3295, %v3291
    %v3297 = vmul.f32 1.0, %v3296
    %v3298 = vtanh.pop %v3278
    %v3300 = vrot.slane %v3241, 7
    %v3302 = vmul.f32 %v3297, %v3300
    %3304 = vrot.lane.b32.xlu0 %v3298, 64
    %v3305 = vpop.permute.xlu0 %3304
    %v3307 = vmul.f32 %v3297, %v3305
    %3309 = vrot.lane.b32.xlu0 %v3307, 32
    %v3310 = vpop.permute.xlu0 %3309
    %v3312 = vadd.f32 %v3302, %v3310
    %v3313 = vtanh.pop %v3312
    %3315 = vrot.lane.b32.xlu0 %v3313, 64
    %v3316 = vpop.permute.xlu0 %3315
    %v3318 = vmul.f32 %v3297, %v3316
    %3320 = vrot.lane.b32.xlu0 %v3318, 32
    %v3321 = vpop.permute.xlu0 %3320
    %3323 = vst.msk [vmem:[#allocation5] sm:$0x2] %vm534, %v3321
    %v3324 = vld [vmem:[#allocation5] sm:$0x3]
    %v3326 = vperm.slane %v2892, 0
    %v3329 = vsel %vm217, %v3324, 0
    %3331 = vmatpush.msra.mxu0 0.0
    %3332 = vmatpush.msra.mxu0 0.0
    %3333 = vmatpush.msra.mxu0 0.0
    %3334 = vmatpush.msra.mxu0 0.0
    %3335 = vmatpush.msra.mxu0 0.0
    %3336 = vmatpush.msra.mxu0 0.0
    %3337 = vmatpush.msra.mxu0 0.0
    %3338 = vmatpush.msra.mxu0 0.0
    %3339 = vmatpush.msra.mxu0 0.0
    %3340 = vmatpush.msra.mxu0 0.0
    %3341 = vmatpush.msra.mxu0 0.0
    %3342 = vmatpush.msra.mxu0 0.0
    %3343 = vmatpush.msra.mxu0 %v2887
    %3344 = vmatpush.msra.mxu0 %v2886
    %3345 = vmatpush.msra.mxu0 %v2885
    %3346 = vmatpush.msra.mxu0 %v2884
    %3347 = vmatmul.f32.gmra.mxu0 %v3329
    %v3348 = vpop.f32.mrf.mxu0
    %v3349 = vadd.f32 %v3326, %v3348
    %3350 = vdwg.mxu0
    %3351 = vmatpush.msra.mxu0 0.0
    %3352 = vmatpush.msra.mxu0 0.0
    %3353 = vmatpush.msra.mxu0 0.0
    %3354 = vmatpush.msra.mxu0 0.0
    %3355 = vmatpush.msra.mxu0 0.0
    %3356 = vmatpush.msra.mxu0 0.0
    %3357 = vmatpush.msra.mxu0 0.0
    %3358 = vmatpush.msra.mxu0 0.0
    %3359 = vmatpush.msra.mxu0 0.0
    %3360 = vmatpush.msra.mxu0 0.0
    %3361 = vmatpush.msra.mxu0 0.0
    %3362 = vmatpush.msra.mxu0 0.0
    %3363 = vmatpush.msra.mxu0 %v2891
    %3364 = vmatpush.msra.mxu0 %v2890
    %3365 = vmatpush.msra.mxu0 %v2889
    %3366 = vmatpush.msra.mxu0 %v2888
    %3367 = vmatmul.f32.gmra.mxu0 %v3068
    %v3368 = vpop.f32.mrf.mxu0
    %v3369 = vadd.f32 0.0, %v3368
    %3370 = vdwg.mxu0
    %v3371 = vadd.f32 %v3349, %v3369
    %v3372 = vxor.u32 %v3371, 2147483648
    %v3373 = vmul.f32 %v3372, 1.442695
    %v3374 = vpow.pop %v3373
    %v3375 = vadd.f32 %v3374, 1.0
    %v3376 = vrcp.pop %v3375
    %v3377 = vmul.f32 %v3375, %v3376
    %v3378 = vsub.f32 1.0, %v3377
    %v3379 = vmul.f32 %v3376, %v3378
    %v3380 = vadd.f32 %v3376, %v3379
    %vm3381 = vweird.f32 %v3375
    %vm3382 = vweird.f32 %v3376
    %vm3383 = vmor %vm3381, %vm3382
    %v3384 = vsel %vm3383, %v3376, %v3380
    %v3385 = vand.u32 2147483647, %v3375
    %vm3386 = vcmp.eq.f32.partialorder %v3385, 8.507059e+37
    %v3387 = vand.u32 %v3375, 2147483648
    %v3388 = vor.u32 1.1754944e-38, %v3387
    %v3389 = vsel %vm3386, %v3388, %v3384
    %v3390 = vmul.f32 1.0, %v3389
    %v3391 = vtanh.pop %v3371
    %v3392 = vmul.f32 %v3390, %v3058
    %3394 = vrot.lane.b32.xlu0 %v3391, 64
    %v3395 = vpop.permute.xlu0 %3394
    %v3397 = vmul.f32 %v3390, %v3395
    %3399 = vrot.lane.b32.xlu0 %v3397, 32
    %v3400 = vpop.permute.xlu0 %3399
    %v3402 = vadd.f32 %v3392, %v3400
    %v3403 = vtanh.pop %v3402
    %3405 = vrot.lane.b32.xlu0 %v3403, 64
    %v3406 = vpop.permute.xlu0 %3405
    %v3408 = vmul.f32 %v3390, %v3406
    %3410 = vrot.lane.b32.xlu0 %v3408, 32
    %v3411 = vpop.permute.xlu0 %3410
    %v3412 = vsel %vm217, %v3411, 0
    %3414 = vmatpush.msra.mxu0 0.0
    %3415 = vmatpush.msra.mxu0 0.0
    %3416 = vmatpush.msra.mxu0 0.0
    %3417 = vmatpush.msra.mxu0 0.0
    %3418 = vmatpush.msra.mxu0 0.0
    %3419 = vmatpush.msra.mxu0 0.0
    %3420 = vmatpush.msra.mxu0 0.0
    %3421 = vmatpush.msra.mxu0 0.0
    %3422 = vmatpush.msra.mxu0 0.0
    %3423 = vmatpush.msra.mxu0 0.0
    %3424 = vmatpush.msra.mxu0 0.0
    %3425 = vmatpush.msra.mxu0 0.0
    %3426 = vmatpush.msra.mxu0 %v2891
    %3427 = vmatpush.msra.mxu0 %v2890
    %3428 = vmatpush.msra.mxu0 %v2889
    %3429 = vmatpush.msra.mxu0 %v2888
    %3430 = vmatmul.f32.gmra.mxu0 %v3412
    %v3431 = vpop.f32.mrf.mxu0
    %v3432 = vadd.f32 0.0, %v3431
    %3433 = vdwg.mxu0
    %v3435 = vrot.slane %v3432, 7
    %v3437 = vadd.f32 %v3349, %v3435
    %v3438 = vxor.u32 %v3437, 2147483648
    %v3439 = vmul.f32 %v3438, 1.442695
    %v3440 = vpow.pop %v3439
    %v3441 = vadd.f32 %v3440, 1.0
    %v3442 = vrcp.pop %v3441
    %v3443 = vmul.f32 %v3441, %v3442
    %v3444 = vsub.f32 1.0, %v3443
    %v3445 = vmul.f32 %v3442, %v3444
    %v3446 = vadd.f32 %v3442, %v3445
    %vm3447 = vweird.f32 %v3441
    %vm3448 = vweird.f32 %v3442
    %vm3449 = vmor %vm3447, %vm3448
    %v3450 = vsel %vm3449, %v3442, %v3446
    %v3451 = vand.u32 2147483647, %v3441
    %vm3452 = vcmp.eq.f32.partialorder %v3451, 8.507059e+37
    %v3453 = vand.u32 %v3441, 2147483648
    %v3454 = vor.u32 1.1754944e-38, %v3453
    %v3455 = vsel %vm3452, %v3454, %v3450
    %v3456 = vmul.f32 1.0, %v3455
    %v3457 = vtanh.pop %v3437
    %v3459 = vrot.slane %v3402, 7
    %v3461 = vmul.f32 %v3456, %v3459
    %3463 = vrot.lane.b32.xlu0 %v3457, 64
    %v3464 = vpop.permute.xlu0 %3463
    %v3466 = vmul.f32 %v3456, %v3464
    %3468 = vrot.lane.b32.xlu0 %v3466, 32
    %v3469 = vpop.permute.xlu0 %3468
    %v3471 = vadd.f32 %v3461, %v3469
    %v3472 = vtanh.pop %v3471
    %3474 = vrot.lane.b32.xlu0 %v3472, 64
    %v3475 = vpop.permute.xlu0 %3474
    %v3477 = vmul.f32 %v3456, %v3475
    %v3479 = vrot.slane %v3477, 1
    %3480 = vrot.lane.b32.xlu0 %v3479, 32
    %v3481 = vpop.permute.xlu0 %3480
    %v3482 = vsel %vm217, %v3481, 0
    %3484 = vmatpush.msra.mxu0 0.0
    %3485 = vmatpush.msra.mxu0 0.0
    %3486 = vmatpush.msra.mxu0 0.0
    %3487 = vmatpush.msra.mxu0 0.0
    %3488 = vmatpush.msra.mxu0 0.0
    %3489 = vmatpush.msra.mxu0 0.0
    %3490 = vmatpush.msra.mxu0 0.0
    %3491 = vmatpush.msra.mxu0 0.0
    %3492 = vmatpush.msra.mxu0 0.0
    %3493 = vmatpush.msra.mxu0 0.0
    %3494 = vmatpush.msra.mxu0 0.0
    %3495 = vmatpush.msra.mxu0 0.0
    %3496 = vmatpush.msra.mxu0 %v2900
    %3497 = vmatpush.msra.mxu0 %v2899
    %3498 = vmatpush.msra.mxu0 %v2898
    %3499 = vmatpush.msra.mxu0 %v2897
    %3500 = vmatmul.f32.gmra.mxu0 %v3482
    %v3501 = vpop.f32.mrf.mxu0
    %v3502 = vadd.f32 0.0, %v3501
    %3503 = vdwg.mxu0
    %v3504 = vrot.slane %v3318, 1
    %3505 = vrot.lane.b32.xlu0 %v3504, 32
    %v3506 = vpop.permute.xlu0 %3505
    %v3507 = vsel %vm217, %v3506, 0
    %3509 = vmatpush.msra.mxu0 0.0
    %3510 = vmatpush.msra.mxu0 0.0
    %3511 = vmatpush.msra.mxu0 0.0
    %3512 = vmatpush.msra.mxu0 0.0
    %3513 = vmatpush.msra.mxu0 0.0
    %3514 = vmatpush.msra.mxu0 0.0
    %3515 = vmatpush.msra.mxu0 0.0
    %3516 = vmatpush.msra.mxu0 0.0
    %3517 = vmatpush.msra.mxu0 0.0
    %3518 = vmatpush.msra.mxu0 0.0
    %3519 = vmatpush.msra.mxu0 0.0
    %3520 = vmatpush.msra.mxu0 0.0
    %3521 = vmatpush.msra.mxu0 %v2896
    %3522 = vmatpush.msra.mxu0 %v2895
    %3523 = vmatpush.msra.mxu0 %v2894
    %3524 = vmatpush.msra.mxu0 %v2893
    %3525 = vmatmul.f32.gmra.mxu0 %v3507
    %v3526 = vpop.f32.mrf.mxu0
    %v3527 = vadd.f32 %v3502, %v3526
    %3528 = vdwg.mxu0
    %v3529 = vsel %vm387, %v3527, 0.0
    %3530 = vadd.xlane.f32.xlu0 %v3529
    %v3531 = vpop.xlane.xlu0 %3530
    %v3532 = vmul.f32 %v3531, %v2720
    %v3533 = vsub.f32 %v3527, %v3532
    %v3534 = vmul.f32 %v3533, %v3533
    %v3535 = vsel %vm387, %v3534, 0.0
    %3536 = vadd.xlane.f32.xlu0 %v3535
    %v3537 = vpop.xlane.xlu0 %3536
    %v3538 = vmul.f32 %v3537, %v2720
    %v3539 = vadd.f32 %v3538, 1e-05
    %v3540 = vrsqrt.pop %v3539
    %v3541 = vmul.f32 %v3540, %v3539
    %v3542 = vmul.f32 %v3541, %v3540
    %v3543 = vmul.f32 0.5, %v3542
    %v3544 = vsub.f32 1.5, %v3543
    %v3545 = vmul.f32 %v3540, %v3544
    %vm3546 = vweird.f32 %v3539
    %vm3547 = vweird.f32 %v3540
    %vm3548 = vmor %vm3546, %vm3547
    %v3549 = vsel %vm3548, %v3540, %v3545
    %v3550 = vmul.f32 %v3533, %v3549
    %v3551 = vmul.f32 %v3550, %v2678
    %v3552 = vadd.f32 %v3551, %v2679
    %v3553 = vperm.slane %v3552, 0
    %v3554 = vmul.f32 %v2748, %v3553
    %v3555 = vsel %vm217, %v3554, 0.0
    %3556 = vadd.xlane.f32.xlu0 %v3555
    %v3557 = vpop.xlane.xlu0 %3556
    %v3558 = vrot.slane %v3557, 4
    %v3559 = vmax.f32 %v3557, %v3558
    %v3560 = vrot.slane %v3559, 2
    %v3561 = vmax.f32 %v3559, %v3560
    %v3562 = vrot.slane %v3561, 1
    %v3563 = vmax.f32 %v3561, %v3562
    %v3564 = vsub.f32 %v3557, %v3563
    %v3565 = vmul.f32 %v3564, 1.442695
    %v3566 = vpow.pop %v3565
    %v3567 = vrot.slane %v3566, 4
    %v3568 = vadd.f32 %v3566, %v3567
    %v3569 = vrot.slane %v3568, 2
    %v3570 = vadd.f32 %v3568, %v3569
    %v3571 = vrot.slane %v3570, 1
    %v3572 = vadd.f32 %v3570, %v3571
    %v3573 = vrcp.pop %v3572
    %v3574 = vmul.f32 %v3566, %v3573
    %v3575 = vmul.f32 %v3574, %v2747
    %v3576 = vsel %vm217, %v3575, 0.0
    %v3577 = vrot.slane %v3576, 4
    %v3578 = vadd.f32 %v3576, %v3577
    %v3579 = vrot.slane %v3578, 2
    %v3580 = vadd.f32 %v3578, %v3579
    %v3581 = vrot.slane %v3580, 1
    %v3582 = vadd.f32 %v3580, %v3581
    %v3584 = vsel %vm217, %v3582, 0
    %3586 = vmatpush.msra.mxu0 0.0
    %3587 = vmatpush.msra.mxu0 0.0
    %3588 = vmatpush.msra.mxu0 0.0
    %3589 = vmatpush.msra.mxu0 0.0
    %3590 = vmatpush.msra.mxu0 0.0
    %3591 = vmatpush.msra.mxu0 0.0
    %3592 = vmatpush.msra.mxu0 0.0
    %3593 = vmatpush.msra.mxu0 0.0
    %3594 = vmatpush.msra.mxu0 0.0
    %3595 = vmatpush.msra.mxu0 0.0
    %3596 = vmatpush.msra.mxu0 0.0
    %3597 = vmatpush.msra.mxu0 0.0
    %3598 = vmatpush.msra.mxu0 %v2904
    %3599 = vmatpush.msra.mxu0 %v2903
    %3600 = vmatpush.msra.mxu0 %v2902
    %3601 = vmatpush.msra.mxu0 %v2901
    %3602 = vmatmul.f32.gmra.mxu0 %v3584
    %v3603 = vpop.f32.mrf.mxu0
    %v3604 = vadd.f32 %v2905, %v3603
    %3605 = vdwg.mxu0
    %3606 = vst [vmem:[%s26 + $0x1] sm:$0x1] %v3604
    %3607 = vmatpush.msra.mxu0 0.0
    %3608 = vmatpush.msra.mxu0 0.0
    %3609 = vmatpush.msra.mxu0 0.0
    %3610 = vmatpush.msra.mxu0 0.0
    %3611 = vmatpush.msra.mxu0 0.0
    %3612 = vmatpush.msra.mxu0 0.0
    %3613 = vmatpush.msra.mxu0 0.0
    %3614 = vmatpush.msra.mxu0 0.0
    %3615 = vmatpush.msra.mxu0 0.0
    %3616 = vmatpush.msra.mxu0 0.0
    %3617 = vmatpush.msra.mxu0 0.0
    %3618 = vmatpush.msra.mxu0 0.0
    %3619 = vmatpush.msra.mxu0 %v2883
    %3620 = vmatpush.msra.mxu0 %v2882
    %3621 = vmatpush.msra.mxu0 %v2881
    %3622 = vmatpush.msra.mxu0 %v2880
    %3623 = vmatmul.f32.gmra.mxu0 %v3507
    %v3624 = vpop.f32.mrf.mxu0
    %v3625 = vadd.f32 0.0, %v3624
    %3626 = vdwg.mxu0
    %v3627 = vadd.f32 %v2878, %v3625
    %v3628 = vxor.u32 %v3627, 2147483648
    %v3629 = vmul.f32 %v3628, 1.442695
    %v3630 = vpow.pop %v3629
    %v3631 = vadd.f32 %v3630, 1.0
    %v3632 = vrcp.pop %v3631
    %v3633 = vmul.f32 %v3631, %v3632
    %v3634 = vsub.f32 1.0, %v3633
    %v3635 = vmul.f32 %v3632, %v3634
    %v3636 = vadd.f32 %v3632, %v3635
    %vm3637 = vweird.f32 %v3631
    %vm3638 = vweird.f32 %v3632
    %vm3639 = vmor %vm3637, %vm3638
    %v3640 = vsel %vm3639, %v3632, %v3636
    %v3641 = vand.u32 2147483647, %v3631
    %vm3642 = vcmp.eq.f32.partialorder %v3641, 8.507059e+37
    %v3643 = vand.u32 %v3631, 2147483648
    %v3644 = vor.u32 1.1754944e-38, %v3643
    %v3645 = vsel %vm3642, %v3644, %v3640
    %v3646 = vmul.f32 1.0, %v3645
    %v3647 = vtanh.pop %v3627
    %v3649 = vrot.slane %v3312, 1
    %v3651 = vmul.f32 %v3646, %v3649
    %3653 = vrot.lane.b32.xlu0 %v3647, 64
    %v3654 = vpop.permute.xlu0 %3653
    %v3656 = vmul.f32 %v3646, %v3654
    %3658 = vrot.lane.b32.xlu0 %v3656, 32
    %v3659 = vpop.permute.xlu0 %3658
    %v3661 = vadd.f32 %v3651, %v3659
    %v3662 = vtanh.pop %v3661
    %3664 = vrot.lane.b32.xlu0 %v3662, 64
    %v3665 = vpop.permute.xlu0 %3664
    %v3667 = vmul.f32 %v3646, %v3665
    %3669 = vrot.lane.b32.xlu0 %v3667, 32
    %v3670 = vpop.permute.xlu0 %3669
    %3672 = vst.msk [vmem:[#allocation5] sm:$0x1] %vm387, %v3670
    %v3673 = vsel %vm217, %v3670, 0
    %3675 = vmatpush.msra.mxu0 0.0
    %3676 = vmatpush.msra.mxu0 0.0
    %3677 = vmatpush.msra.mxu0 0.0
    %3678 = vmatpush.msra.mxu0 0.0
    %3679 = vmatpush.msra.mxu0 0.0
    %3680 = vmatpush.msra.mxu0 0.0
    %3681 = vmatpush.msra.mxu0 0.0
    %3682 = vmatpush.msra.mxu0 0.0
    %3683 = vmatpush.msra.mxu0 0.0
    %3684 = vmatpush.msra.mxu0 0.0
    %3685 = vmatpush.msra.mxu0 0.0
    %3686 = vmatpush.msra.mxu0 0.0
    %3687 = vmatpush.msra.mxu0 %v2883
    %3688 = vmatpush.msra.mxu0 %v2882
    %3689 = vmatpush.msra.mxu0 %v2881
    %3690 = vmatpush.msra.mxu0 %v2880
    %3691 = vmatmul.f32.gmra.mxu0 %v3673
    %v3692 = vpop.f32.mrf.mxu0
    %v3693 = vadd.f32 0.0, %v3692
    %3694 = vdwg.mxu0
    %v3696 = vrot.slane %v3693, 7
    %v3698 = vadd.f32 %v2878, %v3696
    %v3699 = vxor.u32 %v3698, 2147483648
    %v3700 = vmul.f32 %v3699, 1.442695
    %v3701 = vpow.pop %v3700
    %v3702 = vadd.f32 %v3701, 1.0
    %v3703 = vrcp.pop %v3702
    %v3704 = vmul.f32 %v3702, %v3703
    %v3705 = vsub.f32 1.0, %v3704
    %v3706 = vmul.f32 %v3703, %v3705
    %v3707 = vadd.f32 %v3703, %v3706
    %vm3708 = vweird.f32 %v3702
    %vm3709 = vweird.f32 %v3703
    %vm3710 = vmor %vm3708, %vm3709
    %v3711 = vsel %vm3710, %v3703, %v3707
    %v3712 = vand.u32 2147483647, %v3702
    %vm3713 = vcmp.eq.f32.partialorder %v3712, 8.507059e+37
    %v3714 = vand.u32 %v3702, 2147483648
    %v3715 = vor.u32 1.1754944e-38, %v3714
    %v3716 = vsel %vm3713, %v3715, %v3711
    %v3717 = vmul.f32 1.0, %v3716
    %v3718 = vtanh.pop %v3698
    %v3720 = vrot.slane %v3661, 7
    %v3722 = vmul.f32 %v3717, %v3720
    %3724 = vrot.lane.b32.xlu0 %v3718, 64
    %v3725 = vpop.permute.xlu0 %3724
    %v3727 = vmul.f32 %v3717, %v3725
    %3729 = vrot.lane.b32.xlu0 %v3727, 32
    %v3730 = vpop.permute.xlu0 %3729
    %v3732 = vadd.f32 %v3722, %v3730
    %v3733 = vtanh.pop %v3732
    %3735 = vrot.lane.b32.xlu0 %v3733, 64
    %v3736 = vpop.permute.xlu0 %3735
    %v3738 = vmul.f32 %v3717, %v3736
    %3740 = vrot.lane.b32.xlu0 %v3738, 32
    %v3741 = vpop.permute.xlu0 %3740
    %3743 = vst.msk [vmem:[#allocation5] sm:$0x2] %vm534, %v3741
    %v3744 = vrot.slane %v3738, 1
    %3745 = vrot.lane.b32.xlu0 %v3744, 32
    %v3746 = vpop.permute.xlu0 %3745
    %v3747 = vsel %vm217, %v3746, 0
    %3749 = vmatpush.msra.mxu0 0.0
    %3750 = vmatpush.msra.mxu0 0.0
    %3751 = vmatpush.msra.mxu0 0.0
    %3752 = vmatpush.msra.mxu0 0.0
    %3753 = vmatpush.msra.mxu0 0.0
    %3754 = vmatpush.msra.mxu0 0.0
    %3755 = vmatpush.msra.mxu0 0.0
    %3756 = vmatpush.msra.mxu0 0.0
    %3757 = vmatpush.msra.mxu0 0.0
    %3758 = vmatpush.msra.mxu0 0.0
    %3759 = vmatpush.msra.mxu0 0.0
    %3760 = vmatpush.msra.mxu0 0.0
    %3761 = vmatpush.msra.mxu0 %v2883
    %3762 = vmatpush.msra.mxu0 %v2882
    %3763 = vmatpush.msra.mxu0 %v2881
    %3764 = vmatpush.msra.mxu0 %v2880
    %3765 = vmatmul.f32.gmra.mxu0 %v3747
    %v3766 = vpop.f32.mrf.mxu0
    %v3767 = vadd.f32 0.0, %v3766
    %3768 = vdwg.mxu0
    %v3770 = vrot.slane %v3767, 6
    %v3772 = vadd.f32 %v2878, %v3770
    %v3773 = vxor.u32 %v3772, 2147483648
    %v3774 = vmul.f32 %v3773, 1.442695
    %v3775 = vpow.pop %v3774
    %v3776 = vadd.f32 %v3775, 1.0
    %v3777 = vrcp.pop %v3776
    %v3778 = vmul.f32 %v3776, %v3777
    %v3779 = vsub.f32 1.0, %v3778
    %v3780 = vmul.f32 %v3777, %v3779
    %v3781 = vadd.f32 %v3777, %v3780
    %vm3782 = vweird.f32 %v3776
    %vm3783 = vweird.f32 %v3777
    %vm3784 = vmor %vm3782, %vm3783
    %v3785 = vsel %vm3784, %v3777, %v3781
    %v3786 = vand.u32 2147483647, %v3776
    %vm3787 = vcmp.eq.f32.partialorder %v3786, 8.507059e+37
    %v3788 = vand.u32 %v3776, 2147483648
    %v3789 = vor.u32 1.1754944e-38, %v3788
    %v3790 = vsel %vm3787, %v3789, %v3785
    %v3791 = vmul.f32 1.0, %v3790
    %v3792 = vtanh.pop %v3772
    %v3794 = vrot.slane %v3732, 7
    %v3796 = vmul.f32 %v3791, %v3794
    %3798 = vrot.lane.b32.xlu0 %v3792, 64
    %v3799 = vpop.permute.xlu0 %3798
    %v3801 = vmul.f32 %v3791, %v3799
    %3803 = vrot.lane.b32.xlu0 %v3801, 32
    %v3804 = vpop.permute.xlu0 %3803
    %v3806 = vadd.f32 %v3796, %v3804
    %v3807 = vtanh.pop %v3806
    %3809 = vrot.lane.b32.xlu0 %v3807, 64
    %v3810 = vpop.permute.xlu0 %3809
    %v3812 = vmul.f32 %v3791, %v3810
    %3814 = vrot.lane.b32.xlu0 %v3812, 32
    %v3815 = vpop.permute.xlu0 %3814
    %3817 = vst.msk [vmem:[#allocation5] sm:$0x4] %vm684, %v3815
    %v3818 = vld [vmem:[#allocation5] sm:$0x7]
    %v3820 = vsel %vm217, %v3818, 0
    %3822 = vmatpush.msra.mxu0 0.0
    %3823 = vmatpush.msra.mxu0 0.0
    %3824 = vmatpush.msra.mxu0 0.0
    %3825 = vmatpush.msra.mxu0 0.0
    %3826 = vmatpush.msra.mxu0 0.0
    %3827 = vmatpush.msra.mxu0 0.0
    %3828 = vmatpush.msra.mxu0 0.0
    %3829 = vmatpush.msra.mxu0 0.0
    %3830 = vmatpush.msra.mxu0 0.0
    %3831 = vmatpush.msra.mxu0 0.0
    %3832 = vmatpush.msra.mxu0 0.0
    %3833 = vmatpush.msra.mxu0 0.0
    %3834 = vmatpush.msra.mxu0 %v2887
    %3835 = vmatpush.msra.mxu0 %v2886
    %3836 = vmatpush.msra.mxu0 %v2885
    %3837 = vmatpush.msra.mxu0 %v2884
    %3838 = vmatmul.f32.gmra.mxu0 %v3820
    %v3839 = vpop.f32.mrf.mxu0
    %v3840 = vadd.f32 %v3326, %v3839
    %3841 = vdwg.mxu0
    %3842 = vmatpush.msra.mxu0 0.0
    %3843 = vmatpush.msra.mxu0 0.0
    %3844 = vmatpush.msra.mxu0 0.0
    %3845 = vmatpush.msra.mxu0 0.0
    %3846 = vmatpush.msra.mxu0 0.0
    %3847 = vmatpush.msra.mxu0 0.0
    %3848 = vmatpush.msra.mxu0 0.0
    %3849 = vmatpush.msra.mxu0 0.0
    %3850 = vmatpush.msra.mxu0 0.0
    %3851 = vmatpush.msra.mxu0 0.0
    %3852 = vmatpush.msra.mxu0 0.0
    %3853 = vmatpush.msra.mxu0 0.0
    %3854 = vmatpush.msra.mxu0 %v2891
    %3855 = vmatpush.msra.mxu0 %v2890
    %3856 = vmatpush.msra.mxu0 %v2889
    %3857 = vmatpush.msra.mxu0 %v2888
    %3858 = vmatmul.f32.gmra.mxu0 %v3482
    %v3859 = vpop.f32.mrf.mxu0
    %v3860 = vadd.f32 0.0, %v3859
    %3861 = vdwg.mxu0
    %v3862 = vadd.f32 %v3840, %v3860
    %v3863 = vxor.u32 %v3862, 2147483648
    %v3864 = vmul.f32 %v3863, 1.442695
    %v3865 = vpow.pop %v3864
    %v3866 = vadd.f32 %v3865, 1.0
    %v3867 = vrcp.pop %v3866
    %v3868 = vmul.f32 %v3866, %v3867
    %v3869 = vsub.f32 1.0, %v3868
    %v3870 = vmul.f32 %v3867, %v3869
    %v3871 = vadd.f32 %v3867, %v3870
    %vm3872 = vweird.f32 %v3866
    %vm3873 = vweird.f32 %v3867
    %vm3874 = vmor %vm3872, %vm3873
    %v3875 = vsel %vm3874, %v3867, %v3871
    %v3876 = vand.u32 2147483647, %v3866
    %vm3877 = vcmp.eq.f32.partialorder %v3876, 8.507059e+37
    %v3878 = vand.u32 %v3866, 2147483648
    %v3879 = vor.u32 1.1754944e-38, %v3878
    %v3880 = vsel %vm3877, %v3879, %v3875
    %v3881 = vmul.f32 1.0, %v3880
    %v3882 = vtanh.pop %v3862
    %v3884 = vrot.slane %v3471, 1
    %v3886 = vmul.f32 %v3881, %v3884
    %3888 = vrot.lane.b32.xlu0 %v3882, 64
    %v3889 = vpop.permute.xlu0 %3888
    %v3891 = vmul.f32 %v3881, %v3889
    %3893 = vrot.lane.b32.xlu0 %v3891, 32
    %v3894 = vpop.permute.xlu0 %3893
    %v3896 = vadd.f32 %v3886, %v3894
    %v3897 = vtanh.pop %v3896
    %3899 = vrot.lane.b32.xlu0 %v3897, 64
    %v3900 = vpop.permute.xlu0 %3899
    %v3902 = vmul.f32 %v3881, %v3900
    %3904 = vrot.lane.b32.xlu0 %v3902, 32
    %v3905 = vpop.permute.xlu0 %3904
    %v3906 = vsel %vm217, %v3905, 0
    %3908 = vmatpush.msra.mxu0 0.0
    %3909 = vmatpush.msra.mxu0 0.0
    %3910 = vmatpush.msra.mxu0 0.0
    %3911 = vmatpush.msra.mxu0 0.0
    %3912 = vmatpush.msra.mxu0 0.0
    %3913 = vmatpush.msra.mxu0 0.0
    %3914 = vmatpush.msra.mxu0 0.0
    %3915 = vmatpush.msra.mxu0 0.0
    %3916 = vmatpush.msra.mxu0 0.0
    %3917 = vmatpush.msra.mxu0 0.0
    %3918 = vmatpush.msra.mxu0 0.0
    %3919 = vmatpush.msra.mxu0 0.0
    %3920 = vmatpush.msra.mxu0 %v2891
    %3921 = vmatpush.msra.mxu0 %v2890
    %3922 = vmatpush.msra.mxu0 %v2889
    %3923 = vmatpush.msra.mxu0 %v2888
    %3924 = vmatmul.f32.gmra.mxu0 %v3906
    %v3925 = vpop.f32.mrf.mxu0
    %v3926 = vadd.f32 0.0, %v3925
    %3927 = vdwg.mxu0
    %v3929 = vrot.slane %v3926, 7
    %v3931 = vadd.f32 %v3840, %v3929
    %v3932 = vxor.u32 %v3931, 2147483648
    %v3933 = vmul.f32 %v3932, 1.442695
    %v3934 = vpow.pop %v3933
    %v3935 = vadd.f32 %v3934, 1.0
    %v3936 = vrcp.pop %v3935
    %v3937 = vmul.f32 %v3935, %v3936
    %v3938 = vsub.f32 1.0, %v3937
    %v3939 = vmul.f32 %v3936, %v3938
    %v3940 = vadd.f32 %v3936, %v3939
    %vm3941 = vweird.f32 %v3935
    %vm3942 = vweird.f32 %v3936
    %vm3943 = vmor %vm3941, %vm3942
    %v3944 = vsel %vm3943, %v3936, %v3940
    %v3945 = vand.u32 2147483647, %v3935
    %vm3946 = vcmp.eq.f32.partialorder %v3945, 8.507059e+37
    %v3947 = vand.u32 %v3935, 2147483648
    %v3948 = vor.u32 1.1754944e-38, %v3947
    %v3949 = vsel %vm3946, %v3948, %v3944
    %v3950 = vmul.f32 1.0, %v3949
    %v3951 = vtanh.pop %v3931
    %v3953 = vrot.slane %v3896, 7
    %v3955 = vmul.f32 %v3950, %v3953
    %3957 = vrot.lane.b32.xlu0 %v3951, 64
    %v3958 = vpop.permute.xlu0 %3957
    %v3960 = vmul.f32 %v3950, %v3958
    %3962 = vrot.lane.b32.xlu0 %v3960, 32
    %v3963 = vpop.permute.xlu0 %3962
    %v3965 = vadd.f32 %v3955, %v3963
    %v3966 = vtanh.pop %v3965
    %3968 = vrot.lane.b32.xlu0 %v3966, 64
    %v3969 = vpop.permute.xlu0 %3968
    %v3971 = vmul.f32 %v3950, %v3969
    %v3973 = vrot.slane %v3971, 1
    %3974 = vrot.lane.b32.xlu0 %v3973, 32
    %v3975 = vpop.permute.xlu0 %3974
    %v3976 = vsel %vm217, %v3975, 0
    %3978 = vmatpush.msra.mxu0 0.0
    %3979 = vmatpush.msra.mxu0 0.0
    %3980 = vmatpush.msra.mxu0 0.0
    %3981 = vmatpush.msra.mxu0 0.0
    %3982 = vmatpush.msra.mxu0 0.0
    %3983 = vmatpush.msra.mxu0 0.0
    %3984 = vmatpush.msra.mxu0 0.0
    %3985 = vmatpush.msra.mxu0 0.0
    %3986 = vmatpush.msra.mxu0 0.0
    %3987 = vmatpush.msra.mxu0 0.0
    %3988 = vmatpush.msra.mxu0 0.0
    %3989 = vmatpush.msra.mxu0 0.0
    %3990 = vmatpush.msra.mxu0 %v2891
    %3991 = vmatpush.msra.mxu0 %v2890
    %3992 = vmatpush.msra.mxu0 %v2889
    %3993 = vmatpush.msra.mxu0 %v2888
    %3994 = vmatmul.f32.gmra.mxu0 %v3976
    %v3995 = vpop.f32.mrf.mxu0
    %v3996 = vadd.f32 0.0, %v3995
    %3997 = vdwg.mxu0
    %v3999 = vrot.slane %v3996, 6
    %v4001 = vadd.f32 %v3840, %v3999
    %v4002 = vxor.u32 %v4001, 2147483648
    %v4003 = vmul.f32 %v4002, 1.442695
    %v4004 = vpow.pop %v4003
    %v4005 = vadd.f32 %v4004, 1.0
    %v4006 = vrcp.pop %v4005
    %v4007 = vmul.f32 %v4005, %v4006
    %v4008 = vsub.f32 1.0, %v4007
    %v4009 = vmul.f32 %v4006, %v4008
    %v4010 = vadd.f32 %v4006, %v4009
    %vm4011 = vweird.f32 %v4005
    %vm4012 = vweird.f32 %v4006
    %vm4013 = vmor %vm4011, %vm4012
    %v4014 = vsel %vm4013, %v4006, %v4010
    %v4015 = vand.u32 2147483647, %v4005
    %vm4016 = vcmp.eq.f32.partialorder %v4015, 8.507059e+37
    %v4017 = vand.u32 %v4005, 2147483648
    %v4018 = vor.u32 1.1754944e-38, %v4017
    %v4019 = vsel %vm4016, %v4018, %v4014
    %v4020 = vmul.f32 1.0, %v4019
    %v4021 = vtanh.pop %v4001
    %v4023 = vrot.slane %v3965, 7
    %v4025 = vmul.f32 %v4020, %v4023
    %4027 = vrot.lane.b32.xlu0 %v4021, 64
    %v4028 = vpop.permute.xlu0 %4027
    %v4030 = vmul.f32 %v4020, %v4028
    %4032 = vrot.lane.b32.xlu0 %v4030, 32
    %v4033 = vpop.permute.xlu0 %4032
    %v4035 = vadd.f32 %v4025, %v4033
    %v4036 = vtanh.pop %v4035
    %4038 = vrot.lane.b32.xlu0 %v4036, 64
    %v4039 = vpop.permute.xlu0 %4038
    %v4041 = vmul.f32 %v4020, %v4039
    %v4043 = vrot.slane %v4041, 2
    %4044 = vrot.lane.b32.xlu0 %v4043, 32
    %v4045 = vpop.permute.xlu0 %4044
    %v4046 = vsel %vm217, %v4045, 0
    %4048 = vmatpush.msra.mxu0 0.0
    %4049 = vmatpush.msra.mxu0 0.0
    %4050 = vmatpush.msra.mxu0 0.0
    %4051 = vmatpush.msra.mxu0 0.0
    %4052 = vmatpush.msra.mxu0 0.0
    %4053 = vmatpush.msra.mxu0 0.0
    %4054 = vmatpush.msra.mxu0 0.0
    %4055 = vmatpush.msra.mxu0 0.0
    %4056 = vmatpush.msra.mxu0 0.0
    %4057 = vmatpush.msra.mxu0 0.0
    %4058 = vmatpush.msra.mxu0 0.0
    %4059 = vmatpush.msra.mxu0 0.0
    %4060 = vmatpush.msra.mxu0 %v2900
    %4061 = vmatpush.msra.mxu0 %v2899
    %4062 = vmatpush.msra.mxu0 %v2898
    %4063 = vmatpush.msra.mxu0 %v2897
    %4064 = vmatmul.f32.gmra.mxu0 %v4046
    %v4065 = vpop.f32.mrf.mxu0
    %v4066 = vadd.f32 0.0, %v4065
    %4067 = vdwg.mxu0
    %v4068 = vrot.slane %v3812, 2
    %4069 = vrot.lane.b32.xlu0 %v4068, 32
    %v4070 = vpop.permute.xlu0 %4069
    %v4071 = vsel %vm217, %v4070, 0
    %4073 = vmatpush.msra.mxu0 0.0
    %4074 = vmatpush.msra.mxu0 0.0
    %4075 = vmatpush.msra.mxu0 0.0
    %4076 = vmatpush.msra.mxu0 0.0
    %4077 = vmatpush.msra.mxu0 0.0
    %4078 = vmatpush.msra.mxu0 0.0
    %4079 = vmatpush.msra.mxu0 0.0
    %4080 = vmatpush.msra.mxu0 0.0
    %4081 = vmatpush.msra.mxu0 0.0
    %4082 = vmatpush.msra.mxu0 0.0
    %4083 = vmatpush.msra.mxu0 0.0
    %4084 = vmatpush.msra.mxu0 0.0
    %4085 = vmatpush.msra.mxu0 %v2896
    %4086 = vmatpush.msra.mxu0 %v2895
    %4087 = vmatpush.msra.mxu0 %v2894
    %4088 = vmatpush.msra.mxu0 %v2893
    %4089 = vmatmul.f32.gmra.mxu0 %v4071
    %v4090 = vpop.f32.mrf.mxu0
    %v4091 = vadd.f32 %v4066, %v4090
    %4092 = vdwg.mxu0
    %v4093 = vsel %vm387, %v4091, 0.0
    %4094 = vadd.xlane.f32.xlu0 %v4093
    %v4095 = vpop.xlane.xlu0 %4094
    %v4096 = vmul.f32 %v4095, %v2720
    %v4097 = vsub.f32 %v4091, %v4096
    %v4098 = vmul.f32 %v4097, %v4097
    %v4099 = vsel %vm387, %v4098, 0.0
    %4100 = vadd.xlane.f32.xlu0 %v4099
    %v4101 = vpop.xlane.xlu0 %4100
    %v4102 = vmul.f32 %v4101, %v2720
    %v4103 = vadd.f32 %v4102, 1e-05
    %v4104 = vrsqrt.pop %v4103
    %v4105 = vmul.f32 %v4104, %v4103
    %v4106 = vmul.f32 %v4105, %v4104
    %v4107 = vmul.f32 0.5, %v4106
    %v4108 = vsub.f32 1.5, %v4107
    %v4109 = vmul.f32 %v4104, %v4108
    %vm4110 = vweird.f32 %v4103
    %vm4111 = vweird.f32 %v4104
    %vm4112 = vmor %vm4110, %vm4111
    %v4113 = vsel %vm4112, %v4104, %v4109
    %v4114 = vmul.f32 %v4097, %v4113
    %v4115 = vmul.f32 %v4114, %v2678
    %v4116 = vadd.f32 %v4115, %v2679
    %v4117 = vperm.slane %v4116, 0
    %v4118 = vmul.f32 %v2748, %v4117
    %v4119 = vsel %vm217, %v4118, 0.0
    %4120 = vadd.xlane.f32.xlu0 %v4119
    %v4121 = vpop.xlane.xlu0 %4120
    %v4122 = vrot.slane %v4121, 4
    %v4123 = vmax.f32 %v4121, %v4122
    %v4124 = vrot.slane %v4123, 2
    %v4125 = vmax.f32 %v4123, %v4124
    %v4126 = vrot.slane %v4125, 1
    %v4127 = vmax.f32 %v4125, %v4126
    %v4128 = vsub.f32 %v4121, %v4127
    %v4129 = vmul.f32 %v4128, 1.442695
    %v4130 = vpow.pop %v4129
    %v4131 = vrot.slane %v4130, 4
    %v4132 = vadd.f32 %v4130, %v4131
    %v4133 = vrot.slane %v4132, 2
    %v4134 = vadd.f32 %v4132, %v4133
    %v4135 = vrot.slane %v4134, 1
    %v4136 = vadd.f32 %v4134, %v4135
    %v4137 = vrcp.pop %v4136
    %v4138 = vmul.f32 %v4130, %v4137
    %v4139 = vmul.f32 %v4138, %v2747
    %v4140 = vsel %vm217, %v4139, 0.0
    %v4141 = vrot.slane %v4140, 4
    %v4142 = vadd.f32 %v4140, %v4141
    %v4143 = vrot.slane %v4142, 2
    %v4144 = vadd.f32 %v4142, %v4143
    %v4145 = vrot.slane %v4144, 1
    %v4146 = vadd.f32 %v4144, %v4145
    %v4148 = vsel %vm217, %v4146, 0
    %4150 = vmatpush.msra.mxu0 0.0
    %4151 = vmatpush.msra.mxu0 0.0
    %4152 = vmatpush.msra.mxu0 0.0
    %4153 = vmatpush.msra.mxu0 0.0
    %4154 = vmatpush.msra.mxu0 0.0
    %4155 = vmatpush.msra.mxu0 0.0
    %4156 = vmatpush.msra.mxu0 0.0
    %4157 = vmatpush.msra.mxu0 0.0
    %4158 = vmatpush.msra.mxu0 0.0
    %4159 = vmatpush.msra.mxu0 0.0
    %4160 = vmatpush.msra.mxu0 0.0
    %4161 = vmatpush.msra.mxu0 0.0
    %4162 = vmatpush.msra.mxu0 %v2904
    %4163 = vmatpush.msra.mxu0 %v2903
    %4164 = vmatpush.msra.mxu0 %v2902
    %4165 = vmatpush.msra.mxu0 %v2901
    %4166 = vmatmul.f32.gmra.mxu0 %v4148
    %v4167 = vpop.f32.mrf.mxu0
    %v4168 = vadd.f32 %v2905, %v4167
    %4169 = vdwg.mxu0
    %4170 = vst [vmem:[%s26 + $0x2] sm:$0x1] %v4168
    %4171 = vmatpush.msra.mxu0 0.0
    %4172 = vmatpush.msra.mxu0 0.0
    %4173 = vmatpush.msra.mxu0 0.0
    %4174 = vmatpush.msra.mxu0 0.0
    %4175 = vmatpush.msra.mxu0 0.0
    %4176 = vmatpush.msra.mxu0 0.0
    %4177 = vmatpush.msra.mxu0 0.0
    %4178 = vmatpush.msra.mxu0 0.0
    %4179 = vmatpush.msra.mxu0 0.0
    %4180 = vmatpush.msra.mxu0 0.0
    %4181 = vmatpush.msra.mxu0 0.0
    %4182 = vmatpush.msra.mxu0 0.0
    %4183 = vmatpush.msra.mxu0 %v2883
    %4184 = vmatpush.msra.mxu0 %v2882
    %4185 = vmatpush.msra.mxu0 %v2881
    %4186 = vmatpush.msra.mxu0 %v2880
    %4187 = vmatmul.f32.gmra.mxu0 %v4071
    %v4188 = vpop.f32.mrf.mxu0
    %v4189 = vadd.f32 0.0, %v4188
    %4190 = vdwg.mxu0
    %v4191 = vadd.f32 %v2878, %v4189
    %v4192 = vxor.u32 %v4191, 2147483648
    %v4193 = vmul.f32 %v4192, 1.442695
    %v4194 = vpow.pop %v4193
    %v4195 = vadd.f32 %v4194, 1.0
    %v4196 = vrcp.pop %v4195
    %v4197 = vmul.f32 %v4195, %v4196
    %v4198 = vsub.f32 1.0, %v4197
    %v4199 = vmul.f32 %v4196, %v4198
    %v4200 = vadd.f32 %v4196, %v4199
    %vm4201 = vweird.f32 %v4195
    %vm4202 = vweird.f32 %v4196
    %vm4203 = vmor %vm4201, %vm4202
    %v4204 = vsel %vm4203, %v4196, %v4200
    %v4205 = vand.u32 2147483647, %v4195
    %vm4206 = vcmp.eq.f32.partialorder %v4205, 8.507059e+37
    %v4207 = vand.u32 %v4195, 2147483648
    %v4208 = vor.u32 1.1754944e-38, %v4207
    %v4209 = vsel %vm4206, %v4208, %v4204
    %v4210 = vmul.f32 1.0, %v4209
    %v4211 = vtanh.pop %v4191
    %v4213 = vrot.slane %v3806, 2
    %v4215 = vmul.f32 %v4210, %v4213
    %4217 = vrot.lane.b32.xlu0 %v4211, 64
    %v4218 = vpop.permute.xlu0 %4217
    %v4220 = vmul.f32 %v4210, %v4218
    %4222 = vrot.lane.b32.xlu0 %v4220, 32
    %v4223 = vpop.permute.xlu0 %4222
    %v4225 = vadd.f32 %v4215, %v4223
    %v4226 = vtanh.pop %v4225
    %4228 = vrot.lane.b32.xlu0 %v4226, 64
    %v4229 = vpop.permute.xlu0 %4228
    %v4231 = vmul.f32 %v4210, %v4229
    %4233 = vrot.lane.b32.xlu0 %v4231, 32
    %v4234 = vpop.permute.xlu0 %4233
    %4236 = vst.msk [vmem:[#allocation5] sm:$0x1] %vm387, %v4234
    %v4237 = vsel %vm217, %v4234, 0
    %4239 = vmatpush.msra.mxu0 0.0
    %4240 = vmatpush.msra.mxu0 0.0
    %4241 = vmatpush.msra.mxu0 0.0
    %4242 = vmatpush.msra.mxu0 0.0
    %4243 = vmatpush.msra.mxu0 0.0
    %4244 = vmatpush.msra.mxu0 0.0
    %4245 = vmatpush.msra.mxu0 0.0
    %4246 = vmatpush.msra.mxu0 0.0
    %4247 = vmatpush.msra.mxu0 0.0
    %4248 = vmatpush.msra.mxu0 0.0
    %4249 = vmatpush.msra.mxu0 0.0
    %4250 = vmatpush.msra.mxu0 0.0
    %4251 = vmatpush.msra.mxu0 %v2883
    %4252 = vmatpush.msra.mxu0 %v2882
    %4253 = vmatpush.msra.mxu0 %v2881
    %4254 = vmatpush.msra.mxu0 %v2880
    %4255 = vmatmul.f32.gmra.mxu0 %v4237
    %v4256 = vpop.f32.mrf.mxu0
    %v4257 = vadd.f32 0.0, %v4256
    %4258 = vdwg.mxu0
    %v4260 = vrot.slane %v4257, 7
    %v4262 = vadd.f32 %v2878, %v4260
    %v4263 = vxor.u32 %v4262, 2147483648
    %v4264 = vmul.f32 %v4263, 1.442695
    %v4265 = vpow.pop %v4264
    %v4266 = vadd.f32 %v4265, 1.0
    %v4267 = vrcp.pop %v4266
    %v4268 = vmul.f32 %v4266, %v4267
    %v4269 = vsub.f32 1.0, %v4268
    %v4270 = vmul.f32 %v4267, %v4269
    %v4271 = vadd.f32 %v4267, %v4270
    %vm4272 = vweird.f32 %v4266
    %vm4273 = vweird.f32 %v4267
    %vm4274 = vmor %vm4272, %vm4273
    %v4275 = vsel %vm4274, %v4267, %v4271
    %v4276 = vand.u32 2147483647, %v4266
    %vm4277 = vcmp.eq.f32.partialorder %v4276, 8.507059e+37
    %v4278 = vand.u32 %v4266, 2147483648
    %v4279 = vor.u32 1.1754944e-38, %v4278
    %v4280 = vsel %vm4277, %v4279, %v4275
    %v4281 = vmul.f32 1.0, %v4280
    %v4282 = vtanh.pop %v4262
    %v4284 = vrot.slane %v4225, 7
    %v4286 = vmul.f32 %v4281, %v4284
    %4288 = vrot.lane.b32.xlu0 %v4282, 64
    %v4289 = vpop.permute.xlu0 %4288
    %v4291 = vmul.f32 %v4281, %v4289
    %4293 = vrot.lane.b32.xlu0 %v4291, 32
    %v4294 = vpop.permute.xlu0 %4293
    %v4296 = vadd.f32 %v4286, %v4294
    %v4297 = vtanh.pop %v4296
    %4299 = vrot.lane.b32.xlu0 %v4297, 64
    %v4300 = vpop.permute.xlu0 %4299
    %v4302 = vmul.f32 %v4281, %v4300
    %4304 = vrot.lane.b32.xlu0 %v4302, 32
    %v4305 = vpop.permute.xlu0 %4304
    %4307 = vst.msk [vmem:[#allocation5] sm:$0x2] %vm534, %v4305
    %v4308 = vrot.slane %v4302, 1
    %4309 = vrot.lane.b32.xlu0 %v4308, 32
    %v4310 = vpop.permute.xlu0 %4309
    %v4311 = vsel %vm217, %v4310, 0
    %4313 = vmatpush.msra.mxu0 0.0
    %4314 = vmatpush.msra.mxu0 0.0
    %4315 = vmatpush.msra.mxu0 0.0
    %4316 = vmatpush.msra.mxu0 0.0
    %4317 = vmatpush.msra.mxu0 0.0
    %4318 = vmatpush.msra.mxu0 0.0
    %4319 = vmatpush.msra.mxu0 0.0
    %4320 = vmatpush.msra.mxu0 0.0
    %4321 = vmatpush.msra.mxu0 0.0
    %4322 = vmatpush.msra.mxu0 0.0
    %4323 = vmatpush.msra.mxu0 0.0
    %4324 = vmatpush.msra.mxu0 0.0
    %4325 = vmatpush.msra.mxu0 %v2883
    %4326 = vmatpush.msra.mxu0 %v2882
    %4327 = vmatpush.msra.mxu0 %v2881
    %4328 = vmatpush.msra.mxu0 %v2880
    %4329 = vmatmul.f32.gmra.mxu0 %v4311
    %v4330 = vpop.f32.mrf.mxu0
    %v4331 = vadd.f32 0.0, %v4330
    %4332 = vdwg.mxu0
    %v4334 = vrot.slane %v4331, 6
    %v4336 = vadd.f32 %v2878, %v4334
    %v4337 = vxor.u32 %v4336, 2147483648
    %v4338 = vmul.f32 %v4337, 1.442695
    %v4339 = vpow.pop %v4338
    %v4340 = vadd.f32 %v4339, 1.0
    %v4341 = vrcp.pop %v4340
    %v4342 = vmul.f32 %v4340, %v4341
    %v4343 = vsub.f32 1.0, %v4342
    %v4344 = vmul.f32 %v4341, %v4343
    %v4345 = vadd.f32 %v4341, %v4344
    %vm4346 = vweird.f32 %v4340
    %vm4347 = vweird.f32 %v4341
    %vm4348 = vmor %vm4346, %vm4347
    %v4349 = vsel %vm4348, %v4341, %v4345
    %v4350 = vand.u32 2147483647, %v4340
    %vm4351 = vcmp.eq.f32.partialorder %v4350, 8.507059e+37
    %v4352 = vand.u32 %v4340, 2147483648
    %v4353 = vor.u32 1.1754944e-38, %v4352
    %v4354 = vsel %vm4351, %v4353, %v4349
    %v4355 = vmul.f32 1.0, %v4354
    %v4356 = vtanh.pop %v4336
    %v4358 = vrot.slane %v4296, 7
    %v4360 = vmul.f32 %v4355, %v4358
    %4362 = vrot.lane.b32.xlu0 %v4356, 64
    %v4363 = vpop.permute.xlu0 %4362
    %v4365 = vmul.f32 %v4355, %v4363
    %4367 = vrot.lane.b32.xlu0 %v4365, 32
    %v4368 = vpop.permute.xlu0 %4367
    %v4370 = vadd.f32 %v4360, %v4368
    %v4371 = vtanh.pop %v4370
    %4373 = vrot.lane.b32.xlu0 %v4371, 64
    %v4374 = vpop.permute.xlu0 %4373
    %v4376 = vmul.f32 %v4355, %v4374
    %4378 = vrot.lane.b32.xlu0 %v4376, 32
    %v4379 = vpop.permute.xlu0 %4378
    %4381 = vst.msk [vmem:[#allocation5] sm:$0x4] %vm684, %v4379
    %v4382 = vrot.slane %v4376, 2
    %4383 = vrot.lane.b32.xlu0 %v4382, 32
    %v4384 = vpop.permute.xlu0 %4383
    %v4385 = vsel %vm217, %v4384, 0
    %4387 = vmatpush.msra.mxu0 0.0
    %4388 = vmatpush.msra.mxu0 0.0
    %4389 = vmatpush.msra.mxu0 0.0
    %4390 = vmatpush.msra.mxu0 0.0
    %4391 = vmatpush.msra.mxu0 0.0
    %4392 = vmatpush.msra.mxu0 0.0
    %4393 = vmatpush.msra.mxu0 0.0
    %4394 = vmatpush.msra.mxu0 0.0
    %4395 = vmatpush.msra.mxu0 0.0
    %4396 = vmatpush.msra.mxu0 0.0
    %4397 = vmatpush.msra.mxu0 0.0
    %4398 = vmatpush.msra.mxu0 0.0
    %4399 = vmatpush.msra.mxu0 %v2883
    %4400 = vmatpush.msra.mxu0 %v2882
    %4401 = vmatpush.msra.mxu0 %v2881
    %4402 = vmatpush.msra.mxu0 %v2880
    %4403 = vmatmul.f32.gmra.mxu0 %v4385
    %v4404 = vpop.f32.mrf.mxu0
    %v4405 = vadd.f32 0.0, %v4404
    %4406 = vdwg.mxu0
    %v4408 = vrot.slane %v4405, 5
    %v4410 = vadd.f32 %v2878, %v4408
    %v4411 = vxor.u32 %v4410, 2147483648
    %v4412 = vmul.f32 %v4411, 1.442695
    %v4413 = vpow.pop %v4412
    %v4414 = vadd.f32 %v4413, 1.0
    %v4415 = vrcp.pop %v4414
    %v4416 = vmul.f32 %v4414, %v4415
    %v4417 = vsub.f32 1.0, %v4416
    %v4418 = vmul.f32 %v4415, %v4417
    %v4419 = vadd.f32 %v4415, %v4418
    %vm4420 = vweird.f32 %v4414
    %vm4421 = vweird.f32 %v4415
    %vm4422 = vmor %vm4420, %vm4421
    %v4423 = vsel %vm4422, %v4415, %v4419
    %v4424 = vand.u32 2147483647, %v4414
    %vm4425 = vcmp.eq.f32.partialorder %v4424, 8.507059e+37
    %v4426 = vand.u32 %v4414, 2147483648
    %v4427 = vor.u32 1.1754944e-38, %v4426
    %v4428 = vsel %vm4425, %v4427, %v4423
    %v4429 = vmul.f32 1.0, %v4428
    %v4430 = vtanh.pop %v4410
    %v4432 = vrot.slane %v4370, 7
    %v4434 = vmul.f32 %v4429, %v4432
    %4436 = vrot.lane.b32.xlu0 %v4430, 64
    %v4437 = vpop.permute.xlu0 %4436
    %v4439 = vmul.f32 %v4429, %v4437
    %4441 = vrot.lane.b32.xlu0 %v4439, 32
    %v4442 = vpop.permute.xlu0 %4441
    %v4444 = vadd.f32 %v4434, %v4442
    %v4445 = vtanh.pop %v4444
    %4447 = vrot.lane.b32.xlu0 %v4445, 64
    %v4448 = vpop.permute.xlu0 %4447
    %v4450 = vmul.f32 %v4429, %v4448
    %4452 = vrot.lane.b32.xlu0 %v4450, 32
    %v4453 = vpop.permute.xlu0 %4452
    %4455 = vst.msk [vmem:[#allocation5] sm:$0x8] %vm834, %v4453
    %v4456 = vld [vmem:[#allocation5] sm:$0xf]
    %v4458 = vsel %vm217, %v4456, 0
    %4460 = vmatpush.msra.mxu0 0.0
    %4461 = vmatpush.msra.mxu0 0.0
    %4462 = vmatpush.msra.mxu0 0.0
    %4463 = vmatpush.msra.mxu0 0.0
    %4464 = vmatpush.msra.mxu0 0.0
    %4465 = vmatpush.msra.mxu0 0.0
    %4466 = vmatpush.msra.mxu0 0.0
    %4467 = vmatpush.msra.mxu0 0.0
    %4468 = vmatpush.msra.mxu0 0.0
    %4469 = vmatpush.msra.mxu0 0.0
    %4470 = vmatpush.msra.mxu0 0.0
    %4471 = vmatpush.msra.mxu0 0.0
    %4472 = vmatpush.msra.mxu0 %v2887
    %4473 = vmatpush.msra.mxu0 %v2886
    %4474 = vmatpush.msra.mxu0 %v2885
    %4475 = vmatpush.msra.mxu0 %v2884
    %4476 = vmatmul.f32.gmra.mxu0 %v4458
    %v4477 = vpop.f32.mrf.mxu0
    %v4478 = vadd.f32 %v3326, %v4477
    %4479 = vdwg.mxu0
    %4480 = vmatpush.msra.mxu0 0.0
    %4481 = vmatpush.msra.mxu0 0.0
    %4482 = vmatpush.msra.mxu0 0.0
    %4483 = vmatpush.msra.mxu0 0.0
    %4484 = vmatpush.msra.mxu0 0.0
    %4485 = vmatpush.msra.mxu0 0.0
    %4486 = vmatpush.msra.mxu0 0.0
    %4487 = vmatpush.msra.mxu0 0.0
    %4488 = vmatpush.msra.mxu0 0.0
    %4489 = vmatpush.msra.mxu0 0.0
    %4490 = vmatpush.msra.mxu0 0.0
    %4491 = vmatpush.msra.mxu0 0.0
    %4492 = vmatpush.msra.mxu0 %v2891
    %4493 = vmatpush.msra.mxu0 %v2890
    %4494 = vmatpush.msra.mxu0 %v2889
    %4495 = vmatpush.msra.mxu0 %v2888
    %4496 = vmatmul.f32.gmra.mxu0 %v4046
    %v4497 = vpop.f32.mrf.mxu0
    %v4498 = vadd.f32 0.0, %v4497
    %4499 = vdwg.mxu0
    %v4500 = vadd.f32 %v4478, %v4498
    %v4501 = vxor.u32 %v4500, 2147483648
    %v4502 = vmul.f32 %v4501, 1.442695
    %v4503 = vpow.pop %v4502
    %v4504 = vadd.f32 %v4503, 1.0
    %v4505 = vrcp.pop %v4504
    %v4506 = vmul.f32 %v4504, %v4505
    %v4507 = vsub.f32 1.0, %v4506
    %v4508 = vmul.f32 %v4505, %v4507
    %v4509 = vadd.f32 %v4505, %v4508
    %vm4510 = vweird.f32 %v4504
    %vm4511 = vweird.f32 %v4505
    %vm4512 = vmor %vm4510, %vm4511
    %v4513 = vsel %vm4512, %v4505, %v4509
    %v4514 = vand.u32 2147483647, %v4504
    %vm4515 = vcmp.eq.f32.partialorder %v4514, 8.507059e+37
    %v4516 = vand.u32 %v4504, 2147483648
    %v4517 = vor.u32 1.1754944e-38, %v4516
    %v4518 = vsel %vm4515, %v4517, %v4513
    %v4519 = vmul.f32 1.0, %v4518
    %v4520 = vtanh.pop %v4500
    %v4522 = vrot.slane %v4035, 2
    %v4524 = vmul.f32 %v4519, %v4522
    %4526 = vrot.lane.b32.xlu0 %v4520, 64
    %v4527 = vpop.permute.xlu0 %4526
    %v4529 = vmul.f32 %v4519, %v4527
    %4531 = vrot.lane.b32.xlu0 %v4529, 32
    %v4532 = vpop.permute.xlu0 %4531
    %v4534 = vadd.f32 %v4524, %v4532
    %v4535 = vtanh.pop %v4534
    %4537 = vrot.lane.b32.xlu0 %v4535, 64
    %v4538 = vpop.permute.xlu0 %4537
    %v4540 = vmul.f32 %v4519, %v4538
    %4542 = vrot.lane.b32.xlu0 %v4540, 32
    %v4543 = vpop.permute.xlu0 %4542
    %v4544 = vsel %vm217, %v4543, 0
    %4546 = vmatpush.msra.mxu0 0.0
    %4547 = vmatpush.msra.mxu0 0.0
    %4548 = vmatpush.msra.mxu0 0.0
    %4549 = vmatpush.msra.mxu0 0.0
    %4550 = vmatpush.msra.mxu0 0.0
    %4551 = vmatpush.msra.mxu0 0.0
    %4552 = vmatpush.msra.mxu0 0.0
    %4553 = vmatpush.msra.mxu0 0.0
    %4554 = vmatpush.msra.mxu0 0.0
    %4555 = vmatpush.msra.mxu0 0.0
    %4556 = vmatpush.msra.mxu0 0.0
    %4557 = vmatpush.msra.mxu0 0.0
    %4558 = vmatpush.msra.mxu0 %v2891
    %4559 = vmatpush.msra.mxu0 %v2890
    %4560 = vmatpush.msra.mxu0 %v2889
    %4561 = vmatpush.msra.mxu0 %v2888
    %4562 = vmatmul.f32.gmra.mxu0 %v4544
    %v4563 = vpop.f32.mrf.mxu0
    %v4564 = vadd.f32 0.0, %v4563
    %4565 = vdwg.mxu0
    %v4567 = vrot.slane %v4564, 7
    %v4569 = vadd.f32 %v4478, %v4567
    %v4570 = vxor.u32 %v4569, 2147483648
    %v4571 = vmul.f32 %v4570, 1.442695
    %v4572 = vpow.pop %v4571
    %v4573 = vadd.f32 %v4572, 1.0
    %v4574 = vrcp.pop %v4573
    %v4575 = vmul.f32 %v4573, %v4574
    %v4576 = vsub.f32 1.0, %v4575
    %v4577 = vmul.f32 %v4574, %v4576
    %v4578 = vadd.f32 %v4574, %v4577
    %vm4579 = vweird.f32 %v4573
    %vm4580 = vweird.f32 %v4574
    %vm4581 = vmor %vm4579, %vm4580
    %v4582 = vsel %vm4581, %v4574, %v4578
    %v4583 = vand.u32 2147483647, %v4573
    %vm4584 = vcmp.eq.f32.partialorder %v4583, 8.507059e+37
    %v4585 = vand.u32 %v4573, 2147483648
    %v4586 = vor.u32 1.1754944e-38, %v4585
    %v4587 = vsel %vm4584, %v4586, %v4582
    %v4588 = vmul.f32 1.0, %v4587
    %v4589 = vtanh.pop %v4569
    %v4591 = vrot.slane %v4534, 7
    %v4593 = vmul.f32 %v4588, %v4591
    %4595 = vrot.lane.b32.xlu0 %v4589, 64
    %v4596 = vpop.permute.xlu0 %4595
    %v4598 = vmul.f32 %v4588, %v4596
    %4600 = vrot.lane.b32.xlu0 %v4598, 32
    %v4601 = vpop.permute.xlu0 %4600
    %v4603 = vadd.f32 %v4593, %v4601
    %v4604 = vtanh.pop %v4603
    %4606 = vrot.lane.b32.xlu0 %v4604, 64
    %v4607 = vpop.permute.xlu0 %4606
    %v4609 = vmul.f32 %v4588, %v4607
    %v4611 = vrot.slane %v4609, 1
    %4612 = vrot.lane.b32.xlu0 %v4611, 32
    %v4613 = vpop.permute.xlu0 %4612
    %v4614 = vsel %vm217, %v4613, 0
    %4616 = vmatpush.msra.mxu0 0.0
    %4617 = vmatpush.msra.mxu0 0.0
    %4618 = vmatpush.msra.mxu0 0.0
    %4619 = vmatpush.msra.mxu0 0.0
    %4620 = vmatpush.msra.mxu0 0.0
    %4621 = vmatpush.msra.mxu0 0.0
    %4622 = vmatpush.msra.mxu0 0.0
    %4623 = vmatpush.msra.mxu0 0.0
    %4624 = vmatpush.msra.mxu0 0.0
    %4625 = vmatpush.msra.mxu0 0.0
    %4626 = vmatpush.msra.mxu0 0.0
    %4627 = vmatpush.msra.mxu0 0.0
    %4628 = vmatpush.msra.mxu0 %v2891
    %4629 = vmatpush.msra.mxu0 %v2890
    %4630 = vmatpush.msra.mxu0 %v2889
    %4631 = vmatpush.msra.mxu0 %v2888
    %4632 = vmatmul.f32.gmra.mxu0 %v4614
    %v4633 = vpop.f32.mrf.mxu0
    %v4634 = vadd.f32 0.0, %v4633
    %4635 = vdwg.mxu0
    %v4637 = vrot.slane %v4634, 6
    %v4639 = vadd.f32 %v4478, %v4637
    %v4640 = vxor.u32 %v4639, 2147483648
    %v4641 = vmul.f32 %v4640, 1.442695
    %v4642 = vpow.pop %v4641
    %v4643 = vadd.f32 %v4642, 1.0
    %v4644 = vrcp.pop %v4643
    %v4645 = vmul.f32 %v4643, %v4644
    %v4646 = vsub.f32 1.0, %v4645
    %v4647 = vmul.f32 %v4644, %v4646
    %v4648 = vadd.f32 %v4644, %v4647
    %vm4649 = vweird.f32 %v4643
    %vm4650 = vweird.f32 %v4644
    %vm4651 = vmor %vm4649, %vm4650
    %v4652 = vsel %vm4651, %v4644, %v4648
    %v4653 = vand.u32 2147483647, %v4643
    %vm4654 = vcmp.eq.f32.partialorder %v4653, 8.507059e+37
    %v4655 = vand.u32 %v4643, 2147483648
    %v4656 = vor.u32 1.1754944e-38, %v4655
    %v4657 = vsel %vm4654, %v4656, %v4652
    %v4658 = vmul.f32 1.0, %v4657
    %v4659 = vtanh.pop %v4639
    %v4661 = vrot.slane %v4603, 7
    %v4663 = vmul.f32 %v4658, %v4661
    %4665 = vrot.lane.b32.xlu0 %v4659, 64
    %v4666 = vpop.permute.xlu0 %4665
    %v4668 = vmul.f32 %v4658, %v4666
    %4670 = vrot.lane.b32.xlu0 %v4668, 32
    %v4671 = vpop.permute.xlu0 %4670
    %v4673 = vadd.f32 %v4663, %v4671
    %v4674 = vtanh.pop %v4673
    %4676 = vrot.lane.b32.xlu0 %v4674, 64
    %v4677 = vpop.permute.xlu0 %4676
    %v4679 = vmul.f32 %v4658, %v4677
    %v4681 = vrot.slane %v4679, 2
    %4682 = vrot.lane.b32.xlu0 %v4681, 32
    %v4683 = vpop.permute.xlu0 %4682
    %v4684 = vsel %vm217, %v4683, 0
    %4686 = vmatpush.msra.mxu0 0.0
    %4687 = vmatpush.msra.mxu0 0.0
    %4688 = vmatpush.msra.mxu0 0.0
    %4689 = vmatpush.msra.mxu0 0.0
    %4690 = vmatpush.msra.mxu0 0.0
    %4691 = vmatpush.msra.mxu0 0.0
    %4692 = vmatpush.msra.mxu0 0.0
    %4693 = vmatpush.msra.mxu0 0.0
    %4694 = vmatpush.msra.mxu0 0.0
    %4695 = vmatpush.msra.mxu0 0.0
    %4696 = vmatpush.msra.mxu0 0.0
    %4697 = vmatpush.msra.mxu0 0.0
    %4698 = vmatpush.msra.mxu0 %v2891
    %4699 = vmatpush.msra.mxu0 %v2890
    %4700 = vmatpush.msra.mxu0 %v2889
    %4701 = vmatpush.msra.mxu0 %v2888
    %4702 = vmatmul.f32.gmra.mxu0 %v4684
    %v4703 = vpop.f32.mrf.mxu0
    %v4704 = vadd.f32 0.0, %v4703
    %4705 = vdwg.mxu0
    %v4707 = vrot.slane %v4704, 5
    %v4709 = vadd.f32 %v4478, %v4707
    %v4710 = vxor.u32 %v4709, 2147483648
    %v4711 = vmul.f32 %v4710, 1.442695
    %v4712 = vpow.pop %v4711
    %v4713 = vadd.f32 %v4712, 1.0
    %v4714 = vrcp.pop %v4713
    %v4715 = vmul.f32 %v4713, %v4714
    %v4716 = vsub.f32 1.0, %v4715
    %v4717 = vmul.f32 %v4714, %v4716
    %v4718 = vadd.f32 %v4714, %v4717
    %vm4719 = vweird.f32 %v4713
    %vm4720 = vweird.f32 %v4714
    %vm4721 = vmor %vm4719, %vm4720
    %v4722 = vsel %vm4721, %v4714, %v4718
    %v4723 = vand.u32 2147483647, %v4713
    %vm4724 = vcmp.eq.f32.partialorder %v4723, 8.507059e+37
    %v4725 = vand.u32 %v4713, 2147483648
    %v4726 = vor.u32 1.1754944e-38, %v4725
    %v4727 = vsel %vm4724, %v4726, %v4722
    %v4728 = vmul.f32 1.0, %v4727
    %v4729 = vtanh.pop %v4709
    %v4731 = vrot.slane %v4673, 7
    %v4733 = vmul.f32 %v4728, %v4731
    %4735 = vrot.lane.b32.xlu0 %v4729, 64
    %v4736 = vpop.permute.xlu0 %4735
    %v4738 = vmul.f32 %v4728, %v4736
    %4740 = vrot.lane.b32.xlu0 %v4738, 32
    %v4741 = vpop.permute.xlu0 %4740
    %v4743 = vadd.f32 %v4733, %v4741
    %v4744 = vtanh.pop %v4743
    %4746 = vrot.lane.b32.xlu0 %v4744, 64
    %v4747 = vpop.permute.xlu0 %4746
    %v4749 = vmul.f32 %v4728, %v4747
    %v4751 = vrot.slane %v4749, 3
    %4752 = vrot.lane.b32.xlu0 %v4751, 32
    %v4753 = vpop.permute.xlu0 %4752
    %v4754 = vsel %vm217, %v4753, 0
    %4756 = vmatpush.msra.mxu0 0.0
    %4757 = vmatpush.msra.mxu0 0.0
    %4758 = vmatpush.msra.mxu0 0.0
    %4759 = vmatpush.msra.mxu0 0.0
    %4760 = vmatpush.msra.mxu0 0.0
    %4761 = vmatpush.msra.mxu0 0.0
    %4762 = vmatpush.msra.mxu0 0.0
    %4763 = vmatpush.msra.mxu0 0.0
    %4764 = vmatpush.msra.mxu0 0.0
    %4765 = vmatpush.msra.mxu0 0.0
    %4766 = vmatpush.msra.mxu0 0.0
    %4767 = vmatpush.msra.mxu0 0.0
    %4768 = vmatpush.msra.mxu0 %v2900
    %4769 = vmatpush.msra.mxu0 %v2899
    %4770 = vmatpush.msra.mxu0 %v2898
    %4771 = vmatpush.msra.mxu0 %v2897
    %4772 = vmatmul.f32.gmra.mxu0 %v4754
    %v4773 = vpop.f32.mrf.mxu0
    %v4774 = vadd.f32 0.0, %v4773
    %4775 = vdwg.mxu0
    %v4776 = vrot.slane %v4450, 3
    %4777 = vrot.lane.b32.xlu0 %v4776, 32
    %v4778 = vpop.permute.xlu0 %4777
    %v4779 = vsel %vm217, %v4778, 0
    %4781 = vmatpush.msra.mxu0 0.0
    %4782 = vmatpush.msra.mxu0 0.0
    %4783 = vmatpush.msra.mxu0 0.0
    %4784 = vmatpush.msra.mxu0 0.0
    %4785 = vmatpush.msra.mxu0 0.0
    %4786 = vmatpush.msra.mxu0 0.0
    %4787 = vmatpush.msra.mxu0 0.0
    %4788 = vmatpush.msra.mxu0 0.0
    %4789 = vmatpush.msra.mxu0 0.0
    %4790 = vmatpush.msra.mxu0 0.0
    %4791 = vmatpush.msra.mxu0 0.0
    %4792 = vmatpush.msra.mxu0 0.0
    %4793 = vmatpush.msra.mxu0 %v2896
    %4794 = vmatpush.msra.mxu0 %v2895
    %4795 = vmatpush.msra.mxu0 %v2894
    %4796 = vmatpush.msra.mxu0 %v2893
    %4797 = vmatmul.f32.gmra.mxu0 %v4779
    %v4798 = vpop.f32.mrf.mxu0
    %v4799 = vadd.f32 %v4774, %v4798
    %4800 = vdwg.mxu0
    %v4801 = vsel %vm387, %v4799, 0.0
    %4802 = vadd.xlane.f32.xlu0 %v4801
    %v4803 = vpop.xlane.xlu0 %4802
    %v4804 = vmul.f32 %v4803, %v2720
    %v4805 = vsub.f32 %v4799, %v4804
    %v4806 = vmul.f32 %v4805, %v4805
    %v4807 = vsel %vm387, %v4806, 0.0
    %4808 = vadd.xlane.f32.xlu0 %v4807
    %v4809 = vpop.xlane.xlu0 %4808
    %v4810 = vmul.f32 %v4809, %v2720
    %v4811 = vadd.f32 %v4810, 1e-05
    %v4812 = vrsqrt.pop %v4811
    %v4813 = vmul.f32 %v4812, %v4811
    %v4814 = vmul.f32 %v4813, %v4812
    %v4815 = vmul.f32 0.5, %v4814
    %v4816 = vsub.f32 1.5, %v4815
    %v4817 = vmul.f32 %v4812, %v4816
    %vm4818 = vweird.f32 %v4811
    %vm4819 = vweird.f32 %v4812
    %vm4820 = vmor %vm4818, %vm4819
    %v4821 = vsel %vm4820, %v4812, %v4817
    %v4822 = vmul.f32 %v4805, %v4821
    %v4823 = vmul.f32 %v4822, %v2678
    %v4824 = vadd.f32 %v4823, %v2679
    %v4825 = vperm.slane %v4824, 0
    %v4826 = vmul.f32 %v2748, %v4825
    %v4827 = vsel %vm217, %v4826, 0.0
    %4828 = vadd.xlane.f32.xlu0 %v4827
    %v4829 = vpop.xlane.xlu0 %4828
    %v4830 = vrot.slane %v4829, 4
    %v4831 = vmax.f32 %v4829, %v4830
    %v4832 = vrot.slane %v4831, 2
    %v4833 = vmax.f32 %v4831, %v4832
    %v4834 = vrot.slane %v4833, 1
    %v4835 = vmax.f32 %v4833, %v4834
    %v4836 = vsub.f32 %v4829, %v4835
    %v4837 = vmul.f32 %v4836, 1.442695
    %v4838 = vpow.pop %v4837
    %v4839 = vrot.slane %v4838, 4
    %v4840 = vadd.f32 %v4838, %v4839
    %v4841 = vrot.slane %v4840, 2
    %v4842 = vadd.f32 %v4840, %v4841
    %v4843 = vrot.slane %v4842, 1
    %v4844 = vadd.f32 %v4842, %v4843
    %v4845 = vrcp.pop %v4844
    %v4846 = vmul.f32 %v4838, %v4845
    %v4847 = vmul.f32 %v4846, %v2747
    %v4848 = vsel %vm217, %v4847, 0.0
    %v4849 = vrot.slane %v4848, 4
    %v4850 = vadd.f32 %v4848, %v4849
    %v4851 = vrot.slane %v4850, 2
    %v4852 = vadd.f32 %v4850, %v4851
    %v4853 = vrot.slane %v4852, 1
    %v4854 = vadd.f32 %v4852, %v4853
    %v4856 = vsel %vm217, %v4854, 0
    %4858 = vmatpush.msra.mxu0 0.0
    %4859 = vmatpush.msra.mxu0 0.0
    %4860 = vmatpush.msra.mxu0 0.0
    %4861 = vmatpush.msra.mxu0 0.0
    %4862 = vmatpush.msra.mxu0 0.0
    %4863 = vmatpush.msra.mxu0 0.0
    %4864 = vmatpush.msra.mxu0 0.0
    %4865 = vmatpush.msra.mxu0 0.0
    %4866 = vmatpush.msra.mxu0 0.0
    %4867 = vmatpush.msra.mxu0 0.0
    %4868 = vmatpush.msra.mxu0 0.0
    %4869 = vmatpush.msra.mxu0 0.0
    %4870 = vmatpush.msra.mxu0 %v2904
    %4871 = vmatpush.msra.mxu0 %v2903
    %4872 = vmatpush.msra.mxu0 %v2902
    %4873 = vmatpush.msra.mxu0 %v2901
    %4874 = vmatmul.f32.gmra.mxu0 %v4856
    %v4875 = vpop.f32.mrf.mxu0
    %v4876 = vadd.f32 %v2905, %v4875
    %4877 = vdwg.mxu0
    %4878 = vst [vmem:[%s26 + $0x3] sm:$0x1] %v4876
    %4879 = vmatpush.msra.mxu0 0.0
    %4880 = vmatpush.msra.mxu0 0.0
    %4881 = vmatpush.msra.mxu0 0.0
    %4882 = vmatpush.msra.mxu0 0.0
    %4883 = vmatpush.msra.mxu0 0.0
    %4884 = vmatpush.msra.mxu0 0.0
    %4885 = vmatpush.msra.mxu0 0.0
    %4886 = vmatpush.msra.mxu0 0.0
    %4887 = vmatpush.msra.mxu0 0.0
    %4888 = vmatpush.msra.mxu0 0.0
    %4889 = vmatpush.msra.mxu0 0.0
    %4890 = vmatpush.msra.mxu0 0.0
    %4891 = vmatpush.msra.mxu0 %v2883
    %4892 = vmatpush.msra.mxu0 %v2882
    %4893 = vmatpush.msra.mxu0 %v2881
    %4894 = vmatpush.msra.mxu0 %v2880
    %4895 = vmatmul.f32.gmra.mxu0 %v4779
    %v4896 = vpop.f32.mrf.mxu0
    %v4897 = vadd.f32 0.0, %v4896
    %4898 = vdwg.mxu0
    %v4899 = vadd.f32 %v2878, %v4897
    %v4900 = vxor.u32 %v4899, 2147483648
    %v4901 = vmul.f32 %v4900, 1.442695
    %v4902 = vpow.pop %v4901
    %v4903 = vadd.f32 %v4902, 1.0
    %v4904 = vrcp.pop %v4903
    %v4905 = vmul.f32 %v4903, %v4904
    %v4906 = vsub.f32 1.0, %v4905
    %v4907 = vmul.f32 %v4904, %v4906
    %v4908 = vadd.f32 %v4904, %v4907
    %vm4909 = vweird.f32 %v4903
    %vm4910 = vweird.f32 %v4904
    %vm4911 = vmor %vm4909, %vm4910
    %v4912 = vsel %vm4911, %v4904, %v4908
    %v4913 = vand.u32 2147483647, %v4903
    %vm4914 = vcmp.eq.f32.partialorder %v4913, 8.507059e+37
    %v4915 = vand.u32 %v4903, 2147483648
    %v4916 = vor.u32 1.1754944e-38, %v4915
    %v4917 = vsel %vm4914, %v4916, %v4912
    %v4918 = vmul.f32 1.0, %v4917
    %v4919 = vtanh.pop %v4899
    %v4921 = vrot.slane %v4444, 3
    %v4923 = vmul.f32 %v4918, %v4921
    %4925 = vrot.lane.b32.xlu0 %v4919, 64
    %v4926 = vpop.permute.xlu0 %4925
    %v4928 = vmul.f32 %v4918, %v4926
    %4930 = vrot.lane.b32.xlu0 %v4928, 32
    %v4931 = vpop.permute.xlu0 %4930
    %v4933 = vadd.f32 %v4923, %v4931
    %v4934 = vtanh.pop %v4933
    %4936 = vrot.lane.b32.xlu0 %v4934, 64
    %v4937 = vpop.permute.xlu0 %4936
    %v4939 = vmul.f32 %v4918, %v4937
    %4941 = vrot.lane.b32.xlu0 %v4939, 32
    %v4942 = vpop.permute.xlu0 %4941
    %4944 = vst.msk [vmem:[#allocation5] sm:$0x1] %vm387, %v4942
    %v4945 = vsel %vm217, %v4942, 0
    %4947 = vmatpush.msra.mxu0 0.0
    %4948 = vmatpush.msra.mxu0 0.0
    %4949 = vmatpush.msra.mxu0 0.0
    %4950 = vmatpush.msra.mxu0 0.0
    %4951 = vmatpush.msra.mxu0 0.0
    %4952 = vmatpush.msra.mxu0 0.0
    %4953 = vmatpush.msra.mxu0 0.0
    %4954 = vmatpush.msra.mxu0 0.0
    %4955 = vmatpush.msra.mxu0 0.0
    %4956 = vmatpush.msra.mxu0 0.0
    %4957 = vmatpush.msra.mxu0 0.0
    %4958 = vmatpush.msra.mxu0 0.0
    %4959 = vmatpush.msra.mxu0 %v2883
    %4960 = vmatpush.msra.mxu0 %v2882
    %4961 = vmatpush.msra.mxu0 %v2881
    %4962 = vmatpush.msra.mxu0 %v2880
    %4963 = vmatmul.f32.gmra.mxu0 %v4945
    %v4964 = vpop.f32.mrf.mxu0
    %v4965 = vadd.f32 0.0, %v4964
    %4966 = vdwg.mxu0
    %v4968 = vrot.slane %v4965, 7
    %v4970 = vadd.f32 %v2878, %v4968
    %v4971 = vxor.u32 %v4970, 2147483648
    %v4972 = vmul.f32 %v4971, 1.442695
    %v4973 = vpow.pop %v4972
    %v4974 = vadd.f32 %v4973, 1.0
    %v4975 = vrcp.pop %v4974
    %v4976 = vmul.f32 %v4974, %v4975
    %v4977 = vsub.f32 1.0, %v4976
    %v4978 = vmul.f32 %v4975, %v4977
    %v4979 = vadd.f32 %v4975, %v4978
    %vm4980 = vweird.f32 %v4974
    %vm4981 = vweird.f32 %v4975
    %vm4982 = vmor %vm4980, %vm4981
    %v4983 = vsel %vm4982, %v4975, %v4979
    %v4984 = vand.u32 2147483647, %v4974
    %vm4985 = vcmp.eq.f32.partialorder %v4984, 8.507059e+37
    %v4986 = vand.u32 %v4974, 2147483648
    %v4987 = vor.u32 1.1754944e-38, %v4986
    %v4988 = vsel %vm4985, %v4987, %v4983
    %v4989 = vmul.f32 1.0, %v4988
    %v4990 = vtanh.pop %v4970
    %v4992 = vrot.slane %v4933, 7
    %v4994 = vmul.f32 %v4989, %v4992
    %4996 = vrot.lane.b32.xlu0 %v4990, 64
    %v4997 = vpop.permute.xlu0 %4996
    %v4999 = vmul.f32 %v4989, %v4997
    %5001 = vrot.lane.b32.xlu0 %v4999, 32
    %v5002 = vpop.permute.xlu0 %5001
    %v5004 = vadd.f32 %v4994, %v5002
    %v5005 = vtanh.pop %v5004
    %5007 = vrot.lane.b32.xlu0 %v5005, 64
    %v5008 = vpop.permute.xlu0 %5007
    %v5010 = vmul.f32 %v4989, %v5008
    %5012 = vrot.lane.b32.xlu0 %v5010, 32
    %v5013 = vpop.permute.xlu0 %5012
    %5015 = vst.msk [vmem:[#allocation5] sm:$0x2] %vm534, %v5013
    %v5016 = vrot.slane %v5010, 1
    %5017 = vrot.lane.b32.xlu0 %v5016, 32
    %v5018 = vpop.permute.xlu0 %5017
    %v5019 = vsel %vm217, %v5018, 0
    %5021 = vmatpush.msra.mxu0 0.0
    %5022 = vmatpush.msra.mxu0 0.0
    %5023 = vmatpush.msra.mxu0 0.0
    %5024 = vmatpush.msra.mxu0 0.0
    %5025 = vmatpush.msra.mxu0 0.0
    %5026 = vmatpush.msra.mxu0 0.0
    %5027 = vmatpush.msra.mxu0 0.0
    %5028 = vmatpush.msra.mxu0 0.0
    %5029 = vmatpush.msra.mxu0 0.0
    %5030 = vmatpush.msra.mxu0 0.0
    %5031 = vmatpush.msra.mxu0 0.0
    %5032 = vmatpush.msra.mxu0 0.0
    %5033 = vmatpush.msra.mxu0 %v2883
    %5034 = vmatpush.msra.mxu0 %v2882
    %5035 = vmatpush.msra.mxu0 %v2881
    %5036 = vmatpush.msra.mxu0 %v2880
    %5037 = vmatmul.f32.gmra.mxu0 %v5019
    %v5038 = vpop.f32.mrf.mxu0
    %v5039 = vadd.f32 0.0, %v5038
    %5040 = vdwg.mxu0
    %v5042 = vrot.slane %v5039, 6
    %v5044 = vadd.f32 %v2878, %v5042
    %v5045 = vxor.u32 %v5044, 2147483648
    %v5046 = vmul.f32 %v5045, 1.442695
    %v5047 = vpow.pop %v5046
    %v5048 = vadd.f32 %v5047, 1.0
    %v5049 = vrcp.pop %v5048
    %v5050 = vmul.f32 %v5048, %v5049
    %v5051 = vsub.f32 1.0, %v5050
    %v5052 = vmul.f32 %v5049, %v5051
    %v5053 = vadd.f32 %v5049, %v5052
    %vm5054 = vweird.f32 %v5048
    %vm5055 = vweird.f32 %v5049
    %vm5056 = vmor %vm5054, %vm5055
    %v5057 = vsel %vm5056, %v5049, %v5053
    %v5058 = vand.u32 2147483647, %v5048
    %vm5059 = vcmp.eq.f32.partialorder %v5058, 8.507059e+37
    %v5060 = vand.u32 %v5048, 2147483648
    %v5061 = vor.u32 1.1754944e-38, %v5060
    %v5062 = vsel %vm5059, %v5061, %v5057
    %v5063 = vmul.f32 1.0, %v5062
    %v5064 = vtanh.pop %v5044
    %v5066 = vrot.slane %v5004, 7
    %v5068 = vmul.f32 %v5063, %v5066
    %5070 = vrot.lane.b32.xlu0 %v5064, 64
    %v5071 = vpop.permute.xlu0 %5070
    %v5073 = vmul.f32 %v5063, %v5071
    %5075 = vrot.lane.b32.xlu0 %v5073, 32
    %v5076 = vpop.permute.xlu0 %5075
    %v5078 = vadd.f32 %v5068, %v5076
    %v5079 = vtanh.pop %v5078
    %5081 = vrot.lane.b32.xlu0 %v5079, 64
    %v5082 = vpop.permute.xlu0 %5081
    %v5084 = vmul.f32 %v5063, %v5082
    %5086 = vrot.lane.b32.xlu0 %v5084, 32
    %v5087 = vpop.permute.xlu0 %5086
    %5089 = vst.msk [vmem:[#allocation5] sm:$0x4] %vm684, %v5087
    %v5090 = vrot.slane %v5084, 2
    %5091 = vrot.lane.b32.xlu0 %v5090, 32
    %v5092 = vpop.permute.xlu0 %5091
    %v5093 = vsel %vm217, %v5092, 0
    %5095 = vmatpush.msra.mxu0 0.0
    %5096 = vmatpush.msra.mxu0 0.0
    %5097 = vmatpush.msra.mxu0 0.0
    %5098 = vmatpush.msra.mxu0 0.0
    %5099 = vmatpush.msra.mxu0 0.0
    %5100 = vmatpush.msra.mxu0 0.0
    %5101 = vmatpush.msra.mxu0 0.0
    %5102 = vmatpush.msra.mxu0 0.0
    %5103 = vmatpush.msra.mxu0 0.0
    %5104 = vmatpush.msra.mxu0 0.0
    %5105 = vmatpush.msra.mxu0 0.0
    %5106 = vmatpush.msra.mxu0 0.0
    %5107 = vmatpush.msra.mxu0 %v2883
    %5108 = vmatpush.msra.mxu0 %v2882
    %5109 = vmatpush.msra.mxu0 %v2881
    %5110 = vmatpush.msra.mxu0 %v2880
    %5111 = vmatmul.f32.gmra.mxu0 %v5093
    %v5112 = vpop.f32.mrf.mxu0
    %v5113 = vadd.f32 0.0, %v5112
    %5114 = vdwg.mxu0
    %v5116 = vrot.slane %v5113, 5
    %v5118 = vadd.f32 %v2878, %v5116
    %v5119 = vxor.u32 %v5118, 2147483648
    %v5120 = vmul.f32 %v5119, 1.442695
    %v5121 = vpow.pop %v5120
    %v5122 = vadd.f32 %v5121, 1.0
    %v5123 = vrcp.pop %v5122
    %v5124 = vmul.f32 %v5122, %v5123
    %v5125 = vsub.f32 1.0, %v5124
    %v5126 = vmul.f32 %v5123, %v5125
    %v5127 = vadd.f32 %v5123, %v5126
    %vm5128 = vweird.f32 %v5122
    %vm5129 = vweird.f32 %v5123
    %vm5130 = vmor %vm5128, %vm5129
    %v5131 = vsel %vm5130, %v5123, %v5127
    %v5132 = vand.u32 2147483647, %v5122
    %vm5133 = vcmp.eq.f32.partialorder %v5132, 8.507059e+37
    %v5134 = vand.u32 %v5122, 2147483648
    %v5135 = vor.u32 1.1754944e-38, %v5134
    %v5136 = vsel %vm5133, %v5135, %v5131
    %v5137 = vmul.f32 1.0, %v5136
    %v5138 = vtanh.pop %v5118
    %v5140 = vrot.slane %v5078, 7
    %v5142 = vmul.f32 %v5137, %v5140
    %5144 = vrot.lane.b32.xlu0 %v5138, 64
    %v5145 = vpop.permute.xlu0 %5144
    %v5147 = vmul.f32 %v5137, %v5145
    %5149 = vrot.lane.b32.xlu0 %v5147, 32
    %v5150 = vpop.permute.xlu0 %5149
    %v5152 = vadd.f32 %v5142, %v5150
    %v5153 = vtanh.pop %v5152
    %5155 = vrot.lane.b32.xlu0 %v5153, 64
    %v5156 = vpop.permute.xlu0 %5155
    %v5158 = vmul.f32 %v5137, %v5156
    %5160 = vrot.lane.b32.xlu0 %v5158, 32
    %v5161 = vpop.permute.xlu0 %5160
    %5163 = vst.msk [vmem:[#allocation5] sm:$0x8] %vm834, %v5161
    %v5164 = vrot.slane %v5158, 3
    %5165 = vrot.lane.b32.xlu0 %v5164, 32
    %v5166 = vpop.permute.xlu0 %5165
    %v5167 = vsel %vm217, %v5166, 0
    %5169 = vmatpush.msra.mxu0 0.0
    %5170 = vmatpush.msra.mxu0 0.0
    %5171 = vmatpush.msra.mxu0 0.0
    %5172 = vmatpush.msra.mxu0 0.0
    %5173 = vmatpush.msra.mxu0 0.0
    %5174 = vmatpush.msra.mxu0 0.0
    %5175 = vmatpush.msra.mxu0 0.0
    %5176 = vmatpush.msra.mxu0 0.0
    %5177 = vmatpush.msra.mxu0 0.0
    %5178 = vmatpush.msra.mxu0 0.0
    %5179 = vmatpush.msra.mxu0 0.0
    %5180 = vmatpush.msra.mxu0 0.0
    %5181 = vmatpush.msra.mxu0 %v2883
    %5182 = vmatpush.msra.mxu0 %v2882
    %5183 = vmatpush.msra.mxu0 %v2881
    %5184 = vmatpush.msra.mxu0 %v2880
    %5185 = vmatmul.f32.gmra.mxu0 %v5167
    %v5186 = vpop.f32.mrf.mxu0
    %v5187 = vadd.f32 0.0, %v5186
    %5188 = vdwg.mxu0
    %v5190 = vrot.slane %v5187, 4
    %v5192 = vadd.f32 %v2878, %v5190
    %v5193 = vxor.u32 %v5192, 2147483648
    %v5194 = vmul.f32 %v5193, 1.442695
    %v5195 = vpow.pop %v5194
    %v5196 = vadd.f32 %v5195, 1.0
    %v5197 = vrcp.pop %v5196
    %v5198 = vmul.f32 %v5196, %v5197
    %v5199 = vsub.f32 1.0, %v5198
    %v5200 = vmul.f32 %v5197, %v5199
    %v5201 = vadd.f32 %v5197, %v5200
    %vm5202 = vweird.f32 %v5196
    %vm5203 = vweird.f32 %v5197
    %vm5204 = vmor %vm5202, %vm5203
    %v5205 = vsel %vm5204, %v5197, %v5201
    %v5206 = vand.u32 2147483647, %v5196
    %vm5207 = vcmp.eq.f32.partialorder %v5206, 8.507059e+37
    %v5208 = vand.u32 %v5196, 2147483648
    %v5209 = vor.u32 1.1754944e-38, %v5208
    %v5210 = vsel %vm5207, %v5209, %v5205
    %v5211 = vmul.f32 1.0, %v5210
    %v5212 = vtanh.pop %v5192
    %v5214 = vrot.slane %v5152, 7
    %v5216 = vmul.f32 %v5211, %v5214
    %5218 = vrot.lane.b32.xlu0 %v5212, 64
    %v5219 = vpop.permute.xlu0 %5218
    %v5221 = vmul.f32 %v5211, %v5219
    %5223 = vrot.lane.b32.xlu0 %v5221, 32
    %v5224 = vpop.permute.xlu0 %5223
    %v5226 = vadd.f32 %v5216, %v5224
    %v5227 = vtanh.pop %v5226
    %5229 = vrot.lane.b32.xlu0 %v5227, 64
    %v5230 = vpop.permute.xlu0 %5229
    %v5232 = vmul.f32 %v5211, %v5230
    %5234 = vrot.lane.b32.xlu0 %v5232, 32
    %v5235 = vpop.permute.xlu0 %5234
    %5237 = vst.msk [vmem:[#allocation5] sm:$0x10] %vm984, %v5235
    %v5238 = vld [vmem:[#allocation5] sm:$0x1f]
    %v5240 = vsel %vm217, %v5238, 0
    %5242 = vmatpush.msra.mxu0 0.0
    %5243 = vmatpush.msra.mxu0 0.0
    %5244 = vmatpush.msra.mxu0 0.0
    %5245 = vmatpush.msra.mxu0 0.0
    %5246 = vmatpush.msra.mxu0 0.0
    %5247 = vmatpush.msra.mxu0 0.0
    %5248 = vmatpush.msra.mxu0 0.0
    %5249 = vmatpush.msra.mxu0 0.0
    %5250 = vmatpush.msra.mxu0 0.0
    %5251 = vmatpush.msra.mxu0 0.0
    %5252 = vmatpush.msra.mxu0 0.0
    %5253 = vmatpush.msra.mxu0 0.0
    %5254 = vmatpush.msra.mxu0 %v2887
    %5255 = vmatpush.msra.mxu0 %v2886
    %5256 = vmatpush.msra.mxu0 %v2885
    %5257 = vmatpush.msra.mxu0 %v2884
    %5258 = vmatmul.f32.gmra.mxu0 %v5240
    %v5259 = vpop.f32.mrf.mxu0
    %v5260 = vadd.f32 %v3326, %v5259
    %5261 = vdwg.mxu0
    %5262 = vmatpush.msra.mxu0 0.0
    %5263 = vmatpush.msra.mxu0 0.0
    %5264 = vmatpush.msra.mxu0 0.0
    %5265 = vmatpush.msra.mxu0 0.0
    %5266 = vmatpush.msra.mxu0 0.0
    %5267 = vmatpush.msra.mxu0 0.0
    %5268 = vmatpush.msra.mxu0 0.0
    %5269 = vmatpush.msra.mxu0 0.0
    %5270 = vmatpush.msra.mxu0 0.0
    %5271 = vmatpush.msra.mxu0 0.0
    %5272 = vmatpush.msra.mxu0 0.0
    %5273 = vmatpush.msra.mxu0 0.0
    %5274 = vmatpush.msra.mxu0 %v2891
    %5275 = vmatpush.msra.mxu0 %v2890
    %5276 = vmatpush.msra.mxu0 %v2889
    %5277 = vmatpush.msra.mxu0 %v2888
    %5278 = vmatmul.f32.gmra.mxu0 %v4754
    %v5279 = vpop.f32.mrf.mxu0
    %v5280 = vadd.f32 0.0, %v5279
    %5281 = vdwg.mxu0
    %v5282 = vadd.f32 %v5260, %v5280
    %v5283 = vxor.u32 %v5282, 2147483648
    %v5284 = vmul.f32 %v5283, 1.442695
    %v5285 = vpow.pop %v5284
    %v5286 = vadd.f32 %v5285, 1.0
    %v5287 = vrcp.pop %v5286
    %v5288 = vmul.f32 %v5286, %v5287
    %v5289 = vsub.f32 1.0, %v5288
    %v5290 = vmul.f32 %v5287, %v5289
    %v5291 = vadd.f32 %v5287, %v5290
    %vm5292 = vweird.f32 %v5286
    %vm5293 = vweird.f32 %v5287
    %vm5294 = vmor %vm5292, %vm5293
    %v5295 = vsel %vm5294, %v5287, %v5291
    %v5296 = vand.u32 2147483647, %v5286
    %vm5297 = vcmp.eq.f32.partialorder %v5296, 8.507059e+37
    %v5298 = vand.u32 %v5286, 2147483648
    %v5299 = vor.u32 1.1754944e-38, %v5298
    %v5300 = vsel %vm5297, %v5299, %v5295
    %v5301 = vmul.f32 1.0, %v5300
    %v5302 = vtanh.pop %v5282
    %v5304 = vrot.slane %v4743, 3
    %v5306 = vmul.f32 %v5301, %v5304
    %5308 = vrot.lane.b32.xlu0 %v5302, 64
    %v5309 = vpop.permute.xlu0 %5308
    %v5311 = vmul.f32 %v5301, %v5309
    %5313 = vrot.lane.b32.xlu0 %v5311, 32
    %v5314 = vpop.permute.xlu0 %5313
    %v5316 = vadd.f32 %v5306, %v5314
    %v5317 = vtanh.pop %v5316
    %5319 = vrot.lane.b32.xlu0 %v5317, 64
    %v5320 = vpop.permute.xlu0 %5319
    %v5322 = vmul.f32 %v5301, %v5320
    %5324 = vrot.lane.b32.xlu0 %v5322, 32
    %v5325 = vpop.permute.xlu0 %5324
    %v5326 = vsel %vm217, %v5325, 0
    %5328 = vmatpush.msra.mxu0 0.0
    %5329 = vmatpush.msra.mxu0 0.0
    %5330 = vmatpush.msra.mxu0 0.0
    %5331 = vmatpush.msra.mxu0 0.0
    %5332 = vmatpush.msra.mxu0 0.0
    %5333 = vmatpush.msra.mxu0 0.0
    %5334 = vmatpush.msra.mxu0 0.0
    %5335 = vmatpush.msra.mxu0 0.0
    %5336 = vmatpush.msra.mxu0 0.0
    %5337 = vmatpush.msra.mxu0 0.0
    %5338 = vmatpush.msra.mxu0 0.0
    %5339 = vmatpush.msra.mxu0 0.0
    %5340 = vmatpush.msra.mxu0 %v2891
    %5341 = vmatpush.msra.mxu0 %v2890
    %5342 = vmatpush.msra.mxu0 %v2889
    %5343 = vmatpush.msra.mxu0 %v2888
    %5344 = vmatmul.f32.gmra.mxu0 %v5326
    %v5345 = vpop.f32.mrf.mxu0
    %v5346 = vadd.f32 0.0, %v5345
    %5347 = vdwg.mxu0
    %v5349 = vrot.slane %v5346, 7
    %v5351 = vadd.f32 %v5260, %v5349
    %v5352 = vxor.u32 %v5351, 2147483648
    %v5353 = vmul.f32 %v5352, 1.442695
    %v5354 = vpow.pop %v5353
    %v5355 = vadd.f32 %v5354, 1.0
    %v5356 = vrcp.pop %v5355
    %v5357 = vmul.f32 %v5355, %v5356
    %v5358 = vsub.f32 1.0, %v5357
    %v5359 = vmul.f32 %v5356, %v5358
    %v5360 = vadd.f32 %v5356, %v5359
    %vm5361 = vweird.f32 %v5355
    %vm5362 = vweird.f32 %v5356
    %vm5363 = vmor %vm5361, %vm5362
    %v5364 = vsel %vm5363, %v5356, %v5360
    %v5365 = vand.u32 2147483647, %v5355
    %vm5366 = vcmp.eq.f32.partialorder %v5365, 8.507059e+37
    %v5367 = vand.u32 %v5355, 2147483648
    %v5368 = vor.u32 1.1754944e-38, %v5367
    %v5369 = vsel %vm5366, %v5368, %v5364
    %v5370 = vmul.f32 1.0, %v5369
    %v5371 = vtanh.pop %v5351
    %v5373 = vrot.slane %v5316, 7
    %v5375 = vmul.f32 %v5370, %v5373
    %5377 = vrot.lane.b32.xlu0 %v5371, 64
    %v5378 = vpop.permute.xlu0 %5377
    %v5380 = vmul.f32 %v5370, %v5378
    %5382 = vrot.lane.b32.xlu0 %v5380, 32
    %v5383 = vpop.permute.xlu0 %5382
    %v5385 = vadd.f32 %v5375, %v5383
    %v5386 = vtanh.pop %v5385
    %5388 = vrot.lane.b32.xlu0 %v5386, 64
    %v5389 = vpop.permute.xlu0 %5388
    %v5391 = vmul.f32 %v5370, %v5389
    %v5393 = vrot.slane %v5391, 1
    %5394 = vrot.lane.b32.xlu0 %v5393, 32
    %v5395 = vpop.permute.xlu0 %5394
    %v5396 = vsel %vm217, %v5395, 0
    %5398 = vmatpush.msra.mxu0 0.0
    %5399 = vmatpush.msra.mxu0 0.0
    %5400 = vmatpush.msra.mxu0 0.0
    %5401 = vmatpush.msra.mxu0 0.0
    %5402 = vmatpush.msra.mxu0 0.0
    %5403 = vmatpush.msra.mxu0 0.0
    %5404 = vmatpush.msra.mxu0 0.0
    %5405 = vmatpush.msra.mxu0 0.0
    %5406 = vmatpush.msra.mxu0 0.0
    %5407 = vmatpush.msra.mxu0 0.0
    %5408 = vmatpush.msra.mxu0 0.0
    %5409 = vmatpush.msra.mxu0 0.0
    %5410 = vmatpush.msra.mxu0 %v2891
    %5411 = vmatpush.msra.mxu0 %v2890
    %5412 = vmatpush.msra.mxu0 %v2889
    %5413 = vmatpush.msra.mxu0 %v2888
    %5414 = vmatmul.f32.gmra.mxu0 %v5396
    %v5415 = vpop.f32.mrf.mxu0
    %v5416 = vadd.f32 0.0, %v5415
    %5417 = vdwg.mxu0
    %v5419 = vrot.slane %v5416, 6
    %v5421 = vadd.f32 %v5260, %v5419
    %v5422 = vxor.u32 %v5421, 2147483648
    %v5423 = vmul.f32 %v5422, 1.442695
    %v5424 = vpow.pop %v5423
    %v5425 = vadd.f32 %v5424, 1.0
    %v5426 = vrcp.pop %v5425
    %v5427 = vmul.f32 %v5425, %v5426
    %v5428 = vsub.f32 1.0, %v5427
    %v5429 = vmul.f32 %v5426, %v5428
    %v5430 = vadd.f32 %v5426, %v5429
    %vm5431 = vweird.f32 %v5425
    %vm5432 = vweird.f32 %v5426
    %vm5433 = vmor %vm5431, %vm5432
    %v5434 = vsel %vm5433, %v5426, %v5430
    %v5435 = vand.u32 2147483647, %v5425
    %vm5436 = vcmp.eq.f32.partialorder %v5435, 8.507059e+37
    %v5437 = vand.u32 %v5425, 2147483648
    %v5438 = vor.u32 1.1754944e-38, %v5437
    %v5439 = vsel %vm5436, %v5438, %v5434
    %v5440 = vmul.f32 1.0, %v5439
    %v5441 = vtanh.pop %v5421
    %v5443 = vrot.slane %v5385, 7
    %v5445 = vmul.f32 %v5440, %v5443
    %5447 = vrot.lane.b32.xlu0 %v5441, 64
    %v5448 = vpop.permute.xlu0 %5447
    %v5450 = vmul.f32 %v5440, %v5448
    %5452 = vrot.lane.b32.xlu0 %v5450, 32
    %v5453 = vpop.permute.xlu0 %5452
    %v5455 = vadd.f32 %v5445, %v5453
    %v5456 = vtanh.pop %v5455
    %5458 = vrot.lane.b32.xlu0 %v5456, 64
    %v5459 = vpop.permute.xlu0 %5458
    %v5461 = vmul.f32 %v5440, %v5459
    %v5463 = vrot.slane %v5461, 2
    %5464 = vrot.lane.b32.xlu0 %v5463, 32
    %v5465 = vpop.permute.xlu0 %5464
    %v5466 = vsel %vm217, %v5465, 0
    %5468 = vmatpush.msra.mxu0 0.0
    %5469 = vmatpush.msra.mxu0 0.0
    %5470 = vmatpush.msra.mxu0 0.0
    %5471 = vmatpush.msra.mxu0 0.0
    %5472 = vmatpush.msra.mxu0 0.0
    %5473 = vmatpush.msra.mxu0 0.0
    %5474 = vmatpush.msra.mxu0 0.0
    %5475 = vmatpush.msra.mxu0 0.0
    %5476 = vmatpush.msra.mxu0 0.0
    %5477 = vmatpush.msra.mxu0 0.0
    %5478 = vmatpush.msra.mxu0 0.0
    %5479 = vmatpush.msra.mxu0 0.0
    %5480 = vmatpush.msra.mxu0 %v2891
    %5481 = vmatpush.msra.mxu0 %v2890
    %5482 = vmatpush.msra.mxu0 %v2889
    %5483 = vmatpush.msra.mxu0 %v2888
    %5484 = vmatmul.f32.gmra.mxu0 %v5466
    %v5485 = vpop.f32.mrf.mxu0
    %v5486 = vadd.f32 0.0, %v5485
    %5487 = vdwg.mxu0
    %v5489 = vrot.slane %v5486, 5
    %v5491 = vadd.f32 %v5260, %v5489
    %v5492 = vxor.u32 %v5491, 2147483648
    %v5493 = vmul.f32 %v5492, 1.442695
    %v5494 = vpow.pop %v5493
    %v5495 = vadd.f32 %v5494, 1.0
    %v5496 = vrcp.pop %v5495
    %v5497 = vmul.f32 %v5495, %v5496
    %v5498 = vsub.f32 1.0, %v5497
    %v5499 = vmul.f32 %v5496, %v5498
    %v5500 = vadd.f32 %v5496, %v5499
    %vm5501 = vweird.f32 %v5495
    %vm5502 = vweird.f32 %v5496
    %vm5503 = vmor %vm5501, %vm5502
    %v5504 = vsel %vm5503, %v5496, %v5500
    %v5505 = vand.u32 2147483647, %v5495
    %vm5506 = vcmp.eq.f32.partialorder %v5505, 8.507059e+37
    %v5507 = vand.u32 %v5495, 2147483648
    %v5508 = vor.u32 1.1754944e-38, %v5507
    %v5509 = vsel %vm5506, %v5508, %v5504
    %v5510 = vmul.f32 1.0, %v5509
    %v5511 = vtanh.pop %v5491
    %v5513 = vrot.slane %v5455, 7
    %v5515 = vmul.f32 %v5510, %v5513
    %5517 = vrot.lane.b32.xlu0 %v5511, 64
    %v5518 = vpop.permute.xlu0 %5517
    %v5520 = vmul.f32 %v5510, %v5518
    %5522 = vrot.lane.b32.xlu0 %v5520, 32
    %v5523 = vpop.permute.xlu0 %5522
    %v5525 = vadd.f32 %v5515, %v5523
    %v5526 = vtanh.pop %v5525
    %5528 = vrot.lane.b32.xlu0 %v5526, 64
    %v5529 = vpop.permute.xlu0 %5528
    %v5531 = vmul.f32 %v5510, %v5529
    %v5533 = vrot.slane %v5531, 3
    %5534 = vrot.lane.b32.xlu0 %v5533, 32
    %v5535 = vpop.permute.xlu0 %5534
    %v5536 = vsel %vm217, %v5535, 0
    %5538 = vmatpush.msra.mxu0 0.0
    %5539 = vmatpush.msra.mxu0 0.0
    %5540 = vmatpush.msra.mxu0 0.0
    %5541 = vmatpush.msra.mxu0 0.0
    %5542 = vmatpush.msra.mxu0 0.0
    %5543 = vmatpush.msra.mxu0 0.0
    %5544 = vmatpush.msra.mxu0 0.0
    %5545 = vmatpush.msra.mxu0 0.0
    %5546 = vmatpush.msra.mxu0 0.0
    %5547 = vmatpush.msra.mxu0 0.0
    %5548 = vmatpush.msra.mxu0 0.0
    %5549 = vmatpush.msra.mxu0 0.0
    %5550 = vmatpush.msra.mxu0 %v2891
    %5551 = vmatpush.msra.mxu0 %v2890
    %5552 = vmatpush.msra.mxu0 %v2889
    %5553 = vmatpush.msra.mxu0 %v2888
    %5554 = vmatmul.f32.gmra.mxu0 %v5536
    %v5555 = vpop.f32.mrf.mxu0
    %v5556 = vadd.f32 0.0, %v5555
    %5557 = vdwg.mxu0
    %v5559 = vrot.slane %v5556, 4
    %v5561 = vadd.f32 %v5260, %v5559
    %v5562 = vxor.u32 %v5561, 2147483648
    %v5563 = vmul.f32 %v5562, 1.442695
    %v5564 = vpow.pop %v5563
    %v5565 = vadd.f32 %v5564, 1.0
    %v5566 = vrcp.pop %v5565
    %v5567 = vmul.f32 %v5565, %v5566
    %v5568 = vsub.f32 1.0, %v5567
    %v5569 = vmul.f32 %v5566, %v5568
    %v5570 = vadd.f32 %v5566, %v5569
    %vm5571 = vweird.f32 %v5565
    %vm5572 = vweird.f32 %v5566
    %vm5573 = vmor %vm5571, %vm5572
    %v5574 = vsel %vm5573, %v5566, %v5570
    %v5575 = vand.u32 2147483647, %v5565
    %vm5576 = vcmp.eq.f32.partialorder %v5575, 8.507059e+37
    %v5577 = vand.u32 %v5565, 2147483648
    %v5578 = vor.u32 1.1754944e-38, %v5577
    %v5579 = vsel %vm5576, %v5578, %v5574
    %v5580 = vmul.f32 1.0, %v5579
    %v5581 = vtanh.pop %v5561
    %v5583 = vrot.slane %v5525, 7
    %v5585 = vmul.f32 %v5580, %v5583
    %5587 = vrot.lane.b32.xlu0 %v5581, 64
    %v5588 = vpop.permute.xlu0 %5587
    %v5590 = vmul.f32 %v5580, %v5588
    %5592 = vrot.lane.b32.xlu0 %v5590, 32
    %v5593 = vpop.permute.xlu0 %5592
    %v5595 = vadd.f32 %v5585, %v5593
    %v5596 = vtanh.pop %v5595
    %5598 = vrot.lane.b32.xlu0 %v5596, 64
    %v5599 = vpop.permute.xlu0 %5598
    %v5601 = vmul.f32 %v5580, %v5599
    %v5603 = vrot.slane %v5601, 4
    %5604 = vrot.lane.b32.xlu0 %v5603, 32
    %v5605 = vpop.permute.xlu0 %5604
    %v5606 = vsel %vm217, %v5605, 0
    %5608 = vmatpush.msra.mxu0 0.0
    %5609 = vmatpush.msra.mxu0 0.0
    %5610 = vmatpush.msra.mxu0 0.0
    %5611 = vmatpush.msra.mxu0 0.0
    %5612 = vmatpush.msra.mxu0 0.0
    %5613 = vmatpush.msra.mxu0 0.0
    %5614 = vmatpush.msra.mxu0 0.0
    %5615 = vmatpush.msra.mxu0 0.0
    %5616 = vmatpush.msra.mxu0 0.0
    %5617 = vmatpush.msra.mxu0 0.0
    %5618 = vmatpush.msra.mxu0 0.0
    %5619 = vmatpush.msra.mxu0 0.0
    %5620 = vmatpush.msra.mxu0 %v2900
    %5621 = vmatpush.msra.mxu0 %v2899
    %5622 = vmatpush.msra.mxu0 %v2898
    %5623 = vmatpush.msra.mxu0 %v2897
    %5624 = vmatmul.f32.gmra.mxu0 %v5606
    %v5625 = vpop.f32.mrf.mxu0
    %v5626 = vadd.f32 0.0, %v5625
    %5627 = vdwg.mxu0
    %v5628 = vrot.slane %v5232, 4
    %5629 = vrot.lane.b32.xlu0 %v5628, 32
    %v5630 = vpop.permute.xlu0 %5629
    %v5631 = vsel %vm217, %v5630, 0
    %5633 = vmatpush.msra.mxu0 0.0
    %5634 = vmatpush.msra.mxu0 0.0
    %5635 = vmatpush.msra.mxu0 0.0
    %5636 = vmatpush.msra.mxu0 0.0
    %5637 = vmatpush.msra.mxu0 0.0
    %5638 = vmatpush.msra.mxu0 0.0
    %5639 = vmatpush.msra.mxu0 0.0
    %5640 = vmatpush.msra.mxu0 0.0
    %5641 = vmatpush.msra.mxu0 0.0
    %5642 = vmatpush.msra.mxu0 0.0
    %5643 = vmatpush.msra.mxu0 0.0
    %5644 = vmatpush.msra.mxu0 0.0
    %5645 = vmatpush.msra.mxu0 %v2896
    %5646 = vmatpush.msra.mxu0 %v2895
    %5647 = vmatpush.msra.mxu0 %v2894
    %5648 = vmatpush.msra.mxu0 %v2893
    %5649 = vmatmul.f32.gmra.mxu0 %v5631
    %v5650 = vpop.f32.mrf.mxu0
    %v5651 = vadd.f32 %v5626, %v5650
    %5652 = vdwg.mxu0
    %v5653 = vsel %vm387, %v5651, 0.0
    %5654 = vadd.xlane.f32.xlu0 %v5653
    %v5655 = vpop.xlane.xlu0 %5654
    %v5656 = vmul.f32 %v5655, %v2720
    %v5657 = vsub.f32 %v5651, %v5656
    %v5658 = vmul.f32 %v5657, %v5657
    %v5659 = vsel %vm387, %v5658, 0.0
    %5660 = vadd.xlane.f32.xlu0 %v5659
    %v5661 = vpop.xlane.xlu0 %5660
    %v5662 = vmul.f32 %v5661, %v2720
    %v5663 = vadd.f32 %v5662, 1e-05
    %v5664 = vrsqrt.pop %v5663
    %v5665 = vmul.f32 %v5664, %v5663
    %v5666 = vmul.f32 %v5665, %v5664
    %v5667 = vmul.f32 0.5, %v5666
    %v5668 = vsub.f32 1.5, %v5667
    %v5669 = vmul.f32 %v5664, %v5668
    %vm5670 = vweird.f32 %v5663
    %vm5671 = vweird.f32 %v5664
    %vm5672 = vmor %vm5670, %vm5671
    %v5673 = vsel %vm5672, %v5664, %v5669
    %v5674 = vmul.f32 %v5657, %v5673
    %v5675 = vmul.f32 %v5674, %v2678
    %v5676 = vadd.f32 %v5675, %v2679
    %v5677 = vperm.slane %v5676, 0
    %v5678 = vmul.f32 %v2748, %v5677
    %v5679 = vsel %vm217, %v5678, 0.0
    %5680 = vadd.xlane.f32.xlu0 %v5679
    %v5681 = vpop.xlane.xlu0 %5680
    %v5682 = vrot.slane %v5681, 4
    %v5683 = vmax.f32 %v5681, %v5682
    %v5684 = vrot.slane %v5683, 2
    %v5685 = vmax.f32 %v5683, %v5684
    %v5686 = vrot.slane %v5685, 1
    %v5687 = vmax.f32 %v5685, %v5686
    %v5688 = vsub.f32 %v5681, %v5687
    %v5689 = vmul.f32 %v5688, 1.442695
    %v5690 = vpow.pop %v5689
    %v5691 = vrot.slane %v5690, 4
    %v5692 = vadd.f32 %v5690, %v5691
    %v5693 = vrot.slane %v5692, 2
    %v5694 = vadd.f32 %v5692, %v5693
    %v5695 = vrot.slane %v5694, 1
    %v5696 = vadd.f32 %v5694, %v5695
    %v5697 = vrcp.pop %v5696
    %v5698 = vmul.f32 %v5690, %v5697
    %v5699 = vmul.f32 %v5698, %v2747
    %v5700 = vsel %vm217, %v5699, 0.0
    %v5701 = vrot.slane %v5700, 4
    %v5702 = vadd.f32 %v5700, %v5701
    %v5703 = vrot.slane %v5702, 2
    %v5704 = vadd.f32 %v5702, %v5703
    %v5705 = vrot.slane %v5704, 1
    %v5706 = vadd.f32 %v5704, %v5705
    %v5708 = vsel %vm217, %v5706, 0
    %5710 = vmatpush.msra.mxu0 0.0
    %5711 = vmatpush.msra.mxu0 0.0
    %5712 = vmatpush.msra.mxu0 0.0
    %5713 = vmatpush.msra.mxu0 0.0
    %5714 = vmatpush.msra.mxu0 0.0
    %5715 = vmatpush.msra.mxu0 0.0
    %5716 = vmatpush.msra.mxu0 0.0
    %5717 = vmatpush.msra.mxu0 0.0
    %5718 = vmatpush.msra.mxu0 0.0
    %5719 = vmatpush.msra.mxu0 0.0
    %5720 = vmatpush.msra.mxu0 0.0
    %5721 = vmatpush.msra.mxu0 0.0
    %5722 = vmatpush.msra.mxu0 %v2904
    %5723 = vmatpush.msra.mxu0 %v2903
    %5724 = vmatpush.msra.mxu0 %v2902
    %5725 = vmatpush.msra.mxu0 %v2901
    %5726 = vmatmul.f32.gmra.mxu0 %v5708
    %v5727 = vpop.f32.mrf.mxu0
    %v5728 = vadd.f32 %v2905, %v5727
    %5729 = vdwg.mxu0
    %5730 = vst [vmem:[%s26 + $0x4] sm:$0x1] %v5728
    // Predicated region
    $region114: #{forward_pallas.1} parent=1 // pred_check
      _
    $region115: #{forward_pallas.1} parent=1 // pred_check_branch
      %5732 = sbr.rel (0) target = $region117
    $region116: #{forward_pallas.1} parent=1 // pred_region
      _
    $region117: #{forward_pallas.1} parent=1 // pred_fallthru
      _
    // Predicated region
    $region118: #{forward_pallas.1} parent=1 // pred_check
      _
    $region119: #{forward_pallas.1} parent=1 // pred_check_branch
      %5734 = sbr.rel (0) target = $region121
    $region120: #{forward_pallas.1} parent=1 // pred_region
      _
    $region121: #{forward_pallas.1} parent=1 // pred_fallthru
      _
    %5735 = vsyncpa [#allocation7], 1
    %5736 = vsyncpa [#allocation9], 1

</llo_original>
